<compile_context>
chip_gen: v5e
topology: v5e:2x2
jax: 0.10.0
libtpu: 0.0.40
codegen_flags: <defaults>
</compile_context>

<pallas_src>
import functools
import math

import jax
import jax.numpy as jnp
from jax.experimental import pallas as pl
from jax.experimental.pallas import tpu as pltpu


def _round_up(x, m):
    return (x + m - 1) // m * m


# ----------------------------------------------------------------------------- #
# Kernel A: context MLP + transformer blocks + positional skip + decoder Linear
# ----------------------------------------------------------------------------- #
def _layernorm(x, gamma, beta, eps=1e-5):
    mu = jnp.mean(x, axis=-1, keepdims=True)
    var = jnp.mean((x - mu) ** 2, axis=-1, keepdims=True)
    return (x - mu) * jax.lax.rsqrt(var + eps) * gamma + beta


def _transformer_kernel(bn_ref, pos_ref,
                        cw1_ref, cb1_ref, cw2_ref, cb2_ref,
                        wvo_ref, dvec_ref, fw1_ref, fb1_ref, fw2_ref,
                        dec_w_ref, dec_b_ref,
                        o_ref, *, num_layers):
    f32, bf16 = jnp.float32, jnp.bfloat16

    # context = MLP(bottleneck): Linear -> ReLU -> Linear                        (1, D)
    x = bn_ref[0].astype(bf16)
    ctx = jnp.dot(x, cw1_ref[...], preferred_element_type=f32) + cb1_ref[...]
    ctx = jnp.maximum(ctx, 0.0)
    ctx = jnp.dot(ctx.astype(bf16), cw2_ref[...], preferred_element_type=f32) + cb2_ref[...]

    pos = pos_ref[...]                                                           # (N, D) f32
    h = pos
    for l in range(num_layers):
        dv = dvec_ref[l]      # (7, D): [bv, bo, ln1_g, ln1_b, ln2_g, ln2_b, ffn_b2]
        # Cross-attention with a length-1 context: softmax over a single key == 1, so every
        # query's attention output is exactly (ctx Wv + bv) Wo + bo (Wq/Wk are mathematically
        # dead) -- identical to the full multi-head computation, no per-head slicing.
        v = jnp.dot(ctx.astype(bf16), wvo_ref[l, 0], preferred_element_type=f32) + dv[0:1]
        attn = jnp.dot(v.astype(bf16), wvo_ref[l, 1], preferred_element_type=f32) + dv[1:2]
        x1 = _layernorm(h + attn, dv[2:3], dv[3:4])                              # (N, D)
        ff = jnp.dot(x1.astype(bf16), fw1_ref[l], preferred_element_type=f32) + fb1_ref[l]
        ff = jnp.maximum(ff, 0.0)
        ff = jnp.dot(ff.astype(bf16), fw2_ref[l], preferred_element_type=f32) + dv[6:7]
        h = _layernorm(x1 + ff, dv[4:5], dv[5:6])

    h = h + pos
    hd = jnp.dot(h.astype(bf16), dec_w_ref[...], preferred_element_type=f32) + dec_b_ref[...]
    o_ref[0] = hd.astype(o_ref.dtype)


def transformer_stack(bottleneck, pos, params, cfg):
    B = bottleneck.shape[0]
    L, D, F = cfg["num_layers"], cfg["model_dim"], cfg["ff_dim"]
    bd, g, p = cfg["bottleneck_dim"], cfg["grid_size"], cfg["patch_size"]
    N, PP = g * g, D * p * p
    bf16 = jnp.bfloat16

    blocks = params["blocks"]
    wvo = jnp.stack([jnp.stack([blk["wv"], blk["wo"]]) for blk in blocks]).astype(bf16)  # (L,2,D,D)
    dvec = jnp.stack([jnp.concatenate(
        [blk["bv"], blk["bo"], blk["ln1_g"], blk["ln1_b"],
         blk["ln2_g"], blk["ln2_b"], blk["b2"]], axis=0) for blk in blocks])             # (L,7,D)
    fw1 = jnp.stack([blk["w1"] for blk in blocks]).astype(bf16)                          # (L,D,F)
    fb1 = jnp.stack([blk["b1"] for blk in blocks])                                       # (L,1,F)
    fw2 = jnp.stack([blk["w2"] for blk in blocks]).astype(bf16)                          # (L,F,D)

    bn = bottleneck.reshape(B, 1, bd)

    rep = lambda shape: pl.BlockSpec(shape, lambda b: (0,) * len(shape))

    flops = 2 * B * (bd * D + D * D + L * (2 * D * D + 2 * N * D * F) + N * D * PP)
    bytes_acc = (B * bd * 4 + N * D * 4 + (bd * D + D * D) * 2
                 + L * (2 * D * D + D * F + F * D) * 2 + L * (7 * D + F) * 4
                 + D * PP * 2 + PP * 4 + B * N * PP * 2)

    # TODO(synk): if num_layers/model_dim are scaled up, move the layer loop onto an
    # "arbitrary" grid axis (carry h in VMEM scratch) instead of full-block stacked weights.
    return pl.pallas_call(
        functools.partial(_transformer_kernel, num_layers=L),
        out_shape=jax.ShapeDtypeStruct((B, N, PP), bf16),
        grid=(B,),
        in_specs=[
            pl.BlockSpec((1, 1, bd), lambda b: (b, 0, 0)),            # bottleneck
            rep((N, D)),                                              # positional table
            rep((bd, D)), rep((1, D)), rep((D, D)), rep((1, D)),      # context MLP
            rep((L, 2, D, D)), rep((L, 7, D)),                        # attn Wv/Wo + packed vectors
            rep((L, D, F)), rep((L, 1, F)), rep((L, F, D)),           # FFN
            rep((D, PP)), rep((1, PP)),                               # decoder Linear
        ],
        out_specs=pl.BlockSpec((1, N, PP), lambda b: (b, 0, 0)),
        compiler_params=pltpu.CompilerParams(dimension_semantics=("parallel",)),
        cost_estimate=pl.CostEstimate(flops=flops, transcendentals=B * L * 2 * N,
                                      bytes_accessed=bytes_acc),
    )(bn, pos,
      params["ctx_w1"].astype(bf16), params["ctx_b1"],
      params["ctx_w2"].astype(bf16), params["ctx_b2"],
      wvo, dvec, fw1, fb1, fw2,
      params["dec_w"].astype(bf16), params["dec_b"])


# ----------------------------------------------------------------------------- #
# Kernel B: final_refine = Conv2d(D->4D, k, 'same') -> ReLU -> Conv2d(4D->C, k, 'same')
# Both im2cols are built in VMEM from a channel-major, width-flattened padded image.
# ----------------------------------------------------------------------------- #
def _conv_refine_kernel(x_ref, mask_ref, w1t_ref, b1_ref, w2t_ref, b2_ref, o_ref, *,
                        starts1, offs2, sn, out_p):
    f32, bf16 = jnp.float32, jnp.bfloat16
    x = x_ref[0]                                                     # (D, LX) bf16
    # conv1 im2col (channel-major): every (kh,kw) tap is a contiguous static lane slice of x.
    patches_t = jnp.concatenate([x[:, s:s + sn] for s in starts1], axis=0)   # (k*k*D, SN)
    mid_t = jnp.dot(w1t_ref[...], patches_t, preferred_element_type=f32) + b1_ref[...]
    mid_t = jnp.maximum(mid_t, 0.0) * mask_ref[...]                  # zero 'same'-padding pixels
    mid_bf = mid_t.astype(bf16)                                      # (MID, SN)
    # conv2: tap-wise shift-accumulate (16 small matmuls, f32 accumulator, channel-major out).
    acc = jnp.zeros(o_ref.shape[1:], f32)
    for j, o in enumerate(offs2):
        acc = acc + jnp.dot(w2t_ref[j], mid_bf[:, o:o + out_p], preferred_element_type=f32)
    o_ref[0] = (acc + b2_ref[...]).astype(o_ref.dtype)


def final_refine(img_nhwc, params, cfg):
    B, H, W, D = img_nhwc.shape
    p, C = cfg["patch_size"], cfg["in_channels"]
    MID = 4 * D
    C_PAD = 8
    bf16 = jnp.bfloat16

    ph0 = (p - 1) // 2                      # PyTorch 'same' (even k): 1 top/left, 2 bottom/right
    ph1 = (p - 1) - ph0
    Hp, Wp = H + p - 1, W + p - 1
    S0 = Hp * Wp                            # padded-image flat pixel count
    shift = ph0 * (Wp + 1)                  # conv1 tap offset bias in the flat frame
    M0 = _round_up(shift, 8)                # zero lane margin so all slice starts are >= 0
    max_off = (p - 1) * (Wp + 1)
    OUT_P = _round_up(H * Wp, 128)          # lane-dense conv2 output columns
    SN = _round_up(max(S0, OUT_P + max_off), 8)
    LX = _round_up(max(M0 + S0, M0 - shift + max_off + SN), 128)

    # Channel-major, width-flattened padded image: x_t[b, d, M0 + rp*Wp + cp] = padded_img[rp,cp,d]
    xpad = jnp.pad(img_nhwc, ((0, 0), (ph0, ph1), (ph0, ph1), (0, 0)))
    x_t = jnp.transpose(xpad.reshape(B, S0, D), (0, 2, 1))
    x_t = jnp.pad(x_t, ((0, 0), (0, 0), (M0, LX - M0 - S0))).astype(bf16)        # (B, D, LX)

    idx = jnp.arange(SN)
    rp, cp = idx // Wp, idx % Wp
    valid = (rp >= ph0) & (rp < ph0 + H) & (cp >= ph0) & (cp < ph0 + W)
    mask = valid.astype(jnp.float32)[None, :]                                    # (1, SN)

    w1t = params["conv1_w"].reshape(p * p * D, MID).T.astype(bf16)               # (MID, k*k*D)
    b1c = params["conv1_b"].reshape(MID, 1)
    w2t = jnp.transpose(params["conv2_w"].reshape(p * p, MID, C), (0, 2, 1))
    w2t = jnp.pad(w2t, ((0, 0), (0, C_PAD - C), (0, 0))).astype(bf16)            # (k*k, 8, MID)
    b2c = jnp.pad(params["conv2_b"].reshape(C, 1), ((0, C_PAD - C), (0, 0)))     # (8, 1)

    offs = tuple(kh * Wp + kw for kh in range(p) for kw in range(p))
    starts1 = tuple(M0 - shift + o for o in offs)

    flops = B * (2 * MID * (p * p * D) * SN + p * p * 2 * C_PAD * MID * OUT_P)
    bytes_acc = (B * D * LX * 2 + SN * 4 + MID * p * p * D * 2 + MID * 4
                 + p * p * C_PAD * MID * 2 + C_PAD * 4 + B * C_PAD * OUT_P * 4)

    rep = lambda shape: pl.BlockSpec(shape, lambda b: (0,) * len(shape))
    out = pl.pallas_call(
        functools.partial(_conv_refine_kernel, starts1=starts1, offs2=offs, sn=SN, out_p=OUT_P),
        out_shape=jax.ShapeDtypeStruct((B, C_PAD, OUT_P), jnp.float32),
        grid=(B,),
        in_specs=[
            pl.BlockSpec((1, D, LX), lambda b: (b, 0, 0)),
            rep((1, SN)),
            rep((MID, p * p * D)), rep((MID, 1)),
            rep((p * p, C_PAD, MID)), rep((C_PAD, 1)),
        ],
        out_specs=pl.BlockSpec((1, C_PAD, OUT_P), lambda b: (b, 0, 0)),
        compiler_params=pltpu.CompilerParams(dimension_semantics=("parallel",)),
        cost_estimate=pl.CostEstimate(flops=flops, transcendentals=0, bytes_accessed=bytes_acc),
    )(x_t, mask, w1t, b1c, w2t, b2c)

    # (B, C_PAD, OUT_P) -> NCHW: strip channel pad + width-flat pad columns (no transpose needed).
    return out[:, :C, :H * Wp].reshape(B, C, H, Wp)[:, :, :, :W]


# ----------------------------------------------------------------------------- #
# Glue: positional table, params, full forward
# ----------------------------------------------------------------------------- #
def sinusoidal_pos_embed_2d(d_model, height, width):
    """Fixed 2D sin/cos positional embedding, flattened row-major -> (H*W, D)."""
    assert d_model % 4 == 0
    d_half = d_model // 2
    div = jnp.exp(jnp.arange(0, d_half, 2, dtype=jnp.float32) * (-math.log(10000.0) / d_half))
    pos_h = jnp.arange(height, dtype=jnp.float32)[:, None]
    pos_w = jnp.arange(width, dtype=jnp.float32)[:, None]
    pe_h = jnp.zeros((height, d_half), jnp.float32)
    pe_h = pe_h.at[:, 0::2].set(jnp.sin(pos_h * div))
    pe_h = pe_h.at[:, 1::2].set(jnp.cos(pos_h * div))
    pe_w = jnp.zeros((width, d_half), jnp.float32)
    pe_w = pe_w.at[:, 0::2].set(jnp.sin(pos_w * div))
    pe_w = pe_w.at[:, 1::2].set(jnp.cos(pos_w * div))
    pe = jnp.concatenate(
        [jnp.broadcast_to(pe_h[:, None, :], (height, width, d_half)),
         jnp.broadcast_to(pe_w[None, :, :], (height, width, d_half))], axis=-1)
    return pe.reshape(height * width, d_model)


def init_params(key, cfg):
    D, F, C = cfg["model_dim"], cfg["ff_dim"], cfg["in_channels"]
    p, bd, mid = cfg["patch_size"], cfg["bottleneck_dim"], cfg["model_dim"] * 4
    keys = iter(jax.random.split(key, 64))

    def w(shape, scale=0.02):
        return (scale * jax.random.normal(next(keys), shape)).astype(jnp.float32)

    zeros = lambda s: jnp.zeros(s, jnp.float32)
    ones = lambda s: jnp.ones(s, jnp.float32)

    blocks = []
    for _ in range(cfg["num_layers"]):
        blocks.append(dict(
            # wq/bq/wk/bk exist in the module but are mathematically unused: with a length-1
            # cross-attention context, softmax over the single key is identically 1, so the
            # attention output depends only on v (and Wo). Kept for structural fidelity.
            wq=w((D, D)), bq=zeros((1, D)),
            wk=w((D, D)), bk=zeros((1, D)),
            wv=w((D, D)), bv=zeros((1, D)),
            wo=w((D, D)), bo=zeros((1, D)),
            ln1_g=ones((1, D)), ln1_b=zeros((1, D)),
            ln2_g=ones((1, D)), ln2_b=zeros((1, D)),
            w1=w((D, F)), b1=zeros((1, F)),
            w2=w((F, D)), b2=zeros((1, D)),
        ))

    return dict(
        ctx_w1=w((bd, D)), ctx_b1=zeros((1, D)),
        ctx_w2=w((D, D)), ctx_b2=zeros((1, D)),
        blocks=blocks,
        dec_w=w((D, D * p * p)), dec_b=zeros((1, D * p * p)),
        conv1_w=w((p, p, D, mid)), conv1_b=zeros((1, mid)),
        conv2_w=w((p, p, mid, C)), conv2_b=zeros((1, C)),
    )


def host_img_transformer_decoder_hybrid(bottleneck, params, cfg):
    B = bottleneck.shape[0]
    D, p, g = cfg["model_dim"], cfg["patch_size"], cfg["grid_size"]
    pos = sinusoidal_pos_embed_2d(D, g, g)                 # (N, D), constant-folded under jit

    hd = transformer_stack(bottleneck, pos, params, cfg)   # (B, N, p*p*D) bf16

    # view(B,g,g,p,p,D) -> permute(0,5,1,3,2,4) -> view(B,D,img,img); kept NHWC here and fed to
    # the fused conv kernel. This inter-kernel relayout is a ~16 KB/batch bf16 XLA copy (the
    # 16x im2col expansion itself now happens entirely in VMEM inside Kernel B).
    img = hd.reshape(B, g, g, p, p, D).transpose(0, 1, 3, 2, 4, 5).reshape(B, g * p, g * p, D)

    return final_refine(img, params, cfg)


# ----------------------------------------------------------------------------- #
if __name__ == "__main__":
    cfg = dict(
        img_size=16,
        patch_size=4,
        grid_size=4,
        in_channels=3,
        model_dim=32,
        num_heads=4,       # unused by the kernel: head split is irrelevant when softmax == 1
        ff_dim=64,
        num_layers=2,
        bottleneck_dim=8,
    )

    key = jax.random.PRNGKey(0)
    k_param, k_in = jax.random.split(key)
    params = init_params(k_param, cfg)
    bottleneck = jax.random.normal(k_in, (2, cfg["bottleneck_dim"]), dtype=jnp.float32)

    fwd = jax.jit(functools.partial(host_img_transformer_decoder_hybrid, cfg=cfg))
    out = jax.block_until_ready(fwd(bottleneck, params))

    assert out.shape == (2, cfg["in_channels"], cfg["img_size"], cfg["img_size"]), out.shape
    assert bool(jnp.all(jnp.isfinite(out)))
    # TODO(synk): MLP / SinusoidalPositionalEmbedding2D / TransformerBlock are not defined in the
    # provided source; standard (Linear-ReLU-Linear, fixed 2D sin/cos, post-norm cross-attn,
    # inference-mode dropout) variants are implemented above.
    print("KERNEL_OK")
</pallas_src>

<mosaic_0001>
module attributes {stable_mosaic.version = 11 : i64} {
  func.func @_transformer_kernel(%arg0: i32, %arg1: memref<1x1x8xf32, #tpu.memory_space<vmem>>, %arg2: memref<16x32xf32, #tpu.memory_space<vmem>>, %arg3: memref<8x32xbf16, #tpu.memory_space<vmem>>, %arg4: memref<1x32xf32, #tpu.memory_space<vmem>>, %arg5: memref<32x32xbf16, #tpu.memory_space<vmem>>, %arg6: memref<1x32xf32, #tpu.memory_space<vmem>>, %arg7: memref<2x2x32x32xbf16, #tpu.memory_space<vmem>>, %arg8: memref<2x7x32xf32, #tpu.memory_space<vmem>>, %arg9: memref<2x32x64xbf16, #tpu.memory_space<vmem>>, %arg10: memref<2x1x64xf32, #tpu.memory_space<vmem>>, %arg11: memref<2x64x32xbf16, #tpu.memory_space<vmem>>, %arg12: memref<32x512xbf16, #tpu.memory_space<vmem>>, %arg13: memref<1x512xf32, #tpu.memory_space<vmem>>, %arg14: memref<1x16x512xbf16, #tpu.memory_space<vmem>>) attributes {dimension_semantics = [#tpu.dimension_semantics<parallel>], iteration_bounds = array<i64: 2>, scalar_prefetch = 0 : i64, scratch_operands = 0 : i64, tpu.core_type = #tpu.core_type<tc>, window_params = [{transform_indices = @transform_0, window_bounds = array<i64: 1, 1, 8>}, {pipeline_mode = #tpu.pipeline_mode<synchronous>, transform_indices = @transform_1, window_bounds = array<i64: 16, 32>}, {pipeline_mode = #tpu.pipeline_mode<synchronous>, transform_indices = @transform_2, window_bounds = array<i64: 8, 32>}, {pipeline_mode = #tpu.pipeline_mode<synchronous>, transform_indices = @transform_3, window_bounds = array<i64: 1, 32>}, {pipeline_mode = #tpu.pipeline_mode<synchronous>, transform_indices = @transform_4, window_bounds = array<i64: 32, 32>}, {pipeline_mode = #tpu.pipeline_mode<synchronous>, transform_indices = @transform_5, window_bounds = array<i64: 1, 32>}, {pipeline_mode = #tpu.pipeline_mode<synchronous>, transform_indices = @transform_6, window_bounds = array<i64: 2, 2, 32, 32>}, {pipeline_mode = #tpu.pipeline_mode<synchronous>, transform_indices = @transform_7, window_bounds = array<i64: 2, 7, 32>}, {pipeline_mode = #tpu.pipeline_mode<synchronous>, transform_indices = @transform_8, window_bounds = array<i64: 2, 32, 64>}, {pipeline_mode = #tpu.pipeline_mode<synchronous>, transform_indices = @transform_9, window_bounds = array<i64: 2, 1, 64>}, {pipeline_mode = #tpu.pipeline_mode<synchronous>, transform_indices = @transform_10, window_bounds = array<i64: 2, 64, 32>}, {pipeline_mode = #tpu.pipeline_mode<synchronous>, transform_indices = @transform_11, window_bounds = array<i64: 32, 512>}, {pipeline_mode = #tpu.pipeline_mode<synchronous>, transform_indices = @transform_12, window_bounds = array<i64: 1, 512>}, {transform_indices = @transform_13, window_bounds = array<i64: 1, 16, 512>}]} {
    %c0 = arith.constant 0 : index
    %c0_0 = arith.constant 0 : index
    %c0_1 = arith.constant 0 : index
    %0 = vector.load %arg1[%c0, %c0_0, %c0_1] : memref<1x1x8xf32, #tpu.memory_space<vmem>>, vector<1x1x8xf32>
    %1 = vector.shape_cast %0 : vector<1x1x8xf32> to vector<1x8xf32>
    %2 = arith.truncf %1 : vector<1x8xf32> to vector<1x8xbf16>
    %c0_2 = arith.constant 0 : index
    %c0_3 = arith.constant 0 : index
    %3 = vector.load %arg3[%c0_2, %c0_3] : memref<8x32xbf16, #tpu.memory_space<vmem>>, vector<8x32xbf16>
    %cst = arith.constant dense<0.000000e+00> : vector<1x32xf32>
    %4 = tpu.matmul %2, %3, %cst {dimension_numbers = #tpu.dot_dimension_numbers<[1], [0], [0], [1], [0, 0, 1, 1], [], []>} : vector<1x8xbf16>, vector<8x32xbf16>, vector<1x32xf32> -> vector<1x32xf32>
    %c0_4 = arith.constant 0 : index
    %c0_5 = arith.constant 0 : index
    %5 = vector.load %arg4[%c0_4, %c0_5] : memref<1x32xf32, #tpu.memory_space<vmem>>, vector<1x32xf32>
    %6 = arith.addf %4, %5 : vector<1x32xf32>
    %cst_6 = arith.constant 0.000000e+00 : f32
    %7 = vector.broadcast %cst_6 : f32 to vector<1x32xf32>
    %8 = arith.maximumf %6, %7 : vector<1x32xf32>
    %9 = arith.truncf %8 : vector<1x32xf32> to vector<1x32xbf16>
    %c0_7 = arith.constant 0 : index
    %c0_8 = arith.constant 0 : index
    %10 = vector.load %arg5[%c0_7, %c0_8] : memref<32x32xbf16, #tpu.memory_space<vmem>>, vector<32x32xbf16>
    %cst_9 = arith.constant dense<0.000000e+00> : vector<1x32xf32>
    %11 = tpu.matmul %9, %10, %cst_9 {dimension_numbers = #tpu.dot_dimension_numbers<[1], [0], [0], [1], [0, 0, 1, 1], [], []>} : vector<1x32xbf16>, vector<32x32xbf16>, vector<1x32xf32> -> vector<1x32xf32>
    %c0_10 = arith.constant 0 : index
    %c0_11 = arith.constant 0 : index
    %12 = vector.load %arg6[%c0_10, %c0_11] : memref<1x32xf32, #tpu.memory_space<vmem>>, vector<1x32xf32>
    %13 = arith.addf %11, %12 : vector<1x32xf32>
    %c0_12 = arith.constant 0 : index
    %c0_13 = arith.constant 0 : index
    %14 = vector.load %arg2[%c0_12, %c0_13] : memref<16x32xf32, #tpu.memory_space<vmem>>, vector<16x32xf32>
    %c0_14 = arith.constant 0 : index
    %c0_15 = arith.constant 0 : index
    %c0_16 = arith.constant 0 : index
    %15 = vector.load %arg8[%c0_14, %c0_15, %c0_16] : memref<2x7x32xf32, #tpu.memory_space<vmem>>, vector<1x7x32xf32>
    %16 = vector.shape_cast %15 : vector<1x7x32xf32> to vector<7x32xf32>
    %17 = arith.truncf %13 : vector<1x32xf32> to vector<1x32xbf16>
    %c0_17 = arith.constant 0 : index
    %c0_18 = arith.constant 0 : index
    %c0_19 = arith.constant 0 : index
    %c0_20 = arith.constant 0 : index
    %18 = vector.load %arg7[%c0_17, %c0_18, %c0_19, %c0_20] : memref<2x2x32x32xbf16, #tpu.memory_space<vmem>>, vector<1x1x32x32xbf16>
    %19 = vector.shape_cast %18 : vector<1x1x32x32xbf16> to vector<32x32xbf16>
    %cst_21 = arith.constant dense<0.000000e+00> : vector<1x32xf32>
    %20 = tpu.matmul %17, %19, %cst_21 {dimension_numbers = #tpu.dot_dimension_numbers<[1], [0], [0], [1], [0, 0, 1, 1], [], []>} : vector<1x32xbf16>, vector<32x32xbf16>, vector<1x32xf32> -> vector<1x32xf32>
    %21 = vector.extract_strided_slice %16 {offsets = [0, 0], sizes = [1, 32], strides = [1, 1]} : vector<7x32xf32> to vector<1x32xf32>
    %22 = arith.addf %20, %21 : vector<1x32xf32>
    %23 = arith.truncf %22 : vector<1x32xf32> to vector<1x32xbf16>
    %c0_22 = arith.constant 0 : index
    %c1 = arith.constant 1 : index
    %c0_23 = arith.constant 0 : index
    %c0_24 = arith.constant 0 : index
    %24 = vector.load %arg7[%c0_22, %c1, %c0_23, %c0_24] : memref<2x2x32x32xbf16, #tpu.memory_space<vmem>>, vector<1x1x32x32xbf16>
    %25 = vector.shape_cast %24 : vector<1x1x32x32xbf16> to vector<32x32xbf16>
    %cst_25 = arith.constant dense<0.000000e+00> : vector<1x32xf32>
    %26 = tpu.matmul %23, %25, %cst_25 {dimension_numbers = #tpu.dot_dimension_numbers<[1], [0], [0], [1], [0, 0, 1, 1], [], []>} : vector<1x32xbf16>, vector<32x32xbf16>, vector<1x32xf32> -> vector<1x32xf32>
    %27 = vector.extract_strided_slice %16 {offsets = [1, 0], sizes = [1, 32], strides = [1, 1]} : vector<7x32xf32> to vector<1x32xf32>
    %28 = arith.addf %26, %27 : vector<1x32xf32>
    %29 = vector.broadcast %28 : vector<1x32xf32> to vector<16x32xf32>
    %30 = arith.addf %14, %29 : vector<16x32xf32>
    %31 = vector.extract_strided_slice %16 {offsets = [2, 0], sizes = [1, 32], strides = [1, 1]} : vector<7x32xf32> to vector<1x32xf32>
    %32 = vector.extract_strided_slice %16 {offsets = [3, 0], sizes = [1, 32], strides = [1, 1]} : vector<7x32xf32> to vector<1x32xf32>
    %cst_26 = arith.constant dense<0.000000e+00> : vector<16xf32>
    %33 = vector.multi_reduction <add>, %30, %cst_26 [1] : vector<16x32xf32> to vector<16xf32>
    %34 = vector.shape_cast %33 : vector<16xf32> to vector<16x1xf32>
    %cst_27 = arith.constant 3.200000e+01 : f32
    %35 = vector.broadcast %cst_27 : f32 to vector<16x1xf32>
    %36 = arith.divf %34, %35 : vector<16x1xf32>
    %37 = vector.broadcast %36 : vector<16x1xf32> to vector<16x32xf32>
    %38 = arith.subf %30, %37 : vector<16x32xf32>
    %39 = arith.mulf %38, %38 : vector<16x32xf32>
    %cst_28 = arith.constant dense<0.000000e+00> : vector<16xf32>
    %40 = vector.multi_reduction <add>, %39, %cst_28 [1] : vector<16x32xf32> to vector<16xf32>
    %41 = vector.shape_cast %40 : vector<16xf32> to vector<16x1xf32>
    %cst_29 = arith.constant 3.200000e+01 : f32
    %42 = vector.broadcast %cst_29 : f32 to vector<16x1xf32>
    %43 = arith.divf %41, %42 : vector<16x1xf32>
    %44 = vector.broadcast %36 : vector<16x1xf32> to vector<16x32xf32>
    %45 = arith.subf %30, %44 : vector<16x32xf32>
    %cst_30 = arith.constant 9.99999974E-6 : f32
    %46 = vector.broadcast %cst_30 : f32 to vector<16x1xf32>
    %47 = arith.addf %43, %46 : vector<16x1xf32>
    %48 = math.rsqrt %47 : vector<16x1xf32>
    %49 = vector.broadcast %48 : vector<16x1xf32> to vector<16x32xf32>
    %50 = arith.mulf %45, %49 : vector<16x32xf32>
    %51 = vector.broadcast %31 : vector<1x32xf32> to vector<16x32xf32>
    %52 = arith.mulf %50, %51 : vector<16x32xf32>
    %53 = vector.broadcast %32 : vector<1x32xf32> to vector<16x32xf32>
    %54 = arith.addf %52, %53 : vector<16x32xf32>
    %55 = arith.truncf %54 : vector<16x32xf32> to vector<16x32xbf16>
    %c0_31 = arith.constant 0 : index
    %c0_32 = arith.constant 0 : index
    %c0_33 = arith.constant 0 : index
    %56 = vector.load %arg9[%c0_31, %c0_32, %c0_33] : memref<2x32x64xbf16, #tpu.memory_space<vmem>>, vector<1x32x64xbf16>
    %57 = vector.shape_cast %56 : vector<1x32x64xbf16> to vector<32x64xbf16>
    %cst_34 = arith.constant dense<0.000000e+00> : vector<16x64xf32>
    %58 = tpu.matmul %55, %57, %cst_34 {dimension_numbers = #tpu.dot_dimension_numbers<[1], [0], [0], [1], [0, 0, 1, 1], [], []>} : vector<16x32xbf16>, vector<32x64xbf16>, vector<16x64xf32> -> vector<16x64xf32>
    %c0_35 = arith.constant 0 : index
    %c0_36 = arith.constant 0 : index
    %c0_37 = arith.constant 0 : index
    %59 = vector.load %arg10[%c0_35, %c0_36, %c0_37] : memref<2x1x64xf32, #tpu.memory_space<vmem>>, vector<1x1x64xf32>
    %60 = vector.shape_cast %59 : vector<1x1x64xf32> to vector<1x64xf32>
    %61 = vector.broadcast %60 : vector<1x64xf32> to vector<16x64xf32>
    %62 = arith.addf %58, %61 : vector<16x64xf32>
    %cst_38 = arith.constant 0.000000e+00 : f32
    %63 = vector.broadcast %cst_38 : f32 to vector<16x64xf32>
    %64 = arith.maximumf %62, %63 : vector<16x64xf32>
    %65 = arith.truncf %64 : vector<16x64xf32> to vector<16x64xbf16>
    %c0_39 = arith.constant 0 : index
    %c0_40 = arith.constant 0 : index
    %c0_41 = arith.constant 0 : index
    %66 = vector.load %arg11[%c0_39, %c0_40, %c0_41] : memref<2x64x32xbf16, #tpu.memory_space<vmem>>, vector<1x64x32xbf16>
    %67 = vector.shape_cast %66 : vector<1x64x32xbf16> to vector<64x32xbf16>
    %cst_42 = arith.constant dense<0.000000e+00> : vector<16x32xf32>
    %68 = tpu.matmul %65, %67, %cst_42 {dimension_numbers = #tpu.dot_dimension_numbers<[1], [0], [0], [1], [0, 0, 1, 1], [], []>} : vector<16x64xbf16>, vector<64x32xbf16>, vector<16x32xf32> -> vector<16x32xf32>
    %69 = vector.extract_strided_slice %16 {offsets = [6, 0], sizes = [1, 32], strides = [1, 1]} : vector<7x32xf32> to vector<1x32xf32>
    %70 = vector.broadcast %69 : vector<1x32xf32> to vector<16x32xf32>
    %71 = arith.addf %68, %70 : vector<16x32xf32>
    %72 = arith.addf %54, %71 : vector<16x32xf32>
    %73 = vector.extract_strided_slice %16 {offsets = [4, 0], sizes = [1, 32], strides = [1, 1]} : vector<7x32xf32> to vector<1x32xf32>
    %74 = vector.extract_strided_slice %16 {offsets = [5, 0], sizes = [1, 32], strides = [1, 1]} : vector<7x32xf32> to vector<1x32xf32>
    %cst_43 = arith.constant dense<0.000000e+00> : vector<16xf32>
    %75 = vector.multi_reduction <add>, %72, %cst_43 [1] : vector<16x32xf32> to vector<16xf32>
    %76 = vector.shape_cast %75 : vector<16xf32> to vector<16x1xf32>
    %cst_44 = arith.constant 3.200000e+01 : f32
    %77 = vector.broadcast %cst_44 : f32 to vector<16x1xf32>
    %78 = arith.divf %76, %77 : vector<16x1xf32>
    %79 = vector.broadcast %78 : vector<16x1xf32> to vector<16x32xf32>
    %80 = arith.subf %72, %79 : vector<16x32xf32>
    %81 = arith.mulf %80, %80 : vector<16x32xf32>
    %cst_45 = arith.constant dense<0.000000e+00> : vector<16xf32>
    %82 = vector.multi_reduction <add>, %81, %cst_45 [1] : vector<16x32xf32> to vector<16xf32>
    %83 = vector.shape_cast %82 : vector<16xf32> to vector<16x1xf32>
    %cst_46 = arith.constant 3.200000e+01 : f32
    %84 = vector.broadcast %cst_46 : f32 to vector<16x1xf32>
    %85 = arith.divf %83, %84 : vector<16x1xf32>
    %86 = vector.broadcast %78 : vector<16x1xf32> to vector<16x32xf32>
    %87 = arith.subf %72, %86 : vector<16x32xf32>
    %cst_47 = arith.constant 9.99999974E-6 : f32
    %88 = vector.broadcast %cst_47 : f32 to vector<16x1xf32>
    %89 = arith.addf %85, %88 : vector<16x1xf32>
    %90 = math.rsqrt %89 : vector<16x1xf32>
    %91 = vector.broadcast %90 : vector<16x1xf32> to vector<16x32xf32>
    %92 = arith.mulf %87, %91 : vector<16x32xf32>
    %93 = vector.broadcast %73 : vector<1x32xf32> to vector<16x32xf32>
    %94 = arith.mulf %92, %93 : vector<16x32xf32>
    %95 = vector.broadcast %74 : vector<1x32xf32> to vector<16x32xf32>
    %96 = arith.addf %94, %95 : vector<16x32xf32>
    %c1_48 = arith.constant 1 : index
    %c0_49 = arith.constant 0 : index
    %c0_50 = arith.constant 0 : index
    %97 = vector.load %arg8[%c1_48, %c0_49, %c0_50] : memref<2x7x32xf32, #tpu.memory_space<vmem>>, vector<1x7x32xf32>
    %98 = vector.shape_cast %97 : vector<1x7x32xf32> to vector<7x32xf32>
    %99 = arith.truncf %13 : vector<1x32xf32> to vector<1x32xbf16>
    %c1_51 = arith.constant 1 : index
    %c0_52 = arith.constant 0 : index
    %c0_53 = arith.constant 0 : index
    %c0_54 = arith.constant 0 : index
    %100 = vector.load %arg7[%c1_51, %c0_52, %c0_53, %c0_54] : memref<2x2x32x32xbf16, #tpu.memory_space<vmem>>, vector<1x1x32x32xbf16>
    %101 = vector.shape_cast %100 : vector<1x1x32x32xbf16> to vector<32x32xbf16>
    %cst_55 = arith.constant dense<0.000000e+00> : vector<1x32xf32>
    %102 = tpu.matmul %99, %101, %cst_55 {dimension_numbers = #tpu.dot_dimension_numbers<[1], [0], [0], [1], [0, 0, 1, 1], [], []>} : vector<1x32xbf16>, vector<32x32xbf16>, vector<1x32xf32> -> vector<1x32xf32>
    %103 = vector.extract_strided_slice %98 {offsets = [0, 0], sizes = [1, 32], strides = [1, 1]} : vector<7x32xf32> to vector<1x32xf32>
    %104 = arith.addf %102, %103 : vector<1x32xf32>
    %105 = arith.truncf %104 : vector<1x32xf32> to vector<1x32xbf16>
    %c1_56 = arith.constant 1 : index
    %c1_57 = arith.constant 1 : index
    %c0_58 = arith.constant 0 : index
    %c0_59 = arith.constant 0 : index
    %106 = vector.load %arg7[%c1_56, %c1_57, %c0_58, %c0_59] : memref<2x2x32x32xbf16, #tpu.memory_space<vmem>>, vector<1x1x32x32xbf16>
    %107 = vector.shape_cast %106 : vector<1x1x32x32xbf16> to vector<32x32xbf16>
    %cst_60 = arith.constant dense<0.000000e+00> : vector<1x32xf32>
    %108 = tpu.matmul %105, %107, %cst_60 {dimension_numbers = #tpu.dot_dimension_numbers<[1], [0], [0], [1], [0, 0, 1, 1], [], []>} : vector<1x32xbf16>, vector<32x32xbf16>, vector<1x32xf32> -> vector<1x32xf32>
    %109 = vector.extract_strided_slice %98 {offsets = [1, 0], sizes = [1, 32], strides = [1, 1]} : vector<7x32xf32> to vector<1x32xf32>
    %110 = arith.addf %108, %109 : vector<1x32xf32>
    %111 = vector.broadcast %110 : vector<1x32xf32> to vector<16x32xf32>
    %112 = arith.addf %96, %111 : vector<16x32xf32>
    %113 = vector.extract_strided_slice %98 {offsets = [2, 0], sizes = [1, 32], strides = [1, 1]} : vector<7x32xf32> to vector<1x32xf32>
    %114 = vector.extract_strided_slice %98 {offsets = [3, 0], sizes = [1, 32], strides = [1, 1]} : vector<7x32xf32> to vector<1x32xf32>
    %cst_61 = arith.constant dense<0.000000e+00> : vector<16xf32>
    %115 = vector.multi_reduction <add>, %112, %cst_61 [1] : vector<16x32xf32> to vector<16xf32>
    %116 = vector.shape_cast %115 : vector<16xf32> to vector<16x1xf32>
    %cst_62 = arith.constant 3.200000e+01 : f32
    %117 = vector.broadcast %cst_62 : f32 to vector<16x1xf32>
    %118 = arith.divf %116, %117 : vector<16x1xf32>
    %119 = vector.broadcast %118 : vector<16x1xf32> to vector<16x32xf32>
    %120 = arith.subf %112, %119 : vector<16x32xf32>
    %121 = arith.mulf %120, %120 : vector<16x32xf32>
    %cst_63 = arith.constant dense<0.000000e+00> : vector<16xf32>
    %122 = vector.multi_reduction <add>, %121, %cst_63 [1] : vector<16x32xf32> to vector<16xf32>
    %123 = vector.shape_cast %122 : vector<16xf32> to vector<16x1xf32>
    %cst_64 = arith.constant 3.200000e+01 : f32
    %124 = vector.broadcast %cst_64 : f32 to vector<16x1xf32>
    %125 = arith.divf %123, %124 : vector<16x1xf32>
    %126 = vector.broadcast %118 : vector<16x1xf32> to vector<16x32xf32>
    %127 = arith.subf %112, %126 : vector<16x32xf32>
    %cst_65 = arith.constant 9.99999974E-6 : f32
    %128 = vector.broadcast %cst_65 : f32 to vector<16x1xf32>
    %129 = arith.addf %125, %128 : vector<16x1xf32>
    %130 = math.rsqrt %129 : vector<16x1xf32>
    %131 = vector.broadcast %130 : vector<16x1xf32> to vector<16x32xf32>
    %132 = arith.mulf %127, %131 : vector<16x32xf32>
    %133 = vector.broadcast %113 : vector<1x32xf32> to vector<16x32xf32>
    %134 = arith.mulf %132, %133 : vector<16x32xf32>
    %135 = vector.broadcast %114 : vector<1x32xf32> to vector<16x32xf32>
    %136 = arith.addf %134, %135 : vector<16x32xf32>
    %137 = arith.truncf %136 : vector<16x32xf32> to vector<16x32xbf16>
    %c1_66 = arith.constant 1 : index
    %c0_67 = arith.constant 0 : index
    %c0_68 = arith.constant 0 : index
    %138 = vector.load %arg9[%c1_66, %c0_67, %c0_68] : memref<2x32x64xbf16, #tpu.memory_space<vmem>>, vector<1x32x64xbf16>
    %139 = vector.shape_cast %138 : vector<1x32x64xbf16> to vector<32x64xbf16>
    %cst_69 = arith.constant dense<0.000000e+00> : vector<16x64xf32>
    %140 = tpu.matmul %137, %139, %cst_69 {dimension_numbers = #tpu.dot_dimension_numbers<[1], [0], [0], [1], [0, 0, 1, 1], [], []>} : vector<16x32xbf16>, vector<32x64xbf16>, vector<16x64xf32> -> vector<16x64xf32>
    %c1_70 = arith.constant 1 : index
    %c0_71 = arith.constant 0 : index
    %c0_72 = arith.constant 0 : index
    %141 = vector.load %arg10[%c1_70, %c0_71, %c0_72] : memref<2x1x64xf32, #tpu.memory_space<vmem>>, vector<1x1x64xf32>
    %142 = vector.shape_cast %141 : vector<1x1x64xf32> to vector<1x64xf32>
    %143 = vector.broadcast %142 : vector<1x64xf32> to vector<16x64xf32>
    %144 = arith.addf %140, %143 : vector<16x64xf32>
    %cst_73 = arith.constant 0.000000e+00 : f32
    %145 = vector.broadcast %cst_73 : f32 to vector<16x64xf32>
    %146 = arith.maximumf %144, %145 : vector<16x64xf32>
    %147 = arith.truncf %146 : vector<16x64xf32> to vector<16x64xbf16>
    %c1_74 = arith.constant 1 : index
    %c0_75 = arith.constant 0 : index
    %c0_76 = arith.constant 0 : index
    %148 = vector.load %arg11[%c1_74, %c0_75, %c0_76] : memref<2x64x32xbf16, #tpu.memory_space<vmem>>, vector<1x64x32xbf16>
    %149 = vector.shape_cast %148 : vector<1x64x32xbf16> to vector<64x32xbf16>
    %cst_77 = arith.constant dense<0.000000e+00> : vector<16x32xf32>
    %150 = tpu.matmul %147, %149, %cst_77 {dimension_numbers = #tpu.dot_dimension_numbers<[1], [0], [0], [1], [0, 0, 1, 1], [], []>} : vector<16x64xbf16>, vector<64x32xbf16>, vector<16x32xf32> -> vector<16x32xf32>
    %151 = vector.extract_strided_slice %98 {offsets = [6, 0], sizes = [1, 32], strides = [1, 1]} : vector<7x32xf32> to vector<1x32xf32>
    %152 = vector.broadcast %151 : vector<1x32xf32> to vector<16x32xf32>
    %153 = arith.addf %150, %152 : vector<16x32xf32>
    %154 = arith.addf %136, %153 : vector<16x32xf32>
    %155 = vector.extract_strided_slice %98 {offsets = [4, 0], sizes = [1, 32], strides = [1, 1]} : vector<7x32xf32> to vector<1x32xf32>
    %156 = vector.extract_strided_slice %98 {offsets = [5, 0], sizes = [1, 32], strides = [1, 1]} : vector<7x32xf32> to vector<1x32xf32>
    %cst_78 = arith.constant dense<0.000000e+00> : vector<16xf32>
    %157 = vector.multi_reduction <add>, %154, %cst_78 [1] : vector<16x32xf32> to vector<16xf32>
    %158 = vector.shape_cast %157 : vector<16xf32> to vector<16x1xf32>
    %cst_79 = arith.constant 3.200000e+01 : f32
    %159 = vector.broadcast %cst_79 : f32 to vector<16x1xf32>
    %160 = arith.divf %158, %159 : vector<16x1xf32>
    %161 = vector.broadcast %160 : vector<16x1xf32> to vector<16x32xf32>
    %162 = arith.subf %154, %161 : vector<16x32xf32>
    %163 = arith.mulf %162, %162 : vector<16x32xf32>
    %cst_80 = arith.constant dense<0.000000e+00> : vector<16xf32>
    %164 = vector.multi_reduction <add>, %163, %cst_80 [1] : vector<16x32xf32> to vector<16xf32>
    %165 = vector.shape_cast %164 : vector<16xf32> to vector<16x1xf32>
    %cst_81 = arith.constant 3.200000e+01 : f32
    %166 = vector.broadcast %cst_81 : f32 to vector<16x1xf32>
    %167 = arith.divf %165, %166 : vector<16x1xf32>
    %168 = vector.broadcast %160 : vector<16x1xf32> to vector<16x32xf32>
    %169 = arith.subf %154, %168 : vector<16x32xf32>
    %cst_82 = arith.constant 9.99999974E-6 : f32
    %170 = vector.broadcast %cst_82 : f32 to vector<16x1xf32>
    %171 = arith.addf %167, %170 : vector<16x1xf32>
    %172 = math.rsqrt %171 : vector<16x1xf32>
    %173 = vector.broadcast %172 : vector<16x1xf32> to vector<16x32xf32>
    %174 = arith.mulf %169, %173 : vector<16x32xf32>
    %175 = vector.broadcast %155 : vector<1x32xf32> to vector<16x32xf32>
    %176 = arith.mulf %174, %175 : vector<16x32xf32>
    %177 = vector.broadcast %156 : vector<1x32xf32> to vector<16x32xf32>
    %178 = arith.addf %176, %177 : vector<16x32xf32>
    %179 = arith.addf %178, %14 : vector<16x32xf32>
    %180 = arith.truncf %179 : vector<16x32xf32> to vector<16x32xbf16>
    %c0_83 = arith.constant 0 : index
    %c0_84 = arith.constant 0 : index
    %181 = vector.load %arg12[%c0_83, %c0_84] : memref<32x512xbf16, #tpu.memory_space<vmem>>, vector<32x512xbf16>
    %cst_85 = arith.constant dense<0.000000e+00> : vector<16x512xf32>
    %182 = tpu.matmul %180, %181, %cst_85 {dimension_numbers = #tpu.dot_dimension_numbers<[1], [0], [0], [1], [0, 0, 1, 1], [], []>} : vector<16x32xbf16>, vector<32x512xbf16>, vector<16x512xf32> -> vector<16x512xf32>
    %c0_86 = arith.constant 0 : index
    %c0_87 = arith.constant 0 : index
    %183 = vector.load %arg13[%c0_86, %c0_87] : memref<1x512xf32, #tpu.memory_space<vmem>>, vector<1x512xf32>
    %184 = vector.broadcast %183 : vector<1x512xf32> to vector<16x512xf32>
    %185 = arith.addf %182, %184 : vector<16x512xf32>
    %186 = arith.truncf %185 : vector<16x512xf32> to vector<16x512xbf16>
    %c0_88 = arith.constant 0 : index
    %c0_89 = arith.constant 0 : index
    %c0_90 = arith.constant 0 : index
    %187 = vector.load %arg14[%c0_88, %c0_89, %c0_90] : memref<1x16x512xbf16, #tpu.memory_space<vmem>>, vector<1x16x512xbf16>
    %188 = vector.shape_cast %187 : vector<1x16x512xbf16> to vector<16x512xbf16>
    %189 = vector.shape_cast %186 : vector<16x512xbf16> to vector<1x16x512xbf16>
    tpu.vector_store %arg14[%c0_88, %c0_89, %c0_90], %189 {strides = array<i32>} : memref<1x16x512xbf16, #tpu.memory_space<vmem>>, vector<1x16x512xbf16>,
    return
  }
  func.func @transform_0(%arg0: i32) -> (i32, i32, i32) {
    %c0_i32 = arith.constant 0 : i32
    %c0_i32_0 = arith.constant 0 : i32
    %c0_i32_1 = arith.constant 0 : i32
    return %arg0, %c0_i32, %c0_i32_0 : i32, i32, i32
  }
  func.func @transform_1(%arg0: i32) -> (i32, i32) {
    %c0_i32 = arith.constant 0 : i32
    %c0_i32_0 = arith.constant 0 : i32
    %c0_i32_1 = arith.constant 0 : i32
    return %c0_i32, %c0_i32_0 : i32, i32
  }
  func.func @transform_2(%arg0: i32) -> (i32, i32) {
    %c0_i32 = arith.constant 0 : i32
    %c0_i32_0 = arith.constant 0 : i32
    %c0_i32_1 = arith.constant 0 : i32
    return %c0_i32, %c0_i32_0 : i32, i32
  }
  func.func @transform_3(%arg0: i32) -> (i32, i32) {
    %c0_i32 = arith.constant 0 : i32
    %c0_i32_0 = arith.constant 0 : i32
    %c0_i32_1 = arith.constant 0 : i32
    return %c0_i32, %c0_i32_0 : i32, i32
  }
  func.func @transform_4(%arg0: i32) -> (i32, i32) {
    %c0_i32 = arith.constant 0 : i32
    %c0_i32_0 = arith.constant 0 : i32
    %c0_i32_1 = arith.constant 0 : i32
    return %c0_i32, %c0_i32_0 : i32, i32
  }
  func.func @transform_5(%arg0: i32) -> (i32, i32) {
    %c0_i32 = arith.constant 0 : i32
    %c0_i32_0 = arith.constant 0 : i32
    %c0_i32_1 = arith.constant 0 : i32
    return %c0_i32, %c0_i32_0 : i32, i32
  }
  func.func @transform_6(%arg0: i32) -> (i32, i32, i32, i32) {
    %c0_i32 = arith.constant 0 : i32
    %c0_i32_0 = arith.constant 0 : i32
    %c0_i32_1 = arith.constant 0 : i32
    %c0_i32_2 = arith.constant 0 : i32
    %c0_i32_3 = arith.constant 0 : i32
    return %c0_i32, %c0_i32_0, %c0_i32_1, %c0_i32_2 : i32, i32, i32, i32
  }
  func.func @transform_7(%arg0: i32) -> (i32, i32, i32) {
    %c0_i32 = arith.constant 0 : i32
    %c0_i32_0 = arith.constant 0 : i32
    %c0_i32_1 = arith.constant 0 : i32
    %c0_i32_2 = arith.constant 0 : i32
    return %c0_i32, %c0_i32_0, %c0_i32_1 : i32, i32, i32
  }
  func.func @transform_8(%arg0: i32) -> (i32, i32, i32) {
    %c0_i32 = arith.constant 0 : i32
    %c0_i32_0 = arith.constant 0 : i32
    %c0_i32_1 = arith.constant 0 : i32
    %c0_i32_2 = arith.constant 0 : i32
    return %c0_i32, %c0_i32_0, %c0_i32_1 : i32, i32, i32
  }
  func.func @transform_9(%arg0: i32) -> (i32, i32, i32) {
    %c0_i32 = arith.constant 0 : i32
    %c0_i32_0 = arith.constant 0 : i32
    %c0_i32_1 = arith.constant 0 : i32
    %c0_i32_2 = arith.constant 0 : i32
    return %c0_i32, %c0_i32_0, %c0_i32_1 : i32, i32, i32
  }
  func.func @transform_10(%arg0: i32) -> (i32, i32, i32) {
    %c0_i32 = arith.constant 0 : i32
    %c0_i32_0 = arith.constant 0 : i32
    %c0_i32_1 = arith.constant 0 : i32
    %c0_i32_2 = arith.constant 0 : i32
    return %c0_i32, %c0_i32_0, %c0_i32_1 : i32, i32, i32
  }
  func.func @transform_11(%arg0: i32) -> (i32, i32) {
    %c0_i32 = arith.constant 0 : i32
    %c0_i32_0 = arith.constant 0 : i32
    %c0_i32_1 = arith.constant 0 : i32
    return %c0_i32, %c0_i32_0 : i32, i32
  }
  func.func @transform_12(%arg0: i32) -> (i32, i32) {
    %c0_i32 = arith.constant 0 : i32
    %c0_i32_0 = arith.constant 0 : i32
    %c0_i32_1 = arith.constant 0 : i32
    return %c0_i32, %c0_i32_0 : i32, i32
  }
  func.func @transform_13(%arg0: i32) -> (i32, i32, i32) {
    %c0_i32 = arith.constant 0 : i32
    %c0_i32_0 = arith.constant 0 : i32
    %c0_i32_1 = arith.constant 0 : i32
    return %arg0, %c0_i32, %c0_i32_0 : i32, i32, i32
  }
}

module attributes {stable_mosaic.version = 11 : i64} {
  func.func @_conv_refine_kernel(%arg0: i32, %arg1: memref<1x32x512xbf16, #tpu.memory_space<vmem>>, %arg2: memref<1x448xf32, #tpu.memory_space<vmem>>, %arg3: memref<128x512xbf16, #tpu.memory_space<vmem>>, %arg4: memref<128x1xf32, #tpu.memory_space<vmem>>, %arg5: memref<16x8x128xbf16, #tpu.memory_space<vmem>>, %arg6: memref<8x1xf32, #tpu.memory_space<vmem>>, %arg7: memref<1x8x384xf32, #tpu.memory_space<vmem>>) attributes {dimension_semantics = [#tpu.dimension_semantics<parallel>], iteration_bounds = array<i64: 2>, scalar_prefetch = 0 : i64, scratch_operands = 0 : i64, tpu.core_type = #tpu.core_type<tc>, window_params = [{transform_indices = @transform_0, window_bounds = array<i64: 1, 32, 512>}, {pipeline_mode = #tpu.pipeline_mode<synchronous>, transform_indices = @transform_1, window_bounds = array<i64: 1, 448>}, {pipeline_mode = #tpu.pipeline_mode<synchronous>, transform_indices = @transform_2, window_bounds = array<i64: 128, 512>}, {pipeline_mode = #tpu.pipeline_mode<synchronous>, transform_indices = @transform_3, window_bounds = array<i64: 128, 1>}, {pipeline_mode = #tpu.pipeline_mode<synchronous>, transform_indices = @transform_4, window_bounds = array<i64: 16, 8, 128>}, {pipeline_mode = #tpu.pipeline_mode<synchronous>, transform_indices = @transform_5, window_bounds = array<i64: 8, 1>}, {transform_indices = @transform_6, window_bounds = array<i64: 1, 8, 384>}]} {
    %c0 = arith.constant 0 : index
    %c0_0 = arith.constant 0 : index
    %c0_1 = arith.constant 0 : index
    %0 = vector.load %arg1[%c0, %c0_0, %c0_1] : memref<1x32x512xbf16, #tpu.memory_space<vmem>>, vector<1x32x512xbf16>
    %1 = vector.shape_cast %0 : vector<1x32x512xbf16> to vector<32x512xbf16>
    %2 = vector.extract_strided_slice %1 {offsets = [0, 4], sizes = [32, 448], strides = [1, 1]} : vector<32x512xbf16> to vector<32x448xbf16>
    %3 = vector.extract_strided_slice %1 {offsets = [0, 5], sizes = [32, 448], strides = [1, 1]} : vector<32x512xbf16> to vector<32x448xbf16>
    %4 = vector.extract_strided_slice %1 {offsets = [0, 6], sizes = [32, 448], strides = [1, 1]} : vector<32x512xbf16> to vector<32x448xbf16>
    %5 = vector.extract_strided_slice %1 {offsets = [0, 7], sizes = [32, 448], strides = [1, 1]} : vector<32x512xbf16> to vector<32x448xbf16>
    %6 = vector.extract_strided_slice %1 {offsets = [0, 23], sizes = [32, 448], strides = [1, 1]} : vector<32x512xbf16> to vector<32x448xbf16>
    %7 = vector.extract_strided_slice %1 {offsets = [0, 24], sizes = [32, 448], strides = [1, 1]} : vector<32x512xbf16> to vector<32x448xbf16>
    %8 = vector.extract_strided_slice %1 {offsets = [0, 25], sizes = [32, 448], strides = [1, 1]} : vector<32x512xbf16> to vector<32x448xbf16>
    %9 = vector.extract_strided_slice %1 {offsets = [0, 26], sizes = [32, 448], strides = [1, 1]} : vector<32x512xbf16> to vector<32x448xbf16>
    %10 = vector.extract_strided_slice %1 {offsets = [0, 42], sizes = [32, 448], strides = [1, 1]} : vector<32x512xbf16> to vector<32x448xbf16>
    %11 = vector.extract_strided_slice %1 {offsets = [0, 43], sizes = [32, 448], strides = [1, 1]} : vector<32x512xbf16> to vector<32x448xbf16>
    %12 = vector.extract_strided_slice %1 {offsets = [0, 44], sizes = [32, 448], strides = [1, 1]} : vector<32x512xbf16> to vector<32x448xbf16>
    %13 = vector.extract_strided_slice %1 {offsets = [0, 45], sizes = [32, 448], strides = [1, 1]} : vector<32x512xbf16> to vector<32x448xbf16>
    %14 = vector.extract_strided_slice %1 {offsets = [0, 61], sizes = [32, 448], strides = [1, 1]} : vector<32x512xbf16> to vector<32x448xbf16>
    %15 = vector.extract_strided_slice %1 {offsets = [0, 62], sizes = [32, 448], strides = [1, 1]} : vector<32x512xbf16> to vector<32x448xbf16>
    %16 = vector.extract_strided_slice %1 {offsets = [0, 63], sizes = [32, 448], strides = [1, 1]} : vector<32x512xbf16> to vector<32x448xbf16>
    %17 = vector.extract_strided_slice %1 {offsets = [0, 64], sizes = [32, 448], strides = [1, 1]} : vector<32x512xbf16> to vector<32x448xbf16>
    %18 = tpu.concatenate %2, %3, %4, %5, %6, %7, %8, %9, %10, %11, %12, %13, %14, %15, %16, %17 in 0 : vector<32x448xbf16>, vector<32x448xbf16>, vector<32x448xbf16>, vector<32x448xbf16>, vector<32x448xbf16>, vector<32x448xbf16>, vector<32x448xbf16>, vector<32x448xbf16>, vector<32x448xbf16>, vector<32x448xbf16>, vector<32x448xbf16>, vector<32x448xbf16>, vector<32x448xbf16>, vector<32x448xbf16>, vector<32x448xbf16>, vector<32x448xbf16> -> vector<512x448xbf16>
    %c0_2 = arith.constant 0 : index
    %c0_3 = arith.constant 0 : index
    %19 = vector.load %arg3[%c0_2, %c0_3] : memref<128x512xbf16, #tpu.memory_space<vmem>>, vector<128x512xbf16>
    %cst = arith.constant dense<0.000000e+00> : vector<128x448xf32>
    %20 = tpu.matmul %19, %18, %cst {dimension_numbers = #tpu.dot_dimension_numbers<[1], [0], [0], [1], [0, 0, 1, 1], [], []>} : vector<128x512xbf16>, vector<512x448xbf16>, vector<128x448xf32> -> vector<128x448xf32>
    %c0_4 = arith.constant 0 : index
    %c0_5 = arith.constant 0 : index
    %21 = vector.load %arg4[%c0_4, %c0_5] : memref<128x1xf32, #tpu.memory_space<vmem>>, vector<128x1xf32>
    %22 = vector.broadcast %21 : vector<128x1xf32> to vector<128x448xf32>
    %23 = arith.addf %20, %22 : vector<128x448xf32>
    %cst_6 = arith.constant 0.000000e+00 : f32
    %24 = vector.broadcast %cst_6 : f32 to vector<128x448xf32>
    %25 = arith.maximumf %23, %24 : vector<128x448xf32>
    %c0_7 = arith.constant 0 : index
    %c0_8 = arith.constant 0 : index
    %26 = vector.load %arg2[%c0_7, %c0_8] : memref<1x448xf32, #tpu.memory_space<vmem>>, vector<1x448xf32>
    %27 = vector.broadcast %26 : vector<1x448xf32> to vector<128x448xf32>
    %28 = arith.mulf %25, %27 : vector<128x448xf32>
    %29 = arith.truncf %28 : vector<128x448xf32> to vector<128x448xbf16>
    %cst_9 = arith.constant 0.000000e+00 : f32
    %30 = vector.broadcast %cst_9 : f32 to vector<8x384xf32>
    %c0_10 = arith.constant 0 : index
    %c0_11 = arith.constant 0 : index
    %c0_12 = arith.constant 0 : index
    %31 = vector.load %arg5[%c0_10, %c0_11, %c0_12] : memref<16x8x128xbf16, #tpu.memory_space<vmem>>, vector<1x8x128xbf16>
    %32 = vector.shape_cast %31 : vector<1x8x128xbf16> to vector<8x128xbf16>
    %33 = vector.extract_strided_slice %29 {offsets = [0, 0], sizes = [128, 384], strides = [1, 1]} : vector<128x448xbf16> to vector<128x384xbf16>
    %cst_13 = arith.constant dense<0.000000e+00> : vector<8x384xf32>
    %34 = tpu.matmul %32, %33, %cst_13 {dimension_numbers = #tpu.dot_dimension_numbers<[1], [0], [0], [1], [0, 0, 1, 1], [], []>} : vector<8x128xbf16>, vector<128x384xbf16>, vector<8x384xf32> -> vector<8x384xf32>
    %35 = arith.addf %30, %34 : vector<8x384xf32>
    %c1 = arith.constant 1 : index
    %c0_14 = arith.constant 0 : index
    %c0_15 = arith.constant 0 : index
    %36 = vector.load %arg5[%c1, %c0_14, %c0_15] : memref<16x8x128xbf16, #tpu.memory_space<vmem>>, vector<1x8x128xbf16>
    %37 = vector.shape_cast %36 : vector<1x8x128xbf16> to vector<8x128xbf16>
    %38 = vector.extract_strided_slice %29 {offsets = [0, 1], sizes = [128, 384], strides = [1, 1]} : vector<128x448xbf16> to vector<128x384xbf16>
    %cst_16 = arith.constant dense<0.000000e+00> : vector<8x384xf32>
    %39 = tpu.matmul %37, %38, %cst_16 {dimension_numbers = #tpu.dot_dimension_numbers<[1], [0], [0], [1], [0, 0, 1, 1], [], []>} : vector<8x128xbf16>, vector<128x384xbf16>, vector<8x384xf32> -> vector<8x384xf32>
    %40 = arith.addf %35, %39 : vector<8x384xf32>
    %c2 = arith.constant 2 : index
    %c0_17 = arith.constant 0 : index
    %c0_18 = arith.constant 0 : index
    %41 = vector.load %arg5[%c2, %c0_17, %c0_18] : memref<16x8x128xbf16, #tpu.memory_space<vmem>>, vector<1x8x128xbf16>
    %42 = vector.shape_cast %41 : vector<1x8x128xbf16> to vector<8x128xbf16>
    %43 = vector.extract_strided_slice %29 {offsets = [0, 2], sizes = [128, 384], strides = [1, 1]} : vector<128x448xbf16> to vector<128x384xbf16>
    %cst_19 = arith.constant dense<0.000000e+00> : vector<8x384xf32>
    %44 = tpu.matmul %42, %43, %cst_19 {dimension_numbers = #tpu.dot_dimension_numbers<[1], [0], [0], [1], [0, 0, 1, 1], [], []>} : vector<8x128xbf16>, vector<128x384xbf16>, vector<8x384xf32> -> vector<8x384xf32>
    %45 = arith.addf %40, %44 : vector<8x384xf32>
    %c3 = arith.constant 3 : index
    %c0_20 = arith.constant 0 : index
    %c0_21 = arith.constant 0 : index
    %46 = vector.load %arg5[%c3, %c0_20, %c0_21] : memref<16x8x128xbf16, #tpu.memory_space<vmem>>, vector<1x8x128xbf16>
    %47 = vector.shape_cast %46 : vector<1x8x128xbf16> to vector<8x128xbf16>
    %48 = vector.extract_strided_slice %29 {offsets = [0, 3], sizes = [128, 384], strides = [1, 1]} : vector<128x448xbf16> to vector<128x384xbf16>
    %cst_22 = arith.constant dense<0.000000e+00> : vector<8x384xf32>
    %49 = tpu.matmul %47, %48, %cst_22 {dimension_numbers = #tpu.dot_dimension_numbers<[1], [0], [0], [1], [0, 0, 1, 1], [], []>} : vector<8x128xbf16>, vector<128x384xbf16>, vector<8x384xf32> -> vector<8x384xf32>
    %50 = arith.addf %45, %49 : vector<8x384xf32>
    %c4 = arith.constant 4 : index
    %c0_23 = arith.constant 0 : index
    %c0_24 = arith.constant 0 : index
    %51 = vector.load %arg5[%c4, %c0_23, %c0_24] : memref<16x8x128xbf16, #tpu.memory_space<vmem>>, vector<1x8x128xbf16>
    %52 = vector.shape_cast %51 : vector<1x8x128xbf16> to vector<8x128xbf16>
    %53 = vector.extract_strided_slice %29 {offsets = [0, 19], sizes = [128, 384], strides = [1, 1]} : vector<128x448xbf16> to vector<128x384xbf16>
    %cst_25 = arith.constant dense<0.000000e+00> : vector<8x384xf32>
    %54 = tpu.matmul %52, %53, %cst_25 {dimension_numbers = #tpu.dot_dimension_numbers<[1], [0], [0], [1], [0, 0, 1, 1], [], []>} : vector<8x128xbf16>, vector<128x384xbf16>, vector<8x384xf32> -> vector<8x384xf32>
    %55 = arith.addf %50, %54 : vector<8x384xf32>
    %c5 = arith.constant 5 : index
    %c0_26 = arith.constant 0 : index
    %c0_27 = arith.constant 0 : index
    %56 = vector.load %arg5[%c5, %c0_26, %c0_27] : memref<16x8x128xbf16, #tpu.memory_space<vmem>>, vector<1x8x128xbf16>
    %57 = vector.shape_cast %56 : vector<1x8x128xbf16> to vector<8x128xbf16>
    %58 = vector.extract_strided_slice %29 {offsets = [0, 20], sizes = [128, 384], strides = [1, 1]} : vector<128x448xbf16> to vector<128x384xbf16>
    %cst_28 = arith.constant dense<0.000000e+00> : vector<8x384xf32>
    %59 = tpu.matmul %57, %58, %cst_28 {dimension_numbers = #tpu.dot_dimension_numbers<[1], [0], [0], [1], [0, 0, 1, 1], [], []>} : vector<8x128xbf16>, vector<128x384xbf16>, vector<8x384xf32> -> vector<8x384xf32>
    %60 = arith.addf %55, %59 : vector<8x384xf32>
    %c6 = arith.constant 6 : index
    %c0_29 = arith.constant 0 : index
    %c0_30 = arith.constant 0 : index
    %61 = vector.load %arg5[%c6, %c0_29, %c0_30] : memref<16x8x128xbf16, #tpu.memory_space<vmem>>, vector<1x8x128xbf16>
    %62 = vector.shape_cast %61 : vector<1x8x128xbf16> to vector<8x128xbf16>
    %63 = vector.extract_strided_slice %29 {offsets = [0, 21], sizes = [128, 384], strides = [1, 1]} : vector<128x448xbf16> to vector<128x384xbf16>
    %cst_31 = arith.constant dense<0.000000e+00> : vector<8x384xf32>
    %64 = tpu.matmul %62, %63, %cst_31 {dimension_numbers = #tpu.dot_dimension_numbers<[1], [0], [0], [1], [0, 0, 1, 1], [], []>} : vector<8x128xbf16>, vector<128x384xbf16>, vector<8x384xf32> -> vector<8x384xf32>
    %65 = arith.addf %60, %64 : vector<8x384xf32>
    %c7 = arith.constant 7 : index
    %c0_32 = arith.constant 0 : index
    %c0_33 = arith.constant 0 : index
    %66 = vector.load %arg5[%c7, %c0_32, %c0_33] : memref<16x8x128xbf16, #tpu.memory_space<vmem>>, vector<1x8x128xbf16>
    %67 = vector.shape_cast %66 : vector<1x8x128xbf16> to vector<8x128xbf16>
    %68 = vector.extract_strided_slice %29 {offsets = [0, 22], sizes = [128, 384], strides = [1, 1]} : vector<128x448xbf16> to vector<128x384xbf16>
    %cst_34 = arith.constant dense<0.000000e+00> : vector<8x384xf32>
    %69 = tpu.matmul %67, %68, %cst_34 {dimension_numbers = #tpu.dot_dimension_numbers<[1], [0], [0], [1], [0, 0, 1, 1], [], []>} : vector<8x128xbf16>, vector<128x384xbf16>, vector<8x384xf32> -> vector<8x384xf32>
    %70 = arith.addf %65, %69 : vector<8x384xf32>
    %c8 = arith.constant 8 : index
    %c0_35 = arith.constant 0 : index
    %c0_36 = arith.constant 0 : index
    %71 = vector.load %arg5[%c8, %c0_35, %c0_36] : memref<16x8x128xbf16, #tpu.memory_space<vmem>>, vector<1x8x128xbf16>
    %72 = vector.shape_cast %71 : vector<1x8x128xbf16> to vector<8x128xbf16>
    %73 = vector.extract_strided_slice %29 {offsets = [0, 38], sizes = [128, 384], strides = [1, 1]} : vector<128x448xbf16> to vector<128x384xbf16>
    %cst_37 = arith.constant dense<0.000000e+00> : vector<8x384xf32>
    %74 = tpu.matmul %72, %73, %cst_37 {dimension_numbers = #tpu.dot_dimension_numbers<[1], [0], [0], [1], [0, 0, 1, 1], [], []>} : vector<8x128xbf16>, vector<128x384xbf16>, vector<8x384xf32> -> vector<8x384xf32>
    %75 = arith.addf %70, %74 : vector<8x384xf32>
    %c9 = arith.constant 9 : index
    %c0_38 = arith.constant 0 : index
    %c0_39 = arith.constant 0 : index
    %76 = vector.load %arg5[%c9, %c0_38, %c0_39] : memref<16x8x128xbf16, #tpu.memory_space<vmem>>, vector<1x8x128xbf16>
    %77 = vector.shape_cast %76 : vector<1x8x128xbf16> to vector<8x128xbf16>
    %78 = vector.extract_strided_slice %29 {offsets = [0, 39], sizes = [128, 384], strides = [1, 1]} : vector<128x448xbf16> to vector<128x384xbf16>
    %cst_40 = arith.constant dense<0.000000e+00> : vector<8x384xf32>
    %79 = tpu.matmul %77, %78, %cst_40 {dimension_numbers = #tpu.dot_dimension_numbers<[1], [0], [0], [1], [0, 0, 1, 1], [], []>} : vector<8x128xbf16>, vector<128x384xbf16>, vector<8x384xf32> -> vector<8x384xf32>
    %80 = arith.addf %75, %79 : vector<8x384xf32>
    %c10 = arith.constant 10 : index
    %c0_41 = arith.constant 0 : index
    %c0_42 = arith.constant 0 : index
    %81 = vector.load %arg5[%c10, %c0_41, %c0_42] : memref<16x8x128xbf16, #tpu.memory_space<vmem>>, vector<1x8x128xbf16>
    %82 = vector.shape_cast %81 : vector<1x8x128xbf16> to vector<8x128xbf16>
    %83 = vector.extract_strided_slice %29 {offsets = [0, 40], sizes = [128, 384], strides = [1, 1]} : vector<128x448xbf16> to vector<128x384xbf16>
    %cst_43 = arith.constant dense<0.000000e+00> : vector<8x384xf32>
    %84 = tpu.matmul %82, %83, %cst_43 {dimension_numbers = #tpu.dot_dimension_numbers<[1], [0], [0], [1], [0, 0, 1, 1], [], []>} : vector<8x128xbf16>, vector<128x384xbf16>, vector<8x384xf32> -> vector<8x384xf32>
    %85 = arith.addf %80, %84 : vector<8x384xf32>
    %c11 = arith.constant 11 : index
    %c0_44 = arith.constant 0 : index
    %c0_45 = arith.constant 0 : index
    %86 = vector.load %arg5[%c11, %c0_44, %c0_45] : memref<16x8x128xbf16, #tpu.memory_space<vmem>>, vector<1x8x128xbf16>
    %87 = vector.shape_cast %86 : vector<1x8x128xbf16> to vector<8x128xbf16>
    %88 = vector.extract_strided_slice %29 {offsets = [0, 41], sizes = [128, 384], strides = [1, 1]} : vector<128x448xbf16> to vector<128x384xbf16>
    %cst_46 = arith.constant dense<0.000000e+00> : vector<8x384xf32>
    %89 = tpu.matmul %87, %88, %cst_46 {dimension_numbers = #tpu.dot_dimension_numbers<[1], [0], [0], [1], [0, 0, 1, 1], [], []>} : vector<8x128xbf16>, vector<128x384xbf16>, vector<8x384xf32> -> vector<8x384xf32>
    %90 = arith.addf %85, %89 : vector<8x384xf32>
    %c12 = arith.constant 12 : index
    %c0_47 = arith.constant 0 : index
    %c0_48 = arith.constant 0 : index
    %91 = vector.load %arg5[%c12, %c0_47, %c0_48] : memref<16x8x128xbf16, #tpu.memory_space<vmem>>, vector<1x8x128xbf16>
    %92 = vector.shape_cast %91 : vector<1x8x128xbf16> to vector<8x128xbf16>
    %93 = vector.extract_strided_slice %29 {offsets = [0, 57], sizes = [128, 384], strides = [1, 1]} : vector<128x448xbf16> to vector<128x384xbf16>
    %cst_49 = arith.constant dense<0.000000e+00> : vector<8x384xf32>
    %94 = tpu.matmul %92, %93, %cst_49 {dimension_numbers = #tpu.dot_dimension_numbers<[1], [0], [0], [1], [0, 0, 1, 1], [], []>} : vector<8x128xbf16>, vector<128x384xbf16>, vector<8x384xf32> -> vector<8x384xf32>
    %95 = arith.addf %90, %94 : vector<8x384xf32>
    %c13 = arith.constant 13 : index
    %c0_50 = arith.constant 0 : index
    %c0_51 = arith.constant 0 : index
    %96 = vector.load %arg5[%c13, %c0_50, %c0_51] : memref<16x8x128xbf16, #tpu.memory_space<vmem>>, vector<1x8x128xbf16>
    %97 = vector.shape_cast %96 : vector<1x8x128xbf16> to vector<8x128xbf16>
    %98 = vector.extract_strided_slice %29 {offsets = [0, 58], sizes = [128, 384], strides = [1, 1]} : vector<128x448xbf16> to vector<128x384xbf16>
    %cst_52 = arith.constant dense<0.000000e+00> : vector<8x384xf32>
    %99 = tpu.matmul %97, %98, %cst_52 {dimension_numbers = #tpu.dot_dimension_numbers<[1], [0], [0], [1], [0, 0, 1, 1], [], []>} : vector<8x128xbf16>, vector<128x384xbf16>, vector<8x384xf32> -> vector<8x384xf32>
    %100 = arith.addf %95, %99 : vector<8x384xf32>
    %c14 = arith.constant 14 : index
    %c0_53 = arith.constant 0 : index
    %c0_54 = arith.constant 0 : index
    %101 = vector.load %arg5[%c14, %c0_53, %c0_54] : memref<16x8x128xbf16, #tpu.memory_space<vmem>>, vector<1x8x128xbf16>
    %102 = vector.shape_cast %101 : vector<1x8x128xbf16> to vector<8x128xbf16>
    %103 = vector.extract_strided_slice %29 {offsets = [0, 59], sizes = [128, 384], strides = [1, 1]} : vector<128x448xbf16> to vector<128x384xbf16>
    %cst_55 = arith.constant dense<0.000000e+00> : vector<8x384xf32>
    %104 = tpu.matmul %102, %103, %cst_55 {dimension_numbers = #tpu.dot_dimension_numbers<[1], [0], [0], [1], [0, 0, 1, 1], [], []>} : vector<8x128xbf16>, vector<128x384xbf16>, vector<8x384xf32> -> vector<8x384xf32>
    %105 = arith.addf %100, %104 : vector<8x384xf32>
    %c15 = arith.constant 15 : index
    %c0_56 = arith.constant 0 : index
    %c0_57 = arith.constant 0 : index
    %106 = vector.load %arg5[%c15, %c0_56, %c0_57] : memref<16x8x128xbf16, #tpu.memory_space<vmem>>, vector<1x8x128xbf16>
    %107 = vector.shape_cast %106 : vector<1x8x128xbf16> to vector<8x128xbf16>
    %108 = vector.extract_strided_slice %29 {offsets = [0, 60], sizes = [128, 384], strides = [1, 1]} : vector<128x448xbf16> to vector<128x384xbf16>
    %cst_58 = arith.constant dense<0.000000e+00> : vector<8x384xf32>
    %109 = tpu.matmul %107, %108, %cst_58 {dimension_numbers = #tpu.dot_dimension_numbers<[1], [0], [0], [1], [0, 0, 1, 1], [], []>} : vector<8x128xbf16>, vector<128x384xbf16>, vector<8x384xf32> -> vector<8x384xf32>
    %110 = arith.addf %105, %109 : vector<8x384xf32>
    %c0_59 = arith.constant 0 : index
    %c0_60 = arith.constant 0 : index
    %111 = vector.load %arg6[%c0_59, %c0_60] : memref<8x1xf32, #tpu.memory_space<vmem>>, vector<8x1xf32>
    %112 = vector.broadcast %111 : vector<8x1xf32> to vector<8x384xf32>
    %113 = arith.addf %110, %112 : vector<8x384xf32>
    %c0_61 = arith.constant 0 : index
    %c0_62 = arith.constant 0 : index
    %c0_63 = arith.constant 0 : index
    %114 = vector.load %arg7[%c0_61, %c0_62, %c0_63] : memref<1x8x384xf32, #tpu.memory_space<vmem>>, vector<1x8x384xf32>
    %115 = vector.shape_cast %114 : vector<1x8x384xf32> to vector<8x384xf32>
    %116 = vector.shape_cast %113 : vector<8x384xf32> to vector<1x8x384xf32>
    tpu.vector_store %arg7[%c0_61, %c0_62, %c0_63], %116 {strides = array<i32>} : memref<1x8x384xf32, #tpu.memory_space<vmem>>, vector<1x8x384xf32>,
    return
  }
  func.func @transform_0(%arg0: i32) -> (i32, i32, i32) {
    %c0_i32 = arith.constant 0 : i32
    %c0_i32_0 = arith.constant 0 : i32
    %c0_i32_1 = arith.constant 0 : i32
    return %arg0, %c0_i32, %c0_i32_0 : i32, i32, i32
  }
  func.func @transform_1(%arg0: i32) -> (i32, i32) {
    %c0_i32 = arith.constant 0 : i32
    %c0_i32_0 = arith.constant 0 : i32
    %c0_i32_1 = arith.constant 0 : i32
    return %c0_i32, %c0_i32_0 : i32, i32
  }
  func.func @transform_2(%arg0: i32) -> (i32, i32) {
    %c0_i32 = arith.constant 0 : i32
    %c0_i32_0 = arith.constant 0 : i32
    %c0_i32_1 = arith.constant 0 : i32
    return %c0_i32, %c0_i32_0 : i32, i32
  }
  func.func @transform_3(%arg0: i32) -> (i32, i32) {
    %c0_i32 = arith.constant 0 : i32
    %c0_i32_0 = arith.constant 0 : i32
    %c0_i32_1 = arith.constant 0 : i32
    return %c0_i32, %c0_i32_0 : i32, i32
  }
  func.func @transform_4(%arg0: i32) -> (i32, i32, i32) {
    %c0_i32 = arith.constant 0 : i32
    %c0_i32_0 = arith.constant 0 : i32
    %c0_i32_1 = arith.constant 0 : i32
    %c0_i32_2 = arith.constant 0 : i32
    return %c0_i32, %c0_i32_0, %c0_i32_1 : i32, i32, i32
  }
  func.func @transform_5(%arg0: i32) -> (i32, i32) {
    %c0_i32 = arith.constant 0 : i32
    %c0_i32_0 = arith.constant 0 : i32
    %c0_i32_1 = arith.constant 0 : i32
    return %c0_i32, %c0_i32_0 : i32, i32
  }
  func.func @transform_6(%arg0: i32) -> (i32, i32, i32) {
    %c0_i32 = arith.constant 0 : i32
    %c0_i32_0 = arith.constant 0 : i32
    %c0_i32_1 = arith.constant 0 : i32
    return %arg0, %c0_i32, %c0_i32_0 : i32, i32, i32
  }
}

</mosaic_0001>

<llo_original>
// kernel: host_img_transformer_decoder_hybrid.2
$region0: #{host_img_transformer_decoder_hybrid.2}
  #allocation0 [shape = 'u32[]', space=smem, size = 0x4, offset = 0x4, fixed_abs, tag = 'smem constant byte address 0x4 - core index']
  #allocation1 [shape = 'u32[72,128]{1,0:T(1,128)}', space=vmem, size = 0x9000, scoped, tag = 'internal scratch']
  %s0 = inlined_call_operand.vmem [shape: f32[2,1,8], index: 0, kind: input, shape index: {}]
  %s1 = inlined_call_operand.vmem [shape: f32[16,32], index: 1, kind: input, shape index: {}]
  %s2 = inlined_call_operand.vmem [shape: bf16[8,32], index: 2, kind: input, shape index: {}]
  %s3 = inlined_call_operand.vmem [shape: f32[1,32], index: 3, kind: input, shape index: {}]
  %s4 = inlined_call_operand.vmem [shape: bf16[32,32], index: 4, kind: input, shape index: {}]
  %s5 = inlined_call_operand.vmem [shape: f32[1,32], index: 5, kind: input, shape index: {}]
  %s6 = inlined_call_operand.vmem [shape: bf16[2,2,32,32], index: 6, kind: input, shape index: {}]
  %s7 = inlined_call_operand.vmem [shape: f32[2,7,32], index: 7, kind: input, shape index: {}]
  %s8 = inlined_call_operand.vmem [shape: bf16[2,32,64], index: 8, kind: input, shape index: {}]
  %s9 = inlined_call_operand.vmem [shape: f32[2,1,64], index: 9, kind: input, shape index: {}]
  %s10 = inlined_call_operand.vmem [shape: bf16[2,64,32], index: 10, kind: input, shape index: {}]
  %s11 = inlined_call_operand.vmem [shape: bf16[32,512], index: 11, kind: input, shape index: {}]
  %s12 = inlined_call_operand.vmem [shape: f32[1,512], index: 12, kind: input, shape index: {}]
  %s13 = inlined_call_operand.vmem [shape: bf16[2,16,512], index: 13, kind: output, shape index: {}]
  %s14 = sld [smem:[#allocation0]]
  $region85: #{host_img_transformer_decoder_hybrid.2} parent=0
    _
  %s16 = ssub.s32 1, %s14
  %s17 = scalar_select 0, %s16, %s14
  loop: start=0, step=1, limit=4
  $region2: #{host_img_transformer_decoder_hybrid.2} parent=0 // loop_pre_header
    _
  $region3: #{host_img_transformer_decoder_hybrid.2} parent=0 // loop_header
    %s19 = sphi 0, %s23
    %p20 = scmp.ge.s32.totalorder %s19, 4
    %s29 = sphi 0, %s31
    %s32 = sphi 0, %s29
    %s33 = sphi 0, %s32
    %s49 = sphi 0, %s33
    %s53 = sphi 0, %s53
    %s55 = sphi 0, %s53
    %s56 = sphi 0, %s55
    %s70 = sphi 0, %s56
    %s74 = sphi 0, %s74
    %s76 = sphi 0, %s74
    %s77 = sphi 0, %s76
    %s91 = sphi 0, %s77
    %s95 = sphi 0, %s95
    %s97 = sphi 0, %s95
    %s98 = sphi 0, %s97
    %s112 = sphi 0, %s98
    %s116 = sphi 0, %s116
    %s118 = sphi 0, %s116
    %s119 = sphi 0, %s118
    %s133 = sphi 0, %s119
    %s137 = sphi 0, %s137
    %s139 = sphi 0, %s137
    %s140 = sphi 0, %s139
    %s154 = sphi 0, %s140
    %s158 = sphi 0, %s158
    %s160 = sphi 0, %s158
    %s161 = sphi 0, %s160
    %s175 = sphi 0, %s161
    %s179 = sphi 0, %s179
    %s181 = sphi 0, %s179
    %s182 = sphi 0, %s181
    %s196 = sphi 0, %s182
    %s200 = sphi 0, %s200
    %s202 = sphi 0, %s200
    %s203 = sphi 0, %s202
    %s217 = sphi 0, %s203
    %s221 = sphi 0, %s221
    %s223 = sphi 0, %s221
    %s224 = sphi 0, %s223
    %s238 = sphi 0, %s224
    %s242 = sphi 0, %s242
    %s244 = sphi 0, %s242
    %s245 = sphi 0, %s244
    %s259 = sphi 0, %s245
    %s263 = sphi 0, %s263
    %s265 = sphi 0, %s263
    %s266 = sphi 0, %s265
    %s280 = sphi 0, %s266
    %s284 = sphi 0, %s284
    %s286 = sphi 0, %s284
    %s287 = sphi 0, %s286
    %s301 = sphi 0, %s287
    %s307 = sphi 0, %s309
    %s310 = sphi 0, %s307
    %s311 = sphi 0, %s310
    %s327 = sphi 0, %s311
  $region4: #{host_img_transformer_decoder_hybrid.2} parent=0 // loop_header_branch
    %22 = sbr.rel (%p20) target = $region8
  $region5: #{host_img_transformer_decoder_hybrid.2} parent=0 // loop_body
    %s24 = ssub.s32 %s19, 1
    %s25 = ssub.s32 %s19, 2
    %s26 = sadd.s32 %s19, 1
    %s27 = ssub.s32 %s19, %s26
    %p28 = scmp.eq.s32.totalorder %s27, 0
    %s30 = sadd.s32 %s29, 1
    %s31 = scalar_select %p28, %s29, %s30
    %p34 = pneg %p28
    %p35 = scmp.eq.s32.totalorder %s19, 1
    %p36 = por %p34, %p35
    %p37 = scmp.ne.s32.totalorder %s29, %s32
    %p38 = scmp.eq.s32.totalorder %s19, 0
    %p39 = por %p37, %p38
    %p40 = scmp.ne.s32.totalorder %s29, %s32
    %p41 = scmp.eq.s32.totalorder %s24, 1
    %p42 = por %p40, %p41
    %p43 = scmp.ne.s32.totalorder %s32, %s33
    %p44 = scmp.eq.s32.totalorder %s24, 0
    %p45 = por %p43, %p44
    %p46 = scmp.ne.s32.totalorder %s32, %s33
    %p47 = scmp.eq.s32.totalorder %s25, 1
    %p48 = por %p46, %p47
    %p50 = scmp.ne.s32.totalorder %s33, %s49
    %p51 = scmp.eq.s32.totalorder %s25, 0
    %p52 = por %p50, %p51
    %s54 = sadd.s32 %s53, 1
    %p57 = scmp.eq.s32.totalorder %s19, 1
    %p58 = scmp.ne.s32.totalorder %s53, %s55
    %p59 = scmp.eq.s32.totalorder %s19, 0
    %p60 = por %p58, %p59
    %p61 = scmp.ne.s32.totalorder %s53, %s55
    %p62 = scmp.eq.s32.totalorder %s24, 1
    %p63 = por %p61, %p62
    %p64 = scmp.ne.s32.totalorder %s55, %s56
    %p65 = scmp.eq.s32.totalorder %s24, 0
    %p66 = por %p64, %p65
    %p67 = scmp.ne.s32.totalorder %s55, %s56
    %p68 = scmp.eq.s32.totalorder %s25, 1
    %p69 = por %p67, %p68
    %p71 = scmp.ne.s32.totalorder %s56, %s70
    %p72 = scmp.eq.s32.totalorder %s25, 0
    %p73 = por %p71, %p72
    %s75 = sadd.s32 %s74, 1
    %p78 = scmp.eq.s32.totalorder %s19, 1
    %p79 = scmp.ne.s32.totalorder %s74, %s76
    %p80 = scmp.eq.s32.totalorder %s19, 0
    %p81 = por %p79, %p80
    %p82 = scmp.ne.s32.totalorder %s74, %s76
    %p83 = scmp.eq.s32.totalorder %s24, 1
    %p84 = por %p82, %p83
    %p85 = scmp.ne.s32.totalorder %s76, %s77
    %p86 = scmp.eq.s32.totalorder %s24, 0
    %p87 = por %p85, %p86
    %p88 = scmp.ne.s32.totalorder %s76, %s77
    %p89 = scmp.eq.s32.totalorder %s25, 1
    %p90 = por %p88, %p89
    %p92 = scmp.ne.s32.totalorder %s77, %s91
    %p93 = scmp.eq.s32.totalorder %s25, 0
    %p94 = por %p92, %p93
    %s96 = sadd.s32 %s95, 1
    %p99 = scmp.eq.s32.totalorder %s19, 1
    %p100 = scmp.ne.s32.totalorder %s95, %s97
    %p101 = scmp.eq.s32.totalorder %s19, 0
    %p102 = por %p100, %p101
    %p103 = scmp.ne.s32.totalorder %s95, %s97
    %p104 = scmp.eq.s32.totalorder %s24, 1
    %p105 = por %p103, %p104
    %p106 = scmp.ne.s32.totalorder %s97, %s98
    %p107 = scmp.eq.s32.totalorder %s24, 0
    %p108 = por %p106, %p107
    %p109 = scmp.ne.s32.totalorder %s97, %s98
    %p110 = scmp.eq.s32.totalorder %s25, 1
    %p111 = por %p109, %p110
    %p113 = scmp.ne.s32.totalorder %s98, %s112
    %p114 = scmp.eq.s32.totalorder %s25, 0
    %p115 = por %p113, %p114
    %s117 = sadd.s32 %s116, 1
    %p120 = scmp.eq.s32.totalorder %s19, 1
    %p121 = scmp.ne.s32.totalorder %s116, %s118
    %p122 = scmp.eq.s32.totalorder %s19, 0
    %p123 = por %p121, %p122
    %p124 = scmp.ne.s32.totalorder %s116, %s118
    %p125 = scmp.eq.s32.totalorder %s24, 1
    %p126 = por %p124, %p125
    %p127 = scmp.ne.s32.totalorder %s118, %s119
    %p128 = scmp.eq.s32.totalorder %s24, 0
    %p129 = por %p127, %p128
    %p130 = scmp.ne.s32.totalorder %s118, %s119
    %p131 = scmp.eq.s32.totalorder %s25, 1
    %p132 = por %p130, %p131
    %p134 = scmp.ne.s32.totalorder %s119, %s133
    %p135 = scmp.eq.s32.totalorder %s25, 0
    %p136 = por %p134, %p135
    %s138 = sadd.s32 %s137, 1
    %p141 = scmp.eq.s32.totalorder %s19, 1
    %p142 = scmp.ne.s32.totalorder %s137, %s139
    %p143 = scmp.eq.s32.totalorder %s19, 0
    %p144 = por %p142, %p143
    %p145 = scmp.ne.s32.totalorder %s137, %s139
    %p146 = scmp.eq.s32.totalorder %s24, 1
    %p147 = por %p145, %p146
    %p148 = scmp.ne.s32.totalorder %s139, %s140
    %p149 = scmp.eq.s32.totalorder %s24, 0
    %p150 = por %p148, %p149
    %p151 = scmp.ne.s32.totalorder %s139, %s140
    %p152 = scmp.eq.s32.totalorder %s25, 1
    %p153 = por %p151, %p152
    %p155 = scmp.ne.s32.totalorder %s140, %s154
    %p156 = scmp.eq.s32.totalorder %s25, 0
    %p157 = por %p155, %p156
    %s159 = sadd.s32 %s158, 1
    %p162 = scmp.eq.s32.totalorder %s19, 1
    %p163 = scmp.ne.s32.totalorder %s158, %s160
    %p164 = scmp.eq.s32.totalorder %s19, 0
    %p165 = por %p163, %p164
    %p166 = scmp.ne.s32.totalorder %s158, %s160
    %p167 = scmp.eq.s32.totalorder %s24, 1
    %p168 = por %p166, %p167
    %p169 = scmp.ne.s32.totalorder %s160, %s161
    %p170 = scmp.eq.s32.totalorder %s24, 0
    %p171 = por %p169, %p170
    %p172 = scmp.ne.s32.totalorder %s160, %s161
    %p173 = scmp.eq.s32.totalorder %s25, 1
    %p174 = por %p172, %p173
    %p176 = scmp.ne.s32.totalorder %s161, %s175
    %p177 = scmp.eq.s32.totalorder %s25, 0
    %p178 = por %p176, %p177
    %s180 = sadd.s32 %s179, 1
    %p183 = scmp.eq.s32.totalorder %s19, 1
    %p184 = scmp.ne.s32.totalorder %s179, %s181
    %p185 = scmp.eq.s32.totalorder %s19, 0
    %p186 = por %p184, %p185
    %p187 = scmp.ne.s32.totalorder %s179, %s181
    %p188 = scmp.eq.s32.totalorder %s24, 1
    %p189 = por %p187, %p188
    %p190 = scmp.ne.s32.totalorder %s181, %s182
    %p191 = scmp.eq.s32.totalorder %s24, 0
    %p192 = por %p190, %p191
    %p193 = scmp.ne.s32.totalorder %s181, %s182
    %p194 = scmp.eq.s32.totalorder %s25, 1
    %p195 = por %p193, %p194
    %p197 = scmp.ne.s32.totalorder %s182, %s196
    %p198 = scmp.eq.s32.totalorder %s25, 0
    %p199 = por %p197, %p198
    %s201 = sadd.s32 %s200, 1
    %p204 = scmp.eq.s32.totalorder %s19, 1
    %p205 = scmp.ne.s32.totalorder %s200, %s202
    %p206 = scmp.eq.s32.totalorder %s19, 0
    %p207 = por %p205, %p206
    %p208 = scmp.ne.s32.totalorder %s200, %s202
    %p209 = scmp.eq.s32.totalorder %s24, 1
    %p210 = por %p208, %p209
    %p211 = scmp.ne.s32.totalorder %s202, %s203
    %p212 = scmp.eq.s32.totalorder %s24, 0
    %p213 = por %p211, %p212
    %p214 = scmp.ne.s32.totalorder %s202, %s203
    %p215 = scmp.eq.s32.totalorder %s25, 1
    %p216 = por %p214, %p215
    %p218 = scmp.ne.s32.totalorder %s203, %s217
    %p219 = scmp.eq.s32.totalorder %s25, 0
    %p220 = por %p218, %p219
    %s222 = sadd.s32 %s221, 1
    %p225 = scmp.eq.s32.totalorder %s19, 1
    %p226 = scmp.ne.s32.totalorder %s221, %s223
    %p227 = scmp.eq.s32.totalorder %s19, 0
    %p228 = por %p226, %p227
    %p229 = scmp.ne.s32.totalorder %s221, %s223
    %p230 = scmp.eq.s32.totalorder %s24, 1
    %p231 = por %p229, %p230
    %p232 = scmp.ne.s32.totalorder %s223, %s224
    %p233 = scmp.eq.s32.totalorder %s24, 0
    %p234 = por %p232, %p233
    %p235 = scmp.ne.s32.totalorder %s223, %s224
    %p236 = scmp.eq.s32.totalorder %s25, 1
    %p237 = por %p235, %p236
    %p239 = scmp.ne.s32.totalorder %s224, %s238
    %p240 = scmp.eq.s32.totalorder %s25, 0
    %p241 = por %p239, %p240
    %s243 = sadd.s32 %s242, 1
    %p246 = scmp.eq.s32.totalorder %s19, 1
    %p247 = scmp.ne.s32.totalorder %s242, %s244
    %p248 = scmp.eq.s32.totalorder %s19, 0
    %p249 = por %p247, %p248
    %p250 = scmp.ne.s32.totalorder %s242, %s244
    %p251 = scmp.eq.s32.totalorder %s24, 1
    %p252 = por %p250, %p251
    %p253 = scmp.ne.s32.totalorder %s244, %s245
    %p254 = scmp.eq.s32.totalorder %s24, 0
    %p255 = por %p253, %p254
    %p256 = scmp.ne.s32.totalorder %s244, %s245
    %p257 = scmp.eq.s32.totalorder %s25, 1
    %p258 = por %p256, %p257
    %p260 = scmp.ne.s32.totalorder %s245, %s259
    %p261 = scmp.eq.s32.totalorder %s25, 0
    %p262 = por %p260, %p261
    %s264 = sadd.s32 %s263, 1
    %p267 = scmp.eq.s32.totalorder %s19, 1
    %p268 = scmp.ne.s32.totalorder %s263, %s265
    %p269 = scmp.eq.s32.totalorder %s19, 0
    %p270 = por %p268, %p269
    %p271 = scmp.ne.s32.totalorder %s263, %s265
    %p272 = scmp.eq.s32.totalorder %s24, 1
    %p273 = por %p271, %p272
    %p274 = scmp.ne.s32.totalorder %s265, %s266
    %p275 = scmp.eq.s32.totalorder %s24, 0
    %p276 = por %p274, %p275
    %p277 = scmp.ne.s32.totalorder %s265, %s266
    %p278 = scmp.eq.s32.totalorder %s25, 1
    %p279 = por %p277, %p278
    %p281 = scmp.ne.s32.totalorder %s266, %s280
    %p282 = scmp.eq.s32.totalorder %s25, 0
    %p283 = por %p281, %p282
    %s285 = sadd.s32 %s284, 1
    %p288 = scmp.eq.s32.totalorder %s19, 1
    %p289 = scmp.ne.s32.totalorder %s284, %s286
    %p290 = scmp.eq.s32.totalorder %s19, 0
    %p291 = por %p289, %p290
    %p292 = scmp.ne.s32.totalorder %s284, %s286
    %p293 = scmp.eq.s32.totalorder %s24, 1
    %p294 = por %p292, %p293
    %p295 = scmp.ne.s32.totalorder %s286, %s287
    %p296 = scmp.eq.s32.totalorder %s24, 0
    %p297 = por %p295, %p296
    %p298 = scmp.ne.s32.totalorder %s286, %s287
    %p299 = scmp.eq.s32.totalorder %s25, 1
    %p300 = por %p298, %p299
    %p302 = scmp.ne.s32.totalorder %s287, %s301
    %p303 = scmp.eq.s32.totalorder %s25, 0
    %p304 = por %p302, %p303
    %s305 = ssub.s32 %s19, %s26
    %p306 = scmp.eq.s32.totalorder %s305, 0
    %s308 = sadd.s32 %s307, 1
    %s309 = scalar_select %p306, %s307, %s308
    %p312 = pneg %p306
    %p313 = scmp.eq.s32.totalorder %s19, 1
    %p314 = por %p312, %p313
    %p315 = scmp.ne.s32.totalorder %s307, %s310
    %p316 = scmp.eq.s32.totalorder %s19, 0
    %p317 = por %p315, %p316
    %p318 = scmp.ne.s32.totalorder %s307, %s310
    %p319 = scmp.eq.s32.totalorder %s24, 1
    %p320 = por %p318, %p319
    %p321 = scmp.ne.s32.totalorder %s310, %s311
    %p322 = scmp.eq.s32.totalorder %s24, 0
    %p323 = por %p321, %p322
    %p324 = scmp.ne.s32.totalorder %s310, %s311
    %p325 = scmp.eq.s32.totalorder %s25, 1
    %p326 = por %p324, %p325
    %p328 = scmp.ne.s32.totalorder %s311, %s327
    %p329 = scmp.eq.s32.totalorder %s25, 0
    %p330 = por %p328, %p329
    %p331 = scmp.le.s32.totalorder 1, %s19
    %p332 = scmp.lt.s32.totalorder %s19, 3
    %p333 = pnand %p331, %p332
    %p334 = pneg %p333
    // Predicated region
    $region9: #{host_img_transformer_decoder_hybrid.2} parent=5 // pred_check
      _
    $region10: #{host_img_transformer_decoder_hybrid.2} parent=5 // pred_check_branch
      %336 = sbr.rel (%p333) target = $region12
    $region11: #{host_img_transformer_decoder_hybrid.2} parent=5 // pred_region
      %s337 = ssub.s32 %s19, 1
      // Predicated region
      $region13: #{host_img_transformer_decoder_hybrid.2} parent=11 // pred_check
        %p338 = pneg %p66
      $region14: #{host_img_transformer_decoder_hybrid.2} parent=11 // pred_check_branch
        %340 = sbr.rel (%p338) target = $region16
      $region15: #{host_img_transformer_decoder_hybrid.2} parent=11 // pred_region
        _
      $region16: #{host_img_transformer_decoder_hybrid.2} parent=11 // pred_fallthru
        _
      // Predicated region
      $region17: #{host_img_transformer_decoder_hybrid.2} parent=11 // pred_check
        %p341 = pneg %p87
      $region18: #{host_img_transformer_decoder_hybrid.2} parent=11 // pred_check_branch
        %343 = sbr.rel (%p341) target = $region20
      $region19: #{host_img_transformer_decoder_hybrid.2} parent=11 // pred_region
        _
      $region20: #{host_img_transformer_decoder_hybrid.2} parent=11 // pred_fallthru
        _
      // Predicated region
      $region21: #{host_img_transformer_decoder_hybrid.2} parent=11 // pred_check
        %p344 = pneg %p108
      $region22: #{host_img_transformer_decoder_hybrid.2} parent=11 // pred_check_branch
        %346 = sbr.rel (%p344) target = $region24
      $region23: #{host_img_transformer_decoder_hybrid.2} parent=11 // pred_region
        _
      $region24: #{host_img_transformer_decoder_hybrid.2} parent=11 // pred_fallthru
        _
      // Predicated region
      $region25: #{host_img_transformer_decoder_hybrid.2} parent=11 // pred_check
        %p347 = pneg %p129
      $region26: #{host_img_transformer_decoder_hybrid.2} parent=11 // pred_check_branch
        %349 = sbr.rel (%p347) target = $region28
      $region27: #{host_img_transformer_decoder_hybrid.2} parent=11 // pred_region
        _
      $region28: #{host_img_transformer_decoder_hybrid.2} parent=11 // pred_fallthru
        _
      // Predicated region
      $region29: #{host_img_transformer_decoder_hybrid.2} parent=11 // pred_check
        %p350 = pneg %p150
      $region30: #{host_img_transformer_decoder_hybrid.2} parent=11 // pred_check_branch
        %352 = sbr.rel (%p350) target = $region32
      $region31: #{host_img_transformer_decoder_hybrid.2} parent=11 // pred_region
        _
      $region32: #{host_img_transformer_decoder_hybrid.2} parent=11 // pred_fallthru
        _
      // Predicated region
      $region33: #{host_img_transformer_decoder_hybrid.2} parent=11 // pred_check
        %p353 = pneg %p171
      $region34: #{host_img_transformer_decoder_hybrid.2} parent=11 // pred_check_branch
        %355 = sbr.rel (%p353) target = $region36
      $region35: #{host_img_transformer_decoder_hybrid.2} parent=11 // pred_region
        _
      $region36: #{host_img_transformer_decoder_hybrid.2} parent=11 // pred_fallthru
        _
      // Predicated region
      $region37: #{host_img_transformer_decoder_hybrid.2} parent=11 // pred_check
        %p356 = pneg %p192
      $region38: #{host_img_transformer_decoder_hybrid.2} parent=11 // pred_check_branch
        %358 = sbr.rel (%p356) target = $region40
      $region39: #{host_img_transformer_decoder_hybrid.2} parent=11 // pred_region
        _
      $region40: #{host_img_transformer_decoder_hybrid.2} parent=11 // pred_fallthru
        _
      // Predicated region
      $region41: #{host_img_transformer_decoder_hybrid.2} parent=11 // pred_check
        %p359 = pneg %p213
      $region42: #{host_img_transformer_decoder_hybrid.2} parent=11 // pred_check_branch
        %361 = sbr.rel (%p359) target = $region44
      $region43: #{host_img_transformer_decoder_hybrid.2} parent=11 // pred_region
        _
      $region44: #{host_img_transformer_decoder_hybrid.2} parent=11 // pred_fallthru
        _
      // Predicated region
      $region45: #{host_img_transformer_decoder_hybrid.2} parent=11 // pred_check
        %p362 = pneg %p234
      $region46: #{host_img_transformer_decoder_hybrid.2} parent=11 // pred_check_branch
        %364 = sbr.rel (%p362) target = $region48
      $region47: #{host_img_transformer_decoder_hybrid.2} parent=11 // pred_region
        _
      $region48: #{host_img_transformer_decoder_hybrid.2} parent=11 // pred_fallthru
        _
      // Predicated region
      $region49: #{host_img_transformer_decoder_hybrid.2} parent=11 // pred_check
        %p365 = pneg %p255
      $region50: #{host_img_transformer_decoder_hybrid.2} parent=11 // pred_check_branch
        %367 = sbr.rel (%p365) target = $region52
      $region51: #{host_img_transformer_decoder_hybrid.2} parent=11 // pred_region
        _
      $region52: #{host_img_transformer_decoder_hybrid.2} parent=11 // pred_fallthru
        _
      // Predicated region
      $region53: #{host_img_transformer_decoder_hybrid.2} parent=11 // pred_check
        %p368 = pneg %p276
      $region54: #{host_img_transformer_decoder_hybrid.2} parent=11 // pred_check_branch
        %370 = sbr.rel (%p368) target = $region56
      $region55: #{host_img_transformer_decoder_hybrid.2} parent=11 // pred_region
        _
      $region56: #{host_img_transformer_decoder_hybrid.2} parent=11 // pred_fallthru
        _
      // Predicated region
      $region57: #{host_img_transformer_decoder_hybrid.2} parent=11 // pred_check
        %p371 = pneg %p297
      $region58: #{host_img_transformer_decoder_hybrid.2} parent=11 // pred_check_branch
        %373 = sbr.rel (%p371) target = $region60
      $region59: #{host_img_transformer_decoder_hybrid.2} parent=11 // pred_region
        _
      $region60: #{host_img_transformer_decoder_hybrid.2} parent=11 // pred_fallthru
        _
    $region12: #{host_img_transformer_decoder_hybrid.2} parent=5 // pred_fallthru
      _
    %p374 = scmp.lt.s32.totalorder %s19, 2
    // Predicated region
    $region61: #{host_img_transformer_decoder_hybrid.2} parent=5 // pred_check
      %p375 = pneg %p374
    $region62: #{host_img_transformer_decoder_hybrid.2} parent=5 // pred_check_branch
      %377 = sbr.rel (%p375) target = $region64
    $region63: #{host_img_transformer_decoder_hybrid.2} parent=5 // pred_region
      // Predicated region
      $region65: #{host_img_transformer_decoder_hybrid.2} parent=63 // pred_check
        %p378 = pneg %p39
      $region66: #{host_img_transformer_decoder_hybrid.2} parent=63 // pred_check_branch
        %380 = sbr.rel (%p378) target = $region68
      $region67: #{host_img_transformer_decoder_hybrid.2} parent=63 // pred_region
        %p381 = scmp.lt.s32.totalorder %s19, 1
        %s382 = scalar_select %p381, %s19, 1
        %s383 = scalar_lea.vmem %s0, %s382
      $region68: #{host_img_transformer_decoder_hybrid.2} parent=63 // pred_fallthru
        _
    $region64: #{host_img_transformer_decoder_hybrid.2} parent=5 // pred_fallthru
      _
    %p384 = scmp.le.s32.totalorder 1, %s19
    %p385 = scmp.lt.s32.totalorder %s19, 3
    %p386 = pnand %p384, %p385
    %p387 = pneg %p386
    // Predicated region
    $region69: #{host_img_transformer_decoder_hybrid.2} parent=5 // pred_check
      _
    $region70: #{host_img_transformer_decoder_hybrid.2} parent=5 // pred_check_branch
      %389 = sbr.rel (%p386) target = $region72
    $region71: #{host_img_transformer_decoder_hybrid.2} parent=5 // pred_region
      %s390 = ssub.s32 %s19, 1
      %p391 = scmp.lt.s32.totalorder %s24, 1
      %s392 = scalar_select %p391, %s24, 1
      %s393 = scalar_lea.vmem %s0, %s392
      %p394 = pneg %p45
      %p395 = pneg %p42
      %p396 = pneg %p66
      %p397 = pneg %p63
      %p398 = pneg %p87
      %p399 = pneg %p84
      %p400 = pneg %p108
      %p401 = pneg %p105
      %p402 = pneg %p129
      %p403 = pneg %p126
      %p404 = pneg %p150
      %p405 = pneg %p147
      %p406 = pneg %p171
      %p407 = pneg %p168
      %p408 = pneg %p192
      %p409 = pneg %p189
      %p410 = pneg %p213
      %p411 = pneg %p210
      %p412 = pneg %p234
      %p413 = pneg %p231
      %p414 = pneg %p255
      %p415 = pneg %p252
      %p416 = pneg %p276
      %p417 = pneg %p273
      %p418 = pneg %p297
      %p419 = pneg %p294
      %p420 = pneg %p323
      %p421 = pneg %p320
      %p422 = scmp.lt.s32.totalorder %s24, 1
      %s423 = scalar_select %p422, %s24, 1
      %s424 = smul.addr %s423, 8
      %s425 = smul.addr %s424, 4
      %s426 = scalar_lea.vmem %s13, %s425
      %p427 = scmp.lt.s32.totalorder %s24, 1
      %s428 = scalar_select %p427, %s24, 1
      %s429 = scalar_lea.vmem %s0, %s428
      %p430 = scmp.lt.s32.totalorder %s24, 1
      %s431 = scalar_select %p430, %s24, 1
      %s432 = smul.addr %s431, 8
      %s433 = smul.addr %s432, 4
      %s434 = scalar_lea.vmem %s13, %s433
      %v436 = vld [vmem:[%s429] sm:$0x1]
      %v437 = vpack.c.bf16 %v436, %v436
      %v438 = vld [vmem:[%s2] sm:$0xf]
      %v439 = vld [vmem:[%s3] sm:$0x1]
      %vm440 = vcmask 64512
      %v442 = vsel %vm440, %v437, 0
      %vm444 = vcmask 1043456
      %v446 = vsel %vm444, %v438, 0
      %448 = vmatpush.bf16.msra.mxu0 0
      %449 = vmatpush.bf16.msra.mxu0 0
      %450 = vmatpush.bf16.msra.mxu0 0
      %451 = vmatpush.bf16.msra.mxu0 0
      %452 = vmatpush.bf16.msra.mxu0 0
      %453 = vmatpush.bf16.msra.mxu0 0
      %454 = vmatpush.bf16.msra.mxu0 0
      %455 = vmatpush.bf16.msra.mxu0 %v446
      %456 = vmatmul.bf16.gmra.mxu0 %v442
      %v457 = vpop.f32.mrf.mxu0
      %v458 = vadd.f32 %v439, %v457
      %v459 = vpop.f32.mrf.mxu0
      %460 = vdwg.mxu0
      %v461 = vmax.f32 %v458, 0.0
      %v462 = vpack.c.bf16 %v461, %v461
      %v463 = vld [vmem:[%s4] sm:$0xf]
      %v464 = vld [vmem:[%s4 + $0x4] sm:$0xf]
      %v465 = vld [vmem:[%s4 + $0x8] sm:$0xf]
      %v466 = vld [vmem:[%s4 + $0xc] sm:$0xf]
      %v467 = vld [vmem:[%s5] sm:$0x1]
      %v472 = vunpack.c.l.b16 %v463
      %v473 = vunpack.c.l.b16 %v464
      %v474 = vunpack.c.l.b16 %v465
      %v475 = vunpack.c.l.b16 %v466
      %v476 = vpack.c.b16 %v473, %v472
      %v477 = vpack.c.b16 %v475, %v474
      %vm480 = vcmask 261120
      %v482 = vsel %vm480, %v462, 0
      %484 = vmatpush.bf16.msra.mxu0 0
      %485 = vmatpush.bf16.msra.mxu0 0
      %486 = vmatpush.bf16.msra.mxu0 0
      %487 = vmatpush.bf16.msra.mxu0 0
      %488 = vmatpush.bf16.msra.mxu0 0
      %489 = vmatpush.bf16.msra.mxu0 0
      %490 = vmatpush.bf16.msra.mxu0 %v477
      %491 = vmatpush.bf16.msra.mxu0 %v476
      %492 = vmatmul.bf16.gmra.mxu0 %v482
      %v493 = vpop.f32.mrf.mxu0
      %v494 = vadd.f32 %v467, %v493
      %v495 = vpop.f32.mrf.mxu0
      %496 = vdwg.mxu0
      %v497 = vld [vmem:[%s1] sm:$0xff]
      %v498 = vld [vmem:[%s1 + $0x8] sm:$0xff]
      %v499 = vld [vmem:[%s7] sm:$0x7f]
      %v500 = vpack.c.bf16 %v494, %v494
      %v501 = vld [vmem:[%s6] sm:$0xf]
      %v502 = vld [vmem:[%s6 + $0x4] sm:$0xf]
      %v503 = vld [vmem:[%s6 + $0x8] sm:$0xf]
      %v504 = vld [vmem:[%s6 + $0xc] sm:$0xf]
      %v509 = vunpack.c.l.b16 %v501
      %v510 = vunpack.c.l.b16 %v502
      %v511 = vunpack.c.l.b16 %v503
      %v512 = vunpack.c.l.b16 %v504
      %v513 = vpack.c.b16 %v510, %v509
      %v514 = vpack.c.b16 %v512, %v511
      %v518 = vsel %vm480, %v500, 0
      %520 = vmatpush.bf16.msra.mxu0 0
      %521 = vmatpush.bf16.msra.mxu0 0
      %522 = vmatpush.bf16.msra.mxu0 0
      %523 = vmatpush.bf16.msra.mxu0 0
      %524 = vmatpush.bf16.msra.mxu0 0
      %525 = vmatpush.bf16.msra.mxu0 0
      %526 = vmatpush.bf16.msra.mxu0 %v514
      %527 = vmatpush.bf16.msra.mxu0 %v513
      %528 = vmatmul.bf16.gmra.mxu0 %v518
      %v529 = vpop.f32.mrf.mxu0
      %v530 = vadd.f32 %v499, %v529
      %v531 = vpop.f32.mrf.mxu0
      %532 = vdwg.mxu0
      %v533 = vpack.c.bf16 %v530, %v530
      %s534 = scalar_lea.vmem %s6, 16
      %v535 = vld [vmem:[%s534] sm:$0xf]
      %v536 = vld [vmem:[%s534 + $0x4] sm:$0xf]
      %v537 = vld [vmem:[%s534 + $0x8] sm:$0xf]
      %v538 = vld [vmem:[%s534 + $0xc] sm:$0xf]
      %v543 = vunpack.c.l.b16 %v535
      %v544 = vunpack.c.l.b16 %v536
      %v545 = vunpack.c.l.b16 %v537
      %v546 = vunpack.c.l.b16 %v538
      %v547 = vpack.c.b16 %v544, %v543
      %v548 = vpack.c.b16 %v546, %v545
      %v552 = vrot.slane %v499, 1
      %v555 = vsel %vm480, %v533, 0
      %557 = vmatpush.bf16.msra.mxu0 0
      %558 = vmatpush.bf16.msra.mxu0 0
      %559 = vmatpush.bf16.msra.mxu0 0
      %560 = vmatpush.bf16.msra.mxu0 0
      %561 = vmatpush.bf16.msra.mxu0 0
      %562 = vmatpush.bf16.msra.mxu0 0
      %563 = vmatpush.bf16.msra.mxu0 %v548
      %564 = vmatpush.bf16.msra.mxu0 %v547
      %565 = vmatmul.bf16.gmra.mxu0 %v555
      %v566 = vpop.f32.mrf.mxu0
      %v567 = vadd.f32 %v552, %v566
      %v568 = vpop.f32.mrf.mxu0
      %569 = vdwg.mxu0
      %v570 = vperm.slane %v567, 0
      %v571 = vadd.f32 %v497, %v570
      %v572 = vadd.f32 %v498, %v570
      %v573 = vsel %vm480, %v571, 0.0
      %574 = vadd.xlane.f32.xlu0 %v573
      %v575 = vpop.xlane.xlu0 %574
      %v576 = vsel %vm480, %v572, 0.0
      %577 = vadd.xlane.f32.xlu0 %v576
      %v578 = vpop.xlane.xlu0 %577
      %v579 = vrcp.pop 32.0
      %v580 = vmul.f32 32.0, %v579
      %v581 = vsub.f32 1.0, %v580
      %v582 = vmul.f32 %v579, %v581
      %v583 = vadd.f32 %v579, %v582
      %vm584 = vweird.f32 %v579
      %v585 = vsel %vm584, %v579, %v583
      %v586 = vmul.f32 %v575, %v585
      %v587 = vmul.f32 %v578, %v585
      %v588 = vsub.f32 %v571, %v586
      %v589 = vsub.f32 %v572, %v587
      %v590 = vmul.f32 %v588, %v588
      %v591 = vmul.f32 %v589, %v589
      %v592 = vsel %vm480, %v590, 0.0
      %593 = vadd.xlane.f32.xlu0 %v592
      %v594 = vpop.xlane.xlu0 %593
      %v595 = vsel %vm480, %v591, 0.0
      %596 = vadd.xlane.f32.xlu0 %v595
      %v597 = vpop.xlane.xlu0 %596
      %v598 = vmul.f32 %v594, %v585
      %v599 = vmul.f32 %v597, %v585
      %v600 = vadd.f32 %v598, 1e-05
      %v601 = vadd.f32 %v599, 1e-05
      %v602 = vrsqrt.pop %v600
      %v603 = vmul.f32 %v602, %v600
      %v604 = vmul.f32 %v603, %v602
      %v605 = vmul.f32 0.5, %v604
      %v606 = vsub.f32 1.5, %v605
      %v607 = vmul.f32 %v602, %v606
      %vm608 = vweird.f32 %v600
      %vm609 = vweird.f32 %v602
      %vm610 = vmor %vm608, %vm609
      %v611 = vsel %vm610, %v602, %v607
      %v612 = vrsqrt.pop %v601
      %v613 = vmul.f32 %v612, %v601
      %v614 = vmul.f32 %v613, %v612
      %v615 = vmul.f32 0.5, %v614
      %v616 = vsub.f32 1.5, %v615
      %v617 = vmul.f32 %v612, %v616
      %vm618 = vweird.f32 %v601
      %vm619 = vweird.f32 %v612
      %vm620 = vmor %vm618, %vm619
      %v621 = vsel %vm620, %v612, %v617
      %v622 = vmul.f32 %v588, %v611
      %v623 = vmul.f32 %v589, %v621
      %v624 = vperm.slane %v499, 2
      %v625 = vmul.f32 %v622, %v624
      %v626 = vmul.f32 %v623, %v624
      %v627 = vperm.slane %v499, 3
      %v628 = vadd.f32 %v625, %v627
      %v629 = vadd.f32 %v626, %v627
      %v630 = vpack.c.bf16 %v629, %v628
      %v631 = vld [vmem:[%s8] sm:$0xf]
      %v632 = vld [vmem:[%s8 + $0x4] sm:$0xf]
      %v633 = vld [vmem:[%s8 + $0x8] sm:$0xf]
      %v634 = vld [vmem:[%s8 + $0xc] sm:$0xf]
      %v635 = vld [vmem:[%s9] sm:$0x1]
      %v637 = vperm.slane %v635, 0
      %v643 = vunpack.c.l.b16 %v631
      %v644 = vunpack.c.l.b16 %v632
      %v645 = vunpack.c.l.b16 %v633
      %v646 = vunpack.c.l.b16 %v634
      %v647 = vpack.c.b16 %v644, %v643
      %v648 = vpack.c.b16 %v646, %v645
      %v652 = vsel %vm480, %v630, 0
      %654 = vmatpush.bf16.msra.mxu0 0
      %655 = vmatpush.bf16.msra.mxu0 0
      %656 = vmatpush.bf16.msra.mxu0 0
      %657 = vmatpush.bf16.msra.mxu0 0
      %658 = vmatpush.bf16.msra.mxu0 0
      %659 = vmatpush.bf16.msra.mxu0 0
      %660 = vmatpush.bf16.msra.mxu0 %v648
      %661 = vmatpush.bf16.msra.mxu0 %v647
      %662 = vmatmul.bf16.gmra.mxu0 %v652
      %v663 = vpop.f32.mrf.mxu0
      %v664 = vadd.f32 %v637, %v663
      %v665 = vpop.f32.mrf.mxu0
      %v666 = vadd.f32 %v637, %v665
      %667 = vdwg.mxu0
      %v668 = vmax.f32 %v664, 0.0
      %v669 = vmax.f32 %v666, 0.0
      %v670 = vpack.c.bf16 %v669, %v668
      %v671 = vld [vmem:[%s10] sm:$0xf]
      %v672 = vld [vmem:[%s10 + $0x4] sm:$0xf]
      %v673 = vld [vmem:[%s10 + $0x8] sm:$0xf]
      %v674 = vld [vmem:[%s10 + $0xc] sm:$0xf]
      %v675 = vld [vmem:[%s10 + $0x10] sm:$0xf]
      %v676 = vld [vmem:[%s10 + $0x14] sm:$0xf]
      %v677 = vld [vmem:[%s10 + $0x18] sm:$0xf]
      %v678 = vld [vmem:[%s10 + $0x1c] sm:$0xf]
      %v679 = vperm.slane %v499, 6
      %v688 = vunpack.c.l.b16 %v671
      %v689 = vunpack.c.l.b16 %v672
      %v690 = vunpack.c.l.b16 %v673
      %v691 = vunpack.c.l.b16 %v674
      %v692 = vunpack.c.l.b16 %v675
      %v693 = vunpack.c.l.b16 %v676
      %v694 = vunpack.c.l.b16 %v677
      %v695 = vunpack.c.l.b16 %v678
      %v696 = vpack.c.b16 %v689, %v688
      %v697 = vpack.c.b16 %v691, %v690
      %v698 = vpack.c.b16 %v693, %v692
      %v699 = vpack.c.b16 %v695, %v694
      %vm704 = vcmask 523264
      %v706 = vsel %vm704, %v670, 0
      %708 = vmatpush.bf16.msra.mxu0 0
      %709 = vmatpush.bf16.msra.mxu0 0
      %710 = vmatpush.bf16.msra.mxu0 0
      %711 = vmatpush.bf16.msra.mxu0 0
      %712 = vmatpush.bf16.msra.mxu0 %v699
      %713 = vmatpush.bf16.msra.mxu0 %v698
      %714 = vmatpush.bf16.msra.mxu0 %v697
      %715 = vmatpush.bf16.msra.mxu0 %v696
      %716 = vmatmul.bf16.gmra.mxu0 %v706
      %v717 = vpop.f32.mrf.mxu0
      %v718 = vadd.f32 %v679, %v717
      %v719 = vpop.f32.mrf.mxu0
      %v720 = vadd.f32 %v679, %v719
      %721 = vdwg.mxu0
      %v722 = vadd.f32 %v628, %v718
      %v723 = vadd.f32 %v629, %v720
      %v724 = vsel %vm480, %v722, 0.0
      %725 = vadd.xlane.f32.xlu0 %v724
      %v726 = vpop.xlane.xlu0 %725
      %v727 = vsel %vm480, %v723, 0.0
      %728 = vadd.xlane.f32.xlu0 %v727
      %v729 = vpop.xlane.xlu0 %728
      %v730 = vmul.f32 %v726, %v585
      %v731 = vmul.f32 %v729, %v585
      %v732 = vsub.f32 %v722, %v730
      %v733 = vsub.f32 %v723, %v731
      %v734 = vmul.f32 %v732, %v732
      %v735 = vmul.f32 %v733, %v733
      %v736 = vsel %vm480, %v734, 0.0
      %737 = vadd.xlane.f32.xlu0 %v736
      %v738 = vpop.xlane.xlu0 %737
      %v739 = vsel %vm480, %v735, 0.0
      %740 = vadd.xlane.f32.xlu0 %v739
      %v741 = vpop.xlane.xlu0 %740
      %v742 = vmul.f32 %v738, %v585
      %v743 = vmul.f32 %v741, %v585
      %v744 = vadd.f32 %v742, 1e-05
      %v745 = vadd.f32 %v743, 1e-05
      %v746 = vrsqrt.pop %v744
      %v747 = vmul.f32 %v746, %v744
      %v748 = vmul.f32 %v747, %v746
      %v749 = vmul.f32 0.5, %v748
      %v750 = vsub.f32 1.5, %v749
      %v751 = vmul.f32 %v746, %v750
      %vm752 = vweird.f32 %v744
      %vm753 = vweird.f32 %v746
      %vm754 = vmor %vm752, %vm753
      %v755 = vsel %vm754, %v746, %v751
      %v756 = vrsqrt.pop %v745
      %v757 = vmul.f32 %v756, %v745
      %v758 = vmul.f32 %v757, %v756
      %v759 = vmul.f32 0.5, %v758
      %v760 = vsub.f32 1.5, %v759
      %v761 = vmul.f32 %v756, %v760
      %vm762 = vweird.f32 %v745
      %vm763 = vweird.f32 %v756
      %vm764 = vmor %vm762, %vm763
      %v765 = vsel %vm764, %v756, %v761
      %v766 = vmul.f32 %v732, %v755
      %v767 = vmul.f32 %v733, %v765
      %v768 = vperm.slane %v499, 4
      %v769 = vmul.f32 %v766, %v768
      %v770 = vmul.f32 %v767, %v768
      %v771 = vperm.slane %v499, 5
      %v772 = vadd.f32 %v769, %v771
      %v773 = vadd.f32 %v770, %v771
      %s774 = scalar_lea.vmem %s7, 8
      %v775 = vld [vmem:[%s774] sm:$0x7f]
      %s776 = scalar_lea.vmem %s6, 32
      %v777 = vld [vmem:[%s776] sm:$0xf]
      %v778 = vld [vmem:[%s776 + $0x4] sm:$0xf]
      %v779 = vld [vmem:[%s776 + $0x8] sm:$0xf]
      %v780 = vld [vmem:[%s776 + $0xc] sm:$0xf]
      %v785 = vunpack.c.l.b16 %v777
      %v786 = vunpack.c.l.b16 %v778
      %v787 = vunpack.c.l.b16 %v779
      %v788 = vunpack.c.l.b16 %v780
      %v789 = vpack.c.b16 %v786, %v785
      %v790 = vpack.c.b16 %v788, %v787
      %793 = vmatpush.bf16.msra.mxu0 0
      %794 = vmatpush.bf16.msra.mxu0 0
      %795 = vmatpush.bf16.msra.mxu0 0
      %796 = vmatpush.bf16.msra.mxu0 0
      %797 = vmatpush.bf16.msra.mxu0 0
      %798 = vmatpush.bf16.msra.mxu0 0
      %799 = vmatpush.bf16.msra.mxu0 %v790
      %800 = vmatpush.bf16.msra.mxu0 %v789
      %801 = vmatmul.bf16.gmra.mxu0 %v518
      %v802 = vpop.f32.mrf.mxu0
      %v803 = vadd.f32 %v775, %v802
      %v804 = vpop.f32.mrf.mxu0
      %805 = vdwg.mxu0
      %v806 = vpack.c.bf16 %v803, %v803
      %s807 = scalar_lea.vmem %s6, 48
      %v808 = vld [vmem:[%s807] sm:$0xf]
      %v809 = vld [vmem:[%s807 + $0x4] sm:$0xf]
      %v810 = vld [vmem:[%s807 + $0x8] sm:$0xf]
      %v811 = vld [vmem:[%s807 + $0xc] sm:$0xf]
      %v816 = vunpack.c.l.b16 %v808
      %v817 = vunpack.c.l.b16 %v809
      %v818 = vunpack.c.l.b16 %v810
      %v819 = vunpack.c.l.b16 %v811
      %v820 = vpack.c.b16 %v817, %v816
      %v821 = vpack.c.b16 %v819, %v818
      %v825 = vrot.slane %v775, 1
      %v828 = vsel %vm480, %v806, 0
      %830 = vmatpush.bf16.msra.mxu0 0
      %831 = vmatpush.bf16.msra.mxu0 0
      %832 = vmatpush.bf16.msra.mxu0 0
      %833 = vmatpush.bf16.msra.mxu0 0
      %834 = vmatpush.bf16.msra.mxu0 0
      %835 = vmatpush.bf16.msra.mxu0 0
      %836 = vmatpush.bf16.msra.mxu0 %v821
      %837 = vmatpush.bf16.msra.mxu0 %v820
      %838 = vmatmul.bf16.gmra.mxu0 %v828
      %v839 = vpop.f32.mrf.mxu0
      %v840 = vadd.f32 %v825, %v839
      %v841 = vpop.f32.mrf.mxu0
      %842 = vdwg.mxu0
      %v843 = vperm.slane %v840, 0
      %v844 = vadd.f32 %v772, %v843
      %v845 = vadd.f32 %v773, %v843
      %v846 = vsel %vm480, %v844, 0.0
      %847 = vadd.xlane.f32.xlu0 %v846
      %v848 = vpop.xlane.xlu0 %847
      %v849 = vsel %vm480, %v845, 0.0
      %850 = vadd.xlane.f32.xlu0 %v849
      %v851 = vpop.xlane.xlu0 %850
      %v852 = vmul.f32 %v848, %v585
      %v853 = vmul.f32 %v851, %v585
      %v854 = vsub.f32 %v844, %v852
      %v855 = vsub.f32 %v845, %v853
      %v856 = vmul.f32 %v854, %v854
      %v857 = vmul.f32 %v855, %v855
      %v858 = vsel %vm480, %v856, 0.0
      %859 = vadd.xlane.f32.xlu0 %v858
      %v860 = vpop.xlane.xlu0 %859
      %v861 = vsel %vm480, %v857, 0.0
      %862 = vadd.xlane.f32.xlu0 %v861
      %v863 = vpop.xlane.xlu0 %862
      %v864 = vmul.f32 %v860, %v585
      %v865 = vmul.f32 %v863, %v585
      %v866 = vadd.f32 %v864, 1e-05
      %v867 = vadd.f32 %v865, 1e-05
      %v868 = vrsqrt.pop %v866
      %v869 = vmul.f32 %v868, %v866
      %v870 = vmul.f32 %v869, %v868
      %v871 = vmul.f32 0.5, %v870
      %v872 = vsub.f32 1.5, %v871
      %v873 = vmul.f32 %v868, %v872
      %vm874 = vweird.f32 %v866
      %vm875 = vweird.f32 %v868
      %vm876 = vmor %vm874, %vm875
      %v877 = vsel %vm876, %v868, %v873
      %v878 = vrsqrt.pop %v867
      %v879 = vmul.f32 %v878, %v867
      %v880 = vmul.f32 %v879, %v878
      %v881 = vmul.f32 0.5, %v880
      %v882 = vsub.f32 1.5, %v881
      %v883 = vmul.f32 %v878, %v882
      %vm884 = vweird.f32 %v867
      %vm885 = vweird.f32 %v878
      %vm886 = vmor %vm884, %vm885
      %v887 = vsel %vm886, %v878, %v883
      %v888 = vmul.f32 %v854, %v877
      %v889 = vmul.f32 %v855, %v887
      %v890 = vperm.slane %v775, 2
      %v891 = vmul.f32 %v888, %v890
      %v892 = vmul.f32 %v889, %v890
      %v893 = vperm.slane %v775, 3
      %v894 = vadd.f32 %v891, %v893
      %v895 = vadd.f32 %v892, %v893
      %v896 = vpack.c.bf16 %v895, %v894
      %s897 = scalar_lea.vmem %s8, 16
      %v898 = vld [vmem:[%s897] sm:$0xf]
      %v899 = vld [vmem:[%s897 + $0x4] sm:$0xf]
      %v900 = vld [vmem:[%s897 + $0x8] sm:$0xf]
      %v901 = vld [vmem:[%s897 + $0xc] sm:$0xf]
      %s902 = scalar_lea.vmem %s9, 1
      %v903 = vld [vmem:[%s902] sm:$0x1]
      %v905 = vperm.slane %v903, 0
      %v911 = vunpack.c.l.b16 %v898
      %v912 = vunpack.c.l.b16 %v899
      %v913 = vunpack.c.l.b16 %v900
      %v914 = vunpack.c.l.b16 %v901
      %v915 = vpack.c.b16 %v912, %v911
      %v916 = vpack.c.b16 %v914, %v913
      %v920 = vsel %vm480, %v896, 0
      %922 = vmatpush.bf16.msra.mxu0 0
      %923 = vmatpush.bf16.msra.mxu0 0
      %924 = vmatpush.bf16.msra.mxu0 0
      %925 = vmatpush.bf16.msra.mxu0 0
      %926 = vmatpush.bf16.msra.mxu0 0
      %927 = vmatpush.bf16.msra.mxu0 0
      %928 = vmatpush.bf16.msra.mxu0 %v916
      %929 = vmatpush.bf16.msra.mxu0 %v915
      %930 = vmatmul.bf16.gmra.mxu0 %v920
      %v931 = vpop.f32.mrf.mxu0
      %v932 = vadd.f32 %v905, %v931
      %v933 = vpop.f32.mrf.mxu0
      %v934 = vadd.f32 %v905, %v933
      %935 = vdwg.mxu0
      %v936 = vmax.f32 %v932, 0.0
      %v937 = vmax.f32 %v934, 0.0
      %v938 = vpack.c.bf16 %v937, %v936
      %s939 = scalar_lea.vmem %s10, 32
      %v940 = vld [vmem:[%s939] sm:$0xf]
      %v941 = vld [vmem:[%s939 + $0x4] sm:$0xf]
      %v942 = vld [vmem:[%s939 + $0x8] sm:$0xf]
      %v943 = vld [vmem:[%s939 + $0xc] sm:$0xf]
      %v944 = vld [vmem:[%s939 + $0x10] sm:$0xf]
      %v945 = vld [vmem:[%s939 + $0x14] sm:$0xf]
      %v946 = vld [vmem:[%s939 + $0x18] sm:$0xf]
      %v947 = vld [vmem:[%s939 + $0x1c] sm:$0xf]
      %v948 = vperm.slane %v775, 6
      %v957 = vunpack.c.l.b16 %v940
      %v958 = vunpack.c.l.b16 %v941
      %v959 = vunpack.c.l.b16 %v942
      %v960 = vunpack.c.l.b16 %v943
      %v961 = vunpack.c.l.b16 %v944
      %v962 = vunpack.c.l.b16 %v945
      %v963 = vunpack.c.l.b16 %v946
      %v964 = vunpack.c.l.b16 %v947
      %v965 = vpack.c.b16 %v958, %v957
      %v966 = vpack.c.b16 %v960, %v959
      %v967 = vpack.c.b16 %v962, %v961
      %v968 = vpack.c.b16 %v964, %v963
      %v974 = vsel %vm704, %v938, 0
      %976 = vmatpush.bf16.msra.mxu0 0
      %977 = vmatpush.bf16.msra.mxu0 0
      %978 = vmatpush.bf16.msra.mxu0 0
      %979 = vmatpush.bf16.msra.mxu0 0
      %980 = vmatpush.bf16.msra.mxu0 %v968
      %981 = vmatpush.bf16.msra.mxu0 %v967
      %982 = vmatpush.bf16.msra.mxu0 %v966
      %983 = vmatpush.bf16.msra.mxu0 %v965
      %984 = vmatmul.bf16.gmra.mxu0 %v974
      %v985 = vpop.f32.mrf.mxu0
      %v986 = vadd.f32 %v948, %v985
      %v987 = vpop.f32.mrf.mxu0
      %v988 = vadd.f32 %v948, %v987
      %989 = vdwg.mxu0
      %v990 = vadd.f32 %v894, %v986
      %v991 = vadd.f32 %v895, %v988
      %v992 = vsel %vm480, %v990, 0.0
      %993 = vadd.xlane.f32.xlu0 %v992
      %v994 = vpop.xlane.xlu0 %993
      %v995 = vsel %vm480, %v991, 0.0
      %996 = vadd.xlane.f32.xlu0 %v995
      %v997 = vpop.xlane.xlu0 %996
      %v998 = vmul.f32 %v994, %v585
      %v999 = vmul.f32 %v997, %v585
      %v1000 = vsub.f32 %v990, %v998
      %v1001 = vsub.f32 %v991, %v999
      %v1002 = vmul.f32 %v1000, %v1000
      %v1003 = vmul.f32 %v1001, %v1001
      %v1004 = vsel %vm480, %v1002, 0.0
      %1005 = vadd.xlane.f32.xlu0 %v1004
      %v1006 = vpop.xlane.xlu0 %1005
      %v1007 = vsel %vm480, %v1003, 0.0
      %1008 = vadd.xlane.f32.xlu0 %v1007
      %v1009 = vpop.xlane.xlu0 %1008
      %v1010 = vmul.f32 %v1006, %v585
      %v1011 = vmul.f32 %v1009, %v585
      %v1012 = vadd.f32 %v1010, 1e-05
      %v1013 = vadd.f32 %v1011, 1e-05
      %v1014 = vrsqrt.pop %v1012
      %v1015 = vmul.f32 %v1014, %v1012
      %v1016 = vmul.f32 %v1015, %v1014
      %v1017 = vmul.f32 0.5, %v1016
      %v1018 = vsub.f32 1.5, %v1017
      %v1019 = vmul.f32 %v1014, %v1018
      %vm1020 = vweird.f32 %v1012
      %vm1021 = vweird.f32 %v1014
      %vm1022 = vmor %vm1020, %vm1021
      %v1023 = vsel %vm1022, %v1014, %v1019
      %v1024 = vrsqrt.pop %v1013
      %v1025 = vmul.f32 %v1024, %v1013
      %v1026 = vmul.f32 %v1025, %v1024
      %v1027 = vmul.f32 0.5, %v1026
      %v1028 = vsub.f32 1.5, %v1027
      %v1029 = vmul.f32 %v1024, %v1028
      %vm1030 = vweird.f32 %v1013
      %vm1031 = vweird.f32 %v1024
      %vm1032 = vmor %vm1030, %vm1031
      %v1033 = vsel %vm1032, %v1024, %v1029
      %v1034 = vmul.f32 %v1000, %v1023
      %v1035 = vmul.f32 %v1001, %v1033
      %v1036 = vperm.slane %v775, 4
      %v1037 = vmul.f32 %v1034, %v1036
      %v1038 = vmul.f32 %v1035, %v1036
      %v1039 = vperm.slane %v775, 5
      %v1040 = vadd.f32 %v1037, %v1039
      %v1041 = vadd.f32 %v1038, %v1039
      %v1042 = vadd.f32 %v1040, %v497
      %v1043 = vadd.f32 %v1041, %v498
      %v1044 = vpack.c.bf16 %v1043, %v1042
      %v1045 = vld [vmem:[%s11] sm:$0xff]
      %v1046 = vld [vmem:[%s11 + $0x8] sm:$0xff]
      %v1047 = vld [vmem:[%s11 + $0x10] sm:$0xff]
      %v1048 = vld [vmem:[%s11 + $0x18] sm:$0xff]
      %v1049 = vld [vmem:[%s11 + $0x20] sm:$0xff]
      %v1050 = vld [vmem:[%s11 + $0x28] sm:$0xff]
      %v1051 = vld [vmem:[%s11 + $0x30] sm:$0xff]
      %v1052 = vld [vmem:[%s11 + $0x38] sm:$0xff]
      %v1053 = vld [vmem:[%s12] sm:$0xf]
      %v1055 = vperm.slane %v1053, 0
      %v1056 = vperm.slane %v1053, 1
      %v1057 = vperm.slane %v1053, 2
      %v1058 = vperm.slane %v1053, 3
      %v1071 = vunpack.c.l.b16 %v1045
      %v1072 = vunpack.c.h.b16 %v1045
      %v1073 = vunpack.c.l.b16 %v1046
      %v1074 = vunpack.c.h.b16 %v1046
      %v1075 = vunpack.c.l.b16 %v1047
      %v1076 = vunpack.c.h.b16 %v1047
      %v1077 = vunpack.c.l.b16 %v1048
      %v1078 = vunpack.c.h.b16 %v1048
      %v1079 = vunpack.c.l.b16 %v1049
      %v1080 = vunpack.c.h.b16 %v1049
      %v1081 = vunpack.c.l.b16 %v1050
      %v1082 = vunpack.c.h.b16 %v1050
      %v1083 = vunpack.c.l.b16 %v1051
      %v1084 = vunpack.c.h.b16 %v1051
      %v1085 = vunpack.c.l.b16 %v1052
      %v1086 = vunpack.c.h.b16 %v1052
      %v1087 = vpack.c.b16 %v1075, %v1071
      %v1088 = vpack.c.b16 %v1076, %v1072
      %v1089 = vpack.c.b16 %v1077, %v1073
      %v1090 = vpack.c.b16 %v1078, %v1074
      %v1091 = vpack.c.b16 %v1083, %v1079
      %v1092 = vpack.c.b16 %v1084, %v1080
      %v1093 = vpack.c.b16 %v1085, %v1081
      %v1094 = vpack.c.b16 %v1086, %v1082
      %v1104 = vsel %vm480, %v1044, 0
      %1106 = vmatpush.bf16.msra.mxu0 0
      %1107 = vmatpush.bf16.msra.mxu0 0
      %1108 = vmatpush.bf16.msra.mxu0 0
      %1109 = vmatpush.bf16.msra.mxu0 0
      %1110 = vmatpush.bf16.msra.mxu0 0
      %1111 = vmatpush.bf16.msra.mxu0 0
      %1112 = vmatpush.bf16.msra.mxu0 %v1091
      %1113 = vmatpush.bf16.msra.mxu0 %v1087
      %1114 = vmatmul.bf16.gmra.mxu0 %v1104
      %v1115 = vpop.f32.mrf.mxu0
      %v1116 = vadd.f32 %v1055, %v1115
      %v1117 = vpop.f32.mrf.mxu0
      %v1118 = vadd.f32 %v1055, %v1117
      %1119 = vdwg.mxu0
      %1120 = vmatpush.bf16.msra.mxu0 0
      %1121 = vmatpush.bf16.msra.mxu0 0
      %1122 = vmatpush.bf16.msra.mxu0 0
      %1123 = vmatpush.bf16.msra.mxu0 0
      %1124 = vmatpush.bf16.msra.mxu0 0
      %1125 = vmatpush.bf16.msra.mxu0 0
      %1126 = vmatpush.bf16.msra.mxu0 %v1092
      %1127 = vmatpush.bf16.msra.mxu0 %v1088
      %1128 = vmatmul.bf16.gmra.mxu0 %v1104
      %v1129 = vpop.f32.mrf.mxu0
      %v1130 = vadd.f32 %v1056, %v1129
      %v1131 = vpop.f32.mrf.mxu0
      %v1132 = vadd.f32 %v1056, %v1131
      %1133 = vdwg.mxu0
      %1134 = vmatpush.bf16.msra.mxu0 0
      %1135 = vmatpush.bf16.msra.mxu0 0
      %1136 = vmatpush.bf16.msra.mxu0 0
      %1137 = vmatpush.bf16.msra.mxu0 0
      %1138 = vmatpush.bf16.msra.mxu0 0
      %1139 = vmatpush.bf16.msra.mxu0 0
      %1140 = vmatpush.bf16.msra.mxu0 %v1093
      %1141 = vmatpush.bf16.msra.mxu0 %v1089
      %1142 = vmatmul.bf16.gmra.mxu0 %v1104
      %v1143 = vpop.f32.mrf.mxu0
      %v1144 = vadd.f32 %v1057, %v1143
      %v1145 = vpop.f32.mrf.mxu0
      %v1146 = vadd.f32 %v1057, %v1145
      %1147 = vdwg.mxu0
      %1148 = vmatpush.bf16.msra.mxu0 0
      %1149 = vmatpush.bf16.msra.mxu0 0
      %1150 = vmatpush.bf16.msra.mxu0 0
      %1151 = vmatpush.bf16.msra.mxu0 0
      %1152 = vmatpush.bf16.msra.mxu0 0
      %1153 = vmatpush.bf16.msra.mxu0 0
      %1154 = vmatpush.bf16.msra.mxu0 %v1094
      %1155 = vmatpush.bf16.msra.mxu0 %v1090
      %1156 = vmatmul.bf16.gmra.mxu0 %v1104
      %v1157 = vpop.f32.mrf.mxu0
      %v1158 = vadd.f32 %v1058, %v1157
      %v1159 = vpop.f32.mrf.mxu0
      %v1160 = vadd.f32 %v1058, %v1159
      %1161 = vdwg.mxu0
      %v1162 = vpack.c.bf16 %v1130, %v1116
      %v1163 = vpack.c.bf16 %v1158, %v1144
      %v1164 = vpack.c.bf16 %v1132, %v1118
      %v1165 = vpack.c.bf16 %v1160, %v1146
      %1166 = vst [vmem:[%s434] sm:$0xff] %v1162
      %1167 = vst [vmem:[%s434 + $0x8] sm:$0xff] %v1163
      %1168 = vst [vmem:[%s434 + $0x10] sm:$0xff] %v1164
      %1169 = vst [vmem:[%s434 + $0x18] sm:$0xff] %v1165
      %p1170 = scmp.lt.s32.totalorder %s24, 1
      %s1171 = scalar_select %p1170, %s24, 1
      %s1172 = smul.addr %s1171, 8
      %s1173 = smul.addr %s1172, 4
      %s1174 = scalar_lea.vmem %s13, %s1173
      // Predicated region
      $region73: #{host_img_transformer_decoder_hybrid.2} parent=71 // pred_check
        %p1175 = pneg %p320
      $region74: #{host_img_transformer_decoder_hybrid.2} parent=71 // pred_check_branch
        %1177 = sbr.rel (%p1175) target = $region76
      $region75: #{host_img_transformer_decoder_hybrid.2} parent=71 // pred_region
        _
      $region76: #{host_img_transformer_decoder_hybrid.2} parent=71 // pred_fallthru
        _
    $region72: #{host_img_transformer_decoder_hybrid.2} parent=5 // pred_fallthru
      _
    %p1178 = scmp.le.s32.totalorder 2, %s19
    // Predicated region
    $region77: #{host_img_transformer_decoder_hybrid.2} parent=5 // pred_check
      %p1179 = pneg %p1178
    $region78: #{host_img_transformer_decoder_hybrid.2} parent=5 // pred_check_branch
      %1181 = sbr.rel (%p1179) target = $region80
    $region79: #{host_img_transformer_decoder_hybrid.2} parent=5 // pred_region
      %s1182 = ssub.s32 %s19, 2
      // Predicated region
      $region81: #{host_img_transformer_decoder_hybrid.2} parent=79 // pred_check
        %p1183 = pneg %p326
      $region82: #{host_img_transformer_decoder_hybrid.2} parent=79 // pred_check_branch
        %1185 = sbr.rel (%p1183) target = $region84
      $region83: #{host_img_transformer_decoder_hybrid.2} parent=79 // pred_region
        %p1186 = scmp.lt.s32.totalorder %s25, 1
        %s1187 = scalar_select %p1186, %s25, 1
        %s1188 = smul.addr %s1187, 8
        %s1189 = smul.addr %s1188, 4
        %s1190 = scalar_lea.vmem %s13, %s1189
      $region84: #{host_img_transformer_decoder_hybrid.2} parent=79 // pred_fallthru
        _
    $region80: #{host_img_transformer_decoder_hybrid.2} parent=5 // pred_fallthru
      _
  $region6: #{host_img_transformer_decoder_hybrid.2} parent=0 // loop_footer
    %s23 = sadd.s32 1, %s19
  $region7: #{host_img_transformer_decoder_hybrid.2} parent=0 // loop_footer_branch
    %18 = sbr.rel target = $region3
  $region8: #{host_img_transformer_decoder_hybrid.2} parent=0 // loop_exit
    _

// kernel: host_img_transformer_decoder_hybrid.3
$region0: #{host_img_transformer_decoder_hybrid.3}
  #allocation0 [shape = 'u32[]', space=smem, size = 0x4, offset = 0x4, fixed_abs, tag = 'smem constant byte address 0x4 - core index']
  #allocation1 [shape = 'u32[72,128]{1,0:T(1,128)}', space=vmem, size = 0x9000, scoped, tag = 'internal scratch']
  %s0 = inlined_call_operand.vmem [shape: bf16[2,32,512], index: 0, kind: input, shape index: {}]
  %s1 = inlined_call_operand.vmem [shape: f32[1,448], index: 1, kind: input, shape index: {}]
  %s2 = inlined_call_operand.vmem [shape: bf16[128,512], index: 2, kind: input, shape index: {}]
  %s3 = inlined_call_operand.vmem [shape: f32[128,1], index: 3, kind: input, shape index: {}]
  %s4 = inlined_call_operand.vmem [shape: bf16[16,8,128], index: 4, kind: input, shape index: {}]
  %s5 = inlined_call_operand.vmem [shape: f32[8,1], index: 5, kind: input, shape index: {}]
  %s6 = inlined_call_operand.vmem [shape: f32[2,8,384], index: 6, kind: output, shape index: {}]
  %s7 = sld [smem:[#allocation0]]
  $region57: #{host_img_transformer_decoder_hybrid.3} parent=0
    _
  %s9 = ssub.s32 1, %s7
  %s10 = scalar_select 0, %s9, %s7
  loop: start=0, step=1, limit=4
  $region2: #{host_img_transformer_decoder_hybrid.3} parent=0 // loop_pre_header
    _
  $region3: #{host_img_transformer_decoder_hybrid.3} parent=0 // loop_header
    %s12 = sphi 0, %s16
    %p13 = scmp.ge.s32.totalorder %s12, 4
    %s22 = sphi 0, %s24
    %s25 = sphi 0, %s22
    %s26 = sphi 0, %s25
    %s42 = sphi 0, %s26
    %s46 = sphi 0, %s46
    %s48 = sphi 0, %s46
    %s49 = sphi 0, %s48
    %s63 = sphi 0, %s49
    %s67 = sphi 0, %s67
    %s69 = sphi 0, %s67
    %s70 = sphi 0, %s69
    %s84 = sphi 0, %s70
    %s88 = sphi 0, %s88
    %s90 = sphi 0, %s88
    %s91 = sphi 0, %s90
    %s105 = sphi 0, %s91
    %s109 = sphi 0, %s109
    %s111 = sphi 0, %s109
    %s112 = sphi 0, %s111
    %s126 = sphi 0, %s112
    %s130 = sphi 0, %s130
    %s132 = sphi 0, %s130
    %s133 = sphi 0, %s132
    %s147 = sphi 0, %s133
    %s153 = sphi 0, %s155
    %s156 = sphi 0, %s153
    %s157 = sphi 0, %s156
    %s173 = sphi 0, %s157
  $region4: #{host_img_transformer_decoder_hybrid.3} parent=0 // loop_header_branch
    %15 = sbr.rel (%p13) target = $region8
  $region5: #{host_img_transformer_decoder_hybrid.3} parent=0 // loop_body
    %s17 = ssub.s32 %s12, 1
    %s18 = ssub.s32 %s12, 2
    %s19 = sadd.s32 %s12, 1
    %s20 = ssub.s32 %s12, %s19
    %p21 = scmp.eq.s32.totalorder %s20, 0
    %s23 = sadd.s32 %s22, 1
    %s24 = scalar_select %p21, %s22, %s23
    %p27 = pneg %p21
    %p28 = scmp.eq.s32.totalorder %s12, 1
    %p29 = por %p27, %p28
    %p30 = scmp.ne.s32.totalorder %s22, %s25
    %p31 = scmp.eq.s32.totalorder %s12, 0
    %p32 = por %p30, %p31
    %p33 = scmp.ne.s32.totalorder %s22, %s25
    %p34 = scmp.eq.s32.totalorder %s17, 1
    %p35 = por %p33, %p34
    %p36 = scmp.ne.s32.totalorder %s25, %s26
    %p37 = scmp.eq.s32.totalorder %s17, 0
    %p38 = por %p36, %p37
    %p39 = scmp.ne.s32.totalorder %s25, %s26
    %p40 = scmp.eq.s32.totalorder %s18, 1
    %p41 = por %p39, %p40
    %p43 = scmp.ne.s32.totalorder %s26, %s42
    %p44 = scmp.eq.s32.totalorder %s18, 0
    %p45 = por %p43, %p44
    %s47 = sadd.s32 %s46, 1
    %p50 = scmp.eq.s32.totalorder %s12, 1
    %p51 = scmp.ne.s32.totalorder %s46, %s48
    %p52 = scmp.eq.s32.totalorder %s12, 0
    %p53 = por %p51, %p52
    %p54 = scmp.ne.s32.totalorder %s46, %s48
    %p55 = scmp.eq.s32.totalorder %s17, 1
    %p56 = por %p54, %p55
    %p57 = scmp.ne.s32.totalorder %s48, %s49
    %p58 = scmp.eq.s32.totalorder %s17, 0
    %p59 = por %p57, %p58
    %p60 = scmp.ne.s32.totalorder %s48, %s49
    %p61 = scmp.eq.s32.totalorder %s18, 1
    %p62 = por %p60, %p61
    %p64 = scmp.ne.s32.totalorder %s49, %s63
    %p65 = scmp.eq.s32.totalorder %s18, 0
    %p66 = por %p64, %p65
    %s68 = sadd.s32 %s67, 1
    %p71 = scmp.eq.s32.totalorder %s12, 1
    %p72 = scmp.ne.s32.totalorder %s67, %s69
    %p73 = scmp.eq.s32.totalorder %s12, 0
    %p74 = por %p72, %p73
    %p75 = scmp.ne.s32.totalorder %s67, %s69
    %p76 = scmp.eq.s32.totalorder %s17, 1
    %p77 = por %p75, %p76
    %p78 = scmp.ne.s32.totalorder %s69, %s70
    %p79 = scmp.eq.s32.totalorder %s17, 0
    %p80 = por %p78, %p79
    %p81 = scmp.ne.s32.totalorder %s69, %s70
    %p82 = scmp.eq.s32.totalorder %s18, 1
    %p83 = por %p81, %p82
    %p85 = scmp.ne.s32.totalorder %s70, %s84
    %p86 = scmp.eq.s32.totalorder %s18, 0
    %p87 = por %p85, %p86
    %s89 = sadd.s32 %s88, 1
    %p92 = scmp.eq.s32.totalorder %s12, 1
    %p93 = scmp.ne.s32.totalorder %s88, %s90
    %p94 = scmp.eq.s32.totalorder %s12, 0
    %p95 = por %p93, %p94
    %p96 = scmp.ne.s32.totalorder %s88, %s90
    %p97 = scmp.eq.s32.totalorder %s17, 1
    %p98 = por %p96, %p97
    %p99 = scmp.ne.s32.totalorder %s90, %s91
    %p100 = scmp.eq.s32.totalorder %s17, 0
    %p101 = por %p99, %p100
    %p102 = scmp.ne.s32.totalorder %s90, %s91
    %p103 = scmp.eq.s32.totalorder %s18, 1
    %p104 = por %p102, %p103
    %p106 = scmp.ne.s32.totalorder %s91, %s105
    %p107 = scmp.eq.s32.totalorder %s18, 0
    %p108 = por %p106, %p107
    %s110 = sadd.s32 %s109, 1
    %p113 = scmp.eq.s32.totalorder %s12, 1
    %p114 = scmp.ne.s32.totalorder %s109, %s111
    %p115 = scmp.eq.s32.totalorder %s12, 0
    %p116 = por %p114, %p115
    %p117 = scmp.ne.s32.totalorder %s109, %s111
    %p118 = scmp.eq.s32.totalorder %s17, 1
    %p119 = por %p117, %p118
    %p120 = scmp.ne.s32.totalorder %s111, %s112
    %p121 = scmp.eq.s32.totalorder %s17, 0
    %p122 = por %p120, %p121
    %p123 = scmp.ne.s32.totalorder %s111, %s112
    %p124 = scmp.eq.s32.totalorder %s18, 1
    %p125 = por %p123, %p124
    %p127 = scmp.ne.s32.totalorder %s112, %s126
    %p128 = scmp.eq.s32.totalorder %s18, 0
    %p129 = por %p127, %p128
    %s131 = sadd.s32 %s130, 1
    %p134 = scmp.eq.s32.totalorder %s12, 1
    %p135 = scmp.ne.s32.totalorder %s130, %s132
    %p136 = scmp.eq.s32.totalorder %s12, 0
    %p137 = por %p135, %p136
    %p138 = scmp.ne.s32.totalorder %s130, %s132
    %p139 = scmp.eq.s32.totalorder %s17, 1
    %p140 = por %p138, %p139
    %p141 = scmp.ne.s32.totalorder %s132, %s133
    %p142 = scmp.eq.s32.totalorder %s17, 0
    %p143 = por %p141, %p142
    %p144 = scmp.ne.s32.totalorder %s132, %s133
    %p145 = scmp.eq.s32.totalorder %s18, 1
    %p146 = por %p144, %p145
    %p148 = scmp.ne.s32.totalorder %s133, %s147
    %p149 = scmp.eq.s32.totalorder %s18, 0
    %p150 = por %p148, %p149
    %s151 = ssub.s32 %s12, %s19
    %p152 = scmp.eq.s32.totalorder %s151, 0
    %s154 = sadd.s32 %s153, 1
    %s155 = scalar_select %p152, %s153, %s154
    %p158 = pneg %p152
    %p159 = scmp.eq.s32.totalorder %s12, 1
    %p160 = por %p158, %p159
    %p161 = scmp.ne.s32.totalorder %s153, %s156
    %p162 = scmp.eq.s32.totalorder %s12, 0
    %p163 = por %p161, %p162
    %p164 = scmp.ne.s32.totalorder %s153, %s156
    %p165 = scmp.eq.s32.totalorder %s17, 1
    %p166 = por %p164, %p165
    %p167 = scmp.ne.s32.totalorder %s156, %s157
    %p168 = scmp.eq.s32.totalorder %s17, 0
    %p169 = por %p167, %p168
    %p170 = scmp.ne.s32.totalorder %s156, %s157
    %p171 = scmp.eq.s32.totalorder %s18, 1
    %p172 = por %p170, %p171
    %p174 = scmp.ne.s32.totalorder %s157, %s173
    %p175 = scmp.eq.s32.totalorder %s18, 0
    %p176 = por %p174, %p175
    %p177 = scmp.le.s32.totalorder 1, %s12
    %p178 = scmp.lt.s32.totalorder %s12, 3
    %p179 = pnand %p177, %p178
    %p180 = pneg %p179
    // Predicated region
    $region9: #{host_img_transformer_decoder_hybrid.3} parent=5 // pred_check
      _
    $region10: #{host_img_transformer_decoder_hybrid.3} parent=5 // pred_check_branch
      %182 = sbr.rel (%p179) target = $region12
    $region11: #{host_img_transformer_decoder_hybrid.3} parent=5 // pred_region
      %s183 = ssub.s32 %s12, 1
      // Predicated region
      $region13: #{host_img_transformer_decoder_hybrid.3} parent=11 // pred_check
        %p184 = pneg %p59
      $region14: #{host_img_transformer_decoder_hybrid.3} parent=11 // pred_check_branch
        %186 = sbr.rel (%p184) target = $region16
      $region15: #{host_img_transformer_decoder_hybrid.3} parent=11 // pred_region
        _
      $region16: #{host_img_transformer_decoder_hybrid.3} parent=11 // pred_fallthru
        _
      // Predicated region
      $region17: #{host_img_transformer_decoder_hybrid.3} parent=11 // pred_check
        %p187 = pneg %p80
      $region18: #{host_img_transformer_decoder_hybrid.3} parent=11 // pred_check_branch
        %189 = sbr.rel (%p187) target = $region20
      $region19: #{host_img_transformer_decoder_hybrid.3} parent=11 // pred_region
        _
      $region20: #{host_img_transformer_decoder_hybrid.3} parent=11 // pred_fallthru
        _
      // Predicated region
      $region21: #{host_img_transformer_decoder_hybrid.3} parent=11 // pred_check
        %p190 = pneg %p101
      $region22: #{host_img_transformer_decoder_hybrid.3} parent=11 // pred_check_branch
        %192 = sbr.rel (%p190) target = $region24
      $region23: #{host_img_transformer_decoder_hybrid.3} parent=11 // pred_region
        _
      $region24: #{host_img_transformer_decoder_hybrid.3} parent=11 // pred_fallthru
        _
      // Predicated region
      $region25: #{host_img_transformer_decoder_hybrid.3} parent=11 // pred_check
        %p193 = pneg %p122
      $region26: #{host_img_transformer_decoder_hybrid.3} parent=11 // pred_check_branch
        %195 = sbr.rel (%p193) target = $region28
      $region27: #{host_img_transformer_decoder_hybrid.3} parent=11 // pred_region
        _
      $region28: #{host_img_transformer_decoder_hybrid.3} parent=11 // pred_fallthru
        _
      // Predicated region
      $region29: #{host_img_transformer_decoder_hybrid.3} parent=11 // pred_check
        %p196 = pneg %p143
      $region30: #{host_img_transformer_decoder_hybrid.3} parent=11 // pred_check_branch
        %198 = sbr.rel (%p196) target = $region32
      $region31: #{host_img_transformer_decoder_hybrid.3} parent=11 // pred_region
        _
      $region32: #{host_img_transformer_decoder_hybrid.3} parent=11 // pred_fallthru
        _
    $region12: #{host_img_transformer_decoder_hybrid.3} parent=5 // pred_fallthru
      _
    %p199 = scmp.lt.s32.totalorder %s12, 2
    // Predicated region
    $region33: #{host_img_transformer_decoder_hybrid.3} parent=5 // pred_check
      %p200 = pneg %p199
    $region34: #{host_img_transformer_decoder_hybrid.3} parent=5 // pred_check_branch
      %202 = sbr.rel (%p200) target = $region36
    $region35: #{host_img_transformer_decoder_hybrid.3} parent=5 // pred_region
      // Predicated region
      $region37: #{host_img_transformer_decoder_hybrid.3} parent=35 // pred_check
        %p203 = pneg %p32
      $region38: #{host_img_transformer_decoder_hybrid.3} parent=35 // pred_check_branch
        %205 = sbr.rel (%p203) target = $region40
      $region39: #{host_img_transformer_decoder_hybrid.3} parent=35 // pred_region
        %p206 = scmp.lt.s32.totalorder %s12, 1
        %s207 = scalar_select %p206, %s12, 1
        %s208 = smul.addr %s207, 16
        %s209 = smul.addr %s208, 4
        %s210 = scalar_lea.vmem %s0, %s209
      $region40: #{host_img_transformer_decoder_hybrid.3} parent=35 // pred_fallthru
        _
    $region36: #{host_img_transformer_decoder_hybrid.3} parent=5 // pred_fallthru
      _
    %p211 = scmp.le.s32.totalorder 1, %s12
    %p212 = scmp.lt.s32.totalorder %s12, 3
    %p213 = pnand %p211, %p212
    %p214 = pneg %p213
    // Predicated region
    $region41: #{host_img_transformer_decoder_hybrid.3} parent=5 // pred_check
      _
    $region42: #{host_img_transformer_decoder_hybrid.3} parent=5 // pred_check_branch
      %216 = sbr.rel (%p213) target = $region44
    $region43: #{host_img_transformer_decoder_hybrid.3} parent=5 // pred_region
      %s217 = ssub.s32 %s12, 1
      %p218 = scmp.lt.s32.totalorder %s17, 1
      %s219 = scalar_select %p218, %s17, 1
      %s220 = smul.addr %s219, 16
      %s221 = smul.addr %s220, 4
      %s222 = scalar_lea.vmem %s0, %s221
      %p223 = pneg %p38
      %p224 = pneg %p35
      %p225 = pneg %p59
      %p226 = pneg %p56
      %p227 = pneg %p80
      %p228 = pneg %p77
      %p229 = pneg %p101
      %p230 = pneg %p98
      %p231 = pneg %p122
      %p232 = pneg %p119
      %p233 = pneg %p143
      %p234 = pneg %p140
      %p235 = pneg %p169
      %p236 = pneg %p166
      %p237 = scmp.lt.s32.totalorder %s17, 1
      %s238 = scalar_select %p237, %s17, 1
      %s239 = smul.addr %s238, 3
      %s240 = smul.addr %s239, 8
      %s241 = scalar_lea.vmem %s6, %s240
      %p242 = scmp.lt.s32.totalorder %s17, 1
      %s243 = scalar_select %p242, %s17, 1
      %s244 = smul.addr %s243, 16
      %s245 = smul.addr %s244, 4
      %s246 = scalar_lea.vmem %s0, %s245
      %p247 = scmp.lt.s32.totalorder %s17, 1
      %s248 = scalar_select %p247, %s17, 1
      %s249 = smul.addr %s248, 3
      %s250 = smul.addr %s249, 8
      %s251 = scalar_lea.vmem %s6, %s250
      %v252 = vld [vmem:[%s246] sm:$0xff]
      %v253 = vld [vmem:[%s246 + $0x8] sm:$0xff]
      %v254 = vld [vmem:[%s246 + $0x10] sm:$0xff]
      %v255 = vld [vmem:[%s246 + $0x18] sm:$0xff]
      %v256 = vld [vmem:[%s246 + $0x20] sm:$0xff]
      %v257 = vld [vmem:[%s246 + $0x28] sm:$0xff]
      %v258 = vld [vmem:[%s246 + $0x30] sm:$0xff]
      %v259 = vld [vmem:[%s246 + $0x38] sm:$0xff]
      %v268 = vunpack.c.l.b16 %v252
      %v269 = vunpack.c.h.b16 %v252
      %v270 = vunpack.c.l.b16 %v253
      %v271 = vunpack.c.h.b16 %v253
      %v272 = vunpack.c.l.b16 %v254
      %v273 = vunpack.c.h.b16 %v254
      %v274 = vunpack.c.l.b16 %v255
      %v275 = vunpack.c.h.b16 %v255
      %v276 = vunpack.c.l.b16 %v256
      %v277 = vunpack.c.h.b16 %v256
      %v278 = vunpack.c.l.b16 %v257
      %v279 = vunpack.c.h.b16 %v257
      %v280 = vunpack.c.l.b16 %v258
      %v281 = vunpack.c.h.b16 %v258
      %v282 = vunpack.c.l.b16 %v259
      %v283 = vunpack.c.h.b16 %v259
      %v284 = vpack.c.b16 %v272, %v268
      %v285 = vpack.c.b16 %v273, %v269
      %v286 = vpack.c.b16 %v274, %v270
      %v287 = vpack.c.b16 %v275, %v271
      %v288 = vpack.c.b16 %v280, %v276
      %v289 = vpack.c.b16 %v281, %v277
      %v290 = vpack.c.b16 %v282, %v278
      %v291 = vpack.c.b16 %v283, %v279
      %292 = vrot.lane.b32.xlu0 %v284, 127
      %v293 = vpop.permute.xlu0 %292
      %294 = vrot.lane.b32.xlu0 %v285, 127
      %v295 = vpop.permute.xlu0 %294
      %296 = vrot.lane.b32.xlu0 %v286, 127
      %v297 = vpop.permute.xlu0 %296
      %298 = vrot.lane.b32.xlu0 %v287, 127
      %v299 = vpop.permute.xlu0 %298
      %300 = vrot.lane.b32.xlu0 %v288, 127
      %v301 = vpop.permute.xlu0 %300
      %302 = vrot.lane.b32.xlu0 %v289, 127
      %v303 = vpop.permute.xlu0 %302
      %304 = vrot.lane.b32.xlu0 %v290, 127
      %v305 = vpop.permute.xlu0 %304
      %306 = vrot.lane.b32.xlu0 %v291, 127
      %v307 = vpop.permute.xlu0 %306
      %vm308 = vcmask 1039360
      %v309 = vsel %vm308, %v293, %v295
      %v310 = vsel %vm308, %v295, %v297
      %v311 = vsel %vm308, %v297, %v299
      %v312 = vsel %vm308, %v301, %v303
      %v313 = vsel %vm308, %v303, %v305
      %v314 = vsel %vm308, %v305, %v307
      %315 = vrot.lane.b32.xlu0 %v284, 126
      %v316 = vpop.permute.xlu0 %315
      %317 = vrot.lane.b32.xlu0 %v285, 126
      %v318 = vpop.permute.xlu0 %317
      %319 = vrot.lane.b32.xlu0 %v286, 126
      %v320 = vpop.permute.xlu0 %319
      %321 = vrot.lane.b32.xlu0 %v287, 126
      %v322 = vpop.permute.xlu0 %321
      %323 = vrot.lane.b32.xlu0 %v288, 126
      %v324 = vpop.permute.xlu0 %323
      %325 = vrot.lane.b32.xlu0 %v289, 126
      %v326 = vpop.permute.xlu0 %325
      %327 = vrot.lane.b32.xlu0 %v290, 126
      %v328 = vpop.permute.xlu0 %327
      %329 = vrot.lane.b32.xlu0 %v291, 126
      %v330 = vpop.permute.xlu0 %329
      %vm331 = vcmask 1031168
      %v332 = vsel %vm331, %v316, %v318
      %v333 = vsel %vm331, %v318, %v320
      %v334 = vsel %vm331, %v320, %v322
      %v335 = vsel %vm331, %v324, %v326
      %v336 = vsel %vm331, %v326, %v328
      %v337 = vsel %vm331, %v328, %v330
      %338 = vrot.lane.b32.xlu0 %v284, 125
      %v339 = vpop.permute.xlu0 %338
      %340 = vrot.lane.b32.xlu0 %v285, 125
      %v341 = vpop.permute.xlu0 %340
      %342 = vrot.lane.b32.xlu0 %v286, 125
      %v343 = vpop.permute.xlu0 %342
      %344 = vrot.lane.b32.xlu0 %v287, 125
      %v345 = vpop.permute.xlu0 %344
      %346 = vrot.lane.b32.xlu0 %v288, 125
      %v347 = vpop.permute.xlu0 %346
      %348 = vrot.lane.b32.xlu0 %v289, 125
      %v349 = vpop.permute.xlu0 %348
      %350 = vrot.lane.b32.xlu0 %v290, 125
      %v351 = vpop.permute.xlu0 %350
      %352 = vrot.lane.b32.xlu0 %v291, 125
      %v353 = vpop.permute.xlu0 %352
      %vm354 = vcmask 1022976
      %v355 = vsel %vm354, %v339, %v341
      %v356 = vsel %vm354, %v341, %v343
      %v357 = vsel %vm354, %v343, %v345
      %v358 = vsel %vm354, %v347, %v349
      %v359 = vsel %vm354, %v349, %v351
      %v360 = vsel %vm354, %v351, %v353
      %361 = vrot.lane.b32.xlu0 %v284, 109
      %v362 = vpop.permute.xlu0 %361
      %363 = vrot.lane.b32.xlu0 %v285, 109
      %v364 = vpop.permute.xlu0 %363
      %365 = vrot.lane.b32.xlu0 %v286, 109
      %v366 = vpop.permute.xlu0 %365
      %367 = vrot.lane.b32.xlu0 %v287, 109
      %v368 = vpop.permute.xlu0 %367
      %369 = vrot.lane.b32.xlu0 %v288, 109
      %v370 = vpop.permute.xlu0 %369
      %371 = vrot.lane.b32.xlu0 %v289, 109
      %v372 = vpop.permute.xlu0 %371
      %373 = vrot.lane.b32.xlu0 %v290, 109
      %v374 = vpop.permute.xlu0 %373
      %375 = vrot.lane.b32.xlu0 %v291, 109
      %v376 = vpop.permute.xlu0 %375
      %vm377 = vcmask 891904
      %v378 = vsel %vm377, %v362, %v364
      %v379 = vsel %vm377, %v364, %v366
      %v380 = vsel %vm377, %v366, %v368
      %v381 = vsel %vm377, %v370, %v372
      %v382 = vsel %vm377, %v372, %v374
      %v383 = vsel %vm377, %v374, %v376
      %384 = vrot.lane.b32.xlu0 %v284, 108
      %v385 = vpop.permute.xlu0 %384
      %386 = vrot.lane.b32.xlu0 %v285, 108
      %v387 = vpop.permute.xlu0 %386
      %388 = vrot.lane.b32.xlu0 %v286, 108
      %v389 = vpop.permute.xlu0 %388
      %390 = vrot.lane.b32.xlu0 %v287, 108
      %v391 = vpop.permute.xlu0 %390
      %392 = vrot.lane.b32.xlu0 %v288, 108
      %v393 = vpop.permute.xlu0 %392
      %394 = vrot.lane.b32.xlu0 %v289, 108
      %v395 = vpop.permute.xlu0 %394
      %396 = vrot.lane.b32.xlu0 %v290, 108
      %v397 = vpop.permute.xlu0 %396
      %398 = vrot.lane.b32.xlu0 %v291, 108
      %v399 = vpop.permute.xlu0 %398
      %vm400 = vcmask 883712
      %v401 = vsel %vm400, %v385, %v387
      %v402 = vsel %vm400, %v387, %v389
      %v403 = vsel %vm400, %v389, %v391
      %v404 = vsel %vm400, %v393, %v395
      %v405 = vsel %vm400, %v395, %v397
      %v406 = vsel %vm400, %v397, %v399
      %407 = vrot.lane.b32.xlu0 %v284, 107
      %v408 = vpop.permute.xlu0 %407
      %409 = vrot.lane.b32.xlu0 %v285, 107
      %v410 = vpop.permute.xlu0 %409
      %411 = vrot.lane.b32.xlu0 %v286, 107
      %v412 = vpop.permute.xlu0 %411
      %413 = vrot.lane.b32.xlu0 %v287, 107
      %v414 = vpop.permute.xlu0 %413
      %415 = vrot.lane.b32.xlu0 %v288, 107
      %v416 = vpop.permute.xlu0 %415
      %417 = vrot.lane.b32.xlu0 %v289, 107
      %v418 = vpop.permute.xlu0 %417
      %419 = vrot.lane.b32.xlu0 %v290, 107
      %v420 = vpop.permute.xlu0 %419
      %421 = vrot.lane.b32.xlu0 %v291, 107
      %v422 = vpop.permute.xlu0 %421
      %vm423 = vcmask 875520
      %v424 = vsel %vm423, %v408, %v410
      %v425 = vsel %vm423, %v410, %v412
      %v426 = vsel %vm423, %v412, %v414
      %v427 = vsel %vm423, %v416, %v418
      %v428 = vsel %vm423, %v418, %v420
      %v429 = vsel %vm423, %v420, %v422
      %430 = vrot.lane.b32.xlu0 %v284, 106
      %v431 = vpop.permute.xlu0 %430
      %432 = vrot.lane.b32.xlu0 %v285, 106
      %v433 = vpop.permute.xlu0 %432
      %434 = vrot.lane.b32.xlu0 %v286, 106
      %v435 = vpop.permute.xlu0 %434
      %436 = vrot.lane.b32.xlu0 %v287, 106
      %v437 = vpop.permute.xlu0 %436
      %438 = vrot.lane.b32.xlu0 %v288, 106
      %v439 = vpop.permute.xlu0 %438
      %440 = vrot.lane.b32.xlu0 %v289, 106
      %v441 = vpop.permute.xlu0 %440
      %442 = vrot.lane.b32.xlu0 %v290, 106
      %v443 = vpop.permute.xlu0 %442
      %444 = vrot.lane.b32.xlu0 %v291, 106
      %v445 = vpop.permute.xlu0 %444
      %vm446 = vcmask 867328
      %v447 = vsel %vm446, %v431, %v433
      %v448 = vsel %vm446, %v433, %v435
      %v449 = vsel %vm446, %v435, %v437
      %v450 = vsel %vm446, %v439, %v441
      %v451 = vsel %vm446, %v441, %v443
      %v452 = vsel %vm446, %v443, %v445
      %453 = vrot.lane.b32.xlu0 %v284, 90
      %v454 = vpop.permute.xlu0 %453
      %455 = vrot.lane.b32.xlu0 %v285, 90
      %v456 = vpop.permute.xlu0 %455
      %457 = vrot.lane.b32.xlu0 %v286, 90
      %v458 = vpop.permute.xlu0 %457
      %459 = vrot.lane.b32.xlu0 %v287, 90
      %v460 = vpop.permute.xlu0 %459
      %461 = vrot.lane.b32.xlu0 %v288, 90
      %v462 = vpop.permute.xlu0 %461
      %463 = vrot.lane.b32.xlu0 %v289, 90
      %v464 = vpop.permute.xlu0 %463
      %465 = vrot.lane.b32.xlu0 %v290, 90
      %v466 = vpop.permute.xlu0 %465
      %467 = vrot.lane.b32.xlu0 %v291, 90
      %v468 = vpop.permute.xlu0 %467
      %vm469 = vcmask 736256
      %v470 = vsel %vm469, %v454, %v456
      %v471 = vsel %vm469, %v456, %v458
      %v472 = vsel %vm469, %v458, %v460
      %v473 = vsel %vm469, %v462, %v464
      %v474 = vsel %vm469, %v464, %v466
      %v475 = vsel %vm469, %v466, %v468
      %476 = vrot.lane.b32.xlu0 %v284, 89
      %v477 = vpop.permute.xlu0 %476
      %478 = vrot.lane.b32.xlu0 %v285, 89
      %v479 = vpop.permute.xlu0 %478
      %480 = vrot.lane.b32.xlu0 %v286, 89
      %v481 = vpop.permute.xlu0 %480
      %482 = vrot.lane.b32.xlu0 %v287, 89
      %v483 = vpop.permute.xlu0 %482
      %484 = vrot.lane.b32.xlu0 %v288, 89
      %v485 = vpop.permute.xlu0 %484
      %486 = vrot.lane.b32.xlu0 %v289, 89
      %v487 = vpop.permute.xlu0 %486
      %488 = vrot.lane.b32.xlu0 %v290, 89
      %v489 = vpop.permute.xlu0 %488
      %490 = vrot.lane.b32.xlu0 %v291, 89
      %v491 = vpop.permute.xlu0 %490
      %vm492 = vcmask 728064
      %v493 = vsel %vm492, %v477, %v479
      %v494 = vsel %vm492, %v479, %v481
      %v495 = vsel %vm492, %v481, %v483
      %v496 = vsel %vm492, %v485, %v487
      %v497 = vsel %vm492, %v487, %v489
      %v498 = vsel %vm492, %v489, %v491
      %499 = vrot.lane.b32.xlu0 %v284, 88
      %v500 = vpop.permute.xlu0 %499
      %501 = vrot.lane.b32.xlu0 %v285, 88
      %v502 = vpop.permute.xlu0 %501
      %503 = vrot.lane.b32.xlu0 %v286, 88
      %v504 = vpop.permute.xlu0 %503
      %505 = vrot.lane.b32.xlu0 %v287, 88
      %v506 = vpop.permute.xlu0 %505
      %507 = vrot.lane.b32.xlu0 %v288, 88
      %v508 = vpop.permute.xlu0 %507
      %509 = vrot.lane.b32.xlu0 %v289, 88
      %v510 = vpop.permute.xlu0 %509
      %511 = vrot.lane.b32.xlu0 %v290, 88
      %v512 = vpop.permute.xlu0 %511
      %513 = vrot.lane.b32.xlu0 %v291, 88
      %v514 = vpop.permute.xlu0 %513
      %vm515 = vcmask 719872
      %v516 = vsel %vm515, %v500, %v502
      %v517 = vsel %vm515, %v502, %v504
      %v518 = vsel %vm515, %v504, %v506
      %v519 = vsel %vm515, %v508, %v510
      %v520 = vsel %vm515, %v510, %v512
      %v521 = vsel %vm515, %v512, %v514
      %522 = vrot.lane.b32.xlu0 %v284, 87
      %v523 = vpop.permute.xlu0 %522
      %524 = vrot.lane.b32.xlu0 %v285, 87
      %v525 = vpop.permute.xlu0 %524
      %526 = vrot.lane.b32.xlu0 %v286, 87
      %v527 = vpop.permute.xlu0 %526
      %528 = vrot.lane.b32.xlu0 %v287, 87
      %v529 = vpop.permute.xlu0 %528
      %530 = vrot.lane.b32.xlu0 %v288, 87
      %v531 = vpop.permute.xlu0 %530
      %532 = vrot.lane.b32.xlu0 %v289, 87
      %v533 = vpop.permute.xlu0 %532
      %534 = vrot.lane.b32.xlu0 %v290, 87
      %v535 = vpop.permute.xlu0 %534
      %536 = vrot.lane.b32.xlu0 %v291, 87
      %v537 = vpop.permute.xlu0 %536
      %vm538 = vcmask 711680
      %v539 = vsel %vm538, %v523, %v525
      %v540 = vsel %vm538, %v525, %v527
      %v541 = vsel %vm538, %v527, %v529
      %v542 = vsel %vm538, %v531, %v533
      %v543 = vsel %vm538, %v533, %v535
      %v544 = vsel %vm538, %v535, %v537
      %545 = vrot.lane.b32.xlu0 %v284, 71
      %v546 = vpop.permute.xlu0 %545
      %547 = vrot.lane.b32.xlu0 %v285, 71
      %v548 = vpop.permute.xlu0 %547
      %549 = vrot.lane.b32.xlu0 %v286, 71
      %v550 = vpop.permute.xlu0 %549
      %551 = vrot.lane.b32.xlu0 %v287, 71
      %v552 = vpop.permute.xlu0 %551
      %553 = vrot.lane.b32.xlu0 %v288, 71
      %v554 = vpop.permute.xlu0 %553
      %555 = vrot.lane.b32.xlu0 %v289, 71
      %v556 = vpop.permute.xlu0 %555
      %557 = vrot.lane.b32.xlu0 %v290, 71
      %v558 = vpop.permute.xlu0 %557
      %559 = vrot.lane.b32.xlu0 %v291, 71
      %v560 = vpop.permute.xlu0 %559
      %vm561 = vcmask 580608
      %v562 = vsel %vm561, %v546, %v548
      %v563 = vsel %vm561, %v548, %v550
      %v564 = vsel %vm561, %v550, %v552
      %v565 = vsel %vm561, %v554, %v556
      %v566 = vsel %vm561, %v556, %v558
      %v567 = vsel %vm561, %v558, %v560
      %568 = vrot.lane.b32.xlu0 %v284, 70
      %v569 = vpop.permute.xlu0 %568
      %570 = vrot.lane.b32.xlu0 %v285, 70
      %v571 = vpop.permute.xlu0 %570
      %572 = vrot.lane.b32.xlu0 %v286, 70
      %v573 = vpop.permute.xlu0 %572
      %574 = vrot.lane.b32.xlu0 %v287, 70
      %v575 = vpop.permute.xlu0 %574
      %576 = vrot.lane.b32.xlu0 %v288, 70
      %v577 = vpop.permute.xlu0 %576
      %578 = vrot.lane.b32.xlu0 %v289, 70
      %v579 = vpop.permute.xlu0 %578
      %580 = vrot.lane.b32.xlu0 %v290, 70
      %v581 = vpop.permute.xlu0 %580
      %582 = vrot.lane.b32.xlu0 %v291, 70
      %v583 = vpop.permute.xlu0 %582
      %vm584 = vcmask 572416
      %v585 = vsel %vm584, %v569, %v571
      %v586 = vsel %vm584, %v571, %v573
      %v587 = vsel %vm584, %v573, %v575
      %v588 = vsel %vm584, %v577, %v579
      %v589 = vsel %vm584, %v579, %v581
      %v590 = vsel %vm584, %v581, %v583
      %591 = vrot.lane.b32.xlu0 %v284, 69
      %v592 = vpop.permute.xlu0 %591
      %593 = vrot.lane.b32.xlu0 %v285, 69
      %v594 = vpop.permute.xlu0 %593
      %595 = vrot.lane.b32.xlu0 %v286, 69
      %v596 = vpop.permute.xlu0 %595
      %597 = vrot.lane.b32.xlu0 %v287, 69
      %v598 = vpop.permute.xlu0 %597
      %599 = vrot.lane.b32.xlu0 %v288, 69
      %v600 = vpop.permute.xlu0 %599
      %601 = vrot.lane.b32.xlu0 %v289, 69
      %v602 = vpop.permute.xlu0 %601
      %603 = vrot.lane.b32.xlu0 %v290, 69
      %v604 = vpop.permute.xlu0 %603
      %605 = vrot.lane.b32.xlu0 %v291, 69
      %v606 = vpop.permute.xlu0 %605
      %vm607 = vcmask 564224
      %v608 = vsel %vm607, %v592, %v594
      %v609 = vsel %vm607, %v594, %v596
      %v610 = vsel %vm607, %v596, %v598
      %v611 = vsel %vm607, %v600, %v602
      %v612 = vsel %vm607, %v602, %v604
      %v613 = vsel %vm607, %v604, %v606
      %614 = vrot.lane.b32.xlu0 %v284, 68
      %v615 = vpop.permute.xlu0 %614
      %616 = vrot.lane.b32.xlu0 %v285, 68
      %v617 = vpop.permute.xlu0 %616
      %618 = vrot.lane.b32.xlu0 %v286, 68
      %v619 = vpop.permute.xlu0 %618
      %620 = vrot.lane.b32.xlu0 %v287, 68
      %v621 = vpop.permute.xlu0 %620
      %622 = vrot.lane.b32.xlu0 %v288, 68
      %v623 = vpop.permute.xlu0 %622
      %624 = vrot.lane.b32.xlu0 %v289, 68
      %v625 = vpop.permute.xlu0 %624
      %626 = vrot.lane.b32.xlu0 %v290, 68
      %v627 = vpop.permute.xlu0 %626
      %628 = vrot.lane.b32.xlu0 %v291, 68
      %v629 = vpop.permute.xlu0 %628
      %vm630 = vcmask 556032
      %v631 = vsel %vm630, %v615, %v617
      %v632 = vsel %vm630, %v617, %v619
      %v633 = vsel %vm630, %v619, %v621
      %v634 = vsel %vm630, %v623, %v625
      %v635 = vsel %vm630, %v625, %v627
      %v636 = vsel %vm630, %v627, %v629
      %v637 = vld [vmem:[%s2] sm:$0xff]
      %v638 = vld [vmem:[%s2 + $0x8] sm:$0xff]
      %v639 = vld [vmem:[%s2 + $0x10] sm:$0xff]
      %v640 = vld [vmem:[%s2 + $0x18] sm:$0xff]
      %v641 = vld [vmem:[%s2 + $0x20] sm:$0xff]
      %v642 = vld [vmem:[%s2 + $0x28] sm:$0xff]
      %v643 = vld [vmem:[%s2 + $0x30] sm:$0xff]
      %v644 = vld [vmem:[%s2 + $0x38] sm:$0xff]
      %v645 = vld [vmem:[%s2 + $0x40] sm:$0xff]
      %v646 = vld [vmem:[%s2 + $0x48] sm:$0xff]
      %v647 = vld [vmem:[%s2 + $0x50] sm:$0xff]
      %v648 = vld [vmem:[%s2 + $0x58] sm:$0xff]
      %v649 = vld [vmem:[%s2 + $0x60] sm:$0xff]
      %v650 = vld [vmem:[%s2 + $0x68] sm:$0xff]
      %v651 = vld [vmem:[%s2 + $0x70] sm:$0xff]
      %v652 = vld [vmem:[%s2 + $0x78] sm:$0xff]
      %v653 = vld [vmem:[%s2 + $0x80] sm:$0xff]
      %v654 = vld [vmem:[%s2 + $0x88] sm:$0xff]
      %v655 = vld [vmem:[%s2 + $0x90] sm:$0xff]
      %v656 = vld [vmem:[%s2 + $0x98] sm:$0xff]
      %v657 = vld [vmem:[%s2 + $0xa0] sm:$0xff]
      %v658 = vld [vmem:[%s2 + $0xa8] sm:$0xff]
      %v659 = vld [vmem:[%s2 + $0xb0] sm:$0xff]
      %v660 = vld [vmem:[%s2 + $0xb8] sm:$0xff]
      %v661 = vld [vmem:[%s2 + $0xc0] sm:$0xff]
      %v662 = vld [vmem:[%s2 + $0xc8] sm:$0xff]
      %v663 = vld [vmem:[%s2 + $0xd0] sm:$0xff]
      %v664 = vld [vmem:[%s2 + $0xd8] sm:$0xff]
      %v665 = vld [vmem:[%s2 + $0xe0] sm:$0xff]
      %v666 = vld [vmem:[%s2 + $0xe8] sm:$0xff]
      %v667 = vld [vmem:[%s2 + $0xf0] sm:$0xff]
      %v668 = vld [vmem:[%s2 + $0xf8] sm:$0xff]
      %v669 = vld [vmem:[%s3] sm:$0xff]
      %v670 = vld [vmem:[%s3 + $0x8] sm:$0xff]
      %v671 = vld [vmem:[%s3 + $0x10] sm:$0xff]
      %v672 = vld [vmem:[%s3 + $0x18] sm:$0xff]
      %v673 = vld [vmem:[%s3 + $0x20] sm:$0xff]
      %v674 = vld [vmem:[%s3 + $0x28] sm:$0xff]
      %v675 = vld [vmem:[%s3 + $0x30] sm:$0xff]
      %v676 = vld [vmem:[%s3 + $0x38] sm:$0xff]
      %v677 = vld [vmem:[%s3 + $0x40] sm:$0xff]
      %v678 = vld [vmem:[%s3 + $0x48] sm:$0xff]
      %v679 = vld [vmem:[%s3 + $0x50] sm:$0xff]
      %v680 = vld [vmem:[%s3 + $0x58] sm:$0xff]
      %v681 = vld [vmem:[%s3 + $0x60] sm:$0xff]
      %v682 = vld [vmem:[%s3 + $0x68] sm:$0xff]
      %v683 = vld [vmem:[%s3 + $0x70] sm:$0xff]
      %v684 = vld [vmem:[%s3 + $0x78] sm:$0xff]
      %686 = vset.pattern.permute.xlu0 0
      %687 = vperm.xlu0 %686, %v669
      %v688 = vpop.permute.xlu0 %687
      %691 = vset.pattern.permute.xlu0 0
      %692 = vperm.xlu0 %691, %v670
      %v693 = vpop.permute.xlu0 %692
      %696 = vset.pattern.permute.xlu0 0
      %697 = vperm.xlu0 %696, %v671
      %v698 = vpop.permute.xlu0 %697
      %701 = vset.pattern.permute.xlu0 0
      %702 = vperm.xlu0 %701, %v672
      %v703 = vpop.permute.xlu0 %702
      %706 = vset.pattern.permute.xlu0 0
      %707 = vperm.xlu0 %706, %v673
      %v708 = vpop.permute.xlu0 %707
      %711 = vset.pattern.permute.xlu0 0
      %712 = vperm.xlu0 %711, %v674
      %v713 = vpop.permute.xlu0 %712
      %716 = vset.pattern.permute.xlu0 0
      %717 = vperm.xlu0 %716, %v675
      %v718 = vpop.permute.xlu0 %717
      %721 = vset.pattern.permute.xlu0 0
      %722 = vperm.xlu0 %721, %v676
      %v723 = vpop.permute.xlu0 %722
      %726 = vset.pattern.permute.xlu0 0
      %727 = vperm.xlu0 %726, %v677
      %v728 = vpop.permute.xlu0 %727
      %731 = vset.pattern.permute.xlu0 0
      %732 = vperm.xlu0 %731, %v678
      %v733 = vpop.permute.xlu0 %732
      %736 = vset.pattern.permute.xlu0 0
      %737 = vperm.xlu0 %736, %v679
      %v738 = vpop.permute.xlu0 %737
      %741 = vset.pattern.permute.xlu0 0
      %742 = vperm.xlu0 %741, %v680
      %v743 = vpop.permute.xlu0 %742
      %746 = vset.pattern.permute.xlu0 0
      %747 = vperm.xlu0 %746, %v681
      %v748 = vpop.permute.xlu0 %747
      %751 = vset.pattern.permute.xlu0 0
      %752 = vperm.xlu0 %751, %v682
      %v753 = vpop.permute.xlu0 %752
      %756 = vset.pattern.permute.xlu0 0
      %757 = vperm.xlu0 %756, %v683
      %v758 = vpop.permute.xlu0 %757
      %761 = vset.pattern.permute.xlu0 0
      %762 = vperm.xlu0 %761, %v684
      %v763 = vpop.permute.xlu0 %762
      %v797 = vunpack.c.l.b16 %v637
      %v798 = vunpack.c.h.b16 %v637
      %v799 = vunpack.c.l.b16 %v638
      %v800 = vunpack.c.h.b16 %v638
      %v801 = vunpack.c.l.b16 %v639
      %v802 = vunpack.c.h.b16 %v639
      %v803 = vunpack.c.l.b16 %v640
      %v804 = vunpack.c.h.b16 %v640
      %v805 = vunpack.c.l.b16 %v641
      %v806 = vunpack.c.h.b16 %v641
      %v807 = vunpack.c.l.b16 %v642
      %v808 = vunpack.c.h.b16 %v642
      %v809 = vunpack.c.l.b16 %v643
      %v810 = vunpack.c.h.b16 %v643
      %v811 = vunpack.c.l.b16 %v644
      %v812 = vunpack.c.h.b16 %v644
      %v813 = vunpack.c.l.b16 %v645
      %v814 = vunpack.c.h.b16 %v645
      %v815 = vunpack.c.l.b16 %v646
      %v816 = vunpack.c.h.b16 %v646
      %v817 = vunpack.c.l.b16 %v647
      %v818 = vunpack.c.h.b16 %v647
      %v819 = vunpack.c.l.b16 %v648
      %v820 = vunpack.c.h.b16 %v648
      %v821 = vunpack.c.l.b16 %v649
      %v822 = vunpack.c.h.b16 %v649
      %v823 = vunpack.c.l.b16 %v650
      %v824 = vunpack.c.h.b16 %v650
      %v825 = vunpack.c.l.b16 %v651
      %v826 = vunpack.c.h.b16 %v651
      %v827 = vunpack.c.l.b16 %v652
      %v828 = vunpack.c.h.b16 %v652
      %v829 = vunpack.c.l.b16 %v653
      %v830 = vunpack.c.h.b16 %v653
      %v831 = vunpack.c.l.b16 %v654
      %v832 = vunpack.c.h.b16 %v654
      %v833 = vunpack.c.l.b16 %v655
      %v834 = vunpack.c.h.b16 %v655
      %v835 = vunpack.c.l.b16 %v656
      %v836 = vunpack.c.h.b16 %v656
      %v837 = vunpack.c.l.b16 %v657
      %v838 = vunpack.c.h.b16 %v657
      %v839 = vunpack.c.l.b16 %v658
      %v840 = vunpack.c.h.b16 %v658
      %v841 = vunpack.c.l.b16 %v659
      %v842 = vunpack.c.h.b16 %v659
      %v843 = vunpack.c.l.b16 %v660
      %v844 = vunpack.c.h.b16 %v660
      %v845 = vunpack.c.l.b16 %v661
      %v846 = vunpack.c.h.b16 %v661
      %v847 = vunpack.c.l.b16 %v662
      %v848 = vunpack.c.h.b16 %v662
      %v849 = vunpack.c.l.b16 %v663
      %v850 = vunpack.c.h.b16 %v663
      %v851 = vunpack.c.l.b16 %v664
      %v852 = vunpack.c.h.b16 %v664
      %v853 = vunpack.c.l.b16 %v665
      %v854 = vunpack.c.h.b16 %v665
      %v855 = vunpack.c.l.b16 %v666
      %v856 = vunpack.c.h.b16 %v666
      %v857 = vunpack.c.l.b16 %v667
      %v858 = vunpack.c.h.b16 %v667
      %v859 = vunpack.c.l.b16 %v668
      %v860 = vunpack.c.h.b16 %v668
      %v861 = vpack.c.b16 %v801, %v797
      %v862 = vpack.c.b16 %v802, %v798
      %v863 = vpack.c.b16 %v803, %v799
      %v864 = vpack.c.b16 %v804, %v800
      %v865 = vpack.c.b16 %v809, %v805
      %v866 = vpack.c.b16 %v810, %v806
      %v867 = vpack.c.b16 %v811, %v807
      %v868 = vpack.c.b16 %v812, %v808
      %v869 = vpack.c.b16 %v817, %v813
      %v870 = vpack.c.b16 %v818, %v814
      %v871 = vpack.c.b16 %v819, %v815
      %v872 = vpack.c.b16 %v820, %v816
      %v873 = vpack.c.b16 %v825, %v821
      %v874 = vpack.c.b16 %v826, %v822
      %v875 = vpack.c.b16 %v827, %v823
      %v876 = vpack.c.b16 %v828, %v824
      %v877 = vpack.c.b16 %v833, %v829
      %v878 = vpack.c.b16 %v834, %v830
      %v879 = vpack.c.b16 %v835, %v831
      %v880 = vpack.c.b16 %v836, %v832
      %v881 = vpack.c.b16 %v841, %v837
      %v882 = vpack.c.b16 %v842, %v838
      %v883 = vpack.c.b16 %v843, %v839
      %v884 = vpack.c.b16 %v844, %v840
      %v885 = vpack.c.b16 %v849, %v845
      %v886 = vpack.c.b16 %v850, %v846
      %v887 = vpack.c.b16 %v851, %v847
      %v888 = vpack.c.b16 %v852, %v848
      %v889 = vpack.c.b16 %v857, %v853
      %v890 = vpack.c.b16 %v858, %v854
      %v891 = vpack.c.b16 %v859, %v855
      %v892 = vpack.c.b16 %v860, %v856
      %925 = vrot.lane.b32.xlu0 %v284, 124
      %v926 = vpop.permute.xlu0 %925
      %927 = vrot.lane.b32.xlu0 %v285, 124
      %v928 = vpop.permute.xlu0 %927
      %929 = vrot.lane.b32.xlu0 %v286, 124
      %v930 = vpop.permute.xlu0 %929
      %931 = vrot.lane.b32.xlu0 %v287, 124
      %v932 = vpop.permute.xlu0 %931
      %933 = vrot.lane.b32.xlu0 %v288, 124
      %v934 = vpop.permute.xlu0 %933
      %935 = vrot.lane.b32.xlu0 %v289, 124
      %v936 = vpop.permute.xlu0 %935
      %937 = vrot.lane.b32.xlu0 %v290, 124
      %v938 = vpop.permute.xlu0 %937
      %939 = vrot.lane.b32.xlu0 %v291, 124
      %v940 = vpop.permute.xlu0 %939
      %941 = vrot.lane.b32.xlu0 %v309, 124
      %v942 = vpop.permute.xlu0 %941
      %943 = vrot.lane.b32.xlu0 %v310, 124
      %v944 = vpop.permute.xlu0 %943
      %945 = vrot.lane.b32.xlu0 %v311, 124
      %v946 = vpop.permute.xlu0 %945
      %947 = vrot.lane.b32.xlu0 %v299, 124
      %v948 = vpop.permute.xlu0 %947
      %949 = vrot.lane.b32.xlu0 %v312, 124
      %v950 = vpop.permute.xlu0 %949
      %951 = vrot.lane.b32.xlu0 %v313, 124
      %v952 = vpop.permute.xlu0 %951
      %953 = vrot.lane.b32.xlu0 %v314, 124
      %v954 = vpop.permute.xlu0 %953
      %955 = vrot.lane.b32.xlu0 %v307, 124
      %v956 = vpop.permute.xlu0 %955
      %957 = vrot.lane.b32.xlu0 %v332, 124
      %v958 = vpop.permute.xlu0 %957
      %959 = vrot.lane.b32.xlu0 %v333, 124
      %v960 = vpop.permute.xlu0 %959
      %961 = vrot.lane.b32.xlu0 %v334, 124
      %v962 = vpop.permute.xlu0 %961
      %963 = vrot.lane.b32.xlu0 %v322, 124
      %v964 = vpop.permute.xlu0 %963
      %965 = vrot.lane.b32.xlu0 %v335, 124
      %v966 = vpop.permute.xlu0 %965
      %967 = vrot.lane.b32.xlu0 %v336, 124
      %v968 = vpop.permute.xlu0 %967
      %969 = vrot.lane.b32.xlu0 %v337, 124
      %v970 = vpop.permute.xlu0 %969
      %971 = vrot.lane.b32.xlu0 %v330, 124
      %v972 = vpop.permute.xlu0 %971
      %973 = vrot.lane.b32.xlu0 %v355, 124
      %v974 = vpop.permute.xlu0 %973
      %975 = vrot.lane.b32.xlu0 %v356, 124
      %v976 = vpop.permute.xlu0 %975
      %977 = vrot.lane.b32.xlu0 %v357, 124
      %v978 = vpop.permute.xlu0 %977
      %979 = vrot.lane.b32.xlu0 %v345, 124
      %v980 = vpop.permute.xlu0 %979
      %981 = vrot.lane.b32.xlu0 %v358, 124
      %v982 = vpop.permute.xlu0 %981
      %983 = vrot.lane.b32.xlu0 %v359, 124
      %v984 = vpop.permute.xlu0 %983
      %985 = vrot.lane.b32.xlu0 %v360, 124
      %v986 = vpop.permute.xlu0 %985
      %987 = vrot.lane.b32.xlu0 %v353, 124
      %v988 = vpop.permute.xlu0 %987
      %989 = vrot.lane.b32.xlu0 %v378, 124
      %v990 = vpop.permute.xlu0 %989
      %991 = vrot.lane.b32.xlu0 %v379, 124
      %v992 = vpop.permute.xlu0 %991
      %993 = vrot.lane.b32.xlu0 %v380, 124
      %v994 = vpop.permute.xlu0 %993
      %995 = vrot.lane.b32.xlu0 %v368, 124
      %v996 = vpop.permute.xlu0 %995
      %997 = vrot.lane.b32.xlu0 %v381, 124
      %v998 = vpop.permute.xlu0 %997
      %999 = vrot.lane.b32.xlu0 %v382, 124
      %v1000 = vpop.permute.xlu0 %999
      %1001 = vrot.lane.b32.xlu0 %v383, 124
      %v1002 = vpop.permute.xlu0 %1001
      %1003 = vrot.lane.b32.xlu0 %v376, 124
      %v1004 = vpop.permute.xlu0 %1003
      %1005 = vrot.lane.b32.xlu0 %v401, 124
      %v1006 = vpop.permute.xlu0 %1005
      %1007 = vrot.lane.b32.xlu0 %v402, 124
      %v1008 = vpop.permute.xlu0 %1007
      %1009 = vrot.lane.b32.xlu0 %v403, 124
      %v1010 = vpop.permute.xlu0 %1009
      %1011 = vrot.lane.b32.xlu0 %v391, 124
      %v1012 = vpop.permute.xlu0 %1011
      %1013 = vrot.lane.b32.xlu0 %v404, 124
      %v1014 = vpop.permute.xlu0 %1013
      %1015 = vrot.lane.b32.xlu0 %v405, 124
      %v1016 = vpop.permute.xlu0 %1015
      %1017 = vrot.lane.b32.xlu0 %v406, 124
      %v1018 = vpop.permute.xlu0 %1017
      %1019 = vrot.lane.b32.xlu0 %v399, 124
      %v1020 = vpop.permute.xlu0 %1019
      %1021 = vrot.lane.b32.xlu0 %v424, 124
      %v1022 = vpop.permute.xlu0 %1021
      %1023 = vrot.lane.b32.xlu0 %v425, 124
      %v1024 = vpop.permute.xlu0 %1023
      %1025 = vrot.lane.b32.xlu0 %v426, 124
      %v1026 = vpop.permute.xlu0 %1025
      %1027 = vrot.lane.b32.xlu0 %v414, 124
      %v1028 = vpop.permute.xlu0 %1027
      %1029 = vrot.lane.b32.xlu0 %v427, 124
      %v1030 = vpop.permute.xlu0 %1029
      %1031 = vrot.lane.b32.xlu0 %v428, 124
      %v1032 = vpop.permute.xlu0 %1031
      %1033 = vrot.lane.b32.xlu0 %v429, 124
      %v1034 = vpop.permute.xlu0 %1033
      %1035 = vrot.lane.b32.xlu0 %v422, 124
      %v1036 = vpop.permute.xlu0 %1035
      %1037 = vrot.lane.b32.xlu0 %v447, 124
      %v1038 = vpop.permute.xlu0 %1037
      %1039 = vrot.lane.b32.xlu0 %v448, 124
      %v1040 = vpop.permute.xlu0 %1039
      %1041 = vrot.lane.b32.xlu0 %v449, 124
      %v1042 = vpop.permute.xlu0 %1041
      %1043 = vrot.lane.b32.xlu0 %v437, 124
      %v1044 = vpop.permute.xlu0 %1043
      %1045 = vrot.lane.b32.xlu0 %v450, 124
      %v1046 = vpop.permute.xlu0 %1045
      %1047 = vrot.lane.b32.xlu0 %v451, 124
      %v1048 = vpop.permute.xlu0 %1047
      %1049 = vrot.lane.b32.xlu0 %v452, 124
      %v1050 = vpop.permute.xlu0 %1049
      %1051 = vrot.lane.b32.xlu0 %v445, 124
      %v1052 = vpop.permute.xlu0 %1051
      %1053 = vrot.lane.b32.xlu0 %v470, 124
      %v1054 = vpop.permute.xlu0 %1053
      %1055 = vrot.lane.b32.xlu0 %v471, 124
      %v1056 = vpop.permute.xlu0 %1055
      %1057 = vrot.lane.b32.xlu0 %v472, 124
      %v1058 = vpop.permute.xlu0 %1057
      %1059 = vrot.lane.b32.xlu0 %v460, 124
      %v1060 = vpop.permute.xlu0 %1059
      %1061 = vrot.lane.b32.xlu0 %v473, 124
      %v1062 = vpop.permute.xlu0 %1061
      %1063 = vrot.lane.b32.xlu0 %v474, 124
      %v1064 = vpop.permute.xlu0 %1063
      %1065 = vrot.lane.b32.xlu0 %v475, 124
      %v1066 = vpop.permute.xlu0 %1065
      %1067 = vrot.lane.b32.xlu0 %v468, 124
      %v1068 = vpop.permute.xlu0 %1067
      %1069 = vrot.lane.b32.xlu0 %v493, 124
      %v1070 = vpop.permute.xlu0 %1069
      %1071 = vrot.lane.b32.xlu0 %v494, 124
      %v1072 = vpop.permute.xlu0 %1071
      %1073 = vrot.lane.b32.xlu0 %v495, 124
      %v1074 = vpop.permute.xlu0 %1073
      %1075 = vrot.lane.b32.xlu0 %v483, 124
      %v1076 = vpop.permute.xlu0 %1075
      %1077 = vrot.lane.b32.xlu0 %v496, 124
      %v1078 = vpop.permute.xlu0 %1077
      %1079 = vrot.lane.b32.xlu0 %v497, 124
      %v1080 = vpop.permute.xlu0 %1079
      %1081 = vrot.lane.b32.xlu0 %v498, 124
      %v1082 = vpop.permute.xlu0 %1081
      %1083 = vrot.lane.b32.xlu0 %v491, 124
      %v1084 = vpop.permute.xlu0 %1083
      %1085 = vrot.lane.b32.xlu0 %v516, 124
      %v1086 = vpop.permute.xlu0 %1085
      %1087 = vrot.lane.b32.xlu0 %v517, 124
      %v1088 = vpop.permute.xlu0 %1087
      %1089 = vrot.lane.b32.xlu0 %v518, 124
      %v1090 = vpop.permute.xlu0 %1089
      %1091 = vrot.lane.b32.xlu0 %v506, 124
      %v1092 = vpop.permute.xlu0 %1091
      %1093 = vrot.lane.b32.xlu0 %v519, 124
      %v1094 = vpop.permute.xlu0 %1093
      %1095 = vrot.lane.b32.xlu0 %v520, 124
      %v1096 = vpop.permute.xlu0 %1095
      %1097 = vrot.lane.b32.xlu0 %v521, 124
      %v1098 = vpop.permute.xlu0 %1097
      %1099 = vrot.lane.b32.xlu0 %v514, 124
      %v1100 = vpop.permute.xlu0 %1099
      %1101 = vrot.lane.b32.xlu0 %v539, 124
      %v1102 = vpop.permute.xlu0 %1101
      %1103 = vrot.lane.b32.xlu0 %v540, 124
      %v1104 = vpop.permute.xlu0 %1103
      %1105 = vrot.lane.b32.xlu0 %v541, 124
      %v1106 = vpop.permute.xlu0 %1105
      %1107 = vrot.lane.b32.xlu0 %v529, 124
      %v1108 = vpop.permute.xlu0 %1107
      %1109 = vrot.lane.b32.xlu0 %v542, 124
      %v1110 = vpop.permute.xlu0 %1109
      %1111 = vrot.lane.b32.xlu0 %v543, 124
      %v1112 = vpop.permute.xlu0 %1111
      %1113 = vrot.lane.b32.xlu0 %v544, 124
      %v1114 = vpop.permute.xlu0 %1113
      %1115 = vrot.lane.b32.xlu0 %v537, 124
      %v1116 = vpop.permute.xlu0 %1115
      %1117 = vrot.lane.b32.xlu0 %v562, 124
      %v1118 = vpop.permute.xlu0 %1117
      %1119 = vrot.lane.b32.xlu0 %v563, 124
      %v1120 = vpop.permute.xlu0 %1119
      %1121 = vrot.lane.b32.xlu0 %v564, 124
      %v1122 = vpop.permute.xlu0 %1121
      %1123 = vrot.lane.b32.xlu0 %v552, 124
      %v1124 = vpop.permute.xlu0 %1123
      %1125 = vrot.lane.b32.xlu0 %v565, 124
      %v1126 = vpop.permute.xlu0 %1125
      %1127 = vrot.lane.b32.xlu0 %v566, 124
      %v1128 = vpop.permute.xlu0 %1127
      %1129 = vrot.lane.b32.xlu0 %v567, 124
      %v1130 = vpop.permute.xlu0 %1129
      %1131 = vrot.lane.b32.xlu0 %v560, 124
      %v1132 = vpop.permute.xlu0 %1131
      %1133 = vrot.lane.b32.xlu0 %v585, 124
      %v1134 = vpop.permute.xlu0 %1133
      %1135 = vrot.lane.b32.xlu0 %v586, 124
      %v1136 = vpop.permute.xlu0 %1135
      %1137 = vrot.lane.b32.xlu0 %v587, 124
      %v1138 = vpop.permute.xlu0 %1137
      %1139 = vrot.lane.b32.xlu0 %v575, 124
      %v1140 = vpop.permute.xlu0 %1139
      %1141 = vrot.lane.b32.xlu0 %v588, 124
      %v1142 = vpop.permute.xlu0 %1141
      %1143 = vrot.lane.b32.xlu0 %v589, 124
      %v1144 = vpop.permute.xlu0 %1143
      %1145 = vrot.lane.b32.xlu0 %v590, 124
      %v1146 = vpop.permute.xlu0 %1145
      %1147 = vrot.lane.b32.xlu0 %v583, 124
      %v1148 = vpop.permute.xlu0 %1147
      %1149 = vrot.lane.b32.xlu0 %v608, 124
      %v1150 = vpop.permute.xlu0 %1149
      %1151 = vrot.lane.b32.xlu0 %v609, 124
      %v1152 = vpop.permute.xlu0 %1151
      %1153 = vrot.lane.b32.xlu0 %v610, 124
      %v1154 = vpop.permute.xlu0 %1153
      %1155 = vrot.lane.b32.xlu0 %v598, 124
      %v1156 = vpop.permute.xlu0 %1155
      %1157 = vrot.lane.b32.xlu0 %v611, 124
      %v1158 = vpop.permute.xlu0 %1157
      %1159 = vrot.lane.b32.xlu0 %v612, 124
      %v1160 = vpop.permute.xlu0 %1159
      %1161 = vrot.lane.b32.xlu0 %v613, 124
      %v1162 = vpop.permute.xlu0 %1161
      %1163 = vrot.lane.b32.xlu0 %v606, 124
      %v1164 = vpop.permute.xlu0 %1163
      %1165 = vrot.lane.b32.xlu0 %v631, 124
      %v1166 = vpop.permute.xlu0 %1165
      %1167 = vrot.lane.b32.xlu0 %v632, 124
      %v1168 = vpop.permute.xlu0 %1167
      %1169 = vrot.lane.b32.xlu0 %v633, 124
      %v1170 = vpop.permute.xlu0 %1169
      %1171 = vrot.lane.b32.xlu0 %v621, 124
      %v1172 = vpop.permute.xlu0 %1171
      %1173 = vrot.lane.b32.xlu0 %v634, 124
      %v1174 = vpop.permute.xlu0 %1173
      %1175 = vrot.lane.b32.xlu0 %v635, 124
      %v1176 = vpop.permute.xlu0 %1175
      %1177 = vrot.lane.b32.xlu0 %v636, 124
      %v1178 = vpop.permute.xlu0 %1177
      %1179 = vrot.lane.b32.xlu0 %v629, 124
      %v1180 = vpop.permute.xlu0 %1179
      %vm1181 = vcmask 1014784
      %v1182 = vsel %vm1181, %v926, %v928
      %v1183 = vsel %vm1181, %v928, %v930
      %v1184 = vsel %vm1181, %v930, %v932
      %v1185 = vsel %vm1181, %v934, %v936
      %v1186 = vsel %vm1181, %v936, %v938
      %v1187 = vsel %vm1181, %v938, %v940
      %v1188 = vsel %vm1181, %v942, %v944
      %v1189 = vsel %vm1181, %v944, %v946
      %v1190 = vsel %vm1181, %v946, %v948
      %v1191 = vsel %vm1181, %v950, %v952
      %v1192 = vsel %vm1181, %v952, %v954
      %v1193 = vsel %vm1181, %v954, %v956
      %v1194 = vsel %vm1181, %v958, %v960
      %v1195 = vsel %vm1181, %v960, %v962
      %v1196 = vsel %vm1181, %v962, %v964
      %v1197 = vsel %vm1181, %v966, %v968
      %v1198 = vsel %vm1181, %v968, %v970
      %v1199 = vsel %vm1181, %v970, %v972
      %v1200 = vsel %vm1181, %v974, %v976
      %v1201 = vsel %vm1181, %v976, %v978
      %v1202 = vsel %vm1181, %v978, %v980
      %v1203 = vsel %vm1181, %v982, %v984
      %v1204 = vsel %vm1181, %v984, %v986
      %v1205 = vsel %vm1181, %v986, %v988
      %v1206 = vsel %vm1181, %v990, %v992
      %v1207 = vsel %vm1181, %v992, %v994
      %v1208 = vsel %vm1181, %v994, %v996
      %v1209 = vsel %vm1181, %v998, %v1000
      %v1210 = vsel %vm1181, %v1000, %v1002
      %v1211 = vsel %vm1181, %v1002, %v1004
      %v1212 = vsel %vm1181, %v1006, %v1008
      %v1213 = vsel %vm1181, %v1008, %v1010
      %v1214 = vsel %vm1181, %v1010, %v1012
      %v1215 = vsel %vm1181, %v1014, %v1016
      %v1216 = vsel %vm1181, %v1016, %v1018
      %v1217 = vsel %vm1181, %v1018, %v1020
      %v1218 = vsel %vm1181, %v1022, %v1024
      %v1219 = vsel %vm1181, %v1024, %v1026
      %v1220 = vsel %vm1181, %v1026, %v1028
      %v1221 = vsel %vm1181, %v1030, %v1032
      %v1222 = vsel %vm1181, %v1032, %v1034
      %v1223 = vsel %vm1181, %v1034, %v1036
      %v1224 = vsel %vm1181, %v1038, %v1040
      %v1225 = vsel %vm1181, %v1040, %v1042
      %v1226 = vsel %vm1181, %v1042, %v1044
      %v1227 = vsel %vm1181, %v1046, %v1048
      %v1228 = vsel %vm1181, %v1048, %v1050
      %v1229 = vsel %vm1181, %v1050, %v1052
      %v1230 = vsel %vm1181, %v1054, %v1056
      %v1231 = vsel %vm1181, %v1056, %v1058
      %v1232 = vsel %vm1181, %v1058, %v1060
      %v1233 = vsel %vm1181, %v1062, %v1064
      %v1234 = vsel %vm1181, %v1064, %v1066
      %v1235 = vsel %vm1181, %v1066, %v1068
      %v1236 = vsel %vm1181, %v1070, %v1072
      %v1237 = vsel %vm1181, %v1072, %v1074
      %v1238 = vsel %vm1181, %v1074, %v1076
      %v1239 = vsel %vm1181, %v1078, %v1080
      %v1240 = vsel %vm1181, %v1080, %v1082
      %v1241 = vsel %vm1181, %v1082, %v1084
      %v1242 = vsel %vm1181, %v1086, %v1088
      %v1243 = vsel %vm1181, %v1088, %v1090
      %v1244 = vsel %vm1181, %v1090, %v1092
      %v1245 = vsel %vm1181, %v1094, %v1096
      %v1246 = vsel %vm1181, %v1096, %v1098
      %v1247 = vsel %vm1181, %v1098, %v1100
      %v1248 = vsel %vm1181, %v1102, %v1104
      %v1249 = vsel %vm1181, %v1104, %v1106
      %v1250 = vsel %vm1181, %v1106, %v1108
      %v1251 = vsel %vm1181, %v1110, %v1112
      %v1252 = vsel %vm1181, %v1112, %v1114
      %v1253 = vsel %vm1181, %v1114, %v1116
      %v1254 = vsel %vm1181, %v1118, %v1120
      %v1255 = vsel %vm1181, %v1120, %v1122
      %v1256 = vsel %vm1181, %v1122, %v1124
      %v1257 = vsel %vm1181, %v1126, %v1128
      %v1258 = vsel %vm1181, %v1128, %v1130
      %v1259 = vsel %vm1181, %v1130, %v1132
      %v1260 = vsel %vm1181, %v1134, %v1136
      %v1261 = vsel %vm1181, %v1136, %v1138
      %v1262 = vsel %vm1181, %v1138, %v1140
      %v1263 = vsel %vm1181, %v1142, %v1144
      %v1264 = vsel %vm1181, %v1144, %v1146
      %v1265 = vsel %vm1181, %v1146, %v1148
      %v1266 = vsel %vm1181, %v1150, %v1152
      %v1267 = vsel %vm1181, %v1152, %v1154
      %v1268 = vsel %vm1181, %v1154, %v1156
      %v1269 = vsel %vm1181, %v1158, %v1160
      %v1270 = vsel %vm1181, %v1160, %v1162
      %v1271 = vsel %vm1181, %v1162, %v1164
      %v1272 = vsel %vm1181, %v1166, %v1168
      %v1273 = vsel %vm1181, %v1168, %v1170
      %v1274 = vsel %vm1181, %v1170, %v1172
      %v1275 = vsel %vm1181, %v1174, %v1176
      %v1276 = vsel %vm1181, %v1176, %v1178
      %v1277 = vsel %vm1181, %v1178, %v1180
      %1406 = vmatpush.bf16.msra.mxu0 %v1203
      %1407 = vmatpush.bf16.msra.mxu0 %v1200
      %1408 = vmatpush.bf16.msra.mxu0 %v1197
      %1409 = vmatpush.bf16.msra.mxu0 %v1194
      %1410 = vmatpush.bf16.msra.mxu0 %v1191
      %1411 = vmatpush.bf16.msra.mxu0 %v1188
      %1412 = vmatpush.bf16.msra.mxu0 %v1185
      %1413 = vmatpush.bf16.msra.mxu0 %v1182
      %1414 = vmatmul.bf16.gmra.mxu0 %v861
      %v1415 = vpop.f32.mrf.mxu0
      %v1416 = vadd.f32 %v688, %v1415
      %v1417 = vpop.f32.mrf.mxu0
      %v1418 = vadd.f32 %v693, %v1417
      %1419 = vmatmul.bf16.gmra.mxu0 %v865
      %v1420 = vpop.f32.mrf.mxu0
      %v1421 = vadd.f32 %v698, %v1420
      %v1422 = vpop.f32.mrf.mxu0
      %v1423 = vadd.f32 %v703, %v1422
      %1424 = vmatmul.bf16.gmra.mxu0 %v869
      %v1425 = vpop.f32.mrf.mxu0
      %v1426 = vadd.f32 %v708, %v1425
      %v1427 = vpop.f32.mrf.mxu0
      %v1428 = vadd.f32 %v713, %v1427
      %1429 = vmatmul.bf16.gmra.mxu0 %v873
      %v1430 = vpop.f32.mrf.mxu0
      %v1431 = vadd.f32 %v718, %v1430
      %v1432 = vpop.f32.mrf.mxu0
      %v1433 = vadd.f32 %v723, %v1432
      %1434 = vmatmul.bf16.gmra.mxu0 %v877
      %v1435 = vpop.f32.mrf.mxu0
      %v1436 = vadd.f32 %v728, %v1435
      %v1437 = vpop.f32.mrf.mxu0
      %v1438 = vadd.f32 %v733, %v1437
      %1439 = vmatmul.bf16.gmra.mxu0 %v881
      %v1440 = vpop.f32.mrf.mxu0
      %v1441 = vadd.f32 %v738, %v1440
      %v1442 = vpop.f32.mrf.mxu0
      %v1443 = vadd.f32 %v743, %v1442
      %1444 = vmatmul.bf16.gmra.mxu0 %v885
      %v1445 = vpop.f32.mrf.mxu0
      %v1446 = vadd.f32 %v748, %v1445
      %v1447 = vpop.f32.mrf.mxu0
      %v1448 = vadd.f32 %v753, %v1447
      %1449 = vmatmul.bf16.gmra.mxu0 %v889
      %v1450 = vpop.f32.mrf.mxu0
      %v1451 = vadd.f32 %v758, %v1450
      %v1452 = vpop.f32.mrf.mxu0
      %v1453 = vadd.f32 %v763, %v1452
      %1454 = vdwg.mxu0
      %1455 = vmatpush.bf16.msra.mxu0 %v1227
      %1456 = vmatpush.bf16.msra.mxu0 %v1224
      %1457 = vmatpush.bf16.msra.mxu0 %v1221
      %1458 = vmatpush.bf16.msra.mxu0 %v1218
      %1459 = vmatpush.bf16.msra.mxu0 %v1215
      %1460 = vmatpush.bf16.msra.mxu0 %v1212
      %1461 = vmatpush.bf16.msra.mxu0 %v1209
      %1462 = vmatpush.bf16.msra.mxu0 %v1206
      %1463 = vmatmul.bf16.gmra.mxu0 %v862
      %v1464 = vpop.f32.mrf.mxu0
      %v1465 = vadd.f32 %v1416, %v1464
      %v1466 = vpop.f32.mrf.mxu0
      %v1467 = vadd.f32 %v1418, %v1466
      %1468 = vmatmul.bf16.gmra.mxu0 %v866
      %v1469 = vpop.f32.mrf.mxu0
      %v1470 = vadd.f32 %v1421, %v1469
      %v1471 = vpop.f32.mrf.mxu0
      %v1472 = vadd.f32 %v1423, %v1471
      %1473 = vmatmul.bf16.gmra.mxu0 %v870
      %v1474 = vpop.f32.mrf.mxu0
      %v1475 = vadd.f32 %v1426, %v1474
      %v1476 = vpop.f32.mrf.mxu0
      %v1477 = vadd.f32 %v1428, %v1476
      %1478 = vmatmul.bf16.gmra.mxu0 %v874
      %v1479 = vpop.f32.mrf.mxu0
      %v1480 = vadd.f32 %v1431, %v1479
      %v1481 = vpop.f32.mrf.mxu0
      %v1482 = vadd.f32 %v1433, %v1481
      %1483 = vmatmul.bf16.gmra.mxu0 %v878
      %v1484 = vpop.f32.mrf.mxu0
      %v1485 = vadd.f32 %v1436, %v1484
      %v1486 = vpop.f32.mrf.mxu0
      %v1487 = vadd.f32 %v1438, %v1486
      %1488 = vmatmul.bf16.gmra.mxu0 %v882
      %v1489 = vpop.f32.mrf.mxu0
      %v1490 = vadd.f32 %v1441, %v1489
      %v1491 = vpop.f32.mrf.mxu0
      %v1492 = vadd.f32 %v1443, %v1491
      %1493 = vmatmul.bf16.gmra.mxu0 %v886
      %v1494 = vpop.f32.mrf.mxu0
      %v1495 = vadd.f32 %v1446, %v1494
      %v1496 = vpop.f32.mrf.mxu0
      %v1497 = vadd.f32 %v1448, %v1496
      %1498 = vmatmul.bf16.gmra.mxu0 %v890
      %v1499 = vpop.f32.mrf.mxu0
      %v1500 = vadd.f32 %v1451, %v1499
      %v1501 = vpop.f32.mrf.mxu0
      %v1502 = vadd.f32 %v1453, %v1501
      %1503 = vdwg.mxu0
      %1504 = vmatpush.bf16.msra.mxu0 %v1251
      %1505 = vmatpush.bf16.msra.mxu0 %v1248
      %1506 = vmatpush.bf16.msra.mxu0 %v1245
      %1507 = vmatpush.bf16.msra.mxu0 %v1242
      %1508 = vmatpush.bf16.msra.mxu0 %v1239
      %1509 = vmatpush.bf16.msra.mxu0 %v1236
      %1510 = vmatpush.bf16.msra.mxu0 %v1233
      %1511 = vmatpush.bf16.msra.mxu0 %v1230
      %1512 = vmatmul.bf16.gmra.mxu0 %v863
      %v1513 = vpop.f32.mrf.mxu0
      %v1514 = vadd.f32 %v1465, %v1513
      %v1515 = vpop.f32.mrf.mxu0
      %v1516 = vadd.f32 %v1467, %v1515
      %1517 = vmatmul.bf16.gmra.mxu0 %v867
      %v1518 = vpop.f32.mrf.mxu0
      %v1519 = vadd.f32 %v1470, %v1518
      %v1520 = vpop.f32.mrf.mxu0
      %v1521 = vadd.f32 %v1472, %v1520
      %1522 = vmatmul.bf16.gmra.mxu0 %v871
      %v1523 = vpop.f32.mrf.mxu0
      %v1524 = vadd.f32 %v1475, %v1523
      %v1525 = vpop.f32.mrf.mxu0
      %v1526 = vadd.f32 %v1477, %v1525
      %1527 = vmatmul.bf16.gmra.mxu0 %v875
      %v1528 = vpop.f32.mrf.mxu0
      %v1529 = vadd.f32 %v1480, %v1528
      %v1530 = vpop.f32.mrf.mxu0
      %v1531 = vadd.f32 %v1482, %v1530
      %1532 = vmatmul.bf16.gmra.mxu0 %v879
      %v1533 = vpop.f32.mrf.mxu0
      %v1534 = vadd.f32 %v1485, %v1533
      %v1535 = vpop.f32.mrf.mxu0
      %v1536 = vadd.f32 %v1487, %v1535
      %1537 = vmatmul.bf16.gmra.mxu0 %v883
      %v1538 = vpop.f32.mrf.mxu0
      %v1539 = vadd.f32 %v1490, %v1538
      %v1540 = vpop.f32.mrf.mxu0
      %v1541 = vadd.f32 %v1492, %v1540
      %1542 = vmatmul.bf16.gmra.mxu0 %v887
      %v1543 = vpop.f32.mrf.mxu0
      %v1544 = vadd.f32 %v1495, %v1543
      %v1545 = vpop.f32.mrf.mxu0
      %v1546 = vadd.f32 %v1497, %v1545
      %1547 = vmatmul.bf16.gmra.mxu0 %v891
      %v1548 = vpop.f32.mrf.mxu0
      %v1549 = vadd.f32 %v1500, %v1548
      %v1550 = vpop.f32.mrf.mxu0
      %v1551 = vadd.f32 %v1502, %v1550
      %1552 = vdwg.mxu0
      %1553 = vmatpush.bf16.msra.mxu0 %v1275
      %1554 = vmatpush.bf16.msra.mxu0 %v1272
      %1555 = vmatpush.bf16.msra.mxu0 %v1269
      %1556 = vmatpush.bf16.msra.mxu0 %v1266
      %1557 = vmatpush.bf16.msra.mxu0 %v1263
      %1558 = vmatpush.bf16.msra.mxu0 %v1260
      %1559 = vmatpush.bf16.msra.mxu0 %v1257
      %1560 = vmatpush.bf16.msra.mxu0 %v1254
      %1561 = vmatmul.bf16.gmra.mxu0 %v864
      %v1562 = vpop.f32.mrf.mxu0
      %v1563 = vadd.f32 %v1514, %v1562
      %v1564 = vpop.f32.mrf.mxu0
      %v1565 = vadd.f32 %v1516, %v1564
      %1566 = vmatmul.bf16.gmra.mxu0 %v868
      %v1567 = vpop.f32.mrf.mxu0
      %v1568 = vadd.f32 %v1519, %v1567
      %v1569 = vpop.f32.mrf.mxu0
      %v1570 = vadd.f32 %v1521, %v1569
      %1571 = vmatmul.bf16.gmra.mxu0 %v872
      %v1572 = vpop.f32.mrf.mxu0
      %v1573 = vadd.f32 %v1524, %v1572
      %v1574 = vpop.f32.mrf.mxu0
      %v1575 = vadd.f32 %v1526, %v1574
      %1576 = vmatmul.bf16.gmra.mxu0 %v876
      %v1577 = vpop.f32.mrf.mxu0
      %v1578 = vadd.f32 %v1529, %v1577
      %v1579 = vpop.f32.mrf.mxu0
      %v1580 = vadd.f32 %v1531, %v1579
      %1581 = vmatmul.bf16.gmra.mxu0 %v880
      %v1582 = vpop.f32.mrf.mxu0
      %v1583 = vadd.f32 %v1534, %v1582
      %v1584 = vpop.f32.mrf.mxu0
      %v1585 = vadd.f32 %v1536, %v1584
      %1586 = vmatmul.bf16.gmra.mxu0 %v884
      %v1587 = vpop.f32.mrf.mxu0
      %v1588 = vadd.f32 %v1539, %v1587
      %v1589 = vpop.f32.mrf.mxu0
      %v1590 = vadd.f32 %v1541, %v1589
      %1591 = vmatmul.bf16.gmra.mxu0 %v888
      %v1592 = vpop.f32.mrf.mxu0
      %v1593 = vadd.f32 %v1544, %v1592
      %v1594 = vpop.f32.mrf.mxu0
      %v1595 = vadd.f32 %v1546, %v1594
      %1596 = vmatmul.bf16.gmra.mxu0 %v892
      %v1597 = vpop.f32.mrf.mxu0
      %v1598 = vadd.f32 %v1549, %v1597
      %v1599 = vpop.f32.mrf.mxu0
      %v1600 = vadd.f32 %v1551, %v1599
      %1601 = vdwg.mxu0
      %1602 = vmatpush.bf16.msra.mxu0 %v1204
      %1603 = vmatpush.bf16.msra.mxu0 %v1201
      %1604 = vmatpush.bf16.msra.mxu0 %v1198
      %1605 = vmatpush.bf16.msra.mxu0 %v1195
      %1606 = vmatpush.bf16.msra.mxu0 %v1192
      %1607 = vmatpush.bf16.msra.mxu0 %v1189
      %1608 = vmatpush.bf16.msra.mxu0 %v1186
      %1609 = vmatpush.bf16.msra.mxu0 %v1183
      %1610 = vmatmul.bf16.gmra.mxu0 %v861
      %v1611 = vpop.f32.mrf.mxu0
      %v1612 = vadd.f32 %v688, %v1611
      %v1613 = vpop.f32.mrf.mxu0
      %v1614 = vadd.f32 %v693, %v1613
      %1615 = vmatmul.bf16.gmra.mxu0 %v865
      %v1616 = vpop.f32.mrf.mxu0
      %v1617 = vadd.f32 %v698, %v1616
      %v1618 = vpop.f32.mrf.mxu0
      %v1619 = vadd.f32 %v703, %v1618
      %1620 = vmatmul.bf16.gmra.mxu0 %v869
      %v1621 = vpop.f32.mrf.mxu0
      %v1622 = vadd.f32 %v708, %v1621
      %v1623 = vpop.f32.mrf.mxu0
      %v1624 = vadd.f32 %v713, %v1623
      %1625 = vmatmul.bf16.gmra.mxu0 %v873
      %v1626 = vpop.f32.mrf.mxu0
      %v1627 = vadd.f32 %v718, %v1626
      %v1628 = vpop.f32.mrf.mxu0
      %v1629 = vadd.f32 %v723, %v1628
      %1630 = vmatmul.bf16.gmra.mxu0 %v877
      %v1631 = vpop.f32.mrf.mxu0
      %v1632 = vadd.f32 %v728, %v1631
      %v1633 = vpop.f32.mrf.mxu0
      %v1634 = vadd.f32 %v733, %v1633
      %1635 = vmatmul.bf16.gmra.mxu0 %v881
      %v1636 = vpop.f32.mrf.mxu0
      %v1637 = vadd.f32 %v738, %v1636
      %v1638 = vpop.f32.mrf.mxu0
      %v1639 = vadd.f32 %v743, %v1638
      %1640 = vmatmul.bf16.gmra.mxu0 %v885
      %v1641 = vpop.f32.mrf.mxu0
      %v1642 = vadd.f32 %v748, %v1641
      %v1643 = vpop.f32.mrf.mxu0
      %v1644 = vadd.f32 %v753, %v1643
      %1645 = vmatmul.bf16.gmra.mxu0 %v889
      %v1646 = vpop.f32.mrf.mxu0
      %v1647 = vadd.f32 %v758, %v1646
      %v1648 = vpop.f32.mrf.mxu0
      %v1649 = vadd.f32 %v763, %v1648
      %1650 = vdwg.mxu0
      %1651 = vmatpush.bf16.msra.mxu0 %v1228
      %1652 = vmatpush.bf16.msra.mxu0 %v1225
      %1653 = vmatpush.bf16.msra.mxu0 %v1222
      %1654 = vmatpush.bf16.msra.mxu0 %v1219
      %1655 = vmatpush.bf16.msra.mxu0 %v1216
      %1656 = vmatpush.bf16.msra.mxu0 %v1213
      %1657 = vmatpush.bf16.msra.mxu0 %v1210
      %1658 = vmatpush.bf16.msra.mxu0 %v1207
      %1659 = vmatmul.bf16.gmra.mxu0 %v862
      %v1660 = vpop.f32.mrf.mxu0
      %v1661 = vadd.f32 %v1612, %v1660
      %v1662 = vpop.f32.mrf.mxu0
      %v1663 = vadd.f32 %v1614, %v1662
      %1664 = vmatmul.bf16.gmra.mxu0 %v866
      %v1665 = vpop.f32.mrf.mxu0
      %v1666 = vadd.f32 %v1617, %v1665
      %v1667 = vpop.f32.mrf.mxu0
      %v1668 = vadd.f32 %v1619, %v1667
      %1669 = vmatmul.bf16.gmra.mxu0 %v870
      %v1670 = vpop.f32.mrf.mxu0
      %v1671 = vadd.f32 %v1622, %v1670
      %v1672 = vpop.f32.mrf.mxu0
      %v1673 = vadd.f32 %v1624, %v1672
      %1674 = vmatmul.bf16.gmra.mxu0 %v874
      %v1675 = vpop.f32.mrf.mxu0
      %v1676 = vadd.f32 %v1627, %v1675
      %v1677 = vpop.f32.mrf.mxu0
      %v1678 = vadd.f32 %v1629, %v1677
      %1679 = vmatmul.bf16.gmra.mxu0 %v878
      %v1680 = vpop.f32.mrf.mxu0
      %v1681 = vadd.f32 %v1632, %v1680
      %v1682 = vpop.f32.mrf.mxu0
      %v1683 = vadd.f32 %v1634, %v1682
      %1684 = vmatmul.bf16.gmra.mxu0 %v882
      %v1685 = vpop.f32.mrf.mxu0
      %v1686 = vadd.f32 %v1637, %v1685
      %v1687 = vpop.f32.mrf.mxu0
      %v1688 = vadd.f32 %v1639, %v1687
      %1689 = vmatmul.bf16.gmra.mxu0 %v886
      %v1690 = vpop.f32.mrf.mxu0
      %v1691 = vadd.f32 %v1642, %v1690
      %v1692 = vpop.f32.mrf.mxu0
      %v1693 = vadd.f32 %v1644, %v1692
      %1694 = vmatmul.bf16.gmra.mxu0 %v890
      %v1695 = vpop.f32.mrf.mxu0
      %v1696 = vadd.f32 %v1647, %v1695
      %v1697 = vpop.f32.mrf.mxu0
      %v1698 = vadd.f32 %v1649, %v1697
      %1699 = vdwg.mxu0
      %1700 = vmatpush.bf16.msra.mxu0 %v1252
      %1701 = vmatpush.bf16.msra.mxu0 %v1249
      %1702 = vmatpush.bf16.msra.mxu0 %v1246
      %1703 = vmatpush.bf16.msra.mxu0 %v1243
      %1704 = vmatpush.bf16.msra.mxu0 %v1240
      %1705 = vmatpush.bf16.msra.mxu0 %v1237
      %1706 = vmatpush.bf16.msra.mxu0 %v1234
      %1707 = vmatpush.bf16.msra.mxu0 %v1231
      %1708 = vmatmul.bf16.gmra.mxu0 %v863
      %v1709 = vpop.f32.mrf.mxu0
      %v1710 = vadd.f32 %v1661, %v1709
      %v1711 = vpop.f32.mrf.mxu0
      %v1712 = vadd.f32 %v1663, %v1711
      %1713 = vmatmul.bf16.gmra.mxu0 %v867
      %v1714 = vpop.f32.mrf.mxu0
      %v1715 = vadd.f32 %v1666, %v1714
      %v1716 = vpop.f32.mrf.mxu0
      %v1717 = vadd.f32 %v1668, %v1716
      %1718 = vmatmul.bf16.gmra.mxu0 %v871
      %v1719 = vpop.f32.mrf.mxu0
      %v1720 = vadd.f32 %v1671, %v1719
      %v1721 = vpop.f32.mrf.mxu0
      %v1722 = vadd.f32 %v1673, %v1721
      %1723 = vmatmul.bf16.gmra.mxu0 %v875
      %v1724 = vpop.f32.mrf.mxu0
      %v1725 = vadd.f32 %v1676, %v1724
      %v1726 = vpop.f32.mrf.mxu0
      %v1727 = vadd.f32 %v1678, %v1726
      %1728 = vmatmul.bf16.gmra.mxu0 %v879
      %v1729 = vpop.f32.mrf.mxu0
      %v1730 = vadd.f32 %v1681, %v1729
      %v1731 = vpop.f32.mrf.mxu0
      %v1732 = vadd.f32 %v1683, %v1731
      %1733 = vmatmul.bf16.gmra.mxu0 %v883
      %v1734 = vpop.f32.mrf.mxu0
      %v1735 = vadd.f32 %v1686, %v1734
      %v1736 = vpop.f32.mrf.mxu0
      %v1737 = vadd.f32 %v1688, %v1736
      %1738 = vmatmul.bf16.gmra.mxu0 %v887
      %v1739 = vpop.f32.mrf.mxu0
      %v1740 = vadd.f32 %v1691, %v1739
      %v1741 = vpop.f32.mrf.mxu0
      %v1742 = vadd.f32 %v1693, %v1741
      %1743 = vmatmul.bf16.gmra.mxu0 %v891
      %v1744 = vpop.f32.mrf.mxu0
      %v1745 = vadd.f32 %v1696, %v1744
      %v1746 = vpop.f32.mrf.mxu0
      %v1747 = vadd.f32 %v1698, %v1746
      %1748 = vdwg.mxu0
      %1749 = vmatpush.bf16.msra.mxu0 %v1276
      %1750 = vmatpush.bf16.msra.mxu0 %v1273
      %1751 = vmatpush.bf16.msra.mxu0 %v1270
      %1752 = vmatpush.bf16.msra.mxu0 %v1267
      %1753 = vmatpush.bf16.msra.mxu0 %v1264
      %1754 = vmatpush.bf16.msra.mxu0 %v1261
      %1755 = vmatpush.bf16.msra.mxu0 %v1258
      %1756 = vmatpush.bf16.msra.mxu0 %v1255
      %1757 = vmatmul.bf16.gmra.mxu0 %v864
      %v1758 = vpop.f32.mrf.mxu0
      %v1759 = vadd.f32 %v1710, %v1758
      %v1760 = vpop.f32.mrf.mxu0
      %v1761 = vadd.f32 %v1712, %v1760
      %1762 = vmatmul.bf16.gmra.mxu0 %v868
      %v1763 = vpop.f32.mrf.mxu0
      %v1764 = vadd.f32 %v1715, %v1763
      %v1765 = vpop.f32.mrf.mxu0
      %v1766 = vadd.f32 %v1717, %v1765
      %1767 = vmatmul.bf16.gmra.mxu0 %v872
      %v1768 = vpop.f32.mrf.mxu0
      %v1769 = vadd.f32 %v1720, %v1768
      %v1770 = vpop.f32.mrf.mxu0
      %v1771 = vadd.f32 %v1722, %v1770
      %1772 = vmatmul.bf16.gmra.mxu0 %v876
      %v1773 = vpop.f32.mrf.mxu0
      %v1774 = vadd.f32 %v1725, %v1773
      %v1775 = vpop.f32.mrf.mxu0
      %v1776 = vadd.f32 %v1727, %v1775
      %1777 = vmatmul.bf16.gmra.mxu0 %v880
      %v1778 = vpop.f32.mrf.mxu0
      %v1779 = vadd.f32 %v1730, %v1778
      %v1780 = vpop.f32.mrf.mxu0
      %v1781 = vadd.f32 %v1732, %v1780
      %1782 = vmatmul.bf16.gmra.mxu0 %v884
      %v1783 = vpop.f32.mrf.mxu0
      %v1784 = vadd.f32 %v1735, %v1783
      %v1785 = vpop.f32.mrf.mxu0
      %v1786 = vadd.f32 %v1737, %v1785
      %1787 = vmatmul.bf16.gmra.mxu0 %v888
      %v1788 = vpop.f32.mrf.mxu0
      %v1789 = vadd.f32 %v1740, %v1788
      %v1790 = vpop.f32.mrf.mxu0
      %v1791 = vadd.f32 %v1742, %v1790
      %1792 = vmatmul.bf16.gmra.mxu0 %v892
      %v1793 = vpop.f32.mrf.mxu0
      %v1794 = vadd.f32 %v1745, %v1793
      %v1795 = vpop.f32.mrf.mxu0
      %v1796 = vadd.f32 %v1747, %v1795
      %1797 = vdwg.mxu0
      %1798 = vmatpush.bf16.msra.mxu0 %v1205
      %1799 = vmatpush.bf16.msra.mxu0 %v1202
      %1800 = vmatpush.bf16.msra.mxu0 %v1199
      %1801 = vmatpush.bf16.msra.mxu0 %v1196
      %1802 = vmatpush.bf16.msra.mxu0 %v1193
      %1803 = vmatpush.bf16.msra.mxu0 %v1190
      %1804 = vmatpush.bf16.msra.mxu0 %v1187
      %1805 = vmatpush.bf16.msra.mxu0 %v1184
      %1806 = vmatmul.bf16.gmra.mxu0 %v861
      %v1807 = vpop.f32.mrf.mxu0
      %v1808 = vadd.f32 %v688, %v1807
      %v1809 = vpop.f32.mrf.mxu0
      %v1810 = vadd.f32 %v693, %v1809
      %1811 = vmatmul.bf16.gmra.mxu0 %v865
      %v1812 = vpop.f32.mrf.mxu0
      %v1813 = vadd.f32 %v698, %v1812
      %v1814 = vpop.f32.mrf.mxu0
      %v1815 = vadd.f32 %v703, %v1814
      %1816 = vmatmul.bf16.gmra.mxu0 %v869
      %v1817 = vpop.f32.mrf.mxu0
      %v1818 = vadd.f32 %v708, %v1817
      %v1819 = vpop.f32.mrf.mxu0
      %v1820 = vadd.f32 %v713, %v1819
      %1821 = vmatmul.bf16.gmra.mxu0 %v873
      %v1822 = vpop.f32.mrf.mxu0
      %v1823 = vadd.f32 %v718, %v1822
      %v1824 = vpop.f32.mrf.mxu0
      %v1825 = vadd.f32 %v723, %v1824
      %1826 = vmatmul.bf16.gmra.mxu0 %v877
      %v1827 = vpop.f32.mrf.mxu0
      %v1828 = vadd.f32 %v728, %v1827
      %v1829 = vpop.f32.mrf.mxu0
      %v1830 = vadd.f32 %v733, %v1829
      %1831 = vmatmul.bf16.gmra.mxu0 %v881
      %v1832 = vpop.f32.mrf.mxu0
      %v1833 = vadd.f32 %v738, %v1832
      %v1834 = vpop.f32.mrf.mxu0
      %v1835 = vadd.f32 %v743, %v1834
      %1836 = vmatmul.bf16.gmra.mxu0 %v885
      %v1837 = vpop.f32.mrf.mxu0
      %v1838 = vadd.f32 %v748, %v1837
      %v1839 = vpop.f32.mrf.mxu0
      %v1840 = vadd.f32 %v753, %v1839
      %1841 = vmatmul.bf16.gmra.mxu0 %v889
      %v1842 = vpop.f32.mrf.mxu0
      %v1843 = vadd.f32 %v758, %v1842
      %v1844 = vpop.f32.mrf.mxu0
      %v1845 = vadd.f32 %v763, %v1844
      %1846 = vdwg.mxu0
      %1847 = vmatpush.bf16.msra.mxu0 %v1229
      %1848 = vmatpush.bf16.msra.mxu0 %v1226
      %1849 = vmatpush.bf16.msra.mxu0 %v1223
      %1850 = vmatpush.bf16.msra.mxu0 %v1220
      %1851 = vmatpush.bf16.msra.mxu0 %v1217
      %1852 = vmatpush.bf16.msra.mxu0 %v1214
      %1853 = vmatpush.bf16.msra.mxu0 %v1211
      %1854 = vmatpush.bf16.msra.mxu0 %v1208
      %1855 = vmatmul.bf16.gmra.mxu0 %v862
      %v1856 = vpop.f32.mrf.mxu0
      %v1857 = vadd.f32 %v1808, %v1856
      %v1858 = vpop.f32.mrf.mxu0
      %v1859 = vadd.f32 %v1810, %v1858
      %1860 = vmatmul.bf16.gmra.mxu0 %v866
      %v1861 = vpop.f32.mrf.mxu0
      %v1862 = vadd.f32 %v1813, %v1861
      %v1863 = vpop.f32.mrf.mxu0
      %v1864 = vadd.f32 %v1815, %v1863
      %1865 = vmatmul.bf16.gmra.mxu0 %v870
      %v1866 = vpop.f32.mrf.mxu0
      %v1867 = vadd.f32 %v1818, %v1866
      %v1868 = vpop.f32.mrf.mxu0
      %v1869 = vadd.f32 %v1820, %v1868
      %1870 = vmatmul.bf16.gmra.mxu0 %v874
      %v1871 = vpop.f32.mrf.mxu0
      %v1872 = vadd.f32 %v1823, %v1871
      %v1873 = vpop.f32.mrf.mxu0
      %v1874 = vadd.f32 %v1825, %v1873
      %1875 = vmatmul.bf16.gmra.mxu0 %v878
      %v1876 = vpop.f32.mrf.mxu0
      %v1877 = vadd.f32 %v1828, %v1876
      %v1878 = vpop.f32.mrf.mxu0
      %v1879 = vadd.f32 %v1830, %v1878
      %1880 = vmatmul.bf16.gmra.mxu0 %v882
      %v1881 = vpop.f32.mrf.mxu0
      %v1882 = vadd.f32 %v1833, %v1881
      %v1883 = vpop.f32.mrf.mxu0
      %v1884 = vadd.f32 %v1835, %v1883
      %1885 = vmatmul.bf16.gmra.mxu0 %v886
      %v1886 = vpop.f32.mrf.mxu0
      %v1887 = vadd.f32 %v1838, %v1886
      %v1888 = vpop.f32.mrf.mxu0
      %v1889 = vadd.f32 %v1840, %v1888
      %1890 = vmatmul.bf16.gmra.mxu0 %v890
      %v1891 = vpop.f32.mrf.mxu0
      %v1892 = vadd.f32 %v1843, %v1891
      %v1893 = vpop.f32.mrf.mxu0
      %v1894 = vadd.f32 %v1845, %v1893
      %1895 = vdwg.mxu0
      %1896 = vmatpush.bf16.msra.mxu0 %v1253
      %1897 = vmatpush.bf16.msra.mxu0 %v1250
      %1898 = vmatpush.bf16.msra.mxu0 %v1247
      %1899 = vmatpush.bf16.msra.mxu0 %v1244
      %1900 = vmatpush.bf16.msra.mxu0 %v1241
      %1901 = vmatpush.bf16.msra.mxu0 %v1238
      %1902 = vmatpush.bf16.msra.mxu0 %v1235
      %1903 = vmatpush.bf16.msra.mxu0 %v1232
      %1904 = vmatmul.bf16.gmra.mxu0 %v863
      %v1905 = vpop.f32.mrf.mxu0
      %v1906 = vadd.f32 %v1857, %v1905
      %v1907 = vpop.f32.mrf.mxu0
      %v1908 = vadd.f32 %v1859, %v1907
      %1909 = vmatmul.bf16.gmra.mxu0 %v867
      %v1910 = vpop.f32.mrf.mxu0
      %v1911 = vadd.f32 %v1862, %v1910
      %v1912 = vpop.f32.mrf.mxu0
      %v1913 = vadd.f32 %v1864, %v1912
      %1914 = vmatmul.bf16.gmra.mxu0 %v871
      %v1915 = vpop.f32.mrf.mxu0
      %v1916 = vadd.f32 %v1867, %v1915
      %v1917 = vpop.f32.mrf.mxu0
      %v1918 = vadd.f32 %v1869, %v1917
      %1919 = vmatmul.bf16.gmra.mxu0 %v875
      %v1920 = vpop.f32.mrf.mxu0
      %v1921 = vadd.f32 %v1872, %v1920
      %v1922 = vpop.f32.mrf.mxu0
      %v1923 = vadd.f32 %v1874, %v1922
      %1924 = vmatmul.bf16.gmra.mxu0 %v879
      %v1925 = vpop.f32.mrf.mxu0
      %v1926 = vadd.f32 %v1877, %v1925
      %v1927 = vpop.f32.mrf.mxu0
      %v1928 = vadd.f32 %v1879, %v1927
      %1929 = vmatmul.bf16.gmra.mxu0 %v883
      %v1930 = vpop.f32.mrf.mxu0
      %v1931 = vadd.f32 %v1882, %v1930
      %v1932 = vpop.f32.mrf.mxu0
      %v1933 = vadd.f32 %v1884, %v1932
      %1934 = vmatmul.bf16.gmra.mxu0 %v887
      %v1935 = vpop.f32.mrf.mxu0
      %v1936 = vadd.f32 %v1887, %v1935
      %v1937 = vpop.f32.mrf.mxu0
      %v1938 = vadd.f32 %v1889, %v1937
      %1939 = vmatmul.bf16.gmra.mxu0 %v891
      %v1940 = vpop.f32.mrf.mxu0
      %v1941 = vadd.f32 %v1892, %v1940
      %v1942 = vpop.f32.mrf.mxu0
      %v1943 = vadd.f32 %v1894, %v1942
      %1944 = vdwg.mxu0
      %1945 = vmatpush.bf16.msra.mxu0 %v1277
      %1946 = vmatpush.bf16.msra.mxu0 %v1274
      %1947 = vmatpush.bf16.msra.mxu0 %v1271
      %1948 = vmatpush.bf16.msra.mxu0 %v1268
      %1949 = vmatpush.bf16.msra.mxu0 %v1265
      %1950 = vmatpush.bf16.msra.mxu0 %v1262
      %1951 = vmatpush.bf16.msra.mxu0 %v1259
      %1952 = vmatpush.bf16.msra.mxu0 %v1256
      %1953 = vmatmul.bf16.gmra.mxu0 %v864
      %v1954 = vpop.f32.mrf.mxu0
      %v1955 = vadd.f32 %v1906, %v1954
      %v1956 = vpop.f32.mrf.mxu0
      %v1957 = vadd.f32 %v1908, %v1956
      %1958 = vmatmul.bf16.gmra.mxu0 %v868
      %v1959 = vpop.f32.mrf.mxu0
      %v1960 = vadd.f32 %v1911, %v1959
      %v1961 = vpop.f32.mrf.mxu0
      %v1962 = vadd.f32 %v1913, %v1961
      %1963 = vmatmul.bf16.gmra.mxu0 %v872
      %v1964 = vpop.f32.mrf.mxu0
      %v1965 = vadd.f32 %v1916, %v1964
      %v1966 = vpop.f32.mrf.mxu0
      %v1967 = vadd.f32 %v1918, %v1966
      %1968 = vmatmul.bf16.gmra.mxu0 %v876
      %v1969 = vpop.f32.mrf.mxu0
      %v1970 = vadd.f32 %v1921, %v1969
      %v1971 = vpop.f32.mrf.mxu0
      %v1972 = vadd.f32 %v1923, %v1971
      %1973 = vmatmul.bf16.gmra.mxu0 %v880
      %v1974 = vpop.f32.mrf.mxu0
      %v1975 = vadd.f32 %v1926, %v1974
      %v1976 = vpop.f32.mrf.mxu0
      %v1977 = vadd.f32 %v1928, %v1976
      %1978 = vmatmul.bf16.gmra.mxu0 %v884
      %v1979 = vpop.f32.mrf.mxu0
      %v1980 = vadd.f32 %v1931, %v1979
      %v1981 = vpop.f32.mrf.mxu0
      %v1982 = vadd.f32 %v1933, %v1981
      %1983 = vmatmul.bf16.gmra.mxu0 %v888
      %v1984 = vpop.f32.mrf.mxu0
      %v1985 = vadd.f32 %v1936, %v1984
      %v1986 = vpop.f32.mrf.mxu0
      %v1987 = vadd.f32 %v1938, %v1986
      %1988 = vmatmul.bf16.gmra.mxu0 %v892
      %v1989 = vpop.f32.mrf.mxu0
      %v1990 = vadd.f32 %v1941, %v1989
      %v1991 = vpop.f32.mrf.mxu0
      %v1992 = vadd.f32 %v1943, %v1991
      %1993 = vdwg.mxu0
      %1994 = vmatpush.bf16.msra.mxu0 %v988
      %1995 = vmatpush.bf16.msra.mxu0 %v980
      %1996 = vmatpush.bf16.msra.mxu0 %v972
      %1997 = vmatpush.bf16.msra.mxu0 %v964
      %1998 = vmatpush.bf16.msra.mxu0 %v956
      %1999 = vmatpush.bf16.msra.mxu0 %v948
      %2000 = vmatpush.bf16.msra.mxu0 %v940
      %2001 = vmatpush.bf16.msra.mxu0 %v932
      %2002 = vmatmul.bf16.gmra.mxu0 %v861
      %v2003 = vpop.f32.mrf.mxu0
      %v2004 = vadd.f32 %v688, %v2003
      %v2005 = vpop.f32.mrf.mxu0
      %v2006 = vadd.f32 %v693, %v2005
      %2007 = vmatmul.bf16.gmra.mxu0 %v865
      %v2008 = vpop.f32.mrf.mxu0
      %v2009 = vadd.f32 %v698, %v2008
      %v2010 = vpop.f32.mrf.mxu0
      %v2011 = vadd.f32 %v703, %v2010
      %2012 = vmatmul.bf16.gmra.mxu0 %v869
      %v2013 = vpop.f32.mrf.mxu0
      %v2014 = vadd.f32 %v708, %v2013
      %v2015 = vpop.f32.mrf.mxu0
      %v2016 = vadd.f32 %v713, %v2015
      %2017 = vmatmul.bf16.gmra.mxu0 %v873
      %v2018 = vpop.f32.mrf.mxu0
      %v2019 = vadd.f32 %v718, %v2018
      %v2020 = vpop.f32.mrf.mxu0
      %v2021 = vadd.f32 %v723, %v2020
      %2022 = vmatmul.bf16.gmra.mxu0 %v877
      %v2023 = vpop.f32.mrf.mxu0
      %v2024 = vadd.f32 %v728, %v2023
      %v2025 = vpop.f32.mrf.mxu0
      %v2026 = vadd.f32 %v733, %v2025
      %2027 = vmatmul.bf16.gmra.mxu0 %v881
      %v2028 = vpop.f32.mrf.mxu0
      %v2029 = vadd.f32 %v738, %v2028
      %v2030 = vpop.f32.mrf.mxu0
      %v2031 = vadd.f32 %v743, %v2030
      %2032 = vmatmul.bf16.gmra.mxu0 %v885
      %v2033 = vpop.f32.mrf.mxu0
      %v2034 = vadd.f32 %v748, %v2033
      %v2035 = vpop.f32.mrf.mxu0
      %v2036 = vadd.f32 %v753, %v2035
      %2037 = vmatmul.bf16.gmra.mxu0 %v889
      %v2038 = vpop.f32.mrf.mxu0
      %v2039 = vadd.f32 %v758, %v2038
      %v2040 = vpop.f32.mrf.mxu0
      %v2041 = vadd.f32 %v763, %v2040
      %2042 = vdwg.mxu0
      %2043 = vmatpush.bf16.msra.mxu0 %v1052
      %2044 = vmatpush.bf16.msra.mxu0 %v1044
      %2045 = vmatpush.bf16.msra.mxu0 %v1036
      %2046 = vmatpush.bf16.msra.mxu0 %v1028
      %2047 = vmatpush.bf16.msra.mxu0 %v1020
      %2048 = vmatpush.bf16.msra.mxu0 %v1012
      %2049 = vmatpush.bf16.msra.mxu0 %v1004
      %2050 = vmatpush.bf16.msra.mxu0 %v996
      %2051 = vmatmul.bf16.gmra.mxu0 %v862
      %v2052 = vpop.f32.mrf.mxu0
      %v2053 = vadd.f32 %v2004, %v2052
      %v2054 = vpop.f32.mrf.mxu0
      %v2055 = vadd.f32 %v2006, %v2054
      %2056 = vmatmul.bf16.gmra.mxu0 %v866
      %v2057 = vpop.f32.mrf.mxu0
      %v2058 = vadd.f32 %v2009, %v2057
      %v2059 = vpop.f32.mrf.mxu0
      %v2060 = vadd.f32 %v2011, %v2059
      %2061 = vmatmul.bf16.gmra.mxu0 %v870
      %v2062 = vpop.f32.mrf.mxu0
      %v2063 = vadd.f32 %v2014, %v2062
      %v2064 = vpop.f32.mrf.mxu0
      %v2065 = vadd.f32 %v2016, %v2064
      %2066 = vmatmul.bf16.gmra.mxu0 %v874
      %v2067 = vpop.f32.mrf.mxu0
      %v2068 = vadd.f32 %v2019, %v2067
      %v2069 = vpop.f32.mrf.mxu0
      %v2070 = vadd.f32 %v2021, %v2069
      %2071 = vmatmul.bf16.gmra.mxu0 %v878
      %v2072 = vpop.f32.mrf.mxu0
      %v2073 = vadd.f32 %v2024, %v2072
      %v2074 = vpop.f32.mrf.mxu0
      %v2075 = vadd.f32 %v2026, %v2074
      %2076 = vmatmul.bf16.gmra.mxu0 %v882
      %v2077 = vpop.f32.mrf.mxu0
      %v2078 = vadd.f32 %v2029, %v2077
      %v2079 = vpop.f32.mrf.mxu0
      %v2080 = vadd.f32 %v2031, %v2079
      %2081 = vmatmul.bf16.gmra.mxu0 %v886
      %v2082 = vpop.f32.mrf.mxu0
      %v2083 = vadd.f32 %v2034, %v2082
      %v2084 = vpop.f32.mrf.mxu0
      %v2085 = vadd.f32 %v2036, %v2084
      %2086 = vmatmul.bf16.gmra.mxu0 %v890
      %v2087 = vpop.f32.mrf.mxu0
      %v2088 = vadd.f32 %v2039, %v2087
      %v2089 = vpop.f32.mrf.mxu0
      %v2090 = vadd.f32 %v2041, %v2089
      %2091 = vdwg.mxu0
      %2092 = vmatpush.bf16.msra.mxu0 %v1116
      %2093 = vmatpush.bf16.msra.mxu0 %v1108
      %2094 = vmatpush.bf16.msra.mxu0 %v1100
      %2095 = vmatpush.bf16.msra.mxu0 %v1092
      %2096 = vmatpush.bf16.msra.mxu0 %v1084
      %2097 = vmatpush.bf16.msra.mxu0 %v1076
      %2098 = vmatpush.bf16.msra.mxu0 %v1068
      %2099 = vmatpush.bf16.msra.mxu0 %v1060
      %2100 = vmatmul.bf16.gmra.mxu0 %v863
      %v2101 = vpop.f32.mrf.mxu0
      %v2102 = vadd.f32 %v2053, %v2101
      %v2103 = vpop.f32.mrf.mxu0
      %v2104 = vadd.f32 %v2055, %v2103
      %2105 = vmatmul.bf16.gmra.mxu0 %v867
      %v2106 = vpop.f32.mrf.mxu0
      %v2107 = vadd.f32 %v2058, %v2106
      %v2108 = vpop.f32.mrf.mxu0
      %v2109 = vadd.f32 %v2060, %v2108
      %2110 = vmatmul.bf16.gmra.mxu0 %v871
      %v2111 = vpop.f32.mrf.mxu0
      %v2112 = vadd.f32 %v2063, %v2111
      %v2113 = vpop.f32.mrf.mxu0
      %v2114 = vadd.f32 %v2065, %v2113
      %2115 = vmatmul.bf16.gmra.mxu0 %v875
      %v2116 = vpop.f32.mrf.mxu0
      %v2117 = vadd.f32 %v2068, %v2116
      %v2118 = vpop.f32.mrf.mxu0
      %v2119 = vadd.f32 %v2070, %v2118
      %2120 = vmatmul.bf16.gmra.mxu0 %v879
      %v2121 = vpop.f32.mrf.mxu0
      %v2122 = vadd.f32 %v2073, %v2121
      %v2123 = vpop.f32.mrf.mxu0
      %v2124 = vadd.f32 %v2075, %v2123
      %2125 = vmatmul.bf16.gmra.mxu0 %v883
      %v2126 = vpop.f32.mrf.mxu0
      %v2127 = vadd.f32 %v2078, %v2126
      %v2128 = vpop.f32.mrf.mxu0
      %v2129 = vadd.f32 %v2080, %v2128
      %2130 = vmatmul.bf16.gmra.mxu0 %v887
      %v2131 = vpop.f32.mrf.mxu0
      %v2132 = vadd.f32 %v2083, %v2131
      %v2133 = vpop.f32.mrf.mxu0
      %v2134 = vadd.f32 %v2085, %v2133
      %2135 = vmatmul.bf16.gmra.mxu0 %v891
      %v2136 = vpop.f32.mrf.mxu0
      %v2137 = vadd.f32 %v2088, %v2136
      %v2138 = vpop.f32.mrf.mxu0
      %v2139 = vadd.f32 %v2090, %v2138
      %2140 = vdwg.mxu0
      %2141 = vmatpush.bf16.msra.mxu0 %v1180
      %2142 = vmatpush.bf16.msra.mxu0 %v1172
      %2143 = vmatpush.bf16.msra.mxu0 %v1164
      %2144 = vmatpush.bf16.msra.mxu0 %v1156
      %2145 = vmatpush.bf16.msra.mxu0 %v1148
      %2146 = vmatpush.bf16.msra.mxu0 %v1140
      %2147 = vmatpush.bf16.msra.mxu0 %v1132
      %2148 = vmatpush.bf16.msra.mxu0 %v1124
      %2149 = vmatmul.bf16.gmra.mxu0 %v864
      %v2150 = vpop.f32.mrf.mxu0
      %v2151 = vadd.f32 %v2102, %v2150
      %v2152 = vpop.f32.mrf.mxu0
      %v2153 = vadd.f32 %v2104, %v2152
      %2154 = vmatmul.bf16.gmra.mxu0 %v868
      %v2155 = vpop.f32.mrf.mxu0
      %v2156 = vadd.f32 %v2107, %v2155
      %v2157 = vpop.f32.mrf.mxu0
      %v2158 = vadd.f32 %v2109, %v2157
      %2159 = vmatmul.bf16.gmra.mxu0 %v872
      %v2160 = vpop.f32.mrf.mxu0
      %v2161 = vadd.f32 %v2112, %v2160
      %v2162 = vpop.f32.mrf.mxu0
      %v2163 = vadd.f32 %v2114, %v2162
      %2164 = vmatmul.bf16.gmra.mxu0 %v876
      %v2165 = vpop.f32.mrf.mxu0
      %v2166 = vadd.f32 %v2117, %v2165
      %v2167 = vpop.f32.mrf.mxu0
      %v2168 = vadd.f32 %v2119, %v2167
      %2169 = vmatmul.bf16.gmra.mxu0 %v880
      %v2170 = vpop.f32.mrf.mxu0
      %v2171 = vadd.f32 %v2122, %v2170
      %v2172 = vpop.f32.mrf.mxu0
      %v2173 = vadd.f32 %v2124, %v2172
      %2174 = vmatmul.bf16.gmra.mxu0 %v884
      %v2175 = vpop.f32.mrf.mxu0
      %v2176 = vadd.f32 %v2127, %v2175
      %v2177 = vpop.f32.mrf.mxu0
      %v2178 = vadd.f32 %v2129, %v2177
      %2179 = vmatmul.bf16.gmra.mxu0 %v888
      %v2180 = vpop.f32.mrf.mxu0
      %v2181 = vadd.f32 %v2132, %v2180
      %v2182 = vpop.f32.mrf.mxu0
      %v2183 = vadd.f32 %v2134, %v2182
      %2184 = vmatmul.bf16.gmra.mxu0 %v892
      %v2185 = vpop.f32.mrf.mxu0
      %v2186 = vadd.f32 %v2137, %v2185
      %v2187 = vpop.f32.mrf.mxu0
      %v2188 = vadd.f32 %v2139, %v2187
      %2189 = vdwg.mxu0
      %v2190 = vmax.f32 %v1563, 0.0
      %v2191 = vmax.f32 %v1759, 0.0
      %v2192 = vmax.f32 %v1955, 0.0
      %v2193 = vmax.f32 %v2151, 0.0
      %v2194 = vmax.f32 %v1565, 0.0
      %v2195 = vmax.f32 %v1761, 0.0
      %v2196 = vmax.f32 %v1957, 0.0
      %v2197 = vmax.f32 %v2153, 0.0
      %v2198 = vmax.f32 %v1568, 0.0
      %v2199 = vmax.f32 %v1764, 0.0
      %v2200 = vmax.f32 %v1960, 0.0
      %v2201 = vmax.f32 %v2156, 0.0
      %v2202 = vmax.f32 %v1570, 0.0
      %v2203 = vmax.f32 %v1766, 0.0
      %v2204 = vmax.f32 %v1962, 0.0
      %v2205 = vmax.f32 %v2158, 0.0
      %v2206 = vmax.f32 %v1573, 0.0
      %v2207 = vmax.f32 %v1769, 0.0
      %v2208 = vmax.f32 %v1965, 0.0
      %v2209 = vmax.f32 %v2161, 0.0
      %v2210 = vmax.f32 %v1575, 0.0
      %v2211 = vmax.f32 %v1771, 0.0
      %v2212 = vmax.f32 %v1967, 0.0
      %v2213 = vmax.f32 %v2163, 0.0
      %v2214 = vmax.f32 %v1578, 0.0
      %v2215 = vmax.f32 %v1774, 0.0
      %v2216 = vmax.f32 %v1970, 0.0
      %v2217 = vmax.f32 %v2166, 0.0
      %v2218 = vmax.f32 %v1580, 0.0
      %v2219 = vmax.f32 %v1776, 0.0
      %v2220 = vmax.f32 %v1972, 0.0
      %v2221 = vmax.f32 %v2168, 0.0
      %v2222 = vmax.f32 %v1583, 0.0
      %v2223 = vmax.f32 %v1779, 0.0
      %v2224 = vmax.f32 %v1975, 0.0
      %v2225 = vmax.f32 %v2171, 0.0
      %v2226 = vmax.f32 %v1585, 0.0
      %v2227 = vmax.f32 %v1781, 0.0
      %v2228 = vmax.f32 %v1977, 0.0
      %v2229 = vmax.f32 %v2173, 0.0
      %v2230 = vmax.f32 %v1588, 0.0
      %v2231 = vmax.f32 %v1784, 0.0
      %v2232 = vmax.f32 %v1980, 0.0
      %v2233 = vmax.f32 %v2176, 0.0
      %v2234 = vmax.f32 %v1590, 0.0
      %v2235 = vmax.f32 %v1786, 0.0
      %v2236 = vmax.f32 %v1982, 0.0
      %v2237 = vmax.f32 %v2178, 0.0
      %v2238 = vmax.f32 %v1593, 0.0
      %v2239 = vmax.f32 %v1789, 0.0
      %v2240 = vmax.f32 %v1985, 0.0
      %v2241 = vmax.f32 %v2181, 0.0
      %v2242 = vmax.f32 %v1595, 0.0
      %v2243 = vmax.f32 %v1791, 0.0
      %v2244 = vmax.f32 %v1987, 0.0
      %v2245 = vmax.f32 %v2183, 0.0
      %v2246 = vmax.f32 %v1598, 0.0
      %v2247 = vmax.f32 %v1794, 0.0
      %v2248 = vmax.f32 %v1990, 0.0
      %v2249 = vmax.f32 %v2186, 0.0
      %v2250 = vmax.f32 %v1600, 0.0
      %v2251 = vmax.f32 %v1796, 0.0
      %v2252 = vmax.f32 %v1992, 0.0
      %v2253 = vmax.f32 %v2188, 0.0
      %v2254 = vld [vmem:[%s1] sm:$0xf]
      %v2256 = vperm.slane %v2254, 0
      %v2257 = vperm.slane %v2254, 1
      %v2258 = vperm.slane %v2254, 2
      %v2259 = vperm.slane %v2254, 3
      %v2264 = vmul.f32 %v2190, %v2256
      %v2265 = vmul.f32 %v2191, %v2257
      %v2266 = vmul.f32 %v2192, %v2258
      %v2267 = vmul.f32 %v2193, %v2259
      %v2268 = vmul.f32 %v2194, %v2256
      %v2269 = vmul.f32 %v2195, %v2257
      %v2270 = vmul.f32 %v2196, %v2258
      %v2271 = vmul.f32 %v2197, %v2259
      %v2272 = vmul.f32 %v2198, %v2256
      %v2273 = vmul.f32 %v2199, %v2257
      %v2274 = vmul.f32 %v2200, %v2258
      %v2275 = vmul.f32 %v2201, %v2259
      %v2276 = vmul.f32 %v2202, %v2256
      %v2277 = vmul.f32 %v2203, %v2257
      %v2278 = vmul.f32 %v2204, %v2258
      %v2279 = vmul.f32 %v2205, %v2259
      %v2280 = vmul.f32 %v2206, %v2256
      %v2281 = vmul.f32 %v2207, %v2257
      %v2282 = vmul.f32 %v2208, %v2258
      %v2283 = vmul.f32 %v2209, %v2259
      %v2284 = vmul.f32 %v2210, %v2256
      %v2285 = vmul.f32 %v2211, %v2257
      %v2286 = vmul.f32 %v2212, %v2258
      %v2287 = vmul.f32 %v2213, %v2259
      %v2288 = vmul.f32 %v2214, %v2256
      %v2289 = vmul.f32 %v2215, %v2257
      %v2290 = vmul.f32 %v2216, %v2258
      %v2291 = vmul.f32 %v2217, %v2259
      %v2292 = vmul.f32 %v2218, %v2256
      %v2293 = vmul.f32 %v2219, %v2257
      %v2294 = vmul.f32 %v2220, %v2258
      %v2295 = vmul.f32 %v2221, %v2259
      %v2296 = vmul.f32 %v2222, %v2256
      %v2297 = vmul.f32 %v2223, %v2257
      %v2298 = vmul.f32 %v2224, %v2258
      %v2299 = vmul.f32 %v2225, %v2259
      %v2300 = vmul.f32 %v2226, %v2256
      %v2301 = vmul.f32 %v2227, %v2257
      %v2302 = vmul.f32 %v2228, %v2258
      %v2303 = vmul.f32 %v2229, %v2259
      %v2304 = vmul.f32 %v2230, %v2256
      %v2305 = vmul.f32 %v2231, %v2257
      %v2306 = vmul.f32 %v2232, %v2258
      %v2307 = vmul.f32 %v2233, %v2259
      %v2308 = vmul.f32 %v2234, %v2256
      %v2309 = vmul.f32 %v2235, %v2257
      %v2310 = vmul.f32 %v2236, %v2258
      %v2311 = vmul.f32 %v2237, %v2259
      %v2312 = vmul.f32 %v2238, %v2256
      %v2313 = vmul.f32 %v2239, %v2257
      %v2314 = vmul.f32 %v2240, %v2258
      %v2315 = vmul.f32 %v2241, %v2259
      %v2316 = vmul.f32 %v2242, %v2256
      %v2317 = vmul.f32 %v2243, %v2257
      %v2318 = vmul.f32 %v2244, %v2258
      %v2319 = vmul.f32 %v2245, %v2259
      %v2320 = vmul.f32 %v2246, %v2256
      %v2321 = vmul.f32 %v2247, %v2257
      %v2322 = vmul.f32 %v2248, %v2258
      %v2323 = vmul.f32 %v2249, %v2259
      %v2324 = vmul.f32 %v2250, %v2256
      %v2325 = vmul.f32 %v2251, %v2257
      %v2326 = vmul.f32 %v2252, %v2258
      %v2327 = vmul.f32 %v2253, %v2259
      %v2328 = vpack.c.bf16 %v2265, %v2264
      %v2329 = vpack.c.bf16 %v2267, %v2266
      %v2330 = vpack.c.bf16 %v2269, %v2268
      %v2331 = vpack.c.bf16 %v2271, %v2270
      %v2332 = vpack.c.bf16 %v2273, %v2272
      %v2333 = vpack.c.bf16 %v2275, %v2274
      %v2334 = vpack.c.bf16 %v2277, %v2276
      %v2335 = vpack.c.bf16 %v2279, %v2278
      %v2336 = vpack.c.bf16 %v2281, %v2280
      %v2337 = vpack.c.bf16 %v2283, %v2282
      %v2338 = vpack.c.bf16 %v2285, %v2284
      %v2339 = vpack.c.bf16 %v2287, %v2286
      %v2340 = vpack.c.bf16 %v2289, %v2288
      %v2341 = vpack.c.bf16 %v2291, %v2290
      %v2342 = vpack.c.bf16 %v2293, %v2292
      %v2343 = vpack.c.bf16 %v2295, %v2294
      %v2344 = vpack.c.bf16 %v2297, %v2296
      %v2345 = vpack.c.bf16 %v2299, %v2298
      %v2346 = vpack.c.bf16 %v2301, %v2300
      %v2347 = vpack.c.bf16 %v2303, %v2302
      %v2348 = vpack.c.bf16 %v2305, %v2304
      %v2349 = vpack.c.bf16 %v2307, %v2306
      %v2350 = vpack.c.bf16 %v2309, %v2308
      %v2351 = vpack.c.bf16 %v2311, %v2310
      %v2352 = vpack.c.bf16 %v2313, %v2312
      %v2353 = vpack.c.bf16 %v2315, %v2314
      %v2354 = vpack.c.bf16 %v2317, %v2316
      %v2355 = vpack.c.bf16 %v2319, %v2318
      %v2356 = vpack.c.bf16 %v2321, %v2320
      %v2357 = vpack.c.bf16 %v2323, %v2322
      %v2358 = vpack.c.bf16 %v2325, %v2324
      %v2359 = vpack.c.bf16 %v2327, %v2326
      %v2360 = vld [vmem:[%s4] sm:$0xf]
      %s2361 = scalar_lea.vmem %s4, 4
      %v2362 = vld [vmem:[%s2361] sm:$0xf]
      %v2395 = vunpack.c.l.b16 %v2328
      %v2396 = vunpack.c.h.b16 %v2328
      %v2397 = vunpack.c.l.b16 %v2329
      %v2398 = vunpack.c.h.b16 %v2329
      %v2399 = vunpack.c.l.b16 %v2330
      %v2400 = vunpack.c.h.b16 %v2330
      %v2401 = vunpack.c.l.b16 %v2331
      %v2402 = vunpack.c.h.b16 %v2331
      %v2403 = vunpack.c.l.b16 %v2332
      %v2404 = vunpack.c.h.b16 %v2332
      %v2405 = vunpack.c.l.b16 %v2333
      %v2406 = vunpack.c.h.b16 %v2333
      %v2407 = vunpack.c.l.b16 %v2334
      %v2408 = vunpack.c.h.b16 %v2334
      %v2409 = vunpack.c.l.b16 %v2335
      %v2410 = vunpack.c.h.b16 %v2335
      %v2411 = vunpack.c.l.b16 %v2336
      %v2412 = vunpack.c.h.b16 %v2336
      %v2413 = vunpack.c.l.b16 %v2337
      %v2414 = vunpack.c.h.b16 %v2337
      %v2415 = vunpack.c.l.b16 %v2338
      %v2416 = vunpack.c.h.b16 %v2338
      %v2417 = vunpack.c.l.b16 %v2339
      %v2418 = vunpack.c.h.b16 %v2339
      %v2419 = vunpack.c.l.b16 %v2340
      %v2420 = vunpack.c.h.b16 %v2340
      %v2421 = vunpack.c.l.b16 %v2341
      %v2422 = vunpack.c.h.b16 %v2341
      %v2423 = vunpack.c.l.b16 %v2342
      %v2424 = vunpack.c.h.b16 %v2342
      %v2425 = vunpack.c.l.b16 %v2343
      %v2426 = vunpack.c.h.b16 %v2343
      %v2427 = vunpack.c.l.b16 %v2344
      %v2428 = vunpack.c.h.b16 %v2344
      %v2429 = vunpack.c.l.b16 %v2345
      %v2430 = vunpack.c.h.b16 %v2345
      %v2431 = vunpack.c.l.b16 %v2346
      %v2432 = vunpack.c.h.b16 %v2346
      %v2433 = vunpack.c.l.b16 %v2347
      %v2434 = vunpack.c.h.b16 %v2347
      %v2435 = vunpack.c.l.b16 %v2348
      %v2436 = vunpack.c.h.b16 %v2348
      %v2437 = vunpack.c.l.b16 %v2349
      %v2438 = vunpack.c.h.b16 %v2349
      %v2439 = vunpack.c.l.b16 %v2350
      %v2440 = vunpack.c.h.b16 %v2350
      %v2441 = vunpack.c.l.b16 %v2351
      %v2442 = vunpack.c.h.b16 %v2351
      %v2443 = vunpack.c.l.b16 %v2352
      %v2444 = vunpack.c.h.b16 %v2352
      %v2445 = vunpack.c.l.b16 %v2353
      %v2446 = vunpack.c.h.b16 %v2353
      %v2447 = vunpack.c.l.b16 %v2354
      %v2448 = vunpack.c.h.b16 %v2354
      %v2449 = vunpack.c.l.b16 %v2355
      %v2450 = vunpack.c.h.b16 %v2355
      %v2451 = vunpack.c.l.b16 %v2356
      %v2452 = vunpack.c.h.b16 %v2356
      %v2453 = vunpack.c.l.b16 %v2357
      %v2454 = vunpack.c.h.b16 %v2357
      %v2455 = vunpack.c.l.b16 %v2358
      %v2456 = vunpack.c.h.b16 %v2358
      %v2457 = vunpack.c.l.b16 %v2359
      %v2458 = vunpack.c.h.b16 %v2359
      %v2459 = vpack.c.b16 %v2399, %v2395
      %v2460 = vpack.c.b16 %v2400, %v2396
      %v2461 = vpack.c.b16 %v2401, %v2397
      %v2462 = vpack.c.b16 %v2402, %v2398
      %v2463 = vpack.c.b16 %v2407, %v2403
      %v2464 = vpack.c.b16 %v2408, %v2404
      %v2465 = vpack.c.b16 %v2409, %v2405
      %v2466 = vpack.c.b16 %v2410, %v2406
      %v2467 = vpack.c.b16 %v2415, %v2411
      %v2468 = vpack.c.b16 %v2416, %v2412
      %v2469 = vpack.c.b16 %v2417, %v2413
      %v2470 = vpack.c.b16 %v2418, %v2414
      %v2471 = vpack.c.b16 %v2423, %v2419
      %v2472 = vpack.c.b16 %v2424, %v2420
      %v2473 = vpack.c.b16 %v2425, %v2421
      %v2474 = vpack.c.b16 %v2426, %v2422
      %v2475 = vpack.c.b16 %v2431, %v2427
      %v2476 = vpack.c.b16 %v2432, %v2428
      %v2477 = vpack.c.b16 %v2433, %v2429
      %v2478 = vpack.c.b16 %v2434, %v2430
      %v2479 = vpack.c.b16 %v2439, %v2435
      %v2480 = vpack.c.b16 %v2440, %v2436
      %v2481 = vpack.c.b16 %v2441, %v2437
      %v2482 = vpack.c.b16 %v2442, %v2438
      %v2483 = vpack.c.b16 %v2447, %v2443
      %v2484 = vpack.c.b16 %v2448, %v2444
      %v2485 = vpack.c.b16 %v2449, %v2445
      %v2486 = vpack.c.b16 %v2450, %v2446
      %v2487 = vpack.c.b16 %v2455, %v2451
      %v2488 = vpack.c.b16 %v2456, %v2452
      %v2489 = vpack.c.b16 %v2457, %v2453
      %v2490 = vpack.c.b16 %v2458, %v2454
      %2491 = vrot.lane.b32.xlu0 %v2459, 127
      %v2492 = vpop.permute.xlu0 %2491
      %2493 = vrot.lane.b32.xlu0 %v2460, 127
      %v2494 = vpop.permute.xlu0 %2493
      %2495 = vrot.lane.b32.xlu0 %v2461, 127
      %v2496 = vpop.permute.xlu0 %2495
      %2497 = vrot.lane.b32.xlu0 %v2462, 127
      %v2498 = vpop.permute.xlu0 %2497
      %2499 = vrot.lane.b32.xlu0 %v2463, 127
      %v2500 = vpop.permute.xlu0 %2499
      %2501 = vrot.lane.b32.xlu0 %v2464, 127
      %v2502 = vpop.permute.xlu0 %2501
      %2503 = vrot.lane.b32.xlu0 %v2465, 127
      %v2504 = vpop.permute.xlu0 %2503
      %2505 = vrot.lane.b32.xlu0 %v2466, 127
      %v2506 = vpop.permute.xlu0 %2505
      %2507 = vrot.lane.b32.xlu0 %v2467, 127
      %v2508 = vpop.permute.xlu0 %2507
      %2509 = vrot.lane.b32.xlu0 %v2468, 127
      %v2510 = vpop.permute.xlu0 %2509
      %2511 = vrot.lane.b32.xlu0 %v2469, 127
      %v2512 = vpop.permute.xlu0 %2511
      %2513 = vrot.lane.b32.xlu0 %v2470, 127
      %v2514 = vpop.permute.xlu0 %2513
      %2515 = vrot.lane.b32.xlu0 %v2471, 127
      %v2516 = vpop.permute.xlu0 %2515
      %2517 = vrot.lane.b32.xlu0 %v2472, 127
      %v2518 = vpop.permute.xlu0 %2517
      %2519 = vrot.lane.b32.xlu0 %v2473, 127
      %v2520 = vpop.permute.xlu0 %2519
      %2521 = vrot.lane.b32.xlu0 %v2474, 127
      %v2522 = vpop.permute.xlu0 %2521
      %2523 = vrot.lane.b32.xlu0 %v2475, 127
      %v2524 = vpop.permute.xlu0 %2523
      %2525 = vrot.lane.b32.xlu0 %v2476, 127
      %v2526 = vpop.permute.xlu0 %2525
      %2527 = vrot.lane.b32.xlu0 %v2477, 127
      %v2528 = vpop.permute.xlu0 %2527
      %2529 = vrot.lane.b32.xlu0 %v2478, 127
      %v2530 = vpop.permute.xlu0 %2529
      %2531 = vrot.lane.b32.xlu0 %v2479, 127
      %v2532 = vpop.permute.xlu0 %2531
      %2533 = vrot.lane.b32.xlu0 %v2480, 127
      %v2534 = vpop.permute.xlu0 %2533
      %2535 = vrot.lane.b32.xlu0 %v2481, 127
      %v2536 = vpop.permute.xlu0 %2535
      %2537 = vrot.lane.b32.xlu0 %v2482, 127
      %v2538 = vpop.permute.xlu0 %2537
      %2539 = vrot.lane.b32.xlu0 %v2483, 127
      %v2540 = vpop.permute.xlu0 %2539
      %2541 = vrot.lane.b32.xlu0 %v2484, 127
      %v2542 = vpop.permute.xlu0 %2541
      %2543 = vrot.lane.b32.xlu0 %v2485, 127
      %v2544 = vpop.permute.xlu0 %2543
      %2545 = vrot.lane.b32.xlu0 %v2486, 127
      %v2546 = vpop.permute.xlu0 %2545
      %2547 = vrot.lane.b32.xlu0 %v2487, 127
      %v2548 = vpop.permute.xlu0 %2547
      %2549 = vrot.lane.b32.xlu0 %v2488, 127
      %v2550 = vpop.permute.xlu0 %2549
      %2551 = vrot.lane.b32.xlu0 %v2489, 127
      %v2552 = vpop.permute.xlu0 %2551
      %2553 = vrot.lane.b32.xlu0 %v2490, 127
      %v2554 = vpop.permute.xlu0 %2553
      %v2555 = vsel %vm308, %v2492, %v2494
      %v2556 = vsel %vm308, %v2494, %v2496
      %v2557 = vsel %vm308, %v2496, %v2498
      %v2558 = vsel %vm308, %v2500, %v2502
      %v2559 = vsel %vm308, %v2502, %v2504
      %v2560 = vsel %vm308, %v2504, %v2506
      %v2561 = vsel %vm308, %v2508, %v2510
      %v2562 = vsel %vm308, %v2510, %v2512
      %v2563 = vsel %vm308, %v2512, %v2514
      %v2564 = vsel %vm308, %v2516, %v2518
      %v2565 = vsel %vm308, %v2518, %v2520
      %v2566 = vsel %vm308, %v2520, %v2522
      %v2567 = vsel %vm308, %v2524, %v2526
      %v2568 = vsel %vm308, %v2526, %v2528
      %v2569 = vsel %vm308, %v2528, %v2530
      %v2570 = vsel %vm308, %v2532, %v2534
      %v2571 = vsel %vm308, %v2534, %v2536
      %v2572 = vsel %vm308, %v2536, %v2538
      %v2573 = vsel %vm308, %v2540, %v2542
      %v2574 = vsel %vm308, %v2542, %v2544
      %v2575 = vsel %vm308, %v2544, %v2546
      %v2576 = vsel %vm308, %v2548, %v2550
      %v2577 = vsel %vm308, %v2550, %v2552
      %v2578 = vsel %vm308, %v2552, %v2554
      %2603 = vmatpush.bf16.msra.mxu0 %v2576
      %2604 = vmatpush.bf16.msra.mxu0 %v2573
      %2605 = vmatpush.bf16.msra.mxu0 %v2570
      %2606 = vmatpush.bf16.msra.mxu0 %v2567
      %2607 = vmatpush.bf16.msra.mxu0 %v2564
      %2608 = vmatpush.bf16.msra.mxu0 %v2561
      %2609 = vmatpush.bf16.msra.mxu0 %v2558
      %2610 = vmatpush.bf16.msra.mxu0 %v2555
      %2611 = vmatmul.bf16.gmra.mxu0 %v2362
      %v2612 = vpop.f32.mrf.mxu0
      %v2613 = vadd.f32 0.0, %v2612
      %v2614 = vpop.f32.mrf.mxu0
      %2615 = vdwg.mxu0
      %2616 = vmatpush.bf16.msra.mxu0 %v2577
      %2617 = vmatpush.bf16.msra.mxu0 %v2574
      %2618 = vmatpush.bf16.msra.mxu0 %v2571
      %2619 = vmatpush.bf16.msra.mxu0 %v2568
      %2620 = vmatpush.bf16.msra.mxu0 %v2565
      %2621 = vmatpush.bf16.msra.mxu0 %v2562
      %2622 = vmatpush.bf16.msra.mxu0 %v2559
      %2623 = vmatpush.bf16.msra.mxu0 %v2556
      %2624 = vmatmul.bf16.gmra.mxu0 %v2362
      %v2625 = vpop.f32.mrf.mxu0
      %v2626 = vadd.f32 0.0, %v2625
      %v2627 = vpop.f32.mrf.mxu0
      %2628 = vdwg.mxu0
      %2629 = vmatpush.bf16.msra.mxu0 %v2578
      %2630 = vmatpush.bf16.msra.mxu0 %v2575
      %2631 = vmatpush.bf16.msra.mxu0 %v2572
      %2632 = vmatpush.bf16.msra.mxu0 %v2569
      %2633 = vmatpush.bf16.msra.mxu0 %v2566
      %2634 = vmatpush.bf16.msra.mxu0 %v2563
      %2635 = vmatpush.bf16.msra.mxu0 %v2560
      %2636 = vmatpush.bf16.msra.mxu0 %v2557
      %2637 = vmatmul.bf16.gmra.mxu0 %v2362
      %v2638 = vpop.f32.mrf.mxu0
      %v2639 = vadd.f32 0.0, %v2638
      %v2640 = vpop.f32.mrf.mxu0
      %2641 = vdwg.mxu0
      %2666 = vmatpush.bf16.msra.mxu0 %v2487
      %2667 = vmatpush.bf16.msra.mxu0 %v2483
      %2668 = vmatpush.bf16.msra.mxu0 %v2479
      %2669 = vmatpush.bf16.msra.mxu0 %v2475
      %2670 = vmatpush.bf16.msra.mxu0 %v2471
      %2671 = vmatpush.bf16.msra.mxu0 %v2467
      %2672 = vmatpush.bf16.msra.mxu0 %v2463
      %2673 = vmatpush.bf16.msra.mxu0 %v2459
      %2674 = vmatmul.bf16.gmra.mxu0 %v2360
      %v2675 = vpop.f32.mrf.mxu0
      %v2676 = vadd.f32 %v2613, %v2675
      %v2677 = vpop.f32.mrf.mxu0
      %2678 = vdwg.mxu0
      %2679 = vmatpush.bf16.msra.mxu0 %v2488
      %2680 = vmatpush.bf16.msra.mxu0 %v2484
      %2681 = vmatpush.bf16.msra.mxu0 %v2480
      %2682 = vmatpush.bf16.msra.mxu0 %v2476
      %2683 = vmatpush.bf16.msra.mxu0 %v2472
      %2684 = vmatpush.bf16.msra.mxu0 %v2468
      %2685 = vmatpush.bf16.msra.mxu0 %v2464
      %2686 = vmatpush.bf16.msra.mxu0 %v2460
      %2687 = vmatmul.bf16.gmra.mxu0 %v2360
      %v2688 = vpop.f32.mrf.mxu0
      %v2689 = vadd.f32 %v2626, %v2688
      %v2690 = vpop.f32.mrf.mxu0
      %2691 = vdwg.mxu0
      %2692 = vmatpush.bf16.msra.mxu0 %v2489
      %2693 = vmatpush.bf16.msra.mxu0 %v2485
      %2694 = vmatpush.bf16.msra.mxu0 %v2481
      %2695 = vmatpush.bf16.msra.mxu0 %v2477
      %2696 = vmatpush.bf16.msra.mxu0 %v2473
      %2697 = vmatpush.bf16.msra.mxu0 %v2469
      %2698 = vmatpush.bf16.msra.mxu0 %v2465
      %2699 = vmatpush.bf16.msra.mxu0 %v2461
      %2700 = vmatmul.bf16.gmra.mxu0 %v2360
      %v2701 = vpop.f32.mrf.mxu0
      %v2702 = vadd.f32 %v2639, %v2701
      %v2703 = vpop.f32.mrf.mxu0
      %2704 = vdwg.mxu0
      %s2705 = scalar_lea.vmem %s4, 8
      %v2706 = vld [vmem:[%s2705] sm:$0xf]
      %2707 = vrot.lane.b32.xlu0 %v2459, 126
      %v2708 = vpop.permute.xlu0 %2707
      %2709 = vrot.lane.b32.xlu0 %v2460, 126
      %v2710 = vpop.permute.xlu0 %2709
      %2711 = vrot.lane.b32.xlu0 %v2461, 126
      %v2712 = vpop.permute.xlu0 %2711
      %2713 = vrot.lane.b32.xlu0 %v2462, 126
      %v2714 = vpop.permute.xlu0 %2713
      %2715 = vrot.lane.b32.xlu0 %v2463, 126
      %v2716 = vpop.permute.xlu0 %2715
      %2717 = vrot.lane.b32.xlu0 %v2464, 126
      %v2718 = vpop.permute.xlu0 %2717
      %2719 = vrot.lane.b32.xlu0 %v2465, 126
      %v2720 = vpop.permute.xlu0 %2719
      %2721 = vrot.lane.b32.xlu0 %v2466, 126
      %v2722 = vpop.permute.xlu0 %2721
      %2723 = vrot.lane.b32.xlu0 %v2467, 126
      %v2724 = vpop.permute.xlu0 %2723
      %2725 = vrot.lane.b32.xlu0 %v2468, 126
      %v2726 = vpop.permute.xlu0 %2725
      %2727 = vrot.lane.b32.xlu0 %v2469, 126
      %v2728 = vpop.permute.xlu0 %2727
      %2729 = vrot.lane.b32.xlu0 %v2470, 126
      %v2730 = vpop.permute.xlu0 %2729
      %2731 = vrot.lane.b32.xlu0 %v2471, 126
      %v2732 = vpop.permute.xlu0 %2731
      %2733 = vrot.lane.b32.xlu0 %v2472, 126
      %v2734 = vpop.permute.xlu0 %2733
      %2735 = vrot.lane.b32.xlu0 %v2473, 126
      %v2736 = vpop.permute.xlu0 %2735
      %2737 = vrot.lane.b32.xlu0 %v2474, 126
      %v2738 = vpop.permute.xlu0 %2737
      %2739 = vrot.lane.b32.xlu0 %v2475, 126
      %v2740 = vpop.permute.xlu0 %2739
      %2741 = vrot.lane.b32.xlu0 %v2476, 126
      %v2742 = vpop.permute.xlu0 %2741
      %2743 = vrot.lane.b32.xlu0 %v2477, 126
      %v2744 = vpop.permute.xlu0 %2743
      %2745 = vrot.lane.b32.xlu0 %v2478, 126
      %v2746 = vpop.permute.xlu0 %2745
      %2747 = vrot.lane.b32.xlu0 %v2479, 126
      %v2748 = vpop.permute.xlu0 %2747
      %2749 = vrot.lane.b32.xlu0 %v2480, 126
      %v2750 = vpop.permute.xlu0 %2749
      %2751 = vrot.lane.b32.xlu0 %v2481, 126
      %v2752 = vpop.permute.xlu0 %2751
      %2753 = vrot.lane.b32.xlu0 %v2482, 126
      %v2754 = vpop.permute.xlu0 %2753
      %2755 = vrot.lane.b32.xlu0 %v2483, 126
      %v2756 = vpop.permute.xlu0 %2755
      %2757 = vrot.lane.b32.xlu0 %v2484, 126
      %v2758 = vpop.permute.xlu0 %2757
      %2759 = vrot.lane.b32.xlu0 %v2485, 126
      %v2760 = vpop.permute.xlu0 %2759
      %2761 = vrot.lane.b32.xlu0 %v2486, 126
      %v2762 = vpop.permute.xlu0 %2761
      %2763 = vrot.lane.b32.xlu0 %v2487, 126
      %v2764 = vpop.permute.xlu0 %2763
      %2765 = vrot.lane.b32.xlu0 %v2488, 126
      %v2766 = vpop.permute.xlu0 %2765
      %2767 = vrot.lane.b32.xlu0 %v2489, 126
      %v2768 = vpop.permute.xlu0 %2767
      %2769 = vrot.lane.b32.xlu0 %v2490, 126
      %v2770 = vpop.permute.xlu0 %2769
      %v2771 = vsel %vm331, %v2708, %v2710
      %v2772 = vsel %vm331, %v2710, %v2712
      %v2773 = vsel %vm331, %v2712, %v2714
      %v2774 = vsel %vm331, %v2716, %v2718
      %v2775 = vsel %vm331, %v2718, %v2720
      %v2776 = vsel %vm331, %v2720, %v2722
      %v2777 = vsel %vm331, %v2724, %v2726
      %v2778 = vsel %vm331, %v2726, %v2728
      %v2779 = vsel %vm331, %v2728, %v2730
      %v2780 = vsel %vm331, %v2732, %v2734
      %v2781 = vsel %vm331, %v2734, %v2736
      %v2782 = vsel %vm331, %v2736, %v2738
      %v2783 = vsel %vm331, %v2740, %v2742
      %v2784 = vsel %vm331, %v2742, %v2744
      %v2785 = vsel %vm331, %v2744, %v2746
      %v2786 = vsel %vm331, %v2748, %v2750
      %v2787 = vsel %vm331, %v2750, %v2752
      %v2788 = vsel %vm331, %v2752, %v2754
      %v2789 = vsel %vm331, %v2756, %v2758
      %v2790 = vsel %vm331, %v2758, %v2760
      %v2791 = vsel %vm331, %v2760, %v2762
      %v2792 = vsel %vm331, %v2764, %v2766
      %v2793 = vsel %vm331, %v2766, %v2768
      %v2794 = vsel %vm331, %v2768, %v2770
      %2819 = vmatpush.bf16.msra.mxu0 %v2792
      %2820 = vmatpush.bf16.msra.mxu0 %v2789
      %2821 = vmatpush.bf16.msra.mxu0 %v2786
      %2822 = vmatpush.bf16.msra.mxu0 %v2783
      %2823 = vmatpush.bf16.msra.mxu0 %v2780
      %2824 = vmatpush.bf16.msra.mxu0 %v2777
      %2825 = vmatpush.bf16.msra.mxu0 %v2774
      %2826 = vmatpush.bf16.msra.mxu0 %v2771
      %2827 = vmatmul.bf16.gmra.mxu0 %v2706
      %v2828 = vpop.f32.mrf.mxu0
      %v2829 = vadd.f32 0.0, %v2828
      %v2830 = vpop.f32.mrf.mxu0
      %2831 = vdwg.mxu0
      %2832 = vmatpush.bf16.msra.mxu0 %v2793
      %2833 = vmatpush.bf16.msra.mxu0 %v2790
      %2834 = vmatpush.bf16.msra.mxu0 %v2787
      %2835 = vmatpush.bf16.msra.mxu0 %v2784
      %2836 = vmatpush.bf16.msra.mxu0 %v2781
      %2837 = vmatpush.bf16.msra.mxu0 %v2778
      %2838 = vmatpush.bf16.msra.mxu0 %v2775
      %2839 = vmatpush.bf16.msra.mxu0 %v2772
      %2840 = vmatmul.bf16.gmra.mxu0 %v2706
      %v2841 = vpop.f32.mrf.mxu0
      %v2842 = vadd.f32 0.0, %v2841
      %v2843 = vpop.f32.mrf.mxu0
      %2844 = vdwg.mxu0
      %2845 = vmatpush.bf16.msra.mxu0 %v2794
      %2846 = vmatpush.bf16.msra.mxu0 %v2791
      %2847 = vmatpush.bf16.msra.mxu0 %v2788
      %2848 = vmatpush.bf16.msra.mxu0 %v2785
      %2849 = vmatpush.bf16.msra.mxu0 %v2782
      %2850 = vmatpush.bf16.msra.mxu0 %v2779
      %2851 = vmatpush.bf16.msra.mxu0 %v2776
      %2852 = vmatpush.bf16.msra.mxu0 %v2773
      %2853 = vmatmul.bf16.gmra.mxu0 %v2706
      %v2854 = vpop.f32.mrf.mxu0
      %v2855 = vadd.f32 0.0, %v2854
      %v2856 = vpop.f32.mrf.mxu0
      %2857 = vdwg.mxu0
      %v2858 = vadd.f32 %v2676, %v2829
      %v2859 = vadd.f32 %v2689, %v2842
      %v2860 = vadd.f32 %v2702, %v2855
      %s2861 = scalar_lea.vmem %s4, 12
      %v2862 = vld [vmem:[%s2861] sm:$0xf]
      %2863 = vrot.lane.b32.xlu0 %v2459, 125
      %v2864 = vpop.permute.xlu0 %2863
      %2865 = vrot.lane.b32.xlu0 %v2460, 125
      %v2866 = vpop.permute.xlu0 %2865
      %2867 = vrot.lane.b32.xlu0 %v2461, 125
      %v2868 = vpop.permute.xlu0 %2867
      %2869 = vrot.lane.b32.xlu0 %v2462, 125
      %v2870 = vpop.permute.xlu0 %2869
      %2871 = vrot.lane.b32.xlu0 %v2463, 125
      %v2872 = vpop.permute.xlu0 %2871
      %2873 = vrot.lane.b32.xlu0 %v2464, 125
      %v2874 = vpop.permute.xlu0 %2873
      %2875 = vrot.lane.b32.xlu0 %v2465, 125
      %v2876 = vpop.permute.xlu0 %2875
      %2877 = vrot.lane.b32.xlu0 %v2466, 125
      %v2878 = vpop.permute.xlu0 %2877
      %2879 = vrot.lane.b32.xlu0 %v2467, 125
      %v2880 = vpop.permute.xlu0 %2879
      %2881 = vrot.lane.b32.xlu0 %v2468, 125
      %v2882 = vpop.permute.xlu0 %2881
      %2883 = vrot.lane.b32.xlu0 %v2469, 125
      %v2884 = vpop.permute.xlu0 %2883
      %2885 = vrot.lane.b32.xlu0 %v2470, 125
      %v2886 = vpop.permute.xlu0 %2885
      %2887 = vrot.lane.b32.xlu0 %v2471, 125
      %v2888 = vpop.permute.xlu0 %2887
      %2889 = vrot.lane.b32.xlu0 %v2472, 125
      %v2890 = vpop.permute.xlu0 %2889
      %2891 = vrot.lane.b32.xlu0 %v2473, 125
      %v2892 = vpop.permute.xlu0 %2891
      %2893 = vrot.lane.b32.xlu0 %v2474, 125
      %v2894 = vpop.permute.xlu0 %2893
      %2895 = vrot.lane.b32.xlu0 %v2475, 125
      %v2896 = vpop.permute.xlu0 %2895
      %2897 = vrot.lane.b32.xlu0 %v2476, 125
      %v2898 = vpop.permute.xlu0 %2897
      %2899 = vrot.lane.b32.xlu0 %v2477, 125
      %v2900 = vpop.permute.xlu0 %2899
      %2901 = vrot.lane.b32.xlu0 %v2478, 125
      %v2902 = vpop.permute.xlu0 %2901
      %2903 = vrot.lane.b32.xlu0 %v2479, 125
      %v2904 = vpop.permute.xlu0 %2903
      %2905 = vrot.lane.b32.xlu0 %v2480, 125
      %v2906 = vpop.permute.xlu0 %2905
      %2907 = vrot.lane.b32.xlu0 %v2481, 125
      %v2908 = vpop.permute.xlu0 %2907
      %2909 = vrot.lane.b32.xlu0 %v2482, 125
      %v2910 = vpop.permute.xlu0 %2909
      %2911 = vrot.lane.b32.xlu0 %v2483, 125
      %v2912 = vpop.permute.xlu0 %2911
      %2913 = vrot.lane.b32.xlu0 %v2484, 125
      %v2914 = vpop.permute.xlu0 %2913
      %2915 = vrot.lane.b32.xlu0 %v2485, 125
      %v2916 = vpop.permute.xlu0 %2915
      %2917 = vrot.lane.b32.xlu0 %v2486, 125
      %v2918 = vpop.permute.xlu0 %2917
      %2919 = vrot.lane.b32.xlu0 %v2487, 125
      %v2920 = vpop.permute.xlu0 %2919
      %2921 = vrot.lane.b32.xlu0 %v2488, 125
      %v2922 = vpop.permute.xlu0 %2921
      %2923 = vrot.lane.b32.xlu0 %v2489, 125
      %v2924 = vpop.permute.xlu0 %2923
      %2925 = vrot.lane.b32.xlu0 %v2490, 125
      %v2926 = vpop.permute.xlu0 %2925
      %v2927 = vsel %vm354, %v2864, %v2866
      %v2928 = vsel %vm354, %v2866, %v2868
      %v2929 = vsel %vm354, %v2868, %v2870
      %v2930 = vsel %vm354, %v2872, %v2874
      %v2931 = vsel %vm354, %v2874, %v2876
      %v2932 = vsel %vm354, %v2876, %v2878
      %v2933 = vsel %vm354, %v2880, %v2882
      %v2934 = vsel %vm354, %v2882, %v2884
      %v2935 = vsel %vm354, %v2884, %v2886
      %v2936 = vsel %vm354, %v2888, %v2890
      %v2937 = vsel %vm354, %v2890, %v2892
      %v2938 = vsel %vm354, %v2892, %v2894
      %v2939 = vsel %vm354, %v2896, %v2898
      %v2940 = vsel %vm354, %v2898, %v2900
      %v2941 = vsel %vm354, %v2900, %v2902
      %v2942 = vsel %vm354, %v2904, %v2906
      %v2943 = vsel %vm354, %v2906, %v2908
      %v2944 = vsel %vm354, %v2908, %v2910
      %v2945 = vsel %vm354, %v2912, %v2914
      %v2946 = vsel %vm354, %v2914, %v2916
      %v2947 = vsel %vm354, %v2916, %v2918
      %v2948 = vsel %vm354, %v2920, %v2922
      %v2949 = vsel %vm354, %v2922, %v2924
      %v2950 = vsel %vm354, %v2924, %v2926
      %2975 = vmatpush.bf16.msra.mxu0 %v2948
      %2976 = vmatpush.bf16.msra.mxu0 %v2945
      %2977 = vmatpush.bf16.msra.mxu0 %v2942
      %2978 = vmatpush.bf16.msra.mxu0 %v2939
      %2979 = vmatpush.bf16.msra.mxu0 %v2936
      %2980 = vmatpush.bf16.msra.mxu0 %v2933
      %2981 = vmatpush.bf16.msra.mxu0 %v2930
      %2982 = vmatpush.bf16.msra.mxu0 %v2927
      %2983 = vmatmul.bf16.gmra.mxu0 %v2862
      %v2984 = vpop.f32.mrf.mxu0
      %v2985 = vadd.f32 0.0, %v2984
      %v2986 = vpop.f32.mrf.mxu0
      %2987 = vdwg.mxu0
      %2988 = vmatpush.bf16.msra.mxu0 %v2949
      %2989 = vmatpush.bf16.msra.mxu0 %v2946
      %2990 = vmatpush.bf16.msra.mxu0 %v2943
      %2991 = vmatpush.bf16.msra.mxu0 %v2940
      %2992 = vmatpush.bf16.msra.mxu0 %v2937
      %2993 = vmatpush.bf16.msra.mxu0 %v2934
      %2994 = vmatpush.bf16.msra.mxu0 %v2931
      %2995 = vmatpush.bf16.msra.mxu0 %v2928
      %2996 = vmatmul.bf16.gmra.mxu0 %v2862
      %v2997 = vpop.f32.mrf.mxu0
      %v2998 = vadd.f32 0.0, %v2997
      %v2999 = vpop.f32.mrf.mxu0
      %3000 = vdwg.mxu0
      %3001 = vmatpush.bf16.msra.mxu0 %v2950
      %3002 = vmatpush.bf16.msra.mxu0 %v2947
      %3003 = vmatpush.bf16.msra.mxu0 %v2944
      %3004 = vmatpush.bf16.msra.mxu0 %v2941
      %3005 = vmatpush.bf16.msra.mxu0 %v2938
      %3006 = vmatpush.bf16.msra.mxu0 %v2935
      %3007 = vmatpush.bf16.msra.mxu0 %v2932
      %3008 = vmatpush.bf16.msra.mxu0 %v2929
      %3009 = vmatmul.bf16.gmra.mxu0 %v2862
      %v3010 = vpop.f32.mrf.mxu0
      %v3011 = vadd.f32 0.0, %v3010
      %v3012 = vpop.f32.mrf.mxu0
      %3013 = vdwg.mxu0
      %v3014 = vadd.f32 %v2858, %v2985
      %v3015 = vadd.f32 %v2859, %v2998
      %v3016 = vadd.f32 %v2860, %v3011
      %s3017 = scalar_lea.vmem %s4, 16
      %v3018 = vld [vmem:[%s3017] sm:$0xf]
      %3019 = vrot.lane.b32.xlu0 %v2459, 109
      %v3020 = vpop.permute.xlu0 %3019
      %3021 = vrot.lane.b32.xlu0 %v2460, 109
      %v3022 = vpop.permute.xlu0 %3021
      %3023 = vrot.lane.b32.xlu0 %v2461, 109
      %v3024 = vpop.permute.xlu0 %3023
      %3025 = vrot.lane.b32.xlu0 %v2462, 109
      %v3026 = vpop.permute.xlu0 %3025
      %3027 = vrot.lane.b32.xlu0 %v2463, 109
      %v3028 = vpop.permute.xlu0 %3027
      %3029 = vrot.lane.b32.xlu0 %v2464, 109
      %v3030 = vpop.permute.xlu0 %3029
      %3031 = vrot.lane.b32.xlu0 %v2465, 109
      %v3032 = vpop.permute.xlu0 %3031
      %3033 = vrot.lane.b32.xlu0 %v2466, 109
      %v3034 = vpop.permute.xlu0 %3033
      %3035 = vrot.lane.b32.xlu0 %v2467, 109
      %v3036 = vpop.permute.xlu0 %3035
      %3037 = vrot.lane.b32.xlu0 %v2468, 109
      %v3038 = vpop.permute.xlu0 %3037
      %3039 = vrot.lane.b32.xlu0 %v2469, 109
      %v3040 = vpop.permute.xlu0 %3039
      %3041 = vrot.lane.b32.xlu0 %v2470, 109
      %v3042 = vpop.permute.xlu0 %3041
      %3043 = vrot.lane.b32.xlu0 %v2471, 109
      %v3044 = vpop.permute.xlu0 %3043
      %3045 = vrot.lane.b32.xlu0 %v2472, 109
      %v3046 = vpop.permute.xlu0 %3045
      %3047 = vrot.lane.b32.xlu0 %v2473, 109
      %v3048 = vpop.permute.xlu0 %3047
      %3049 = vrot.lane.b32.xlu0 %v2474, 109
      %v3050 = vpop.permute.xlu0 %3049
      %3051 = vrot.lane.b32.xlu0 %v2475, 109
      %v3052 = vpop.permute.xlu0 %3051
      %3053 = vrot.lane.b32.xlu0 %v2476, 109
      %v3054 = vpop.permute.xlu0 %3053
      %3055 = vrot.lane.b32.xlu0 %v2477, 109
      %v3056 = vpop.permute.xlu0 %3055
      %3057 = vrot.lane.b32.xlu0 %v2478, 109
      %v3058 = vpop.permute.xlu0 %3057
      %3059 = vrot.lane.b32.xlu0 %v2479, 109
      %v3060 = vpop.permute.xlu0 %3059
      %3061 = vrot.lane.b32.xlu0 %v2480, 109
      %v3062 = vpop.permute.xlu0 %3061
      %3063 = vrot.lane.b32.xlu0 %v2481, 109
      %v3064 = vpop.permute.xlu0 %3063
      %3065 = vrot.lane.b32.xlu0 %v2482, 109
      %v3066 = vpop.permute.xlu0 %3065
      %3067 = vrot.lane.b32.xlu0 %v2483, 109
      %v3068 = vpop.permute.xlu0 %3067
      %3069 = vrot.lane.b32.xlu0 %v2484, 109
      %v3070 = vpop.permute.xlu0 %3069
      %3071 = vrot.lane.b32.xlu0 %v2485, 109
      %v3072 = vpop.permute.xlu0 %3071
      %3073 = vrot.lane.b32.xlu0 %v2486, 109
      %v3074 = vpop.permute.xlu0 %3073
      %3075 = vrot.lane.b32.xlu0 %v2487, 109
      %v3076 = vpop.permute.xlu0 %3075
      %3077 = vrot.lane.b32.xlu0 %v2488, 109
      %v3078 = vpop.permute.xlu0 %3077
      %3079 = vrot.lane.b32.xlu0 %v2489, 109
      %v3080 = vpop.permute.xlu0 %3079
      %3081 = vrot.lane.b32.xlu0 %v2490, 109
      %v3082 = vpop.permute.xlu0 %3081
      %v3083 = vsel %vm377, %v3020, %v3022
      %v3084 = vsel %vm377, %v3022, %v3024
      %v3085 = vsel %vm377, %v3024, %v3026
      %v3086 = vsel %vm377, %v3028, %v3030
      %v3087 = vsel %vm377, %v3030, %v3032
      %v3088 = vsel %vm377, %v3032, %v3034
      %v3089 = vsel %vm377, %v3036, %v3038
      %v3090 = vsel %vm377, %v3038, %v3040
      %v3091 = vsel %vm377, %v3040, %v3042
      %v3092 = vsel %vm377, %v3044, %v3046
      %v3093 = vsel %vm377, %v3046, %v3048
      %v3094 = vsel %vm377, %v3048, %v3050
      %v3095 = vsel %vm377, %v3052, %v3054
      %v3096 = vsel %vm377, %v3054, %v3056
      %v3097 = vsel %vm377, %v3056, %v3058
      %v3098 = vsel %vm377, %v3060, %v3062
      %v3099 = vsel %vm377, %v3062, %v3064
      %v3100 = vsel %vm377, %v3064, %v3066
      %v3101 = vsel %vm377, %v3068, %v3070
      %v3102 = vsel %vm377, %v3070, %v3072
      %v3103 = vsel %vm377, %v3072, %v3074
      %v3104 = vsel %vm377, %v3076, %v3078
      %v3105 = vsel %vm377, %v3078, %v3080
      %v3106 = vsel %vm377, %v3080, %v3082
      %3131 = vmatpush.bf16.msra.mxu0 %v3104
      %3132 = vmatpush.bf16.msra.mxu0 %v3101
      %3133 = vmatpush.bf16.msra.mxu0 %v3098
      %3134 = vmatpush.bf16.msra.mxu0 %v3095
      %3135 = vmatpush.bf16.msra.mxu0 %v3092
      %3136 = vmatpush.bf16.msra.mxu0 %v3089
      %3137 = vmatpush.bf16.msra.mxu0 %v3086
      %3138 = vmatpush.bf16.msra.mxu0 %v3083
      %3139 = vmatmul.bf16.gmra.mxu0 %v3018
      %v3140 = vpop.f32.mrf.mxu0
      %v3141 = vadd.f32 0.0, %v3140
      %v3142 = vpop.f32.mrf.mxu0
      %3143 = vdwg.mxu0
      %3144 = vmatpush.bf16.msra.mxu0 %v3105
      %3145 = vmatpush.bf16.msra.mxu0 %v3102
      %3146 = vmatpush.bf16.msra.mxu0 %v3099
      %3147 = vmatpush.bf16.msra.mxu0 %v3096
      %3148 = vmatpush.bf16.msra.mxu0 %v3093
      %3149 = vmatpush.bf16.msra.mxu0 %v3090
      %3150 = vmatpush.bf16.msra.mxu0 %v3087
      %3151 = vmatpush.bf16.msra.mxu0 %v3084
      %3152 = vmatmul.bf16.gmra.mxu0 %v3018
      %v3153 = vpop.f32.mrf.mxu0
      %v3154 = vadd.f32 0.0, %v3153
      %v3155 = vpop.f32.mrf.mxu0
      %3156 = vdwg.mxu0
      %3157 = vmatpush.bf16.msra.mxu0 %v3106
      %3158 = vmatpush.bf16.msra.mxu0 %v3103
      %3159 = vmatpush.bf16.msra.mxu0 %v3100
      %3160 = vmatpush.bf16.msra.mxu0 %v3097
      %3161 = vmatpush.bf16.msra.mxu0 %v3094
      %3162 = vmatpush.bf16.msra.mxu0 %v3091
      %3163 = vmatpush.bf16.msra.mxu0 %v3088
      %3164 = vmatpush.bf16.msra.mxu0 %v3085
      %3165 = vmatmul.bf16.gmra.mxu0 %v3018
      %v3166 = vpop.f32.mrf.mxu0
      %v3167 = vadd.f32 0.0, %v3166
      %v3168 = vpop.f32.mrf.mxu0
      %3169 = vdwg.mxu0
      %v3170 = vadd.f32 %v3014, %v3141
      %v3171 = vadd.f32 %v3015, %v3154
      %v3172 = vadd.f32 %v3016, %v3167
      %s3173 = scalar_lea.vmem %s4, 20
      %v3174 = vld [vmem:[%s3173] sm:$0xf]
      %3175 = vrot.lane.b32.xlu0 %v2459, 108
      %v3176 = vpop.permute.xlu0 %3175
      %3177 = vrot.lane.b32.xlu0 %v2460, 108
      %v3178 = vpop.permute.xlu0 %3177
      %3179 = vrot.lane.b32.xlu0 %v2461, 108
      %v3180 = vpop.permute.xlu0 %3179
      %3181 = vrot.lane.b32.xlu0 %v2462, 108
      %v3182 = vpop.permute.xlu0 %3181
      %3183 = vrot.lane.b32.xlu0 %v2463, 108
      %v3184 = vpop.permute.xlu0 %3183
      %3185 = vrot.lane.b32.xlu0 %v2464, 108
      %v3186 = vpop.permute.xlu0 %3185
      %3187 = vrot.lane.b32.xlu0 %v2465, 108
      %v3188 = vpop.permute.xlu0 %3187
      %3189 = vrot.lane.b32.xlu0 %v2466, 108
      %v3190 = vpop.permute.xlu0 %3189
      %3191 = vrot.lane.b32.xlu0 %v2467, 108
      %v3192 = vpop.permute.xlu0 %3191
      %3193 = vrot.lane.b32.xlu0 %v2468, 108
      %v3194 = vpop.permute.xlu0 %3193
      %3195 = vrot.lane.b32.xlu0 %v2469, 108
      %v3196 = vpop.permute.xlu0 %3195
      %3197 = vrot.lane.b32.xlu0 %v2470, 108
      %v3198 = vpop.permute.xlu0 %3197
      %3199 = vrot.lane.b32.xlu0 %v2471, 108
      %v3200 = vpop.permute.xlu0 %3199
      %3201 = vrot.lane.b32.xlu0 %v2472, 108
      %v3202 = vpop.permute.xlu0 %3201
      %3203 = vrot.lane.b32.xlu0 %v2473, 108
      %v3204 = vpop.permute.xlu0 %3203
      %3205 = vrot.lane.b32.xlu0 %v2474, 108
      %v3206 = vpop.permute.xlu0 %3205
      %3207 = vrot.lane.b32.xlu0 %v2475, 108
      %v3208 = vpop.permute.xlu0 %3207
      %3209 = vrot.lane.b32.xlu0 %v2476, 108
      %v3210 = vpop.permute.xlu0 %3209
      %3211 = vrot.lane.b32.xlu0 %v2477, 108
      %v3212 = vpop.permute.xlu0 %3211
      %3213 = vrot.lane.b32.xlu0 %v2478, 108
      %v3214 = vpop.permute.xlu0 %3213
      %3215 = vrot.lane.b32.xlu0 %v2479, 108
      %v3216 = vpop.permute.xlu0 %3215
      %3217 = vrot.lane.b32.xlu0 %v2480, 108
      %v3218 = vpop.permute.xlu0 %3217
      %3219 = vrot.lane.b32.xlu0 %v2481, 108
      %v3220 = vpop.permute.xlu0 %3219
      %3221 = vrot.lane.b32.xlu0 %v2482, 108
      %v3222 = vpop.permute.xlu0 %3221
      %3223 = vrot.lane.b32.xlu0 %v2483, 108
      %v3224 = vpop.permute.xlu0 %3223
      %3225 = vrot.lane.b32.xlu0 %v2484, 108
      %v3226 = vpop.permute.xlu0 %3225
      %3227 = vrot.lane.b32.xlu0 %v2485, 108
      %v3228 = vpop.permute.xlu0 %3227
      %3229 = vrot.lane.b32.xlu0 %v2486, 108
      %v3230 = vpop.permute.xlu0 %3229
      %3231 = vrot.lane.b32.xlu0 %v2487, 108
      %v3232 = vpop.permute.xlu0 %3231
      %3233 = vrot.lane.b32.xlu0 %v2488, 108
      %v3234 = vpop.permute.xlu0 %3233
      %3235 = vrot.lane.b32.xlu0 %v2489, 108
      %v3236 = vpop.permute.xlu0 %3235
      %3237 = vrot.lane.b32.xlu0 %v2490, 108
      %v3238 = vpop.permute.xlu0 %3237
      %v3239 = vsel %vm400, %v3176, %v3178
      %v3240 = vsel %vm400, %v3178, %v3180
      %v3241 = vsel %vm400, %v3180, %v3182
      %v3242 = vsel %vm400, %v3184, %v3186
      %v3243 = vsel %vm400, %v3186, %v3188
      %v3244 = vsel %vm400, %v3188, %v3190
      %v3245 = vsel %vm400, %v3192, %v3194
      %v3246 = vsel %vm400, %v3194, %v3196
      %v3247 = vsel %vm400, %v3196, %v3198
      %v3248 = vsel %vm400, %v3200, %v3202
      %v3249 = vsel %vm400, %v3202, %v3204
      %v3250 = vsel %vm400, %v3204, %v3206
      %v3251 = vsel %vm400, %v3208, %v3210
      %v3252 = vsel %vm400, %v3210, %v3212
      %v3253 = vsel %vm400, %v3212, %v3214
      %v3254 = vsel %vm400, %v3216, %v3218
      %v3255 = vsel %vm400, %v3218, %v3220
      %v3256 = vsel %vm400, %v3220, %v3222
      %v3257 = vsel %vm400, %v3224, %v3226
      %v3258 = vsel %vm400, %v3226, %v3228
      %v3259 = vsel %vm400, %v3228, %v3230
      %v3260 = vsel %vm400, %v3232, %v3234
      %v3261 = vsel %vm400, %v3234, %v3236
      %v3262 = vsel %vm400, %v3236, %v3238
      %3287 = vmatpush.bf16.msra.mxu0 %v3260
      %3288 = vmatpush.bf16.msra.mxu0 %v3257
      %3289 = vmatpush.bf16.msra.mxu0 %v3254
      %3290 = vmatpush.bf16.msra.mxu0 %v3251
      %3291 = vmatpush.bf16.msra.mxu0 %v3248
      %3292 = vmatpush.bf16.msra.mxu0 %v3245
      %3293 = vmatpush.bf16.msra.mxu0 %v3242
      %3294 = vmatpush.bf16.msra.mxu0 %v3239
      %3295 = vmatmul.bf16.gmra.mxu0 %v3174
      %v3296 = vpop.f32.mrf.mxu0
      %v3297 = vadd.f32 0.0, %v3296
      %v3298 = vpop.f32.mrf.mxu0
      %3299 = vdwg.mxu0
      %3300 = vmatpush.bf16.msra.mxu0 %v3261
      %3301 = vmatpush.bf16.msra.mxu0 %v3258
      %3302 = vmatpush.bf16.msra.mxu0 %v3255
      %3303 = vmatpush.bf16.msra.mxu0 %v3252
      %3304 = vmatpush.bf16.msra.mxu0 %v3249
      %3305 = vmatpush.bf16.msra.mxu0 %v3246
      %3306 = vmatpush.bf16.msra.mxu0 %v3243
      %3307 = vmatpush.bf16.msra.mxu0 %v3240
      %3308 = vmatmul.bf16.gmra.mxu0 %v3174
      %v3309 = vpop.f32.mrf.mxu0
      %v3310 = vadd.f32 0.0, %v3309
      %v3311 = vpop.f32.mrf.mxu0
      %3312 = vdwg.mxu0
      %3313 = vmatpush.bf16.msra.mxu0 %v3262
      %3314 = vmatpush.bf16.msra.mxu0 %v3259
      %3315 = vmatpush.bf16.msra.mxu0 %v3256
      %3316 = vmatpush.bf16.msra.mxu0 %v3253
      %3317 = vmatpush.bf16.msra.mxu0 %v3250
      %3318 = vmatpush.bf16.msra.mxu0 %v3247
      %3319 = vmatpush.bf16.msra.mxu0 %v3244
      %3320 = vmatpush.bf16.msra.mxu0 %v3241
      %3321 = vmatmul.bf16.gmra.mxu0 %v3174
      %v3322 = vpop.f32.mrf.mxu0
      %v3323 = vadd.f32 0.0, %v3322
      %v3324 = vpop.f32.mrf.mxu0
      %3325 = vdwg.mxu0
      %v3326 = vadd.f32 %v3170, %v3297
      %v3327 = vadd.f32 %v3171, %v3310
      %v3328 = vadd.f32 %v3172, %v3323
      %s3329 = scalar_lea.vmem %s4, 24
      %v3330 = vld [vmem:[%s3329] sm:$0xf]
      %3331 = vrot.lane.b32.xlu0 %v2459, 107
      %v3332 = vpop.permute.xlu0 %3331
      %3333 = vrot.lane.b32.xlu0 %v2460, 107
      %v3334 = vpop.permute.xlu0 %3333
      %3335 = vrot.lane.b32.xlu0 %v2461, 107
      %v3336 = vpop.permute.xlu0 %3335
      %3337 = vrot.lane.b32.xlu0 %v2462, 107
      %v3338 = vpop.permute.xlu0 %3337
      %3339 = vrot.lane.b32.xlu0 %v2463, 107
      %v3340 = vpop.permute.xlu0 %3339
      %3341 = vrot.lane.b32.xlu0 %v2464, 107
      %v3342 = vpop.permute.xlu0 %3341
      %3343 = vrot.lane.b32.xlu0 %v2465, 107
      %v3344 = vpop.permute.xlu0 %3343
      %3345 = vrot.lane.b32.xlu0 %v2466, 107
      %v3346 = vpop.permute.xlu0 %3345
      %3347 = vrot.lane.b32.xlu0 %v2467, 107
      %v3348 = vpop.permute.xlu0 %3347
      %3349 = vrot.lane.b32.xlu0 %v2468, 107
      %v3350 = vpop.permute.xlu0 %3349
      %3351 = vrot.lane.b32.xlu0 %v2469, 107
      %v3352 = vpop.permute.xlu0 %3351
      %3353 = vrot.lane.b32.xlu0 %v2470, 107
      %v3354 = vpop.permute.xlu0 %3353
      %3355 = vrot.lane.b32.xlu0 %v2471, 107
      %v3356 = vpop.permute.xlu0 %3355
      %3357 = vrot.lane.b32.xlu0 %v2472, 107
      %v3358 = vpop.permute.xlu0 %3357
      %3359 = vrot.lane.b32.xlu0 %v2473, 107
      %v3360 = vpop.permute.xlu0 %3359
      %3361 = vrot.lane.b32.xlu0 %v2474, 107
      %v3362 = vpop.permute.xlu0 %3361
      %3363 = vrot.lane.b32.xlu0 %v2475, 107
      %v3364 = vpop.permute.xlu0 %3363
      %3365 = vrot.lane.b32.xlu0 %v2476, 107
      %v3366 = vpop.permute.xlu0 %3365
      %3367 = vrot.lane.b32.xlu0 %v2477, 107
      %v3368 = vpop.permute.xlu0 %3367
      %3369 = vrot.lane.b32.xlu0 %v2478, 107
      %v3370 = vpop.permute.xlu0 %3369
      %3371 = vrot.lane.b32.xlu0 %v2479, 107
      %v3372 = vpop.permute.xlu0 %3371
      %3373 = vrot.lane.b32.xlu0 %v2480, 107
      %v3374 = vpop.permute.xlu0 %3373
      %3375 = vrot.lane.b32.xlu0 %v2481, 107
      %v3376 = vpop.permute.xlu0 %3375
      %3377 = vrot.lane.b32.xlu0 %v2482, 107
      %v3378 = vpop.permute.xlu0 %3377
      %3379 = vrot.lane.b32.xlu0 %v2483, 107
      %v3380 = vpop.permute.xlu0 %3379
      %3381 = vrot.lane.b32.xlu0 %v2484, 107
      %v3382 = vpop.permute.xlu0 %3381
      %3383 = vrot.lane.b32.xlu0 %v2485, 107
      %v3384 = vpop.permute.xlu0 %3383
      %3385 = vrot.lane.b32.xlu0 %v2486, 107
      %v3386 = vpop.permute.xlu0 %3385
      %3387 = vrot.lane.b32.xlu0 %v2487, 107
      %v3388 = vpop.permute.xlu0 %3387
      %3389 = vrot.lane.b32.xlu0 %v2488, 107
      %v3390 = vpop.permute.xlu0 %3389
      %3391 = vrot.lane.b32.xlu0 %v2489, 107
      %v3392 = vpop.permute.xlu0 %3391
      %3393 = vrot.lane.b32.xlu0 %v2490, 107
      %v3394 = vpop.permute.xlu0 %3393
      %v3395 = vsel %vm423, %v3332, %v3334
      %v3396 = vsel %vm423, %v3334, %v3336
      %v3397 = vsel %vm423, %v3336, %v3338
      %v3398 = vsel %vm423, %v3340, %v3342
      %v3399 = vsel %vm423, %v3342, %v3344
      %v3400 = vsel %vm423, %v3344, %v3346
      %v3401 = vsel %vm423, %v3348, %v3350
      %v3402 = vsel %vm423, %v3350, %v3352
      %v3403 = vsel %vm423, %v3352, %v3354
      %v3404 = vsel %vm423, %v3356, %v3358
      %v3405 = vsel %vm423, %v3358, %v3360
      %v3406 = vsel %vm423, %v3360, %v3362
      %v3407 = vsel %vm423, %v3364, %v3366
      %v3408 = vsel %vm423, %v3366, %v3368
      %v3409 = vsel %vm423, %v3368, %v3370
      %v3410 = vsel %vm423, %v3372, %v3374
      %v3411 = vsel %vm423, %v3374, %v3376
      %v3412 = vsel %vm423, %v3376, %v3378
      %v3413 = vsel %vm423, %v3380, %v3382
      %v3414 = vsel %vm423, %v3382, %v3384
      %v3415 = vsel %vm423, %v3384, %v3386
      %v3416 = vsel %vm423, %v3388, %v3390
      %v3417 = vsel %vm423, %v3390, %v3392
      %v3418 = vsel %vm423, %v3392, %v3394
      %3443 = vmatpush.bf16.msra.mxu0 %v3416
      %3444 = vmatpush.bf16.msra.mxu0 %v3413
      %3445 = vmatpush.bf16.msra.mxu0 %v3410
      %3446 = vmatpush.bf16.msra.mxu0 %v3407
      %3447 = vmatpush.bf16.msra.mxu0 %v3404
      %3448 = vmatpush.bf16.msra.mxu0 %v3401
      %3449 = vmatpush.bf16.msra.mxu0 %v3398
      %3450 = vmatpush.bf16.msra.mxu0 %v3395
      %3451 = vmatmul.bf16.gmra.mxu0 %v3330
      %v3452 = vpop.f32.mrf.mxu0
      %v3453 = vadd.f32 0.0, %v3452
      %v3454 = vpop.f32.mrf.mxu0
      %3455 = vdwg.mxu0
      %3456 = vmatpush.bf16.msra.mxu0 %v3417
      %3457 = vmatpush.bf16.msra.mxu0 %v3414
      %3458 = vmatpush.bf16.msra.mxu0 %v3411
      %3459 = vmatpush.bf16.msra.mxu0 %v3408
      %3460 = vmatpush.bf16.msra.mxu0 %v3405
      %3461 = vmatpush.bf16.msra.mxu0 %v3402
      %3462 = vmatpush.bf16.msra.mxu0 %v3399
      %3463 = vmatpush.bf16.msra.mxu0 %v3396
      %3464 = vmatmul.bf16.gmra.mxu0 %v3330
      %v3465 = vpop.f32.mrf.mxu0
      %v3466 = vadd.f32 0.0, %v3465
      %v3467 = vpop.f32.mrf.mxu0
      %3468 = vdwg.mxu0
      %3469 = vmatpush.bf16.msra.mxu0 %v3418
      %3470 = vmatpush.bf16.msra.mxu0 %v3415
      %3471 = vmatpush.bf16.msra.mxu0 %v3412
      %3472 = vmatpush.bf16.msra.mxu0 %v3409
      %3473 = vmatpush.bf16.msra.mxu0 %v3406
      %3474 = vmatpush.bf16.msra.mxu0 %v3403
      %3475 = vmatpush.bf16.msra.mxu0 %v3400
      %3476 = vmatpush.bf16.msra.mxu0 %v3397
      %3477 = vmatmul.bf16.gmra.mxu0 %v3330
      %v3478 = vpop.f32.mrf.mxu0
      %v3479 = vadd.f32 0.0, %v3478
      %v3480 = vpop.f32.mrf.mxu0
      %3481 = vdwg.mxu0
      %v3482 = vadd.f32 %v3326, %v3453
      %v3483 = vadd.f32 %v3327, %v3466
      %v3484 = vadd.f32 %v3328, %v3479
      %s3485 = scalar_lea.vmem %s4, 28
      %v3486 = vld [vmem:[%s3485] sm:$0xf]
      %3487 = vrot.lane.b32.xlu0 %v2459, 106
      %v3488 = vpop.permute.xlu0 %3487
      %3489 = vrot.lane.b32.xlu0 %v2460, 106
      %v3490 = vpop.permute.xlu0 %3489
      %3491 = vrot.lane.b32.xlu0 %v2461, 106
      %v3492 = vpop.permute.xlu0 %3491
      %3493 = vrot.lane.b32.xlu0 %v2462, 106
      %v3494 = vpop.permute.xlu0 %3493
      %3495 = vrot.lane.b32.xlu0 %v2463, 106
      %v3496 = vpop.permute.xlu0 %3495
      %3497 = vrot.lane.b32.xlu0 %v2464, 106
      %v3498 = vpop.permute.xlu0 %3497
      %3499 = vrot.lane.b32.xlu0 %v2465, 106
      %v3500 = vpop.permute.xlu0 %3499
      %3501 = vrot.lane.b32.xlu0 %v2466, 106
      %v3502 = vpop.permute.xlu0 %3501
      %3503 = vrot.lane.b32.xlu0 %v2467, 106
      %v3504 = vpop.permute.xlu0 %3503
      %3505 = vrot.lane.b32.xlu0 %v2468, 106
      %v3506 = vpop.permute.xlu0 %3505
      %3507 = vrot.lane.b32.xlu0 %v2469, 106
      %v3508 = vpop.permute.xlu0 %3507
      %3509 = vrot.lane.b32.xlu0 %v2470, 106
      %v3510 = vpop.permute.xlu0 %3509
      %3511 = vrot.lane.b32.xlu0 %v2471, 106
      %v3512 = vpop.permute.xlu0 %3511
      %3513 = vrot.lane.b32.xlu0 %v2472, 106
      %v3514 = vpop.permute.xlu0 %3513
      %3515 = vrot.lane.b32.xlu0 %v2473, 106
      %v3516 = vpop.permute.xlu0 %3515
      %3517 = vrot.lane.b32.xlu0 %v2474, 106
      %v3518 = vpop.permute.xlu0 %3517
      %3519 = vrot.lane.b32.xlu0 %v2475, 106
      %v3520 = vpop.permute.xlu0 %3519
      %3521 = vrot.lane.b32.xlu0 %v2476, 106
      %v3522 = vpop.permute.xlu0 %3521
      %3523 = vrot.lane.b32.xlu0 %v2477, 106
      %v3524 = vpop.permute.xlu0 %3523
      %3525 = vrot.lane.b32.xlu0 %v2478, 106
      %v3526 = vpop.permute.xlu0 %3525
      %3527 = vrot.lane.b32.xlu0 %v2479, 106
      %v3528 = vpop.permute.xlu0 %3527
      %3529 = vrot.lane.b32.xlu0 %v2480, 106
      %v3530 = vpop.permute.xlu0 %3529
      %3531 = vrot.lane.b32.xlu0 %v2481, 106
      %v3532 = vpop.permute.xlu0 %3531
      %3533 = vrot.lane.b32.xlu0 %v2482, 106
      %v3534 = vpop.permute.xlu0 %3533
      %3535 = vrot.lane.b32.xlu0 %v2483, 106
      %v3536 = vpop.permute.xlu0 %3535
      %3537 = vrot.lane.b32.xlu0 %v2484, 106
      %v3538 = vpop.permute.xlu0 %3537
      %3539 = vrot.lane.b32.xlu0 %v2485, 106
      %v3540 = vpop.permute.xlu0 %3539
      %3541 = vrot.lane.b32.xlu0 %v2486, 106
      %v3542 = vpop.permute.xlu0 %3541
      %3543 = vrot.lane.b32.xlu0 %v2487, 106
      %v3544 = vpop.permute.xlu0 %3543
      %3545 = vrot.lane.b32.xlu0 %v2488, 106
      %v3546 = vpop.permute.xlu0 %3545
      %3547 = vrot.lane.b32.xlu0 %v2489, 106
      %v3548 = vpop.permute.xlu0 %3547
      %3549 = vrot.lane.b32.xlu0 %v2490, 106
      %v3550 = vpop.permute.xlu0 %3549
      %v3551 = vsel %vm446, %v3488, %v3490
      %v3552 = vsel %vm446, %v3490, %v3492
      %v3553 = vsel %vm446, %v3492, %v3494
      %v3554 = vsel %vm446, %v3496, %v3498
      %v3555 = vsel %vm446, %v3498, %v3500
      %v3556 = vsel %vm446, %v3500, %v3502
      %v3557 = vsel %vm446, %v3504, %v3506
      %v3558 = vsel %vm446, %v3506, %v3508
      %v3559 = vsel %vm446, %v3508, %v3510
      %v3560 = vsel %vm446, %v3512, %v3514
      %v3561 = vsel %vm446, %v3514, %v3516
      %v3562 = vsel %vm446, %v3516, %v3518
      %v3563 = vsel %vm446, %v3520, %v3522
      %v3564 = vsel %vm446, %v3522, %v3524
      %v3565 = vsel %vm446, %v3524, %v3526
      %v3566 = vsel %vm446, %v3528, %v3530
      %v3567 = vsel %vm446, %v3530, %v3532
      %v3568 = vsel %vm446, %v3532, %v3534
      %v3569 = vsel %vm446, %v3536, %v3538
      %v3570 = vsel %vm446, %v3538, %v3540
      %v3571 = vsel %vm446, %v3540, %v3542
      %v3572 = vsel %vm446, %v3544, %v3546
      %v3573 = vsel %vm446, %v3546, %v3548
      %v3574 = vsel %vm446, %v3548, %v3550
      %3599 = vmatpush.bf16.msra.mxu0 %v3572
      %3600 = vmatpush.bf16.msra.mxu0 %v3569
      %3601 = vmatpush.bf16.msra.mxu0 %v3566
      %3602 = vmatpush.bf16.msra.mxu0 %v3563
      %3603 = vmatpush.bf16.msra.mxu0 %v3560
      %3604 = vmatpush.bf16.msra.mxu0 %v3557
      %3605 = vmatpush.bf16.msra.mxu0 %v3554
      %3606 = vmatpush.bf16.msra.mxu0 %v3551
      %3607 = vmatmul.bf16.gmra.mxu0 %v3486
      %v3608 = vpop.f32.mrf.mxu0
      %v3609 = vadd.f32 0.0, %v3608
      %v3610 = vpop.f32.mrf.mxu0
      %3611 = vdwg.mxu0
      %3612 = vmatpush.bf16.msra.mxu0 %v3573
      %3613 = vmatpush.bf16.msra.mxu0 %v3570
      %3614 = vmatpush.bf16.msra.mxu0 %v3567
      %3615 = vmatpush.bf16.msra.mxu0 %v3564
      %3616 = vmatpush.bf16.msra.mxu0 %v3561
      %3617 = vmatpush.bf16.msra.mxu0 %v3558
      %3618 = vmatpush.bf16.msra.mxu0 %v3555
      %3619 = vmatpush.bf16.msra.mxu0 %v3552
      %3620 = vmatmul.bf16.gmra.mxu0 %v3486
      %v3621 = vpop.f32.mrf.mxu0
      %v3622 = vadd.f32 0.0, %v3621
      %v3623 = vpop.f32.mrf.mxu0
      %3624 = vdwg.mxu0
      %3625 = vmatpush.bf16.msra.mxu0 %v3574
      %3626 = vmatpush.bf16.msra.mxu0 %v3571
      %3627 = vmatpush.bf16.msra.mxu0 %v3568
      %3628 = vmatpush.bf16.msra.mxu0 %v3565
      %3629 = vmatpush.bf16.msra.mxu0 %v3562
      %3630 = vmatpush.bf16.msra.mxu0 %v3559
      %3631 = vmatpush.bf16.msra.mxu0 %v3556
      %3632 = vmatpush.bf16.msra.mxu0 %v3553
      %3633 = vmatmul.bf16.gmra.mxu0 %v3486
      %v3634 = vpop.f32.mrf.mxu0
      %v3635 = vadd.f32 0.0, %v3634
      %v3636 = vpop.f32.mrf.mxu0
      %3637 = vdwg.mxu0
      %v3638 = vadd.f32 %v3482, %v3609
      %v3639 = vadd.f32 %v3483, %v3622
      %v3640 = vadd.f32 %v3484, %v3635
      %s3641 = scalar_lea.vmem %s4, 32
      %v3642 = vld [vmem:[%s3641] sm:$0xf]
      %3643 = vrot.lane.b32.xlu0 %v2459, 90
      %v3644 = vpop.permute.xlu0 %3643
      %3645 = vrot.lane.b32.xlu0 %v2460, 90
      %v3646 = vpop.permute.xlu0 %3645
      %3647 = vrot.lane.b32.xlu0 %v2461, 90
      %v3648 = vpop.permute.xlu0 %3647
      %3649 = vrot.lane.b32.xlu0 %v2462, 90
      %v3650 = vpop.permute.xlu0 %3649
      %3651 = vrot.lane.b32.xlu0 %v2463, 90
      %v3652 = vpop.permute.xlu0 %3651
      %3653 = vrot.lane.b32.xlu0 %v2464, 90
      %v3654 = vpop.permute.xlu0 %3653
      %3655 = vrot.lane.b32.xlu0 %v2465, 90
      %v3656 = vpop.permute.xlu0 %3655
      %3657 = vrot.lane.b32.xlu0 %v2466, 90
      %v3658 = vpop.permute.xlu0 %3657
      %3659 = vrot.lane.b32.xlu0 %v2467, 90
      %v3660 = vpop.permute.xlu0 %3659
      %3661 = vrot.lane.b32.xlu0 %v2468, 90
      %v3662 = vpop.permute.xlu0 %3661
      %3663 = vrot.lane.b32.xlu0 %v2469, 90
      %v3664 = vpop.permute.xlu0 %3663
      %3665 = vrot.lane.b32.xlu0 %v2470, 90
      %v3666 = vpop.permute.xlu0 %3665
      %3667 = vrot.lane.b32.xlu0 %v2471, 90
      %v3668 = vpop.permute.xlu0 %3667
      %3669 = vrot.lane.b32.xlu0 %v2472, 90
      %v3670 = vpop.permute.xlu0 %3669
      %3671 = vrot.lane.b32.xlu0 %v2473, 90
      %v3672 = vpop.permute.xlu0 %3671
      %3673 = vrot.lane.b32.xlu0 %v2474, 90
      %v3674 = vpop.permute.xlu0 %3673
      %3675 = vrot.lane.b32.xlu0 %v2475, 90
      %v3676 = vpop.permute.xlu0 %3675
      %3677 = vrot.lane.b32.xlu0 %v2476, 90
      %v3678 = vpop.permute.xlu0 %3677
      %3679 = vrot.lane.b32.xlu0 %v2477, 90
      %v3680 = vpop.permute.xlu0 %3679
      %3681 = vrot.lane.b32.xlu0 %v2478, 90
      %v3682 = vpop.permute.xlu0 %3681
      %3683 = vrot.lane.b32.xlu0 %v2479, 90
      %v3684 = vpop.permute.xlu0 %3683
      %3685 = vrot.lane.b32.xlu0 %v2480, 90
      %v3686 = vpop.permute.xlu0 %3685
      %3687 = vrot.lane.b32.xlu0 %v2481, 90
      %v3688 = vpop.permute.xlu0 %3687
      %3689 = vrot.lane.b32.xlu0 %v2482, 90
      %v3690 = vpop.permute.xlu0 %3689
      %3691 = vrot.lane.b32.xlu0 %v2483, 90
      %v3692 = vpop.permute.xlu0 %3691
      %3693 = vrot.lane.b32.xlu0 %v2484, 90
      %v3694 = vpop.permute.xlu0 %3693
      %3695 = vrot.lane.b32.xlu0 %v2485, 90
      %v3696 = vpop.permute.xlu0 %3695
      %3697 = vrot.lane.b32.xlu0 %v2486, 90
      %v3698 = vpop.permute.xlu0 %3697
      %3699 = vrot.lane.b32.xlu0 %v2487, 90
      %v3700 = vpop.permute.xlu0 %3699
      %3701 = vrot.lane.b32.xlu0 %v2488, 90
      %v3702 = vpop.permute.xlu0 %3701
      %3703 = vrot.lane.b32.xlu0 %v2489, 90
      %v3704 = vpop.permute.xlu0 %3703
      %3705 = vrot.lane.b32.xlu0 %v2490, 90
      %v3706 = vpop.permute.xlu0 %3705
      %v3707 = vsel %vm469, %v3644, %v3646
      %v3708 = vsel %vm469, %v3646, %v3648
      %v3709 = vsel %vm469, %v3648, %v3650
      %v3710 = vsel %vm469, %v3652, %v3654
      %v3711 = vsel %vm469, %v3654, %v3656
      %v3712 = vsel %vm469, %v3656, %v3658
      %v3713 = vsel %vm469, %v3660, %v3662
      %v3714 = vsel %vm469, %v3662, %v3664
      %v3715 = vsel %vm469, %v3664, %v3666
      %v3716 = vsel %vm469, %v3668, %v3670
      %v3717 = vsel %vm469, %v3670, %v3672
      %v3718 = vsel %vm469, %v3672, %v3674
      %v3719 = vsel %vm469, %v3676, %v3678
      %v3720 = vsel %vm469, %v3678, %v3680
      %v3721 = vsel %vm469, %v3680, %v3682
      %v3722 = vsel %vm469, %v3684, %v3686
      %v3723 = vsel %vm469, %v3686, %v3688
      %v3724 = vsel %vm469, %v3688, %v3690
      %v3725 = vsel %vm469, %v3692, %v3694
      %v3726 = vsel %vm469, %v3694, %v3696
      %v3727 = vsel %vm469, %v3696, %v3698
      %v3728 = vsel %vm469, %v3700, %v3702
      %v3729 = vsel %vm469, %v3702, %v3704
      %v3730 = vsel %vm469, %v3704, %v3706
      %3755 = vmatpush.bf16.msra.mxu0 %v3728
      %3756 = vmatpush.bf16.msra.mxu0 %v3725
      %3757 = vmatpush.bf16.msra.mxu0 %v3722
      %3758 = vmatpush.bf16.msra.mxu0 %v3719
      %3759 = vmatpush.bf16.msra.mxu0 %v3716
      %3760 = vmatpush.bf16.msra.mxu0 %v3713
      %3761 = vmatpush.bf16.msra.mxu0 %v3710
      %3762 = vmatpush.bf16.msra.mxu0 %v3707
      %3763 = vmatmul.bf16.gmra.mxu0 %v3642
      %v3764 = vpop.f32.mrf.mxu0
      %v3765 = vadd.f32 0.0, %v3764
      %v3766 = vpop.f32.mrf.mxu0
      %3767 = vdwg.mxu0
      %3768 = vmatpush.bf16.msra.mxu0 %v3729
      %3769 = vmatpush.bf16.msra.mxu0 %v3726
      %3770 = vmatpush.bf16.msra.mxu0 %v3723
      %3771 = vmatpush.bf16.msra.mxu0 %v3720
      %3772 = vmatpush.bf16.msra.mxu0 %v3717
      %3773 = vmatpush.bf16.msra.mxu0 %v3714
      %3774 = vmatpush.bf16.msra.mxu0 %v3711
      %3775 = vmatpush.bf16.msra.mxu0 %v3708
      %3776 = vmatmul.bf16.gmra.mxu0 %v3642
      %v3777 = vpop.f32.mrf.mxu0
      %v3778 = vadd.f32 0.0, %v3777
      %v3779 = vpop.f32.mrf.mxu0
      %3780 = vdwg.mxu0
      %3781 = vmatpush.bf16.msra.mxu0 %v3730
      %3782 = vmatpush.bf16.msra.mxu0 %v3727
      %3783 = vmatpush.bf16.msra.mxu0 %v3724
      %3784 = vmatpush.bf16.msra.mxu0 %v3721
      %3785 = vmatpush.bf16.msra.mxu0 %v3718
      %3786 = vmatpush.bf16.msra.mxu0 %v3715
      %3787 = vmatpush.bf16.msra.mxu0 %v3712
      %3788 = vmatpush.bf16.msra.mxu0 %v3709
      %3789 = vmatmul.bf16.gmra.mxu0 %v3642
      %v3790 = vpop.f32.mrf.mxu0
      %v3791 = vadd.f32 0.0, %v3790
      %v3792 = vpop.f32.mrf.mxu0
      %3793 = vdwg.mxu0
      %v3794 = vadd.f32 %v3638, %v3765
      %v3795 = vadd.f32 %v3639, %v3778
      %v3796 = vadd.f32 %v3640, %v3791
      %s3797 = scalar_lea.vmem %s4, 36
      %v3798 = vld [vmem:[%s3797] sm:$0xf]
      %3799 = vrot.lane.b32.xlu0 %v2459, 89
      %v3800 = vpop.permute.xlu0 %3799
      %3801 = vrot.lane.b32.xlu0 %v2460, 89
      %v3802 = vpop.permute.xlu0 %3801
      %3803 = vrot.lane.b32.xlu0 %v2461, 89
      %v3804 = vpop.permute.xlu0 %3803
      %3805 = vrot.lane.b32.xlu0 %v2462, 89
      %v3806 = vpop.permute.xlu0 %3805
      %3807 = vrot.lane.b32.xlu0 %v2463, 89
      %v3808 = vpop.permute.xlu0 %3807
      %3809 = vrot.lane.b32.xlu0 %v2464, 89
      %v3810 = vpop.permute.xlu0 %3809
      %3811 = vrot.lane.b32.xlu0 %v2465, 89
      %v3812 = vpop.permute.xlu0 %3811
      %3813 = vrot.lane.b32.xlu0 %v2466, 89
      %v3814 = vpop.permute.xlu0 %3813
      %3815 = vrot.lane.b32.xlu0 %v2467, 89
      %v3816 = vpop.permute.xlu0 %3815
      %3817 = vrot.lane.b32.xlu0 %v2468, 89
      %v3818 = vpop.permute.xlu0 %3817
      %3819 = vrot.lane.b32.xlu0 %v2469, 89
      %v3820 = vpop.permute.xlu0 %3819
      %3821 = vrot.lane.b32.xlu0 %v2470, 89
      %v3822 = vpop.permute.xlu0 %3821
      %3823 = vrot.lane.b32.xlu0 %v2471, 89
      %v3824 = vpop.permute.xlu0 %3823
      %3825 = vrot.lane.b32.xlu0 %v2472, 89
      %v3826 = vpop.permute.xlu0 %3825
      %3827 = vrot.lane.b32.xlu0 %v2473, 89
      %v3828 = vpop.permute.xlu0 %3827
      %3829 = vrot.lane.b32.xlu0 %v2474, 89
      %v3830 = vpop.permute.xlu0 %3829
      %3831 = vrot.lane.b32.xlu0 %v2475, 89
      %v3832 = vpop.permute.xlu0 %3831
      %3833 = vrot.lane.b32.xlu0 %v2476, 89
      %v3834 = vpop.permute.xlu0 %3833
      %3835 = vrot.lane.b32.xlu0 %v2477, 89
      %v3836 = vpop.permute.xlu0 %3835
      %3837 = vrot.lane.b32.xlu0 %v2478, 89
      %v3838 = vpop.permute.xlu0 %3837
      %3839 = vrot.lane.b32.xlu0 %v2479, 89
      %v3840 = vpop.permute.xlu0 %3839
      %3841 = vrot.lane.b32.xlu0 %v2480, 89
      %v3842 = vpop.permute.xlu0 %3841
      %3843 = vrot.lane.b32.xlu0 %v2481, 89
      %v3844 = vpop.permute.xlu0 %3843
      %3845 = vrot.lane.b32.xlu0 %v2482, 89
      %v3846 = vpop.permute.xlu0 %3845
      %3847 = vrot.lane.b32.xlu0 %v2483, 89
      %v3848 = vpop.permute.xlu0 %3847
      %3849 = vrot.lane.b32.xlu0 %v2484, 89
      %v3850 = vpop.permute.xlu0 %3849
      %3851 = vrot.lane.b32.xlu0 %v2485, 89
      %v3852 = vpop.permute.xlu0 %3851
      %3853 = vrot.lane.b32.xlu0 %v2486, 89
      %v3854 = vpop.permute.xlu0 %3853
      %3855 = vrot.lane.b32.xlu0 %v2487, 89
      %v3856 = vpop.permute.xlu0 %3855
      %3857 = vrot.lane.b32.xlu0 %v2488, 89
      %v3858 = vpop.permute.xlu0 %3857
      %3859 = vrot.lane.b32.xlu0 %v2489, 89
      %v3860 = vpop.permute.xlu0 %3859
      %3861 = vrot.lane.b32.xlu0 %v2490, 89
      %v3862 = vpop.permute.xlu0 %3861
      %v3863 = vsel %vm492, %v3800, %v3802
      %v3864 = vsel %vm492, %v3802, %v3804
      %v3865 = vsel %vm492, %v3804, %v3806
      %v3866 = vsel %vm492, %v3808, %v3810
      %v3867 = vsel %vm492, %v3810, %v3812
      %v3868 = vsel %vm492, %v3812, %v3814
      %v3869 = vsel %vm492, %v3816, %v3818
      %v3870 = vsel %vm492, %v3818, %v3820
      %v3871 = vsel %vm492, %v3820, %v3822
      %v3872 = vsel %vm492, %v3824, %v3826
      %v3873 = vsel %vm492, %v3826, %v3828
      %v3874 = vsel %vm492, %v3828, %v3830
      %v3875 = vsel %vm492, %v3832, %v3834
      %v3876 = vsel %vm492, %v3834, %v3836
      %v3877 = vsel %vm492, %v3836, %v3838
      %v3878 = vsel %vm492, %v3840, %v3842
      %v3879 = vsel %vm492, %v3842, %v3844
      %v3880 = vsel %vm492, %v3844, %v3846
      %v3881 = vsel %vm492, %v3848, %v3850
      %v3882 = vsel %vm492, %v3850, %v3852
      %v3883 = vsel %vm492, %v3852, %v3854
      %v3884 = vsel %vm492, %v3856, %v3858
      %v3885 = vsel %vm492, %v3858, %v3860
      %v3886 = vsel %vm492, %v3860, %v3862
      %3911 = vmatpush.bf16.msra.mxu0 %v3884
      %3912 = vmatpush.bf16.msra.mxu0 %v3881
      %3913 = vmatpush.bf16.msra.mxu0 %v3878
      %3914 = vmatpush.bf16.msra.mxu0 %v3875
      %3915 = vmatpush.bf16.msra.mxu0 %v3872
      %3916 = vmatpush.bf16.msra.mxu0 %v3869
      %3917 = vmatpush.bf16.msra.mxu0 %v3866
      %3918 = vmatpush.bf16.msra.mxu0 %v3863
      %3919 = vmatmul.bf16.gmra.mxu0 %v3798
      %v3920 = vpop.f32.mrf.mxu0
      %v3921 = vadd.f32 0.0, %v3920
      %v3922 = vpop.f32.mrf.mxu0
      %3923 = vdwg.mxu0
      %3924 = vmatpush.bf16.msra.mxu0 %v3885
      %3925 = vmatpush.bf16.msra.mxu0 %v3882
      %3926 = vmatpush.bf16.msra.mxu0 %v3879
      %3927 = vmatpush.bf16.msra.mxu0 %v3876
      %3928 = vmatpush.bf16.msra.mxu0 %v3873
      %3929 = vmatpush.bf16.msra.mxu0 %v3870
      %3930 = vmatpush.bf16.msra.mxu0 %v3867
      %3931 = vmatpush.bf16.msra.mxu0 %v3864
      %3932 = vmatmul.bf16.gmra.mxu0 %v3798
      %v3933 = vpop.f32.mrf.mxu0
      %v3934 = vadd.f32 0.0, %v3933
      %v3935 = vpop.f32.mrf.mxu0
      %3936 = vdwg.mxu0
      %3937 = vmatpush.bf16.msra.mxu0 %v3886
      %3938 = vmatpush.bf16.msra.mxu0 %v3883
      %3939 = vmatpush.bf16.msra.mxu0 %v3880
      %3940 = vmatpush.bf16.msra.mxu0 %v3877
      %3941 = vmatpush.bf16.msra.mxu0 %v3874
      %3942 = vmatpush.bf16.msra.mxu0 %v3871
      %3943 = vmatpush.bf16.msra.mxu0 %v3868
      %3944 = vmatpush.bf16.msra.mxu0 %v3865
      %3945 = vmatmul.bf16.gmra.mxu0 %v3798
      %v3946 = vpop.f32.mrf.mxu0
      %v3947 = vadd.f32 0.0, %v3946
      %v3948 = vpop.f32.mrf.mxu0
      %3949 = vdwg.mxu0
      %v3950 = vadd.f32 %v3794, %v3921
      %v3951 = vadd.f32 %v3795, %v3934
      %v3952 = vadd.f32 %v3796, %v3947
      %s3953 = scalar_lea.vmem %s4, 40
      %v3954 = vld [vmem:[%s3953] sm:$0xf]
      %3955 = vrot.lane.b32.xlu0 %v2459, 88
      %v3956 = vpop.permute.xlu0 %3955
      %3957 = vrot.lane.b32.xlu0 %v2460, 88
      %v3958 = vpop.permute.xlu0 %3957
      %3959 = vrot.lane.b32.xlu0 %v2461, 88
      %v3960 = vpop.permute.xlu0 %3959
      %3961 = vrot.lane.b32.xlu0 %v2462, 88
      %v3962 = vpop.permute.xlu0 %3961
      %3963 = vrot.lane.b32.xlu0 %v2463, 88
      %v3964 = vpop.permute.xlu0 %3963
      %3965 = vrot.lane.b32.xlu0 %v2464, 88
      %v3966 = vpop.permute.xlu0 %3965
      %3967 = vrot.lane.b32.xlu0 %v2465, 88
      %v3968 = vpop.permute.xlu0 %3967
      %3969 = vrot.lane.b32.xlu0 %v2466, 88
      %v3970 = vpop.permute.xlu0 %3969
      %3971 = vrot.lane.b32.xlu0 %v2467, 88
      %v3972 = vpop.permute.xlu0 %3971
      %3973 = vrot.lane.b32.xlu0 %v2468, 88
      %v3974 = vpop.permute.xlu0 %3973
      %3975 = vrot.lane.b32.xlu0 %v2469, 88
      %v3976 = vpop.permute.xlu0 %3975
      %3977 = vrot.lane.b32.xlu0 %v2470, 88
      %v3978 = vpop.permute.xlu0 %3977
      %3979 = vrot.lane.b32.xlu0 %v2471, 88
      %v3980 = vpop.permute.xlu0 %3979
      %3981 = vrot.lane.b32.xlu0 %v2472, 88
      %v3982 = vpop.permute.xlu0 %3981
      %3983 = vrot.lane.b32.xlu0 %v2473, 88
      %v3984 = vpop.permute.xlu0 %3983
      %3985 = vrot.lane.b32.xlu0 %v2474, 88
      %v3986 = vpop.permute.xlu0 %3985
      %3987 = vrot.lane.b32.xlu0 %v2475, 88
      %v3988 = vpop.permute.xlu0 %3987
      %3989 = vrot.lane.b32.xlu0 %v2476, 88
      %v3990 = vpop.permute.xlu0 %3989
      %3991 = vrot.lane.b32.xlu0 %v2477, 88
      %v3992 = vpop.permute.xlu0 %3991
      %3993 = vrot.lane.b32.xlu0 %v2478, 88
      %v3994 = vpop.permute.xlu0 %3993
      %3995 = vrot.lane.b32.xlu0 %v2479, 88
      %v3996 = vpop.permute.xlu0 %3995
      %3997 = vrot.lane.b32.xlu0 %v2480, 88
      %v3998 = vpop.permute.xlu0 %3997
      %3999 = vrot.lane.b32.xlu0 %v2481, 88
      %v4000 = vpop.permute.xlu0 %3999
      %4001 = vrot.lane.b32.xlu0 %v2482, 88
      %v4002 = vpop.permute.xlu0 %4001
      %4003 = vrot.lane.b32.xlu0 %v2483, 88
      %v4004 = vpop.permute.xlu0 %4003
      %4005 = vrot.lane.b32.xlu0 %v2484, 88
      %v4006 = vpop.permute.xlu0 %4005
      %4007 = vrot.lane.b32.xlu0 %v2485, 88
      %v4008 = vpop.permute.xlu0 %4007
      %4009 = vrot.lane.b32.xlu0 %v2486, 88
      %v4010 = vpop.permute.xlu0 %4009
      %4011 = vrot.lane.b32.xlu0 %v2487, 88
      %v4012 = vpop.permute.xlu0 %4011
      %4013 = vrot.lane.b32.xlu0 %v2488, 88
      %v4014 = vpop.permute.xlu0 %4013
      %4015 = vrot.lane.b32.xlu0 %v2489, 88
      %v4016 = vpop.permute.xlu0 %4015
      %4017 = vrot.lane.b32.xlu0 %v2490, 88
      %v4018 = vpop.permute.xlu0 %4017
      %v4019 = vsel %vm515, %v3956, %v3958
      %v4020 = vsel %vm515, %v3958, %v3960
      %v4021 = vsel %vm515, %v3960, %v3962
      %v4022 = vsel %vm515, %v3964, %v3966
      %v4023 = vsel %vm515, %v3966, %v3968
      %v4024 = vsel %vm515, %v3968, %v3970
      %v4025 = vsel %vm515, %v3972, %v3974
      %v4026 = vsel %vm515, %v3974, %v3976
      %v4027 = vsel %vm515, %v3976, %v3978
      %v4028 = vsel %vm515, %v3980, %v3982
      %v4029 = vsel %vm515, %v3982, %v3984
      %v4030 = vsel %vm515, %v3984, %v3986
      %v4031 = vsel %vm515, %v3988, %v3990
      %v4032 = vsel %vm515, %v3990, %v3992
      %v4033 = vsel %vm515, %v3992, %v3994
      %v4034 = vsel %vm515, %v3996, %v3998
      %v4035 = vsel %vm515, %v3998, %v4000
      %v4036 = vsel %vm515, %v4000, %v4002
      %v4037 = vsel %vm515, %v4004, %v4006
      %v4038 = vsel %vm515, %v4006, %v4008
      %v4039 = vsel %vm515, %v4008, %v4010
      %v4040 = vsel %vm515, %v4012, %v4014
      %v4041 = vsel %vm515, %v4014, %v4016
      %v4042 = vsel %vm515, %v4016, %v4018
      %4067 = vmatpush.bf16.msra.mxu0 %v4040
      %4068 = vmatpush.bf16.msra.mxu0 %v4037
      %4069 = vmatpush.bf16.msra.mxu0 %v4034
      %4070 = vmatpush.bf16.msra.mxu0 %v4031
      %4071 = vmatpush.bf16.msra.mxu0 %v4028
      %4072 = vmatpush.bf16.msra.mxu0 %v4025
      %4073 = vmatpush.bf16.msra.mxu0 %v4022
      %4074 = vmatpush.bf16.msra.mxu0 %v4019
      %4075 = vmatmul.bf16.gmra.mxu0 %v3954
      %v4076 = vpop.f32.mrf.mxu0
      %v4077 = vadd.f32 0.0, %v4076
      %v4078 = vpop.f32.mrf.mxu0
      %4079 = vdwg.mxu0
      %4080 = vmatpush.bf16.msra.mxu0 %v4041
      %4081 = vmatpush.bf16.msra.mxu0 %v4038
      %4082 = vmatpush.bf16.msra.mxu0 %v4035
      %4083 = vmatpush.bf16.msra.mxu0 %v4032
      %4084 = vmatpush.bf16.msra.mxu0 %v4029
      %4085 = vmatpush.bf16.msra.mxu0 %v4026
      %4086 = vmatpush.bf16.msra.mxu0 %v4023
      %4087 = vmatpush.bf16.msra.mxu0 %v4020
      %4088 = vmatmul.bf16.gmra.mxu0 %v3954
      %v4089 = vpop.f32.mrf.mxu0
      %v4090 = vadd.f32 0.0, %v4089
      %v4091 = vpop.f32.mrf.mxu0
      %4092 = vdwg.mxu0
      %4093 = vmatpush.bf16.msra.mxu0 %v4042
      %4094 = vmatpush.bf16.msra.mxu0 %v4039
      %4095 = vmatpush.bf16.msra.mxu0 %v4036
      %4096 = vmatpush.bf16.msra.mxu0 %v4033
      %4097 = vmatpush.bf16.msra.mxu0 %v4030
      %4098 = vmatpush.bf16.msra.mxu0 %v4027
      %4099 = vmatpush.bf16.msra.mxu0 %v4024
      %4100 = vmatpush.bf16.msra.mxu0 %v4021
      %4101 = vmatmul.bf16.gmra.mxu0 %v3954
      %v4102 = vpop.f32.mrf.mxu0
      %v4103 = vadd.f32 0.0, %v4102
      %v4104 = vpop.f32.mrf.mxu0
      %4105 = vdwg.mxu0
      %v4106 = vadd.f32 %v3950, %v4077
      %v4107 = vadd.f32 %v3951, %v4090
      %v4108 = vadd.f32 %v3952, %v4103
      %s4109 = scalar_lea.vmem %s4, 44
      %v4110 = vld [vmem:[%s4109] sm:$0xf]
      %4111 = vrot.lane.b32.xlu0 %v2459, 87
      %v4112 = vpop.permute.xlu0 %4111
      %4113 = vrot.lane.b32.xlu0 %v2460, 87
      %v4114 = vpop.permute.xlu0 %4113
      %4115 = vrot.lane.b32.xlu0 %v2461, 87
      %v4116 = vpop.permute.xlu0 %4115
      %4117 = vrot.lane.b32.xlu0 %v2462, 87
      %v4118 = vpop.permute.xlu0 %4117
      %4119 = vrot.lane.b32.xlu0 %v2463, 87
      %v4120 = vpop.permute.xlu0 %4119
      %4121 = vrot.lane.b32.xlu0 %v2464, 87
      %v4122 = vpop.permute.xlu0 %4121
      %4123 = vrot.lane.b32.xlu0 %v2465, 87
      %v4124 = vpop.permute.xlu0 %4123
      %4125 = vrot.lane.b32.xlu0 %v2466, 87
      %v4126 = vpop.permute.xlu0 %4125
      %4127 = vrot.lane.b32.xlu0 %v2467, 87
      %v4128 = vpop.permute.xlu0 %4127
      %4129 = vrot.lane.b32.xlu0 %v2468, 87
      %v4130 = vpop.permute.xlu0 %4129
      %4131 = vrot.lane.b32.xlu0 %v2469, 87
      %v4132 = vpop.permute.xlu0 %4131
      %4133 = vrot.lane.b32.xlu0 %v2470, 87
      %v4134 = vpop.permute.xlu0 %4133
      %4135 = vrot.lane.b32.xlu0 %v2471, 87
      %v4136 = vpop.permute.xlu0 %4135
      %4137 = vrot.lane.b32.xlu0 %v2472, 87
      %v4138 = vpop.permute.xlu0 %4137
      %4139 = vrot.lane.b32.xlu0 %v2473, 87
      %v4140 = vpop.permute.xlu0 %4139
      %4141 = vrot.lane.b32.xlu0 %v2474, 87
      %v4142 = vpop.permute.xlu0 %4141
      %4143 = vrot.lane.b32.xlu0 %v2475, 87
      %v4144 = vpop.permute.xlu0 %4143
      %4145 = vrot.lane.b32.xlu0 %v2476, 87
      %v4146 = vpop.permute.xlu0 %4145
      %4147 = vrot.lane.b32.xlu0 %v2477, 87
      %v4148 = vpop.permute.xlu0 %4147
      %4149 = vrot.lane.b32.xlu0 %v2478, 87
      %v4150 = vpop.permute.xlu0 %4149
      %4151 = vrot.lane.b32.xlu0 %v2479, 87
      %v4152 = vpop.permute.xlu0 %4151
      %4153 = vrot.lane.b32.xlu0 %v2480, 87
      %v4154 = vpop.permute.xlu0 %4153
      %4155 = vrot.lane.b32.xlu0 %v2481, 87
      %v4156 = vpop.permute.xlu0 %4155
      %4157 = vrot.lane.b32.xlu0 %v2482, 87
      %v4158 = vpop.permute.xlu0 %4157
      %4159 = vrot.lane.b32.xlu0 %v2483, 87
      %v4160 = vpop.permute.xlu0 %4159
      %4161 = vrot.lane.b32.xlu0 %v2484, 87
      %v4162 = vpop.permute.xlu0 %4161
      %4163 = vrot.lane.b32.xlu0 %v2485, 87
      %v4164 = vpop.permute.xlu0 %4163
      %4165 = vrot.lane.b32.xlu0 %v2486, 87
      %v4166 = vpop.permute.xlu0 %4165
      %4167 = vrot.lane.b32.xlu0 %v2487, 87
      %v4168 = vpop.permute.xlu0 %4167
      %4169 = vrot.lane.b32.xlu0 %v2488, 87
      %v4170 = vpop.permute.xlu0 %4169
      %4171 = vrot.lane.b32.xlu0 %v2489, 87
      %v4172 = vpop.permute.xlu0 %4171
      %4173 = vrot.lane.b32.xlu0 %v2490, 87
      %v4174 = vpop.permute.xlu0 %4173
      %v4175 = vsel %vm538, %v4112, %v4114
      %v4176 = vsel %vm538, %v4114, %v4116
      %v4177 = vsel %vm538, %v4116, %v4118
      %v4178 = vsel %vm538, %v4120, %v4122
      %v4179 = vsel %vm538, %v4122, %v4124
      %v4180 = vsel %vm538, %v4124, %v4126
      %v4181 = vsel %vm538, %v4128, %v4130
      %v4182 = vsel %vm538, %v4130, %v4132
      %v4183 = vsel %vm538, %v4132, %v4134
      %v4184 = vsel %vm538, %v4136, %v4138
      %v4185 = vsel %vm538, %v4138, %v4140
      %v4186 = vsel %vm538, %v4140, %v4142
      %v4187 = vsel %vm538, %v4144, %v4146
      %v4188 = vsel %vm538, %v4146, %v4148
      %v4189 = vsel %vm538, %v4148, %v4150
      %v4190 = vsel %vm538, %v4152, %v4154
      %v4191 = vsel %vm538, %v4154, %v4156
      %v4192 = vsel %vm538, %v4156, %v4158
      %v4193 = vsel %vm538, %v4160, %v4162
      %v4194 = vsel %vm538, %v4162, %v4164
      %v4195 = vsel %vm538, %v4164, %v4166
      %v4196 = vsel %vm538, %v4168, %v4170
      %v4197 = vsel %vm538, %v4170, %v4172
      %v4198 = vsel %vm538, %v4172, %v4174
      %4223 = vmatpush.bf16.msra.mxu0 %v4196
      %4224 = vmatpush.bf16.msra.mxu0 %v4193
      %4225 = vmatpush.bf16.msra.mxu0 %v4190
      %4226 = vmatpush.bf16.msra.mxu0 %v4187
      %4227 = vmatpush.bf16.msra.mxu0 %v4184
      %4228 = vmatpush.bf16.msra.mxu0 %v4181
      %4229 = vmatpush.bf16.msra.mxu0 %v4178
      %4230 = vmatpush.bf16.msra.mxu0 %v4175
      %4231 = vmatmul.bf16.gmra.mxu0 %v4110
      %v4232 = vpop.f32.mrf.mxu0
      %v4233 = vadd.f32 0.0, %v4232
      %v4234 = vpop.f32.mrf.mxu0
      %4235 = vdwg.mxu0
      %4236 = vmatpush.bf16.msra.mxu0 %v4197
      %4237 = vmatpush.bf16.msra.mxu0 %v4194
      %4238 = vmatpush.bf16.msra.mxu0 %v4191
      %4239 = vmatpush.bf16.msra.mxu0 %v4188
      %4240 = vmatpush.bf16.msra.mxu0 %v4185
      %4241 = vmatpush.bf16.msra.mxu0 %v4182
      %4242 = vmatpush.bf16.msra.mxu0 %v4179
      %4243 = vmatpush.bf16.msra.mxu0 %v4176
      %4244 = vmatmul.bf16.gmra.mxu0 %v4110
      %v4245 = vpop.f32.mrf.mxu0
      %v4246 = vadd.f32 0.0, %v4245
      %v4247 = vpop.f32.mrf.mxu0
      %4248 = vdwg.mxu0
      %4249 = vmatpush.bf16.msra.mxu0 %v4198
      %4250 = vmatpush.bf16.msra.mxu0 %v4195
      %4251 = vmatpush.bf16.msra.mxu0 %v4192
      %4252 = vmatpush.bf16.msra.mxu0 %v4189
      %4253 = vmatpush.bf16.msra.mxu0 %v4186
      %4254 = vmatpush.bf16.msra.mxu0 %v4183
      %4255 = vmatpush.bf16.msra.mxu0 %v4180
      %4256 = vmatpush.bf16.msra.mxu0 %v4177
      %4257 = vmatmul.bf16.gmra.mxu0 %v4110
      %v4258 = vpop.f32.mrf.mxu0
      %v4259 = vadd.f32 0.0, %v4258
      %v4260 = vpop.f32.mrf.mxu0
      %4261 = vdwg.mxu0
      %v4262 = vadd.f32 %v4106, %v4233
      %v4263 = vadd.f32 %v4107, %v4246
      %v4264 = vadd.f32 %v4108, %v4259
      %s4265 = scalar_lea.vmem %s4, 48
      %v4266 = vld [vmem:[%s4265] sm:$0xf]
      %4267 = vrot.lane.b32.xlu0 %v2459, 71
      %v4268 = vpop.permute.xlu0 %4267
      %4269 = vrot.lane.b32.xlu0 %v2460, 71
      %v4270 = vpop.permute.xlu0 %4269
      %4271 = vrot.lane.b32.xlu0 %v2461, 71
      %v4272 = vpop.permute.xlu0 %4271
      %4273 = vrot.lane.b32.xlu0 %v2462, 71
      %v4274 = vpop.permute.xlu0 %4273
      %4275 = vrot.lane.b32.xlu0 %v2463, 71
      %v4276 = vpop.permute.xlu0 %4275
      %4277 = vrot.lane.b32.xlu0 %v2464, 71
      %v4278 = vpop.permute.xlu0 %4277
      %4279 = vrot.lane.b32.xlu0 %v2465, 71
      %v4280 = vpop.permute.xlu0 %4279
      %4281 = vrot.lane.b32.xlu0 %v2466, 71
      %v4282 = vpop.permute.xlu0 %4281
      %4283 = vrot.lane.b32.xlu0 %v2467, 71
      %v4284 = vpop.permute.xlu0 %4283
      %4285 = vrot.lane.b32.xlu0 %v2468, 71
      %v4286 = vpop.permute.xlu0 %4285
      %4287 = vrot.lane.b32.xlu0 %v2469, 71
      %v4288 = vpop.permute.xlu0 %4287
      %4289 = vrot.lane.b32.xlu0 %v2470, 71
      %v4290 = vpop.permute.xlu0 %4289
      %4291 = vrot.lane.b32.xlu0 %v2471, 71
      %v4292 = vpop.permute.xlu0 %4291
      %4293 = vrot.lane.b32.xlu0 %v2472, 71
      %v4294 = vpop.permute.xlu0 %4293
      %4295 = vrot.lane.b32.xlu0 %v2473, 71
      %v4296 = vpop.permute.xlu0 %4295
      %4297 = vrot.lane.b32.xlu0 %v2474, 71
      %v4298 = vpop.permute.xlu0 %4297
      %4299 = vrot.lane.b32.xlu0 %v2475, 71
      %v4300 = vpop.permute.xlu0 %4299
      %4301 = vrot.lane.b32.xlu0 %v2476, 71
      %v4302 = vpop.permute.xlu0 %4301
      %4303 = vrot.lane.b32.xlu0 %v2477, 71
      %v4304 = vpop.permute.xlu0 %4303
      %4305 = vrot.lane.b32.xlu0 %v2478, 71
      %v4306 = vpop.permute.xlu0 %4305
      %4307 = vrot.lane.b32.xlu0 %v2479, 71
      %v4308 = vpop.permute.xlu0 %4307
      %4309 = vrot.lane.b32.xlu0 %v2480, 71
      %v4310 = vpop.permute.xlu0 %4309
      %4311 = vrot.lane.b32.xlu0 %v2481, 71
      %v4312 = vpop.permute.xlu0 %4311
      %4313 = vrot.lane.b32.xlu0 %v2482, 71
      %v4314 = vpop.permute.xlu0 %4313
      %4315 = vrot.lane.b32.xlu0 %v2483, 71
      %v4316 = vpop.permute.xlu0 %4315
      %4317 = vrot.lane.b32.xlu0 %v2484, 71
      %v4318 = vpop.permute.xlu0 %4317
      %4319 = vrot.lane.b32.xlu0 %v2485, 71
      %v4320 = vpop.permute.xlu0 %4319
      %4321 = vrot.lane.b32.xlu0 %v2486, 71
      %v4322 = vpop.permute.xlu0 %4321
      %4323 = vrot.lane.b32.xlu0 %v2487, 71
      %v4324 = vpop.permute.xlu0 %4323
      %4325 = vrot.lane.b32.xlu0 %v2488, 71
      %v4326 = vpop.permute.xlu0 %4325
      %4327 = vrot.lane.b32.xlu0 %v2489, 71
      %v4328 = vpop.permute.xlu0 %4327
      %4329 = vrot.lane.b32.xlu0 %v2490, 71
      %v4330 = vpop.permute.xlu0 %4329
      %v4331 = vsel %vm561, %v4268, %v4270
      %v4332 = vsel %vm561, %v4270, %v4272
      %v4333 = vsel %vm561, %v4272, %v4274
      %v4334 = vsel %vm561, %v4276, %v4278
      %v4335 = vsel %vm561, %v4278, %v4280
      %v4336 = vsel %vm561, %v4280, %v4282
      %v4337 = vsel %vm561, %v4284, %v4286
      %v4338 = vsel %vm561, %v4286, %v4288
      %v4339 = vsel %vm561, %v4288, %v4290
      %v4340 = vsel %vm561, %v4292, %v4294
      %v4341 = vsel %vm561, %v4294, %v4296
      %v4342 = vsel %vm561, %v4296, %v4298
      %v4343 = vsel %vm561, %v4300, %v4302
      %v4344 = vsel %vm561, %v4302, %v4304
      %v4345 = vsel %vm561, %v4304, %v4306
      %v4346 = vsel %vm561, %v4308, %v4310
      %v4347 = vsel %vm561, %v4310, %v4312
      %v4348 = vsel %vm561, %v4312, %v4314
      %v4349 = vsel %vm561, %v4316, %v4318
      %v4350 = vsel %vm561, %v4318, %v4320
      %v4351 = vsel %vm561, %v4320, %v4322
      %v4352 = vsel %vm561, %v4324, %v4326
      %v4353 = vsel %vm561, %v4326, %v4328
      %v4354 = vsel %vm561, %v4328, %v4330
      %4379 = vmatpush.bf16.msra.mxu0 %v4352
      %4380 = vmatpush.bf16.msra.mxu0 %v4349
      %4381 = vmatpush.bf16.msra.mxu0 %v4346
      %4382 = vmatpush.bf16.msra.mxu0 %v4343
      %4383 = vmatpush.bf16.msra.mxu0 %v4340
      %4384 = vmatpush.bf16.msra.mxu0 %v4337
      %4385 = vmatpush.bf16.msra.mxu0 %v4334
      %4386 = vmatpush.bf16.msra.mxu0 %v4331
      %4387 = vmatmul.bf16.gmra.mxu0 %v4266
      %v4388 = vpop.f32.mrf.mxu0
      %v4389 = vadd.f32 0.0, %v4388
      %v4390 = vpop.f32.mrf.mxu0
      %4391 = vdwg.mxu0
      %4392 = vmatpush.bf16.msra.mxu0 %v4353
      %4393 = vmatpush.bf16.msra.mxu0 %v4350
      %4394 = vmatpush.bf16.msra.mxu0 %v4347
      %4395 = vmatpush.bf16.msra.mxu0 %v4344
      %4396 = vmatpush.bf16.msra.mxu0 %v4341
      %4397 = vmatpush.bf16.msra.mxu0 %v4338
      %4398 = vmatpush.bf16.msra.mxu0 %v4335
      %4399 = vmatpush.bf16.msra.mxu0 %v4332
      %4400 = vmatmul.bf16.gmra.mxu0 %v4266
      %v4401 = vpop.f32.mrf.mxu0
      %v4402 = vadd.f32 0.0, %v4401
      %v4403 = vpop.f32.mrf.mxu0
      %4404 = vdwg.mxu0
      %4405 = vmatpush.bf16.msra.mxu0 %v4354
      %4406 = vmatpush.bf16.msra.mxu0 %v4351
      %4407 = vmatpush.bf16.msra.mxu0 %v4348
      %4408 = vmatpush.bf16.msra.mxu0 %v4345
      %4409 = vmatpush.bf16.msra.mxu0 %v4342
      %4410 = vmatpush.bf16.msra.mxu0 %v4339
      %4411 = vmatpush.bf16.msra.mxu0 %v4336
      %4412 = vmatpush.bf16.msra.mxu0 %v4333
      %4413 = vmatmul.bf16.gmra.mxu0 %v4266
      %v4414 = vpop.f32.mrf.mxu0
      %v4415 = vadd.f32 0.0, %v4414
      %v4416 = vpop.f32.mrf.mxu0
      %4417 = vdwg.mxu0
      %v4418 = vadd.f32 %v4262, %v4389
      %v4419 = vadd.f32 %v4263, %v4402
      %v4420 = vadd.f32 %v4264, %v4415
      %s4421 = scalar_lea.vmem %s4, 52
      %v4422 = vld [vmem:[%s4421] sm:$0xf]
      %4423 = vrot.lane.b32.xlu0 %v2459, 70
      %v4424 = vpop.permute.xlu0 %4423
      %4425 = vrot.lane.b32.xlu0 %v2460, 70
      %v4426 = vpop.permute.xlu0 %4425
      %4427 = vrot.lane.b32.xlu0 %v2461, 70
      %v4428 = vpop.permute.xlu0 %4427
      %4429 = vrot.lane.b32.xlu0 %v2462, 70
      %v4430 = vpop.permute.xlu0 %4429
      %4431 = vrot.lane.b32.xlu0 %v2463, 70
      %v4432 = vpop.permute.xlu0 %4431
      %4433 = vrot.lane.b32.xlu0 %v2464, 70
      %v4434 = vpop.permute.xlu0 %4433
      %4435 = vrot.lane.b32.xlu0 %v2465, 70
      %v4436 = vpop.permute.xlu0 %4435
      %4437 = vrot.lane.b32.xlu0 %v2466, 70
      %v4438 = vpop.permute.xlu0 %4437
      %4439 = vrot.lane.b32.xlu0 %v2467, 70
      %v4440 = vpop.permute.xlu0 %4439
      %4441 = vrot.lane.b32.xlu0 %v2468, 70
      %v4442 = vpop.permute.xlu0 %4441
      %4443 = vrot.lane.b32.xlu0 %v2469, 70
      %v4444 = vpop.permute.xlu0 %4443
      %4445 = vrot.lane.b32.xlu0 %v2470, 70
      %v4446 = vpop.permute.xlu0 %4445
      %4447 = vrot.lane.b32.xlu0 %v2471, 70
      %v4448 = vpop.permute.xlu0 %4447
      %4449 = vrot.lane.b32.xlu0 %v2472, 70
      %v4450 = vpop.permute.xlu0 %4449
      %4451 = vrot.lane.b32.xlu0 %v2473, 70
      %v4452 = vpop.permute.xlu0 %4451
      %4453 = vrot.lane.b32.xlu0 %v2474, 70
      %v4454 = vpop.permute.xlu0 %4453
      %4455 = vrot.lane.b32.xlu0 %v2475, 70
      %v4456 = vpop.permute.xlu0 %4455
      %4457 = vrot.lane.b32.xlu0 %v2476, 70
      %v4458 = vpop.permute.xlu0 %4457
      %4459 = vrot.lane.b32.xlu0 %v2477, 70
      %v4460 = vpop.permute.xlu0 %4459
      %4461 = vrot.lane.b32.xlu0 %v2478, 70
      %v4462 = vpop.permute.xlu0 %4461
      %4463 = vrot.lane.b32.xlu0 %v2479, 70
      %v4464 = vpop.permute.xlu0 %4463
      %4465 = vrot.lane.b32.xlu0 %v2480, 70
      %v4466 = vpop.permute.xlu0 %4465
      %4467 = vrot.lane.b32.xlu0 %v2481, 70
      %v4468 = vpop.permute.xlu0 %4467
      %4469 = vrot.lane.b32.xlu0 %v2482, 70
      %v4470 = vpop.permute.xlu0 %4469
      %4471 = vrot.lane.b32.xlu0 %v2483, 70
      %v4472 = vpop.permute.xlu0 %4471
      %4473 = vrot.lane.b32.xlu0 %v2484, 70
      %v4474 = vpop.permute.xlu0 %4473
      %4475 = vrot.lane.b32.xlu0 %v2485, 70
      %v4476 = vpop.permute.xlu0 %4475
      %4477 = vrot.lane.b32.xlu0 %v2486, 70
      %v4478 = vpop.permute.xlu0 %4477
      %4479 = vrot.lane.b32.xlu0 %v2487, 70
      %v4480 = vpop.permute.xlu0 %4479
      %4481 = vrot.lane.b32.xlu0 %v2488, 70
      %v4482 = vpop.permute.xlu0 %4481
      %4483 = vrot.lane.b32.xlu0 %v2489, 70
      %v4484 = vpop.permute.xlu0 %4483
      %4485 = vrot.lane.b32.xlu0 %v2490, 70
      %v4486 = vpop.permute.xlu0 %4485
      %v4487 = vsel %vm584, %v4424, %v4426
      %v4488 = vsel %vm584, %v4426, %v4428
      %v4489 = vsel %vm584, %v4428, %v4430
      %v4490 = vsel %vm584, %v4432, %v4434
      %v4491 = vsel %vm584, %v4434, %v4436
      %v4492 = vsel %vm584, %v4436, %v4438
      %v4493 = vsel %vm584, %v4440, %v4442
      %v4494 = vsel %vm584, %v4442, %v4444
      %v4495 = vsel %vm584, %v4444, %v4446
      %v4496 = vsel %vm584, %v4448, %v4450
      %v4497 = vsel %vm584, %v4450, %v4452
      %v4498 = vsel %vm584, %v4452, %v4454
      %v4499 = vsel %vm584, %v4456, %v4458
      %v4500 = vsel %vm584, %v4458, %v4460
      %v4501 = vsel %vm584, %v4460, %v4462
      %v4502 = vsel %vm584, %v4464, %v4466
      %v4503 = vsel %vm584, %v4466, %v4468
      %v4504 = vsel %vm584, %v4468, %v4470
      %v4505 = vsel %vm584, %v4472, %v4474
      %v4506 = vsel %vm584, %v4474, %v4476
      %v4507 = vsel %vm584, %v4476, %v4478
      %v4508 = vsel %vm584, %v4480, %v4482
      %v4509 = vsel %vm584, %v4482, %v4484
      %v4510 = vsel %vm584, %v4484, %v4486
      %4535 = vmatpush.bf16.msra.mxu0 %v4508
      %4536 = vmatpush.bf16.msra.mxu0 %v4505
      %4537 = vmatpush.bf16.msra.mxu0 %v4502
      %4538 = vmatpush.bf16.msra.mxu0 %v4499
      %4539 = vmatpush.bf16.msra.mxu0 %v4496
      %4540 = vmatpush.bf16.msra.mxu0 %v4493
      %4541 = vmatpush.bf16.msra.mxu0 %v4490
      %4542 = vmatpush.bf16.msra.mxu0 %v4487
      %4543 = vmatmul.bf16.gmra.mxu0 %v4422
      %v4544 = vpop.f32.mrf.mxu0
      %v4545 = vadd.f32 0.0, %v4544
      %v4546 = vpop.f32.mrf.mxu0
      %4547 = vdwg.mxu0
      %4548 = vmatpush.bf16.msra.mxu0 %v4509
      %4549 = vmatpush.bf16.msra.mxu0 %v4506
      %4550 = vmatpush.bf16.msra.mxu0 %v4503
      %4551 = vmatpush.bf16.msra.mxu0 %v4500
      %4552 = vmatpush.bf16.msra.mxu0 %v4497
      %4553 = vmatpush.bf16.msra.mxu0 %v4494
      %4554 = vmatpush.bf16.msra.mxu0 %v4491
      %4555 = vmatpush.bf16.msra.mxu0 %v4488
      %4556 = vmatmul.bf16.gmra.mxu0 %v4422
      %v4557 = vpop.f32.mrf.mxu0
      %v4558 = vadd.f32 0.0, %v4557
      %v4559 = vpop.f32.mrf.mxu0
      %4560 = vdwg.mxu0
      %4561 = vmatpush.bf16.msra.mxu0 %v4510
      %4562 = vmatpush.bf16.msra.mxu0 %v4507
      %4563 = vmatpush.bf16.msra.mxu0 %v4504
      %4564 = vmatpush.bf16.msra.mxu0 %v4501
      %4565 = vmatpush.bf16.msra.mxu0 %v4498
      %4566 = vmatpush.bf16.msra.mxu0 %v4495
      %4567 = vmatpush.bf16.msra.mxu0 %v4492
      %4568 = vmatpush.bf16.msra.mxu0 %v4489
      %4569 = vmatmul.bf16.gmra.mxu0 %v4422
      %v4570 = vpop.f32.mrf.mxu0
      %v4571 = vadd.f32 0.0, %v4570
      %v4572 = vpop.f32.mrf.mxu0
      %4573 = vdwg.mxu0
      %v4574 = vadd.f32 %v4418, %v4545
      %v4575 = vadd.f32 %v4419, %v4558
      %v4576 = vadd.f32 %v4420, %v4571
      %s4577 = scalar_lea.vmem %s4, 56
      %v4578 = vld [vmem:[%s4577] sm:$0xf]
      %4579 = vrot.lane.b32.xlu0 %v2459, 69
      %v4580 = vpop.permute.xlu0 %4579
      %4581 = vrot.lane.b32.xlu0 %v2460, 69
      %v4582 = vpop.permute.xlu0 %4581
      %4583 = vrot.lane.b32.xlu0 %v2461, 69
      %v4584 = vpop.permute.xlu0 %4583
      %4585 = vrot.lane.b32.xlu0 %v2462, 69
      %v4586 = vpop.permute.xlu0 %4585
      %4587 = vrot.lane.b32.xlu0 %v2463, 69
      %v4588 = vpop.permute.xlu0 %4587
      %4589 = vrot.lane.b32.xlu0 %v2464, 69
      %v4590 = vpop.permute.xlu0 %4589
      %4591 = vrot.lane.b32.xlu0 %v2465, 69
      %v4592 = vpop.permute.xlu0 %4591
      %4593 = vrot.lane.b32.xlu0 %v2466, 69
      %v4594 = vpop.permute.xlu0 %4593
      %4595 = vrot.lane.b32.xlu0 %v2467, 69
      %v4596 = vpop.permute.xlu0 %4595
      %4597 = vrot.lane.b32.xlu0 %v2468, 69
      %v4598 = vpop.permute.xlu0 %4597
      %4599 = vrot.lane.b32.xlu0 %v2469, 69
      %v4600 = vpop.permute.xlu0 %4599
      %4601 = vrot.lane.b32.xlu0 %v2470, 69
      %v4602 = vpop.permute.xlu0 %4601
      %4603 = vrot.lane.b32.xlu0 %v2471, 69
      %v4604 = vpop.permute.xlu0 %4603
      %4605 = vrot.lane.b32.xlu0 %v2472, 69
      %v4606 = vpop.permute.xlu0 %4605
      %4607 = vrot.lane.b32.xlu0 %v2473, 69
      %v4608 = vpop.permute.xlu0 %4607
      %4609 = vrot.lane.b32.xlu0 %v2474, 69
      %v4610 = vpop.permute.xlu0 %4609
      %4611 = vrot.lane.b32.xlu0 %v2475, 69
      %v4612 = vpop.permute.xlu0 %4611
      %4613 = vrot.lane.b32.xlu0 %v2476, 69
      %v4614 = vpop.permute.xlu0 %4613
      %4615 = vrot.lane.b32.xlu0 %v2477, 69
      %v4616 = vpop.permute.xlu0 %4615
      %4617 = vrot.lane.b32.xlu0 %v2478, 69
      %v4618 = vpop.permute.xlu0 %4617
      %4619 = vrot.lane.b32.xlu0 %v2479, 69
      %v4620 = vpop.permute.xlu0 %4619
      %4621 = vrot.lane.b32.xlu0 %v2480, 69
      %v4622 = vpop.permute.xlu0 %4621
      %4623 = vrot.lane.b32.xlu0 %v2481, 69
      %v4624 = vpop.permute.xlu0 %4623
      %4625 = vrot.lane.b32.xlu0 %v2482, 69
      %v4626 = vpop.permute.xlu0 %4625
      %4627 = vrot.lane.b32.xlu0 %v2483, 69
      %v4628 = vpop.permute.xlu0 %4627
      %4629 = vrot.lane.b32.xlu0 %v2484, 69
      %v4630 = vpop.permute.xlu0 %4629
      %4631 = vrot.lane.b32.xlu0 %v2485, 69
      %v4632 = vpop.permute.xlu0 %4631
      %4633 = vrot.lane.b32.xlu0 %v2486, 69
      %v4634 = vpop.permute.xlu0 %4633
      %4635 = vrot.lane.b32.xlu0 %v2487, 69
      %v4636 = vpop.permute.xlu0 %4635
      %4637 = vrot.lane.b32.xlu0 %v2488, 69
      %v4638 = vpop.permute.xlu0 %4637
      %4639 = vrot.lane.b32.xlu0 %v2489, 69
      %v4640 = vpop.permute.xlu0 %4639
      %4641 = vrot.lane.b32.xlu0 %v2490, 69
      %v4642 = vpop.permute.xlu0 %4641
      %v4643 = vsel %vm607, %v4580, %v4582
      %v4644 = vsel %vm607, %v4582, %v4584
      %v4645 = vsel %vm607, %v4584, %v4586
      %v4646 = vsel %vm607, %v4588, %v4590
      %v4647 = vsel %vm607, %v4590, %v4592
      %v4648 = vsel %vm607, %v4592, %v4594
      %v4649 = vsel %vm607, %v4596, %v4598
      %v4650 = vsel %vm607, %v4598, %v4600
      %v4651 = vsel %vm607, %v4600, %v4602
      %v4652 = vsel %vm607, %v4604, %v4606
      %v4653 = vsel %vm607, %v4606, %v4608
      %v4654 = vsel %vm607, %v4608, %v4610
      %v4655 = vsel %vm607, %v4612, %v4614
      %v4656 = vsel %vm607, %v4614, %v4616
      %v4657 = vsel %vm607, %v4616, %v4618
      %v4658 = vsel %vm607, %v4620, %v4622
      %v4659 = vsel %vm607, %v4622, %v4624
      %v4660 = vsel %vm607, %v4624, %v4626
      %v4661 = vsel %vm607, %v4628, %v4630
      %v4662 = vsel %vm607, %v4630, %v4632
      %v4663 = vsel %vm607, %v4632, %v4634
      %v4664 = vsel %vm607, %v4636, %v4638
      %v4665 = vsel %vm607, %v4638, %v4640
      %v4666 = vsel %vm607, %v4640, %v4642
      %4691 = vmatpush.bf16.msra.mxu0 %v4664
      %4692 = vmatpush.bf16.msra.mxu0 %v4661
      %4693 = vmatpush.bf16.msra.mxu0 %v4658
      %4694 = vmatpush.bf16.msra.mxu0 %v4655
      %4695 = vmatpush.bf16.msra.mxu0 %v4652
      %4696 = vmatpush.bf16.msra.mxu0 %v4649
      %4697 = vmatpush.bf16.msra.mxu0 %v4646
      %4698 = vmatpush.bf16.msra.mxu0 %v4643
      %4699 = vmatmul.bf16.gmra.mxu0 %v4578
      %v4700 = vpop.f32.mrf.mxu0
      %v4701 = vadd.f32 0.0, %v4700
      %v4702 = vpop.f32.mrf.mxu0
      %4703 = vdwg.mxu0
      %4704 = vmatpush.bf16.msra.mxu0 %v4665
      %4705 = vmatpush.bf16.msra.mxu0 %v4662
      %4706 = vmatpush.bf16.msra.mxu0 %v4659
      %4707 = vmatpush.bf16.msra.mxu0 %v4656
      %4708 = vmatpush.bf16.msra.mxu0 %v4653
      %4709 = vmatpush.bf16.msra.mxu0 %v4650
      %4710 = vmatpush.bf16.msra.mxu0 %v4647
      %4711 = vmatpush.bf16.msra.mxu0 %v4644
      %4712 = vmatmul.bf16.gmra.mxu0 %v4578
      %v4713 = vpop.f32.mrf.mxu0
      %v4714 = vadd.f32 0.0, %v4713
      %v4715 = vpop.f32.mrf.mxu0
      %4716 = vdwg.mxu0
      %4717 = vmatpush.bf16.msra.mxu0 %v4666
      %4718 = vmatpush.bf16.msra.mxu0 %v4663
      %4719 = vmatpush.bf16.msra.mxu0 %v4660
      %4720 = vmatpush.bf16.msra.mxu0 %v4657
      %4721 = vmatpush.bf16.msra.mxu0 %v4654
      %4722 = vmatpush.bf16.msra.mxu0 %v4651
      %4723 = vmatpush.bf16.msra.mxu0 %v4648
      %4724 = vmatpush.bf16.msra.mxu0 %v4645
      %4725 = vmatmul.bf16.gmra.mxu0 %v4578
      %v4726 = vpop.f32.mrf.mxu0
      %v4727 = vadd.f32 0.0, %v4726
      %v4728 = vpop.f32.mrf.mxu0
      %4729 = vdwg.mxu0
      %v4730 = vadd.f32 %v4574, %v4701
      %v4731 = vadd.f32 %v4575, %v4714
      %v4732 = vadd.f32 %v4576, %v4727
      %s4733 = scalar_lea.vmem %s4, 60
      %v4734 = vld [vmem:[%s4733] sm:$0xf]
      %4735 = vrot.lane.b32.xlu0 %v2459, 68
      %v4736 = vpop.permute.xlu0 %4735
      %4737 = vrot.lane.b32.xlu0 %v2460, 68
      %v4738 = vpop.permute.xlu0 %4737
      %4739 = vrot.lane.b32.xlu0 %v2461, 68
      %v4740 = vpop.permute.xlu0 %4739
      %4741 = vrot.lane.b32.xlu0 %v2462, 68
      %v4742 = vpop.permute.xlu0 %4741
      %4743 = vrot.lane.b32.xlu0 %v2463, 68
      %v4744 = vpop.permute.xlu0 %4743
      %4745 = vrot.lane.b32.xlu0 %v2464, 68
      %v4746 = vpop.permute.xlu0 %4745
      %4747 = vrot.lane.b32.xlu0 %v2465, 68
      %v4748 = vpop.permute.xlu0 %4747
      %4749 = vrot.lane.b32.xlu0 %v2466, 68
      %v4750 = vpop.permute.xlu0 %4749
      %4751 = vrot.lane.b32.xlu0 %v2467, 68
      %v4752 = vpop.permute.xlu0 %4751
      %4753 = vrot.lane.b32.xlu0 %v2468, 68
      %v4754 = vpop.permute.xlu0 %4753
      %4755 = vrot.lane.b32.xlu0 %v2469, 68
      %v4756 = vpop.permute.xlu0 %4755
      %4757 = vrot.lane.b32.xlu0 %v2470, 68
      %v4758 = vpop.permute.xlu0 %4757
      %4759 = vrot.lane.b32.xlu0 %v2471, 68
      %v4760 = vpop.permute.xlu0 %4759
      %4761 = vrot.lane.b32.xlu0 %v2472, 68
      %v4762 = vpop.permute.xlu0 %4761
      %4763 = vrot.lane.b32.xlu0 %v2473, 68
      %v4764 = vpop.permute.xlu0 %4763
      %4765 = vrot.lane.b32.xlu0 %v2474, 68
      %v4766 = vpop.permute.xlu0 %4765
      %4767 = vrot.lane.b32.xlu0 %v2475, 68
      %v4768 = vpop.permute.xlu0 %4767
      %4769 = vrot.lane.b32.xlu0 %v2476, 68
      %v4770 = vpop.permute.xlu0 %4769
      %4771 = vrot.lane.b32.xlu0 %v2477, 68
      %v4772 = vpop.permute.xlu0 %4771
      %4773 = vrot.lane.b32.xlu0 %v2478, 68
      %v4774 = vpop.permute.xlu0 %4773
      %4775 = vrot.lane.b32.xlu0 %v2479, 68
      %v4776 = vpop.permute.xlu0 %4775
      %4777 = vrot.lane.b32.xlu0 %v2480, 68
      %v4778 = vpop.permute.xlu0 %4777
      %4779 = vrot.lane.b32.xlu0 %v2481, 68
      %v4780 = vpop.permute.xlu0 %4779
      %4781 = vrot.lane.b32.xlu0 %v2482, 68
      %v4782 = vpop.permute.xlu0 %4781
      %4783 = vrot.lane.b32.xlu0 %v2483, 68
      %v4784 = vpop.permute.xlu0 %4783
      %4785 = vrot.lane.b32.xlu0 %v2484, 68
      %v4786 = vpop.permute.xlu0 %4785
      %4787 = vrot.lane.b32.xlu0 %v2485, 68
      %v4788 = vpop.permute.xlu0 %4787
      %4789 = vrot.lane.b32.xlu0 %v2486, 68
      %v4790 = vpop.permute.xlu0 %4789
      %4791 = vrot.lane.b32.xlu0 %v2487, 68
      %v4792 = vpop.permute.xlu0 %4791
      %4793 = vrot.lane.b32.xlu0 %v2488, 68
      %v4794 = vpop.permute.xlu0 %4793
      %4795 = vrot.lane.b32.xlu0 %v2489, 68
      %v4796 = vpop.permute.xlu0 %4795
      %4797 = vrot.lane.b32.xlu0 %v2490, 68
      %v4798 = vpop.permute.xlu0 %4797
      %v4799 = vsel %vm630, %v4736, %v4738
      %v4800 = vsel %vm630, %v4738, %v4740
      %v4801 = vsel %vm630, %v4740, %v4742
      %v4802 = vsel %vm630, %v4744, %v4746
      %v4803 = vsel %vm630, %v4746, %v4748
      %v4804 = vsel %vm630, %v4748, %v4750
      %v4805 = vsel %vm630, %v4752, %v4754
      %v4806 = vsel %vm630, %v4754, %v4756
      %v4807 = vsel %vm630, %v4756, %v4758
      %v4808 = vsel %vm630, %v4760, %v4762
      %v4809 = vsel %vm630, %v4762, %v4764
      %v4810 = vsel %vm630, %v4764, %v4766
      %v4811 = vsel %vm630, %v4768, %v4770
      %v4812 = vsel %vm630, %v4770, %v4772
      %v4813 = vsel %vm630, %v4772, %v4774
      %v4814 = vsel %vm630, %v4776, %v4778
      %v4815 = vsel %vm630, %v4778, %v4780
      %v4816 = vsel %vm630, %v4780, %v4782
      %v4817 = vsel %vm630, %v4784, %v4786
      %v4818 = vsel %vm630, %v4786, %v4788
      %v4819 = vsel %vm630, %v4788, %v4790
      %v4820 = vsel %vm630, %v4792, %v4794
      %v4821 = vsel %vm630, %v4794, %v4796
      %v4822 = vsel %vm630, %v4796, %v4798
      %4847 = vmatpush.bf16.msra.mxu0 %v4820
      %4848 = vmatpush.bf16.msra.mxu0 %v4817
      %4849 = vmatpush.bf16.msra.mxu0 %v4814
      %4850 = vmatpush.bf16.msra.mxu0 %v4811
      %4851 = vmatpush.bf16.msra.mxu0 %v4808
      %4852 = vmatpush.bf16.msra.mxu0 %v4805
      %4853 = vmatpush.bf16.msra.mxu0 %v4802
      %4854 = vmatpush.bf16.msra.mxu0 %v4799
      %4855 = vmatmul.bf16.gmra.mxu0 %v4734
      %v4856 = vpop.f32.mrf.mxu0
      %v4857 = vadd.f32 0.0, %v4856
      %v4858 = vpop.f32.mrf.mxu0
      %4859 = vdwg.mxu0
      %4860 = vmatpush.bf16.msra.mxu0 %v4821
      %4861 = vmatpush.bf16.msra.mxu0 %v4818
      %4862 = vmatpush.bf16.msra.mxu0 %v4815
      %4863 = vmatpush.bf16.msra.mxu0 %v4812
      %4864 = vmatpush.bf16.msra.mxu0 %v4809
      %4865 = vmatpush.bf16.msra.mxu0 %v4806
      %4866 = vmatpush.bf16.msra.mxu0 %v4803
      %4867 = vmatpush.bf16.msra.mxu0 %v4800
      %4868 = vmatmul.bf16.gmra.mxu0 %v4734
      %v4869 = vpop.f32.mrf.mxu0
      %v4870 = vadd.f32 0.0, %v4869
      %v4871 = vpop.f32.mrf.mxu0
      %4872 = vdwg.mxu0
      %4873 = vmatpush.bf16.msra.mxu0 %v4822
      %4874 = vmatpush.bf16.msra.mxu0 %v4819
      %4875 = vmatpush.bf16.msra.mxu0 %v4816
      %4876 = vmatpush.bf16.msra.mxu0 %v4813
      %4877 = vmatpush.bf16.msra.mxu0 %v4810
      %4878 = vmatpush.bf16.msra.mxu0 %v4807
      %4879 = vmatpush.bf16.msra.mxu0 %v4804
      %4880 = vmatpush.bf16.msra.mxu0 %v4801
      %4881 = vmatmul.bf16.gmra.mxu0 %v4734
      %v4882 = vpop.f32.mrf.mxu0
      %v4883 = vadd.f32 0.0, %v4882
      %v4884 = vpop.f32.mrf.mxu0
      %4885 = vdwg.mxu0
      %v4886 = vadd.f32 %v4730, %v4857
      %v4887 = vadd.f32 %v4731, %v4870
      %v4888 = vadd.f32 %v4732, %v4883
      %v4889 = vld [vmem:[%s5] sm:$0xff]
      %4891 = vset.pattern.permute.xlu0 0
      %4892 = vperm.xlu0 %4891, %v4889
      %v4893 = vpop.permute.xlu0 %4892
      %v4895 = vadd.f32 %v4886, %v4893
      %v4896 = vadd.f32 %v4887, %v4893
      %v4897 = vadd.f32 %v4888, %v4893
      %4898 = vst [vmem:[%s251] sm:$0xff] %v4895
      %4899 = vst [vmem:[%s251 + $0x8] sm:$0xff] %v4896
      %4900 = vst [vmem:[%s251 + $0x10] sm:$0xff] %v4897
      %p4901 = scmp.lt.s32.totalorder %s17, 1
      %s4902 = scalar_select %p4901, %s17, 1
      %s4903 = smul.addr %s4902, 3
      %s4904 = smul.addr %s4903, 8
      %s4905 = scalar_lea.vmem %s6, %s4904
      // Predicated region
      $region45: #{host_img_transformer_decoder_hybrid.3} parent=43 // pred_check
        %p4906 = pneg %p166
      $region46: #{host_img_transformer_decoder_hybrid.3} parent=43 // pred_check_branch
        %4908 = sbr.rel (%p4906) target = $region48
      $region47: #{host_img_transformer_decoder_hybrid.3} parent=43 // pred_region
        _
      $region48: #{host_img_transformer_decoder_hybrid.3} parent=43 // pred_fallthru
        _
    $region44: #{host_img_transformer_decoder_hybrid.3} parent=5 // pred_fallthru
      _
    %p4909 = scmp.le.s32.totalorder 2, %s12
    // Predicated region
    $region49: #{host_img_transformer_decoder_hybrid.3} parent=5 // pred_check
      %p4910 = pneg %p4909
    $region50: #{host_img_transformer_decoder_hybrid.3} parent=5 // pred_check_branch
      %4912 = sbr.rel (%p4910) target = $region52
    $region51: #{host_img_transformer_decoder_hybrid.3} parent=5 // pred_region
      %s4913 = ssub.s32 %s12, 2
      // Predicated region
      $region53: #{host_img_transformer_decoder_hybrid.3} parent=51 // pred_check
        %p4914 = pneg %p172
      $region54: #{host_img_transformer_decoder_hybrid.3} parent=51 // pred_check_branch
        %4916 = sbr.rel (%p4914) target = $region56
      $region55: #{host_img_transformer_decoder_hybrid.3} parent=51 // pred_region
        %p4917 = scmp.lt.s32.totalorder %s18, 1
        %s4918 = scalar_select %p4917, %s18, 1
        %s4919 = smul.addr %s4918, 3
        %s4920 = smul.addr %s4919, 8
        %s4921 = scalar_lea.vmem %s6, %s4920
      $region56: #{host_img_transformer_decoder_hybrid.3} parent=51 // pred_fallthru
        _
    $region52: #{host_img_transformer_decoder_hybrid.3} parent=5 // pred_fallthru
      _
  $region6: #{host_img_transformer_decoder_hybrid.3} parent=0 // loop_footer
    %s16 = sadd.s32 1, %s12
  $region7: #{host_img_transformer_decoder_hybrid.3} parent=0 // loop_footer_branch
    %11 = sbr.rel target = $region3
  $region8: #{host_img_transformer_decoder_hybrid.3} parent=0 // loop_exit
    _

</llo_original>
